<compile_context>
chip_gen: v5e
topology: v5e:2x2
jax: 0.10.0
libtpu: 0.0.40
codegen_flags: <defaults>
</compile_context>

<pallas_src>
import math
from functools import partial

import jax
import jax.numpy as jnp
from jax import lax
from jax.experimental import pallas as pl
from jax.experimental.pallas import tpu as pltpu

PAD_ID = 0
NEG_INF = -1e9
LN_EPS = 1e-6


def _pick(dim, pref):
    """Tile size: whole dim if small, else a TPU-friendly fixed tile."""
    return dim if dim <= pref else pref


# ---------------------------------------------------------------------------
# Fused multi-output projection:  out_i = x @ w_i + b_i   (x read once).
# Resident path: all weights stay in VMEM across every M tile (no K axis).
# ---------------------------------------------------------------------------
def _make_multi_proj_resident_kernel(n_out):
    def kernel(*refs):
        x_ref = refs[0]
        w_refs = refs[1:1 + n_out]
        b_refs = refs[1 + n_out:1 + 2 * n_out]
        o_refs = refs[1 + 2 * n_out:]
        x = x_ref[...]
        for o, w, b in zip(o_refs, w_refs, b_refs):
            o[...] = (jnp.dot(x, w[...], preferred_element_type=jnp.float32)
                      + b[...]).astype(o.dtype)
    return kernel


def _make_multi_proj_ktiled_kernel(n_out, k_total):
    def kernel(*refs):
        x_ref = refs[0]
        w_refs = refs[1:1 + n_out]
        b_refs = refs[1 + n_out:1 + 2 * n_out]
        o_refs = refs[1 + 2 * n_out:1 + 3 * n_out]
        acc_refs = refs[1 + 3 * n_out:]
        kk = pl.program_id(1)
        tk = x_ref.shape[1]

        @pl.when(kk == 0)
        def _():
            for acc in acc_refs:
                acc[...] = jnp.zeros_like(acc)

        x = x_ref[...]
        if k_total % tk != 0:  # mask the zero-padded tail of the K axis
            col_ok = (kk * tk + lax.broadcasted_iota(jnp.int32, (1, tk), 1)) < k_total
            row_ok = (kk * tk + lax.broadcasted_iota(jnp.int32, (tk, 1), 0)) < k_total
            x = jnp.where(col_ok, x, 0)
            ws = [jnp.where(row_ok, w[...], 0) for w in w_refs]
        else:
            ws = [w[...] for w in w_refs]

        for acc, w in zip(acc_refs, ws):
            acc[...] += jnp.dot(x, w, preferred_element_type=jnp.float32)

        @pl.when(kk == pl.num_programs(1) - 1)
        def _():
            for o, acc, b in zip(o_refs, acc_refs, b_refs):
                o[...] = (acc[...] + b[...]).astype(o.dtype)

    return kernel


def fused_projection(x, weights, biases, out_dtype=jnp.bfloat16):
    """[x @ w_i + b_i] for all i, reading x from HBM only once."""
    n = len(weights)
    M, K = x.shape
    N = weights[0].shape[1]
    tm = _pick(M, 256)  # v6e: raise to 512-1024; v7x: keep <=256 (64 MiB VMEM)
    out = jax.ShapeDtypeStruct((M, N), out_dtype)
    b2d = [b.reshape(1, N) for b in biases]

    if K * N * 2 * n <= (8 << 20):
        # Whole weight set fits comfortably in VMEM: constant index maps keep
        # it resident; each weight is DMA'd from HBM exactly once.
        outs = pl.pallas_call(
            _make_multi_proj_resident_kernel(n),
            grid=(pl.cdiv(M, tm),),
            in_specs=([pl.BlockSpec((tm, K), lambda i: (i, 0))]
                      + [pl.BlockSpec((K, N), lambda i: (0, 0))] * n
                      + [pl.BlockSpec((1, N), lambda i: (0, 0))] * n),
            out_specs=tuple([pl.BlockSpec((tm, N), lambda i: (i, 0))] * n),
            out_shape=tuple([out] * n),
            compiler_params=pltpu.CompilerParams(
                dimension_semantics=("parallel",)),
        )(x, *weights, *b2d)
    else:
        tk = _pick(K, 512)
        outs = pl.pallas_call(
            _make_multi_proj_ktiled_kernel(n, K),
            grid=(pl.cdiv(M, tm), pl.cdiv(K, tk)),
            in_specs=([pl.BlockSpec((tm, tk), lambda i, k: (i, k))]
                      + [pl.BlockSpec((tk, N), lambda i, k: (k, 0))] * n
                      + [pl.BlockSpec((1, N), lambda i, k: (0, 0))] * n),
            out_specs=tuple([pl.BlockSpec((tm, N), lambda i, k: (i, 0))] * n),
            out_shape=tuple([out] * n),
            scratch_shapes=[pltpu.VMEM((tm, N), jnp.float32) for _ in range(n)],
            compiler_params=pltpu.CompilerParams(
                dimension_semantics=("parallel", "arbitrary")),
        )(x, *weights, *b2d)
    if not isinstance(outs, (list, tuple)):
        outs = (outs,)
    return tuple(outs)


# ---------------------------------------------------------------------------
# Flash-style attention, all heads per grid step.
# grid = (B, q tiles, kv blocks); online softmax stats per head in VMEM.
# Q/K/V stay in (B, S, D) layout; heads are static lane slices of width dh.
# The 1/sqrt(dh) scale is folded into wq, so q arrives pre-scaled.
# ---------------------------------------------------------------------------
def _flash_attn_kernel(q_ref, k_ref, v_ref, kbias_ref, o_ref,
                       m_sc, l_sc, acc_sc, *, causal, kv_len, nheads, dh):
    qi = pl.program_id(1)
    kvb = pl.program_id(2)
    tq = q_ref.shape[1]
    tkv = k_ref.shape[1]
    has_tail = (kv_len % tkv) != 0
    k_start = kvb * tkv
    q_first = qi * tq

    @pl.when(kvb == 0)
    def _init():
        m_sc[...] = jnp.full_like(m_sc, NEG_INF)
        l_sc[...] = jnp.zeros_like(l_sc)
        acc_sc[...] = jnp.zeros_like(acc_sc)

    def _update(masked):
        q = q_ref[0]                              # (tq, D)  bf16 (pre-scaled)
        k = k_ref[0]                              # (tkv, D) bf16
        v = v_ref[0]                              # (tkv, D) bf16
        kbias = kbias_ref[0]                      # (1, tkv) f32 key-pad bias
        if masked:
            kpos = k_start + lax.broadcasted_iota(jnp.int32, (tq, tkv), 1)
            if causal:
                qpos = q_first + lax.broadcasted_iota(jnp.int32, (tq, tkv), 0)
                invalid = kpos > qpos
                if has_tail:
                    invalid = jnp.logical_or(invalid, kpos >= kv_len)
            else:
                invalid = kpos >= kv_len
            if has_tail:  # keep padded-tail v rows out of the accumulation
                vrow_ok = (k_start + lax.broadcasted_iota(
                    jnp.int32, (tkv, 1), 0)) < kv_len
                v = jnp.where(vrow_ok, v, 0)
        for h in range(nheads):
            hs = slice(h * dh, (h + 1) * dh)
            s = lax.dot_general(q[:, hs], k[:, hs], (((1,), (1,)), ((), ())),
                                preferred_element_type=jnp.float32)   # (tq,tkv)
            s = s + kbias
            if masked:
                s = jnp.where(invalid, NEG_INF, s)
            m_prev = m_sc[:, h:h + 1]
            m_new = jnp.maximum(m_prev, jnp.max(s, axis=-1, keepdims=True))
            alpha = jnp.exp(m_prev - m_new)
            p = jnp.exp(s - m_new)
            l_sc[:, h:h + 1] = alpha * l_sc[:, h:h + 1] + jnp.sum(
                p, axis=-1, keepdims=True)
            acc_sc[:, hs] = alpha * acc_sc[:, hs] + jnp.dot(
                p.astype(v.dtype), v[:, hs], preferred_element_type=jnp.float32)
            m_sc[:, h:h + 1] = m_new

    if causal or has_tail:
        is_tail = kvb == pl.num_programs(2) - 1
        if causal:
            # skip fully-future blocks; only diagonal / tail blocks get masked
            visible = k_start <= q_first + tq - 1
            need_mask = (k_start + tkv - 1) > q_first
            if has_tail:
                need_mask = jnp.logical_or(need_mask, is_tail)

            @pl.when(jnp.logical_and(visible, need_mask))
            def _masked():
                _update(True)

            @pl.when(jnp.logical_and(visible, jnp.logical_not(need_mask)))
            def _clean():
                _update(False)
        else:
            @pl.when(is_tail)
            def _masked():
                _update(True)

            @pl.when(jnp.logical_not(is_tail))
            def _clean():
                _update(False)
    else:
        _update(False)

    @pl.when(kvb == pl.num_programs(2) - 1)
    def _fin():
        for h in range(nheads):
            hs = slice(h * dh, (h + 1) * dh)
            # guard: a row whose every key is masked (finite -1e9 bias) keeps
            # m at ~NEG_INF -> emit zeros instead of a garbage average.
            safe = m_sc[:, h:h + 1] > (0.5 * NEG_INF)
            inv = jnp.where(safe,
                            1.0 / jnp.maximum(l_sc[:, h:h + 1], 1e-30), 0.0)
            acc_sc[:, hs] = acc_sc[:, hs] * inv
        o_ref[0] = acc_sc[...].astype(o_ref.dtype)      # one lane-dense slab


def multi_head_attention(x_q2d, x_kv2d, key_bias, ap, nheads, *,
                         causal, B, Sq, Sk, self_attention):
    D = x_q2d.shape[1]
    dh = D // nheads

    if self_attention:
        q2, k2, v2 = fused_projection(
            x_q2d, [ap["wq"], ap["wk"], ap["wv"]], [ap["bq"], ap["bk"], ap["bv"]])
    else:
        (q2,) = fused_projection(x_q2d, [ap["wq"]], [ap["bq"]])
        k2, v2 = fused_projection(x_kv2d, [ap["wk"], ap["wv"]],
                                  [ap["bk"], ap["bv"]])

    # No HBM head transposes: (B*S, D) -> (B, S, D) is a free reshape.
    q = q2.reshape(B, Sq, D)
    k = k2.reshape(B, Sk, D)
    v = v2.reshape(B, Sk, D)

    tq = _pick(Sq, 256)
    tkv = _pick(Sk, 512)
    grid = (B, pl.cdiv(Sq, tq), pl.cdiv(Sk, tkv))
    o = pl.pallas_call(
        partial(_flash_attn_kernel, causal=causal, kv_len=Sk,
                nheads=nheads, dh=dh),
        grid=grid,
        in_specs=[
            pl.BlockSpec((1, tq, D), lambda b, qi, kv: (b, qi, 0)),
            pl.BlockSpec((1, tkv, D), lambda b, qi, kv: (b, kv, 0)),
            pl.BlockSpec((1, tkv, D), lambda b, qi, kv: (b, kv, 0)),
            pl.BlockSpec((1, 1, tkv), lambda b, qi, kv: (b, 0, kv)),
        ],
        out_specs=pl.BlockSpec((1, tq, D), lambda b, qi, kv: (b, qi, 0)),
        out_shape=jax.ShapeDtypeStruct((B, Sq, D), jnp.bfloat16),
        scratch_shapes=[pltpu.VMEM((tq, nheads), jnp.float32),
                        pltpu.VMEM((tq, nheads), jnp.float32),
                        pltpu.VMEM((tq, D), jnp.float32)],
        compiler_params=pltpu.CompilerParams(
            dimension_semantics=("parallel", "parallel", "arbitrary")),
    )(q, k, v, key_bias)
    return o.reshape(B * Sq, D)     # free reshape, layout already (S, D)


# ---------------------------------------------------------------------------
# Fused: (a @ wo + bo) + residual -> layernorm
# TODO(synk): for very large d_model on v7x (64 MiB VMEM) this resident (K,N)
# weight block needs K/N tiling; fine at these model sizes.
# ---------------------------------------------------------------------------
def _proj_add_ln_kernel(a_ref, w_ref, bias_ref, res_ref, g_ref, b_ref, o_ref):
    y = jnp.dot(a_ref[...], w_ref[...], preferred_element_type=jnp.float32)
    y = y + bias_ref[...] + res_ref[...].astype(jnp.float32)
    mu = jnp.mean(y, axis=-1, keepdims=True)
    var = jnp.mean(jnp.square(y - mu), axis=-1, keepdims=True)
    o_ref[...] = ((y - mu) * lax.rsqrt(var + LN_EPS) * g_ref[...]
                  + b_ref[...]).astype(o_ref.dtype)


def proj_add_layernorm(a, w, bias, resid, gamma, beta):
    M, K = a.shape
    N = w.shape[1]
    tm = _pick(M, 256)
    return pl.pallas_call(
        _proj_add_ln_kernel,
        grid=(pl.cdiv(M, tm),),
        in_specs=[pl.BlockSpec((tm, K), lambda i: (i, 0)),
                  pl.BlockSpec((K, N), lambda i: (0, 0)),
                  pl.BlockSpec((1, N), lambda i: (0, 0)),
                  pl.BlockSpec((tm, N), lambda i: (i, 0)),
                  pl.BlockSpec((1, N), lambda i: (0, 0)),
                  pl.BlockSpec((1, N), lambda i: (0, 0))],
        out_specs=pl.BlockSpec((tm, N), lambda i: (i, 0)),
        out_shape=jax.ShapeDtypeStruct((M, N), jnp.bfloat16),
        compiler_params=pltpu.CompilerParams(dimension_semantics=("parallel",)),
    )(a, w, bias.reshape(1, N), resid, gamma.reshape(1, N), beta.reshape(1, N))


# ---------------------------------------------------------------------------
# Fused FFN: relu(x@w1+b1)@w2+b2 + residual -> layernorm, K-tiled over d_ff.
# ---------------------------------------------------------------------------
def _ffn_ln_kernel(x_ref, w1_ref, b1_ref, w2_ref, b2_ref, g_ref, b_ref,
                   o_ref, acc_ref, *, f_total):
    f = pl.program_id(1)
    tf = w1_ref.shape[1]

    @pl.when(f == 0)
    def _():
        acc_ref[...] = jnp.zeros_like(acc_ref)

    h = jnp.dot(x_ref[...], w1_ref[...], preferred_element_type=jnp.float32)
    h = jnp.maximum(h + b1_ref[...], 0.0)
    if f_total % tf != 0:  # mask the zero-padded tail of the d_ff axis
        col_ok = (f * tf + lax.broadcasted_iota(jnp.int32, (1, tf), 1)) < f_total
        row_ok = (f * tf + lax.broadcasted_iota(jnp.int32, (tf, 1), 0)) < f_total
        h = jnp.where(col_ok, h, 0.0)
        w2 = jnp.where(row_ok, w2_ref[...], 0)
    else:
        w2 = w2_ref[...]
    acc_ref[...] += jnp.dot(h.astype(jnp.bfloat16), w2,
                            preferred_element_type=jnp.float32)

    @pl.when(f == pl.num_programs(1) - 1)
    def _():
        y = acc_ref[...] + b2_ref[...] + x_ref[...].astype(jnp.float32)
        mu = jnp.mean(y, axis=-1, keepdims=True)
        var = jnp.mean(jnp.square(y - mu), axis=-1, keepdims=True)
        o_ref[...] = ((y - mu) * lax.rsqrt(var + LN_EPS) * g_ref[...]
                      + b_ref[...]).astype(o_ref.dtype)


def ffn_add_layernorm(x, w1, b1, w2, b2, gamma, beta):
    M, D = x.shape
    F = w1.shape[1]
    tm, tf = _pick(M, 256), _pick(F, 512)
    grid = (pl.cdiv(M, tm), pl.cdiv(F, tf))
    return pl.pallas_call(
        partial(_ffn_ln_kernel, f_total=F),
        grid=grid,
        in_specs=[pl.BlockSpec((tm, D), lambda i, f: (i, 0)),
                  pl.BlockSpec((D, tf), lambda i, f: (0, f)),
                  pl.BlockSpec((1, tf), lambda i, f: (0, f)),
                  pl.BlockSpec((tf, D), lambda i, f: (f, 0)),
                  pl.BlockSpec((1, D), lambda i, f: (0, 0)),
                  pl.BlockSpec((1, D), lambda i, f: (0, 0)),
                  pl.BlockSpec((1, D), lambda i, f: (0, 0))],
        out_specs=pl.BlockSpec((tm, D), lambda i, f: (i, 0)),
        out_shape=jax.ShapeDtypeStruct((M, D), jnp.bfloat16),
        scratch_shapes=[pltpu.VMEM((tm, D), jnp.float32)],
        compiler_params=pltpu.CompilerParams(
            dimension_semantics=("parallel", "arbitrary")),
    )(x, w1, b1.reshape(1, F), w2, b2.reshape(1, D),
      gamma.reshape(1, D), beta.reshape(1, D))


# ---------------------------------------------------------------------------
# Output projection, V-tiled, with online logsumexp + per-row loss statistics
# (sum of logits, gathered target logit).  The label-smoothed CE is computed
# from these rows, so the (M,V) log-probs tensor never feeds the loss.
# ---------------------------------------------------------------------------
def _vocab_proj_kernel(x_ref, w_ref, b_ref, tgt_ref,
                       logit_ref, lse_ref, rowsum_ref, tgtlogit_ref,
                       m_sc, l_sc, s_sc, t_sc, *, vocab):
    j = pl.program_id(1)
    tv = w_ref.shape[1]

    @pl.when(j == 0)
    def _():
        m_sc[...] = jnp.full_like(m_sc, NEG_INF)
        l_sc[...] = jnp.zeros_like(l_sc)
        s_sc[...] = jnp.zeros_like(s_sc)
        t_sc[...] = jnp.zeros_like(t_sc)

    logits = jnp.dot(x_ref[...], w_ref[...],
                     preferred_element_type=jnp.float32) + b_ref[...]
    logit_ref[...] = logits

    col = j * tv + lax.broadcasted_iota(jnp.int32, logits.shape, 1)
    if vocab % tv != 0:  # exclude padded tail columns from the statistics
        in_range = col < vocab
        stats = jnp.where(in_range, logits, NEG_INF)
        summ = jnp.where(in_range, logits, 0.0)
    else:
        stats = logits
        summ = logits

    m_prev = m_sc[...]
    m_new = jnp.maximum(m_prev, jnp.max(stats, axis=-1, keepdims=True))
    l_sc[...] = (l_sc[...] * jnp.exp(m_prev - m_new)
                 + jnp.sum(jnp.exp(stats - m_new), axis=-1, keepdims=True))
    m_sc[...] = m_new
    s_sc[...] += jnp.sum(summ, axis=-1, keepdims=True)
    t_sc[...] += jnp.sum(jnp.where(col == tgt_ref[...], logits, 0.0),
                         axis=-1, keepdims=True)

    @pl.when(j == pl.num_programs(1) - 1)
    def _():
        lse_ref[...] = m_sc[...] + jnp.log(l_sc[...])
        rowsum_ref[...] = s_sc[...]
        tgtlogit_ref[...] = t_sc[...]


def output_projection(x, w, b, tgt_ids):
    M, D = x.shape
    V = w.shape[1]
    tm, tv = _pick(M, 256), _pick(V, 1024)
    grid = (pl.cdiv(M, tm), pl.cdiv(V, tv))
    row = jax.ShapeDtypeStruct((M, 1), jnp.float32)
    row_spec = pl.BlockSpec((tm, 1), lambda i, j: (i, 0))
    return pl.pallas_call(
        partial(_vocab_proj_kernel, vocab=V),
        grid=grid,
        in_specs=[pl.BlockSpec((tm, D), lambda i, j: (i, 0)),
                  pl.BlockSpec((D, tv), lambda i, j: (0, j)),
                  pl.BlockSpec((1, tv), lambda i, j: (0, j)),
                  pl.BlockSpec((tm, 1), lambda i, j: (i, 0))],
        out_specs=(pl.BlockSpec((tm, tv), lambda i, j: (i, j)),
                   row_spec, row_spec, row_spec),
        out_shape=(jax.ShapeDtypeStruct((M, V), jnp.float32), row, row, row),
        scratch_shapes=[pltpu.VMEM((tm, 1), jnp.float32) for _ in range(4)],
        compiler_params=pltpu.CompilerParams(
            dimension_semantics=("parallel", "arbitrary")),
    )(x, w, b.reshape(1, V), tgt_ids)


# --------------------------- model building blocks --------------------------

def encoder_layer(x2d, src_key_bias, lp, nheads, B, Ss):
    a = multi_head_attention(x2d, x2d, src_key_bias, lp["self_attn"], nheads,
                             causal=False, B=B, Sq=Ss, Sk=Ss, self_attention=True)
    x2d = proj_add_layernorm(a, lp["self_attn"]["wo"], lp["self_attn"]["bo"],
                             x2d, lp["ln1_g"], lp["ln1_b"])
    x2d = ffn_add_layernorm(x2d, lp["ffn_w1"], lp["ffn_b1"],
                            lp["ffn_w2"], lp["ffn_b2"], lp["ln2_g"], lp["ln2_b"])
    return x2d


def decoder_layer(y2d, enc2d, tgt_key_bias, src_key_bias, lp, nheads, B, St, Ss):
    a = multi_head_attention(y2d, y2d, tgt_key_bias, lp["self_attn"], nheads,
                             causal=True, B=B, Sq=St, Sk=St, self_attention=True)
    y2d = proj_add_layernorm(a, lp["self_attn"]["wo"], lp["self_attn"]["bo"],
                             y2d, lp["ln1_g"], lp["ln1_b"])
    c = multi_head_attention(y2d, enc2d, src_key_bias, lp["cross_attn"], nheads,
                             causal=False, B=B, Sq=St, Sk=Ss, self_attention=False)
    y2d = proj_add_layernorm(c, lp["cross_attn"]["wo"], lp["cross_attn"]["bo"],
                             y2d, lp["ln2_g"], lp["ln2_b"])
    y2d = ffn_add_layernorm(y2d, lp["ffn_w1"], lp["ffn_b1"],
                            lp["ffn_w2"], lp["ffn_b2"], lp["ln3_g"], lp["ln3_b"])
    return y2d


def sinusoidal_pe(seq_len, d_model):
    pos = jnp.arange(seq_len, dtype=jnp.float32)[:, None]
    i = jnp.arange(d_model // 2, dtype=jnp.float32)[None, :]
    angle = pos / jnp.power(10000.0, (2.0 * i) / d_model)
    pe = jnp.zeros((seq_len, d_model), jnp.float32)
    pe = pe.at[:, 0::2].set(jnp.sin(angle))
    pe = pe.at[:, 1::2].set(jnp.cos(angle))
    return pe


# ------------------------------- parameters ---------------------------------

def init_attn_params(key, d_model):
    ks = jax.random.split(key, 4)
    std = 0.02
    return {
        "wq": std * jax.random.normal(ks[0], (d_model, d_model), jnp.float32),
        "bq": jnp.zeros((d_model,), jnp.float32),
        "wk": std * jax.random.normal(ks[1], (d_model, d_model), jnp.float32),
        "bk": jnp.zeros((d_model,), jnp.float32),
        "wv": std * jax.random.normal(ks[2], (d_model, d_model), jnp.float32),
        "bv": jnp.zeros((d_model,), jnp.float32),
        "wo": std * jax.random.normal(ks[3], (d_model, d_model), jnp.float32),
        "bo": jnp.zeros((d_model,), jnp.float32),
    }


def init_params(key, src_vocab, tgt_vocab, d_model, d_ff, n_enc, n_dec):
    keys = jax.random.split(key, 8)
    std = 0.02
    params = {
        "src_emb": std * jax.random.normal(keys[0], (src_vocab, d_model), jnp.float32),
        "tgt_emb": std * jax.random.normal(keys[1], (tgt_vocab, d_model), jnp.float32),
        "out_w": std * jax.random.normal(keys[2], (d_model, tgt_vocab), jnp.float32),
        "out_b": jnp.zeros((tgt_vocab,), jnp.float32),
        "enc_layers": [],
        "dec_layers": [],
    }
    ek = jax.random.split(keys[3], n_enc)
    for i in range(n_enc):
        lk = jax.random.split(ek[i], 3)
        params["enc_layers"].append({
            "self_attn": init_attn_params(lk[0], d_model),
            "ffn_w1": std * jax.random.normal(lk[1], (d_model, d_ff), jnp.float32),
            "ffn_b1": jnp.zeros((d_ff,), jnp.float32),
            "ffn_w2": std * jax.random.normal(lk[2], (d_ff, d_model), jnp.float32),
            "ffn_b2": jnp.zeros((d_model,), jnp.float32),
            "ln1_g": jnp.ones((d_model,), jnp.float32),
            "ln1_b": jnp.zeros((d_model,), jnp.float32),
            "ln2_g": jnp.ones((d_model,), jnp.float32),
            "ln2_b": jnp.zeros((d_model,), jnp.float32),
        })
    dk = jax.random.split(keys[4], n_dec)
    for i in range(n_dec):
        lk = jax.random.split(dk[i], 4)
        params["dec_layers"].append({
            "self_attn": init_attn_params(lk[0], d_model),
            "cross_attn": init_attn_params(lk[1], d_model),
            "ffn_w1": std * jax.random.normal(lk[2], (d_model, d_ff), jnp.float32),
            "ffn_b1": jnp.zeros((d_ff,), jnp.float32),
            "ffn_w2": std * jax.random.normal(lk[3], (d_ff, d_model), jnp.float32),
            "ffn_b2": jnp.zeros((d_model,), jnp.float32),
            "ln1_g": jnp.ones((d_model,), jnp.float32),
            "ln1_b": jnp.zeros((d_model,), jnp.float32),
            "ln2_g": jnp.ones((d_model,), jnp.float32),
            "ln2_b": jnp.zeros((d_model,), jnp.float32),
            "ln3_g": jnp.ones((d_model,), jnp.float32),
            "ln3_b": jnp.zeros((d_model,), jnp.float32),
        })
    return params


def prepare_params(params, nheads):
    """One-time weight prep (call OUTSIDE jit, at parameter-load time):
    bf16 casts for matmul weights + 1/sqrt(dh) scale folded into wq/bq."""
    d_model = params["src_emb"].shape[1]
    scale = 1.0 / math.sqrt(d_model // nheads)

    def prep_attn(ap):
        return {
            "wq": (ap["wq"] * scale).astype(jnp.bfloat16), "bq": ap["bq"] * scale,
            "wk": ap["wk"].astype(jnp.bfloat16), "bk": ap["bk"],
            "wv": ap["wv"].astype(jnp.bfloat16), "bv": ap["bv"],
            "wo": ap["wo"].astype(jnp.bfloat16), "bo": ap["bo"],
        }

    def prep_common(lp):
        return {
            "ffn_w1": lp["ffn_w1"].astype(jnp.bfloat16), "ffn_b1": lp["ffn_b1"],
            "ffn_w2": lp["ffn_w2"].astype(jnp.bfloat16), "ffn_b2": lp["ffn_b2"],
            "ln1_g": lp["ln1_g"], "ln1_b": lp["ln1_b"],
            "ln2_g": lp["ln2_g"], "ln2_b": lp["ln2_b"],
        }

    new = {
        "src_emb": params["src_emb"], "tgt_emb": params["tgt_emb"],
        "out_w": params["out_w"].astype(jnp.bfloat16), "out_b": params["out_b"],
        "enc_layers": [], "dec_layers": [],
    }
    for lp in params["enc_layers"]:
        e = prep_common(lp)
        e["self_attn"] = prep_attn(lp["self_attn"])
        new["enc_layers"].append(e)
    for lp in params["dec_layers"]:
        d = prep_common(lp)
        d["self_attn"] = prep_attn(lp["self_attn"])
        d["cross_attn"] = prep_attn(lp["cross_attn"])
        d["ln3_g"] = lp["ln3_g"]
        d["ln3_b"] = lp["ln3_b"]
        new["dec_layers"].append(d)
    return new


# ------------------------------ full forward --------------------------------

def transformer_forward(p, padded_src_seq, padded_tgt_seq, *,
                        d_model, nheads, label_smoothing):
    B, Ss = padded_src_seq.shape
    _, St = padded_tgt_seq.shape

    # compact additive key-padding biases; causal / OOB structure is built
    # inside the attention kernel from iota (no [B,H,Sq,Sk] mask in HBM).
    src_key_bias = jnp.where(padded_src_seq == PAD_ID, NEG_INF,
                             0.0).astype(jnp.float32)[:, None, :]   # [B,1,Ss]
    tgt_key_bias = jnp.where(padded_tgt_seq == PAD_ID, NEG_INF,
                             0.0).astype(jnp.float32)[:, None, :]   # [B,1,St]

    # ---------------- Encoder ----------------
    x = jnp.take(p["src_emb"], padded_src_seq, axis=0) * math.sqrt(d_model)
    x = (x + sinusoidal_pe(Ss, d_model)[None]).astype(jnp.bfloat16)
    x2d = x.reshape(B * Ss, d_model)
    for lp in p["enc_layers"]:
        x2d = encoder_layer(x2d, src_key_bias, lp, nheads, B, Ss)
    encoder_padded_outputs = x2d.reshape(B, Ss, d_model).astype(jnp.float32)

    # ---------------- Decoder ----------------
    y = jnp.take(p["tgt_emb"], padded_tgt_seq, axis=0) * math.sqrt(d_model)
    y = (y + sinusoidal_pe(St, d_model)[None]).astype(jnp.bfloat16)
    y2d = y.reshape(B * St, d_model)
    for lp in p["dec_layers"]:
        y2d = decoder_layer(y2d, x2d, tgt_key_bias, src_key_bias,
                            lp, nheads, B, St, Ss)

    V = p["out_w"].shape[1]
    tgt_ids2d = padded_tgt_seq.reshape(B * St, 1).astype(jnp.int32)
    logits2d, lse2d, rowsum2d, tgtlog2d = output_projection(
        y2d, p["out_w"], p["out_b"], tgt_ids2d)

    logits = logits2d.reshape(B, St, V)
    log_probs = (logits2d - lse2d).reshape(B, St, V)   # fused XLA elementwise

    # label-smoothed CE from per-row statistics (pad positions ignored):
    #   -sum(smooth * logp) = lse - (1-ls)*logit[target] - (ls/V)*sum_v logit[v]
    # TODO(synk): exact decoder output_dict fields / sos-eos target shifting of
    # the original Decoder are not available; this mirrors the standard recipe.
    ls = label_smoothing
    lse = lse2d.reshape(B, St)
    rowsum = rowsum2d.reshape(B, St)
    tgt_logit = tgtlog2d.reshape(B, St)
    per_tok = lse - (1.0 - ls) * tgt_logit - (ls / V) * rowsum
    valid = (padded_tgt_seq != PAD_ID).astype(jnp.float32)
    loss = jnp.sum(per_tok * valid) / jnp.maximum(jnp.sum(valid), 1.0)

    return {
        "encoder_padded_outputs": encoder_padded_outputs,
        "logits": logits,
        "log_probs": log_probs,
        "loss": loss,
    }


# ----------------------------------- main ------------------------------------

if __name__ == "__main__":
    # small, lane-friendly shapes (d_model / d_ff / vocab multiples of 128)
    B = 2
    SRC_LEN = 10
    TGT_LEN = 8
    D_MODEL = 128
    N_HEADS = 4
    D_FF = 256
    N_ENC = 2
    N_DEC = 2
    SRC_VOCAB = 256
    TGT_VOCAB = 256
    LABEL_SMOOTHING = 0.1

    key = jax.random.PRNGKey(0)
    k_param, k_src, k_tgt = jax.random.split(key, 3)

    params = init_params(k_param, SRC_VOCAB, TGT_VOCAB,
                         D_MODEL, D_FF, N_ENC, N_DEC)
    # weight prep (bf16 casts + scale fold) hoisted out of the jitted forward
    prepared = prepare_params(params, N_HEADS)

    padded_src = jax.random.randint(k_src, (B, SRC_LEN), 1, SRC_VOCAB, jnp.int32)
    padded_tgt = jax.random.randint(k_tgt, (B, TGT_LEN), 1, TGT_VOCAB, jnp.int32)
    # introduce some padding at the tail to exercise the masks
    padded_src = padded_src.at[0, -2:].set(PAD_ID)
    padded_tgt = padded_tgt.at[1, -3:].set(PAD_ID)

    fwd = jax.jit(partial(transformer_forward, d_model=D_MODEL, nheads=N_HEADS,
                          label_smoothing=LABEL_SMOOTHING))
    out = fwd(prepared, padded_src, padded_tgt)
    jax.block_until_ready(out)

    assert out["logits"].shape == (B, TGT_LEN, TGT_VOCAB)
    assert out["log_probs"].shape == (B, TGT_LEN, TGT_VOCAB)
    assert out["encoder_padded_outputs"].shape == (B, SRC_LEN, D_MODEL)
    assert bool(jnp.isfinite(out["loss"]))
    # log-softmax rows must normalize to 1
    assert bool(jnp.allclose(jnp.sum(jnp.exp(out["log_probs"][0, 0])), 1.0,
                             atol=1e-3))
    print("KERNEL_OK")
</pallas_src>

<mosaic_0001>
module attributes {stable_mosaic.version = 11 : i64} {
  func.func @kernel(%arg0: i32, %arg1: memref<20x128xbf16, #tpu.memory_space<vmem>>, %arg2: memref<128x128xbf16, #tpu.memory_space<vmem>>, %arg3: memref<128x128xbf16, #tpu.memory_space<vmem>>, %arg4: memref<128x128xbf16, #tpu.memory_space<vmem>>, %arg5: memref<1x128xf32, #tpu.memory_space<vmem>>, %arg6: memref<1x128xf32, #tpu.memory_space<vmem>>, %arg7: memref<1x128xf32, #tpu.memory_space<vmem>>, %arg8: memref<20x128xbf16, #tpu.memory_space<vmem>>, %arg9: memref<20x128xbf16, #tpu.memory_space<vmem>>, %arg10: memref<20x128xbf16, #tpu.memory_space<vmem>>) attributes {dimension_semantics = [#tpu.dimension_semantics<parallel>], iteration_bounds = array<i64: 1>, scalar_prefetch = 0 : i64, scratch_operands = 0 : i64, tpu.core_type = #tpu.core_type<tc>, window_params = [{transform_indices = @transform_0, window_bounds = array<i64: 20, 128>}, {pipeline_mode = #tpu.pipeline_mode<synchronous>, transform_indices = @transform_1, window_bounds = array<i64: 128, 128>}, {pipeline_mode = #tpu.pipeline_mode<synchronous>, transform_indices = @transform_2, window_bounds = array<i64: 128, 128>}, {pipeline_mode = #tpu.pipeline_mode<synchronous>, transform_indices = @transform_3, window_bounds = array<i64: 128, 128>}, {pipeline_mode = #tpu.pipeline_mode<synchronous>, transform_indices = @transform_4, window_bounds = array<i64: 1, 128>}, {pipeline_mode = #tpu.pipeline_mode<synchronous>, transform_indices = @transform_5, window_bounds = array<i64: 1, 128>}, {pipeline_mode = #tpu.pipeline_mode<synchronous>, transform_indices = @transform_6, window_bounds = array<i64: 1, 128>}, {transform_indices = @transform_7, window_bounds = array<i64: 20, 128>}, {transform_indices = @transform_8, window_bounds = array<i64: 20, 128>}, {transform_indices = @transform_9, window_bounds = array<i64: 20, 128>}]} {
    %c0 = arith.constant 0 : index
    %c0_0 = arith.constant 0 : index
    %0 = vector.load %arg1[%c0, %c0_0] : memref<20x128xbf16, #tpu.memory_space<vmem>>, vector<20x128xbf16>
    %c0_1 = arith.constant 0 : index
    %c0_2 = arith.constant 0 : index
    %1 = vector.load %arg2[%c0_1, %c0_2] : memref<128x128xbf16, #tpu.memory_space<vmem>>, vector<128x128xbf16>
    %cst = arith.constant dense<0.000000e+00> : vector<20x128xf32>
    %2 = tpu.matmul %0, %1, %cst {dimension_numbers = #tpu.dot_dimension_numbers<[1], [0], [0], [1], [0, 0, 1, 1], [], []>} : vector<20x128xbf16>, vector<128x128xbf16>, vector<20x128xf32> -> vector<20x128xf32>
    %c0_3 = arith.constant 0 : index
    %c0_4 = arith.constant 0 : index
    %3 = vector.load %arg5[%c0_3, %c0_4] : memref<1x128xf32, #tpu.memory_space<vmem>>, vector<1x128xf32>
    %4 = vector.broadcast %3 : vector<1x128xf32> to vector<20x128xf32>
    %5 = arith.addf %2, %4 : vector<20x128xf32>
    %6 = arith.truncf %5 : vector<20x128xf32> to vector<20x128xbf16>
    %c0_5 = arith.constant 0 : index
    %c0_6 = arith.constant 0 : index
    %7 = vector.load %arg8[%c0_5, %c0_6] : memref<20x128xbf16, #tpu.memory_space<vmem>>, vector<20x128xbf16>
    tpu.vector_store %arg8[%c0_5, %c0_6], %6 {strides = array<i32>} : memref<20x128xbf16, #tpu.memory_space<vmem>>, vector<20x128xbf16>,
    %c0_7 = arith.constant 0 : index
    %c0_8 = arith.constant 0 : index
    %8 = vector.load %arg3[%c0_7, %c0_8] : memref<128x128xbf16, #tpu.memory_space<vmem>>, vector<128x128xbf16>
    %cst_9 = arith.constant dense<0.000000e+00> : vector<20x128xf32>
    %9 = tpu.matmul %0, %8, %cst_9 {dimension_numbers = #tpu.dot_dimension_numbers<[1], [0], [0], [1], [0, 0, 1, 1], [], []>} : vector<20x128xbf16>, vector<128x128xbf16>, vector<20x128xf32> -> vector<20x128xf32>
    %c0_10 = arith.constant 0 : index
    %c0_11 = arith.constant 0 : index
    %10 = vector.load %arg6[%c0_10, %c0_11] : memref<1x128xf32, #tpu.memory_space<vmem>>, vector<1x128xf32>
    %11 = vector.broadcast %10 : vector<1x128xf32> to vector<20x128xf32>
    %12 = arith.addf %9, %11 : vector<20x128xf32>
    %13 = arith.truncf %12 : vector<20x128xf32> to vector<20x128xbf16>
    %c0_12 = arith.constant 0 : index
    %c0_13 = arith.constant 0 : index
    %14 = vector.load %arg9[%c0_12, %c0_13] : memref<20x128xbf16, #tpu.memory_space<vmem>>, vector<20x128xbf16>
    tpu.vector_store %arg9[%c0_12, %c0_13], %13 {strides = array<i32>} : memref<20x128xbf16, #tpu.memory_space<vmem>>, vector<20x128xbf16>,
    %c0_14 = arith.constant 0 : index
    %c0_15 = arith.constant 0 : index
    %15 = vector.load %arg4[%c0_14, %c0_15] : memref<128x128xbf16, #tpu.memory_space<vmem>>, vector<128x128xbf16>
    %cst_16 = arith.constant dense<0.000000e+00> : vector<20x128xf32>
    %16 = tpu.matmul %0, %15, %cst_16 {dimension_numbers = #tpu.dot_dimension_numbers<[1], [0], [0], [1], [0, 0, 1, 1], [], []>} : vector<20x128xbf16>, vector<128x128xbf16>, vector<20x128xf32> -> vector<20x128xf32>
    %c0_17 = arith.constant 0 : index
    %c0_18 = arith.constant 0 : index
    %17 = vector.load %arg7[%c0_17, %c0_18] : memref<1x128xf32, #tpu.memory_space<vmem>>, vector<1x128xf32>
    %18 = vector.broadcast %17 : vector<1x128xf32> to vector<20x128xf32>
    %19 = arith.addf %16, %18 : vector<20x128xf32>
    %20 = arith.truncf %19 : vector<20x128xf32> to vector<20x128xbf16>
    %c0_19 = arith.constant 0 : index
    %c0_20 = arith.constant 0 : index
    %21 = vector.load %arg10[%c0_19, %c0_20] : memref<20x128xbf16, #tpu.memory_space<vmem>>, vector<20x128xbf16>
    tpu.vector_store %arg10[%c0_19, %c0_20], %20 {strides = array<i32>} : memref<20x128xbf16, #tpu.memory_space<vmem>>, vector<20x128xbf16>,
    return
  }
  func.func @transform_0(%arg0: i32) -> (i32, i32) {
    %c0_i32 = arith.constant 0 : i32
    %c0_i32_0 = arith.constant 0 : i32
    return %arg0, %c0_i32 : i32, i32
  }
  func.func @transform_1(%arg0: i32) -> (i32, i32) {
    %c0_i32 = arith.constant 0 : i32
    %c0_i32_0 = arith.constant 0 : i32
    %c0_i32_1 = arith.constant 0 : i32
    return %c0_i32, %c0_i32_0 : i32, i32
  }
  func.func @transform_2(%arg0: i32) -> (i32, i32) {
    %c0_i32 = arith.constant 0 : i32
    %c0_i32_0 = arith.constant 0 : i32
    %c0_i32_1 = arith.constant 0 : i32
    return %c0_i32, %c0_i32_0 : i32, i32
  }
  func.func @transform_3(%arg0: i32) -> (i32, i32) {
    %c0_i32 = arith.constant 0 : i32
    %c0_i32_0 = arith.constant 0 : i32
    %c0_i32_1 = arith.constant 0 : i32
    return %c0_i32, %c0_i32_0 : i32, i32
  }
  func.func @transform_4(%arg0: i32) -> (i32, i32) {
    %c0_i32 = arith.constant 0 : i32
    %c0_i32_0 = arith.constant 0 : i32
    %c0_i32_1 = arith.constant 0 : i32
    return %c0_i32, %c0_i32_0 : i32, i32
  }
  func.func @transform_5(%arg0: i32) -> (i32, i32) {
    %c0_i32 = arith.constant 0 : i32
    %c0_i32_0 = arith.constant 0 : i32
    %c0_i32_1 = arith.constant 0 : i32
    return %c0_i32, %c0_i32_0 : i32, i32
  }
  func.func @transform_6(%arg0: i32) -> (i32, i32) {
    %c0_i32 = arith.constant 0 : i32
    %c0_i32_0 = arith.constant 0 : i32
    %c0_i32_1 = arith.constant 0 : i32
    return %c0_i32, %c0_i32_0 : i32, i32
  }
  func.func @transform_7(%arg0: i32) -> (i32, i32) {
    %c0_i32 = arith.constant 0 : i32
    %c0_i32_0 = arith.constant 0 : i32
    return %arg0, %c0_i32 : i32, i32
  }
  func.func @transform_8(%arg0: i32) -> (i32, i32) {
    %c0_i32 = arith.constant 0 : i32
    %c0_i32_0 = arith.constant 0 : i32
    return %arg0, %c0_i32 : i32, i32
  }
  func.func @transform_9(%arg0: i32) -> (i32, i32) {
    %c0_i32 = arith.constant 0 : i32
    %c0_i32_0 = arith.constant 0 : i32
    return %arg0, %c0_i32 : i32, i32
  }
}

module attributes {stable_mosaic.version = 11 : i64} {
  func.func @_flash_attn_kernel(%arg0: i32, %arg1: i32, %arg2: i32, %arg3: memref<1x10x128xbf16, #tpu.memory_space<vmem>>, %arg4: memref<1x10x128xbf16, #tpu.memory_space<vmem>>, %arg5: memref<1x10x128xbf16, #tpu.memory_space<vmem>>, %arg6: memref<1x1x10xf32, #tpu.memory_space<vmem>>, %arg7: memref<1x10x128xbf16, #tpu.memory_space<vmem>>, %arg8: memref<10x4xf32, #tpu.memory_space<vmem>>, %arg9: memref<10x4xf32, #tpu.memory_space<vmem>>, %arg10: memref<10x128xf32, #tpu.memory_space<vmem>>) attributes {dimension_semantics = [#tpu.dimension_semantics<parallel>, #tpu.dimension_semantics<parallel>, #tpu.dimension_semantics<arbitrary>], iteration_bounds = array<i64: 2, 1, 1>, scalar_prefetch = 0 : i64, scratch_operands = 3 : i64, tpu.core_type = #tpu.core_type<tc>, window_params = [{transform_indices = @transform_0, window_bounds = array<i64: 1, 10, 128>}, {transform_indices = @transform_1, window_bounds = array<i64: 1, 10, 128>}, {transform_indices = @transform_2, window_bounds = array<i64: 1, 10, 128>}, {transform_indices = @transform_3, window_bounds = array<i64: 1, 1, 10>}, {transform_indices = @transform_4, window_bounds = array<i64: 1, 10, 128>}]} {
    %c0_i32 = arith.constant 0 : i32
    %0 = arith.cmpi eq, %arg2, %c0_i32 : i32
    %1 = arith.extui %0 : i1 to i32
    %c0_i32_0 = arith.constant 0 : i32
    %2 = arith.cmpi ne, %1, %c0_i32_0 : i32
    scf.if %2 {
      %cst_71 = arith.constant -1.000000e+09 : f32
      %130 = vector.broadcast %cst_71 : f32 to vector<10x4xf32>
      %c0_72 = arith.constant 0 : index
      %c0_73 = arith.constant 0 : index
      %131 = vector.load %arg8[%c0_72, %c0_73] : memref<10x4xf32, #tpu.memory_space<vmem>>, vector<10x4xf32>
      tpu.vector_store %arg8[%c0_72, %c0_73], %130 {strides = array<i32>} : memref<10x4xf32, #tpu.memory_space<vmem>>, vector<10x4xf32>,
      %cst_74 = arith.constant 0.000000e+00 : f32
      %132 = vector.broadcast %cst_74 : f32 to vector<10x4xf32>
      %c0_75 = arith.constant 0 : index
      %c0_76 = arith.constant 0 : index
      %133 = vector.load %arg9[%c0_75, %c0_76] : memref<10x4xf32, #tpu.memory_space<vmem>>, vector<10x4xf32>
      tpu.vector_store %arg9[%c0_75, %c0_76], %132 {strides = array<i32>} : memref<10x4xf32, #tpu.memory_space<vmem>>, vector<10x4xf32>,
      %cst_77 = arith.constant 0.000000e+00 : f32
      %134 = vector.broadcast %cst_77 : f32 to vector<10x128xf32>
      %c0_78 = arith.constant 0 : index
      %c0_79 = arith.constant 0 : index
      %135 = vector.load %arg10[%c0_78, %c0_79] : memref<10x128xf32, #tpu.memory_space<vmem>>, vector<10x128xf32>
      tpu.vector_store %arg10[%c0_78, %c0_79], %134 {strides = array<i32>} : memref<10x128xf32, #tpu.memory_space<vmem>>, vector<10x128xf32>,
    } else {
    }
    %c0 = arith.constant 0 : index
    %c0_1 = arith.constant 0 : index
    %c0_2 = arith.constant 0 : index
    %3 = vector.load %arg3[%c0, %c0_1, %c0_2] : memref<1x10x128xbf16, #tpu.memory_space<vmem>>, vector<1x10x128xbf16>
    %4 = vector.shape_cast %3 : vector<1x10x128xbf16> to vector<10x128xbf16>
    %c0_3 = arith.constant 0 : index
    %c0_4 = arith.constant 0 : index
    %c0_5 = arith.constant 0 : index
    %5 = vector.load %arg4[%c0_3, %c0_4, %c0_5] : memref<1x10x128xbf16, #tpu.memory_space<vmem>>, vector<1x10x128xbf16>
    %6 = vector.shape_cast %5 : vector<1x10x128xbf16> to vector<10x128xbf16>
    %c0_6 = arith.constant 0 : index
    %c0_7 = arith.constant 0 : index
    %c0_8 = arith.constant 0 : index
    %7 = vector.load %arg5[%c0_6, %c0_7, %c0_8] : memref<1x10x128xbf16, #tpu.memory_space<vmem>>, vector<1x10x128xbf16>
    %8 = vector.shape_cast %7 : vector<1x10x128xbf16> to vector<10x128xbf16>
    %c0_9 = arith.constant 0 : index
    %c0_10 = arith.constant 0 : index
    %c0_11 = arith.constant 0 : index
    %9 = vector.load %arg6[%c0_9, %c0_10, %c0_11] : memref<1x1x10xf32, #tpu.memory_space<vmem>>, vector<1x1x10xf32>
    %10 = vector.shape_cast %9 : vector<1x1x10xf32> to vector<1x10xf32>
    %11 = vector.extract_strided_slice %4 {offsets = [0, 0], sizes = [10, 32], strides = [1, 1]} : vector<10x128xbf16> to vector<10x32xbf16>
    %12 = vector.extract_strided_slice %6 {offsets = [0, 0], sizes = [10, 32], strides = [1, 1]} : vector<10x128xbf16> to vector<10x32xbf16>
    %cst = arith.constant dense<0.000000e+00> : vector<10x10xf32>
    %13 = tpu.matmul %11, %12, %cst {dimension_numbers = #tpu.dot_dimension_numbers<[1], [1], [0], [0], [0, 0, 1, 0], [], []>} : vector<10x32xbf16>, vector<10x32xbf16>, vector<10x10xf32> -> vector<10x10xf32>
    %14 = vector.broadcast %10 : vector<1x10xf32> to vector<10x10xf32>
    %15 = arith.addf %13, %14 : vector<10x10xf32>
    %c0_12 = arith.constant 0 : index
    %c0_13 = arith.constant 0 : index
    %16 = vector.load %arg8[%c0_12, %c0_13] : memref<10x4xf32, #tpu.memory_space<vmem>>, vector<10x1xf32>
    %cst_14 = arith.constant dense<0xFF800000> : vector<10xf32>
    %17 = vector.multi_reduction <maximumf>, %15, %cst_14 [1] : vector<10x10xf32> to vector<10xf32>
    %18 = vector.shape_cast %17 : vector<10xf32> to vector<10x1xf32>
    %19 = arith.maximumf %16, %18 : vector<10x1xf32>
    %20 = arith.subf %16, %19 : vector<10x1xf32>
    %21 = math.exp %20 : vector<10x1xf32>
    %22 = vector.broadcast %19 : vector<10x1xf32> to vector<10x10xf32>
    %23 = arith.subf %15, %22 : vector<10x10xf32>
    %24 = math.exp %23 : vector<10x10xf32>
    %c0_15 = arith.constant 0 : index
    %c0_16 = arith.constant 0 : index
    %25 = vector.load %arg9[%c0_15, %c0_16] : memref<10x4xf32, #tpu.memory_space<vmem>>, vector<10x1xf32>
    %26 = arith.mulf %21, %25 : vector<10x1xf32>
    %cst_17 = arith.constant dense<0.000000e+00> : vector<10xf32>
    %27 = vector.multi_reduction <add>, %24, %cst_17 [1] : vector<10x10xf32> to vector<10xf32>
    %28 = vector.shape_cast %27 : vector<10xf32> to vector<10x1xf32>
    %29 = arith.addf %26, %28 : vector<10x1xf32>
    %c0_18 = arith.constant 0 : index
    %c0_19 = arith.constant 0 : index
    %30 = vector.load %arg9[%c0_18, %c0_19] : memref<10x4xf32, #tpu.memory_space<vmem>>, vector<10x1xf32>
    tpu.vector_store %arg9[%c0_18, %c0_19], %29 {strides = array<i32>} : memref<10x4xf32, #tpu.memory_space<vmem>>, vector<10x1xf32>,
    %c0_20 = arith.constant 0 : index
    %c0_21 = arith.constant 0 : index
    %31 = vector.load %arg10[%c0_20, %c0_21] : memref<10x128xf32, #tpu.memory_space<vmem>>, vector<10x32xf32>
    %32 = vector.broadcast %21 : vector<10x1xf32> to vector<10x32xf32>
    %33 = arith.mulf %32, %31 : vector<10x32xf32>
    %34 = arith.truncf %24 : vector<10x10xf32> to vector<10x10xbf16>
    %35 = vector.extract_strided_slice %8 {offsets = [0, 0], sizes = [10, 32], strides = [1, 1]} : vector<10x128xbf16> to vector<10x32xbf16>
    %cst_22 = arith.constant dense<0.000000e+00> : vector<10x32xf32>
    %36 = tpu.matmul %34, %35, %cst_22 {dimension_numbers = #tpu.dot_dimension_numbers<[1], [0], [0], [1], [0, 0, 1, 1], [], []>} : vector<10x10xbf16>, vector<10x32xbf16>, vector<10x32xf32> -> vector<10x32xf32>
    %37 = arith.addf %33, %36 : vector<10x32xf32>
    %c0_23 = arith.constant 0 : index
    %c0_24 = arith.constant 0 : index
    %38 = vector.load %arg10[%c0_23, %c0_24] : memref<10x128xf32, #tpu.memory_space<vmem>>, vector<10x32xf32>
    tpu.vector_store %arg10[%c0_23, %c0_24], %37 {strides = array<i32>} : memref<10x128xf32, #tpu.memory_space<vmem>>, vector<10x32xf32>,
    %c0_25 = arith.constant 0 : index
    %c0_26 = arith.constant 0 : index
    %39 = vector.load %arg8[%c0_25, %c0_26] : memref<10x4xf32, #tpu.memory_space<vmem>>, vector<10x1xf32>
    tpu.vector_store %arg8[%c0_25, %c0_26], %19 {strides = array<i32>} : memref<10x4xf32, #tpu.memory_space<vmem>>, vector<10x1xf32>,
    %40 = vector.extract_strided_slice %4 {offsets = [0, 32], sizes = [10, 32], strides = [1, 1]} : vector<10x128xbf16> to vector<10x32xbf16>
    %41 = vector.extract_strided_slice %6 {offsets = [0, 32], sizes = [10, 32], strides = [1, 1]} : vector<10x128xbf16> to vector<10x32xbf16>
    %cst_27 = arith.constant dense<0.000000e+00> : vector<10x10xf32>
    %42 = tpu.matmul %40, %41, %cst_27 {dimension_numbers = #tpu.dot_dimension_numbers<[1], [1], [0], [0], [0, 0, 1, 0], [], []>} : vector<10x32xbf16>, vector<10x32xbf16>, vector<10x10xf32> -> vector<10x10xf32>
    %43 = vector.broadcast %10 : vector<1x10xf32> to vector<10x10xf32>
    %44 = arith.addf %42, %43 : vector<10x10xf32>
    %c0_28 = arith.constant 0 : index
    %c1 = arith.constant 1 : index
    %45 = vector.load %arg8[%c0_28, %c1] : memref<10x4xf32, #tpu.memory_space<vmem>>, vector<10x1xf32>
    %cst_29 = arith.constant dense<0xFF800000> : vector<10xf32>
    %46 = vector.multi_reduction <maximumf>, %44, %cst_29 [1] : vector<10x10xf32> to vector<10xf32>
    %47 = vector.shape_cast %46 : vector<10xf32> to vector<10x1xf32>
    %48 = arith.maximumf %45, %47 : vector<10x1xf32>
    %49 = arith.subf %45, %48 : vector<10x1xf32>
    %50 = math.exp %49 : vector<10x1xf32>
    %51 = vector.broadcast %48 : vector<10x1xf32> to vector<10x10xf32>
    %52 = arith.subf %44, %51 : vector<10x10xf32>
    %53 = math.exp %52 : vector<10x10xf32>
    %c0_30 = arith.constant 0 : index
    %c1_31 = arith.constant 1 : index
    %54 = vector.load %arg9[%c0_30, %c1_31] : memref<10x4xf32, #tpu.memory_space<vmem>>, vector<10x1xf32>
    %55 = arith.mulf %50, %54 : vector<10x1xf32>
    %cst_32 = arith.constant dense<0.000000e+00> : vector<10xf32>
    %56 = vector.multi_reduction <add>, %53, %cst_32 [1] : vector<10x10xf32> to vector<10xf32>
    %57 = vector.shape_cast %56 : vector<10xf32> to vector<10x1xf32>
    %58 = arith.addf %55, %57 : vector<10x1xf32>
    %c0_33 = arith.constant 0 : index
    %c1_34 = arith.constant 1 : index
    %59 = vector.load %arg9[%c0_33, %c1_34] : memref<10x4xf32, #tpu.memory_space<vmem>>, vector<10x1xf32>
    tpu.vector_store %arg9[%c0_33, %c1_34], %58 {strides = array<i32>} : memref<10x4xf32, #tpu.memory_space<vmem>>, vector<10x1xf32>,
    %c0_35 = arith.constant 0 : index
    %c32 = arith.constant 32 : index
    %60 = vector.load %arg10[%c0_35, %c32] : memref<10x128xf32, #tpu.memory_space<vmem>>, vector<10x32xf32>
    %61 = vector.broadcast %50 : vector<10x1xf32> to vector<10x32xf32>
    %62 = arith.mulf %61, %60 : vector<10x32xf32>
    %63 = arith.truncf %53 : vector<10x10xf32> to vector<10x10xbf16>
    %64 = vector.extract_strided_slice %8 {offsets = [0, 32], sizes = [10, 32], strides = [1, 1]} : vector<10x128xbf16> to vector<10x32xbf16>
    %cst_36 = arith.constant dense<0.000000e+00> : vector<10x32xf32>
    %65 = tpu.matmul %63, %64, %cst_36 {dimension_numbers = #tpu.dot_dimension_numbers<[1], [0], [0], [1], [0, 0, 1, 1], [], []>} : vector<10x10xbf16>, vector<10x32xbf16>, vector<10x32xf32> -> vector<10x32xf32>
    %66 = arith.addf %62, %65 : vector<10x32xf32>
    %c0_37 = arith.constant 0 : index
    %c32_38 = arith.constant 32 : index
    %67 = vector.load %arg10[%c0_37, %c32_38] : memref<10x128xf32, #tpu.memory_space<vmem>>, vector<10x32xf32>
    tpu.vector_store %arg10[%c0_37, %c32_38], %66 {strides = array<i32>} : memref<10x128xf32, #tpu.memory_space<vmem>>, vector<10x32xf32>,
    %c0_39 = arith.constant 0 : index
    %c1_40 = arith.constant 1 : index
    %68 = vector.load %arg8[%c0_39, %c1_40] : memref<10x4xf32, #tpu.memory_space<vmem>>, vector<10x1xf32>
    tpu.vector_store %arg8[%c0_39, %c1_40], %48 {strides = array<i32>} : memref<10x4xf32, #tpu.memory_space<vmem>>, vector<10x1xf32>,
    %69 = vector.extract_strided_slice %4 {offsets = [0, 64], sizes = [10, 32], strides = [1, 1]} : vector<10x128xbf16> to vector<10x32xbf16>
    %70 = vector.extract_strided_slice %6 {offsets = [0, 64], sizes = [10, 32], strides = [1, 1]} : vector<10x128xbf16> to vector<10x32xbf16>
    %cst_41 = arith.constant dense<0.000000e+00> : vector<10x10xf32>
    %71 = tpu.matmul %69, %70, %cst_41 {dimension_numbers = #tpu.dot_dimension_numbers<[1], [1], [0], [0], [0, 0, 1, 0], [], []>} : vector<10x32xbf16>, vector<10x32xbf16>, vector<10x10xf32> -> vector<10x10xf32>
    %72 = vector.broadcast %10 : vector<1x10xf32> to vector<10x10xf32>
    %73 = arith.addf %71, %72 : vector<10x10xf32>
    %c0_42 = arith.constant 0 : index
    %c2 = arith.constant 2 : index
    %74 = vector.load %arg8[%c0_42, %c2] : memref<10x4xf32, #tpu.memory_space<vmem>>, vector<10x1xf32>
    %cst_43 = arith.constant dense<0xFF800000> : vector<10xf32>
    %75 = vector.multi_reduction <maximumf>, %73, %cst_43 [1] : vector<10x10xf32> to vector<10xf32>
    %76 = vector.shape_cast %75 : vector<10xf32> to vector<10x1xf32>
    %77 = arith.maximumf %74, %76 : vector<10x1xf32>
    %78 = arith.subf %74, %77 : vector<10x1xf32>
    %79 = math.exp %78 : vector<10x1xf32>
    %80 = vector.broadcast %77 : vector<10x1xf32> to vector<10x10xf32>
    %81 = arith.subf %73, %80 : vector<10x10xf32>
    %82 = math.exp %81 : vector<10x10xf32>
    %c0_44 = arith.constant 0 : index
    %c2_45 = arith.constant 2 : index
    %83 = vector.load %arg9[%c0_44, %c2_45] : memref<10x4xf32, #tpu.memory_space<vmem>>, vector<10x1xf32>
    %84 = arith.mulf %79, %83 : vector<10x1xf32>
    %cst_46 = arith.constant dense<0.000000e+00> : vector<10xf32>
    %85 = vector.multi_reduction <add>, %82, %cst_46 [1] : vector<10x10xf32> to vector<10xf32>
    %86 = vector.shape_cast %85 : vector<10xf32> to vector<10x1xf32>
    %87 = arith.addf %84, %86 : vector<10x1xf32>
    %c0_47 = arith.constant 0 : index
    %c2_48 = arith.constant 2 : index
    %88 = vector.load %arg9[%c0_47, %c2_48] : memref<10x4xf32, #tpu.memory_space<vmem>>, vector<10x1xf32>
    tpu.vector_store %arg9[%c0_47, %c2_48], %87 {strides = array<i32>} : memref<10x4xf32, #tpu.memory_space<vmem>>, vector<10x1xf32>,
    %c0_49 = arith.constant 0 : index
    %c64 = arith.constant 64 : index
    %89 = vector.load %arg10[%c0_49, %c64] : memref<10x128xf32, #tpu.memory_space<vmem>>, vector<10x32xf32>
    %90 = vector.broadcast %79 : vector<10x1xf32> to vector<10x32xf32>
    %91 = arith.mulf %90, %89 : vector<10x32xf32>
    %92 = arith.truncf %82 : vector<10x10xf32> to vector<10x10xbf16>
    %93 = vector.extract_strided_slice %8 {offsets = [0, 64], sizes = [10, 32], strides = [1, 1]} : vector<10x128xbf16> to vector<10x32xbf16>
    %cst_50 = arith.constant dense<0.000000e+00> : vector<10x32xf32>
    %94 = tpu.matmul %92, %93, %cst_50 {dimension_numbers = #tpu.dot_dimension_numbers<[1], [0], [0], [1], [0, 0, 1, 1], [], []>} : vector<10x10xbf16>, vector<10x32xbf16>, vector<10x32xf32> -> vector<10x32xf32>
    %95 = arith.addf %91, %94 : vector<10x32xf32>
    %c0_51 = arith.constant 0 : index
    %c64_52 = arith.constant 64 : index
    %96 = vector.load %arg10[%c0_51, %c64_52] : memref<10x128xf32, #tpu.memory_space<vmem>>, vector<10x32xf32>
    tpu.vector_store %arg10[%c0_51, %c64_52], %95 {strides = array<i32>} : memref<10x128xf32, #tpu.memory_space<vmem>>, vector<10x32xf32>,
    %c0_53 = arith.constant 0 : index
    %c2_54 = arith.constant 2 : index
    %97 = vector.load %arg8[%c0_53, %c2_54] : memref<10x4xf32, #tpu.memory_space<vmem>>, vector<10x1xf32>
    tpu.vector_store %arg8[%c0_53, %c2_54], %77 {strides = array<i32>} : memref<10x4xf32, #tpu.memory_space<vmem>>, vector<10x1xf32>,
    %98 = vector.extract_strided_slice %4 {offsets = [0, 96], sizes = [10, 32], strides = [1, 1]} : vector<10x128xbf16> to vector<10x32xbf16>
    %99 = vector.extract_strided_slice %6 {offsets = [0, 96], sizes = [10, 32], strides = [1, 1]} : vector<10x128xbf16> to vector<10x32xbf16>
    %cst_55 = arith.constant dense<0.000000e+00> : vector<10x10xf32>
    %100 = tpu.matmul %98, %99, %cst_55 {dimension_numbers = #tpu.dot_dimension_numbers<[1], [1], [0], [0], [0, 0, 1, 0], [], []>} : vector<10x32xbf16>, vector<10x32xbf16>, vector<10x10xf32> -> vector<10x10xf32>
    %101 = vector.broadcast %10 : vector<1x10xf32> to vector<10x10xf32>
    %102 = arith.addf %100, %101 : vector<10x10xf32>
    %c0_56 = arith.constant 0 : index
    %c3 = arith.constant 3 : index
    %103 = vector.load %arg8[%c0_56, %c3] : memref<10x4xf32, #tpu.memory_space<vmem>>, vector<10x1xf32>
    %cst_57 = arith.constant dense<0xFF800000> : vector<10xf32>
    %104 = vector.multi_reduction <maximumf>, %102, %cst_57 [1] : vector<10x10xf32> to vector<10xf32>
    %105 = vector.shape_cast %104 : vector<10xf32> to vector<10x1xf32>
    %106 = arith.maximumf %103, %105 : vector<10x1xf32>
    %107 = arith.subf %103, %106 : vector<10x1xf32>
    %108 = math.exp %107 : vector<10x1xf32>
    %109 = vector.broadcast %106 : vector<10x1xf32> to vector<10x10xf32>
    %110 = arith.subf %102, %109 : vector<10x10xf32>
    %111 = math.exp %110 : vector<10x10xf32>
    %c0_58 = arith.constant 0 : index
    %c3_59 = arith.constant 3 : index
    %112 = vector.load %arg9[%c0_58, %c3_59] : memref<10x4xf32, #tpu.memory_space<vmem>>, vector<10x1xf32>
    %113 = arith.mulf %108, %112 : vector<10x1xf32>
    %cst_60 = arith.constant dense<0.000000e+00> : vector<10xf32>
    %114 = vector.multi_reduction <add>, %111, %cst_60 [1] : vector<10x10xf32> to vector<10xf32>
    %115 = vector.shape_cast %114 : vector<10xf32> to vector<10x1xf32>
    %116 = arith.addf %113, %115 : vector<10x1xf32>
    %c0_61 = arith.constant 0 : index
    %c3_62 = arith.constant 3 : index
    %117 = vector.load %arg9[%c0_61, %c3_62] : memref<10x4xf32, #tpu.memory_space<vmem>>, vector<10x1xf32>
    tpu.vector_store %arg9[%c0_61, %c3_62], %116 {strides = array<i32>} : memref<10x4xf32, #tpu.memory_space<vmem>>, vector<10x1xf32>,
    %c0_63 = arith.constant 0 : index
    %c96 = arith.constant 96 : index
    %118 = vector.load %arg10[%c0_63, %c96] : memref<10x128xf32, #tpu.memory_space<vmem>>, vector<10x32xf32>
    %119 = vector.broadcast %108 : vector<10x1xf32> to vector<10x32xf32>
    %120 = arith.mulf %119, %118 : vector<10x32xf32>
    %121 = arith.truncf %111 : vector<10x10xf32> to vector<10x10xbf16>
    %122 = vector.extract_strided_slice %8 {offsets = [0, 96], sizes = [10, 32], strides = [1, 1]} : vector<10x128xbf16> to vector<10x32xbf16>
    %cst_64 = arith.constant dense<0.000000e+00> : vector<10x32xf32>
    %123 = tpu.matmul %121, %122, %cst_64 {dimension_numbers = #tpu.dot_dimension_numbers<[1], [0], [0], [1], [0, 0, 1, 1], [], []>} : vector<10x10xbf16>, vector<10x32xbf16>, vector<10x32xf32> -> vector<10x32xf32>
    %124 = arith.addf %120, %123 : vector<10x32xf32>
    %c0_65 = arith.constant 0 : index
    %c96_66 = arith.constant 96 : index
    %125 = vector.load %arg10[%c0_65, %c96_66] : memref<10x128xf32, #tpu.memory_space<vmem>>, vector<10x32xf32>
    tpu.vector_store %arg10[%c0_65, %c96_66], %124 {strides = array<i32>} : memref<10x128xf32, #tpu.memory_space<vmem>>, vector<10x32xf32>,
    %c0_67 = arith.constant 0 : index
    %c3_68 = arith.constant 3 : index
    %126 = vector.load %arg8[%c0_67, %c3_68] : memref<10x4xf32, #tpu.memory_space<vmem>>, vector<10x1xf32>
    tpu.vector_store %arg8[%c0_67, %c3_68], %106 {strides = array<i32>} : memref<10x4xf32, #tpu.memory_space<vmem>>, vector<10x1xf32>,
    %c0_i32_69 = arith.constant 0 : i32
    %127 = arith.cmpi eq, %arg2, %c0_i32_69 : i32
    %128 = arith.extui %127 : i1 to i32
    %c0_i32_70 = arith.constant 0 : i32
    %129 = arith.cmpi ne, %128, %c0_i32_70 : i32
    scf.if %129 {
      %c0_71 = arith.constant 0 : index
      %c0_72 = arith.constant 0 : index
      %130 = vector.load %arg8[%c0_71, %c0_72] : memref<10x4xf32, #tpu.memory_space<vmem>>, vector<10x1xf32>
      %cst_73 = arith.constant -5.000000e+08 : f32
      %131 = vector.broadcast %cst_73 : f32 to vector<10x1xf32>
      %132 = arith.cmpf ogt, %130, %131 : vector<10x1xf32>
      %c0_74 = arith.constant 0 : index
      %c0_75 = arith.constant 0 : index
      %133 = vector.load %arg9[%c0_74, %c0_75] : memref<10x4xf32, #tpu.memory_space<vmem>>, vector<10x1xf32>
      %cst_76 = arith.constant 1.000000e-30 : f32
      %134 = vector.broadcast %cst_76 : f32 to vector<10x1xf32>
      %135 = arith.maximumf %133, %134 : vector<10x1xf32>
      %cst_77 = arith.constant 1.000000e+00 : f32
      %136 = vector.broadcast %cst_77 : f32 to vector<10x1xf32>
      %137 = arith.divf %136, %135 : vector<10x1xf32>
      %cst_78 = arith.constant 0.000000e+00 : f32
      %138 = vector.broadcast %cst_78 : f32 to vector<10x1xf32>
      %139 = arith.select %132, %137, %138 : vector<10x1xi1>, vector<10x1xf32>
      %c0_79 = arith.constant 0 : index
      %c0_80 = arith.constant 0 : index
      %140 = vector.load %arg10[%c0_79, %c0_80] : memref<10x128xf32, #tpu.memory_space<vmem>>, vector<10x32xf32>
      %141 = vector.broadcast %139 : vector<10x1xf32> to vector<10x32xf32>
      %142 = arith.mulf %140, %141 : vector<10x32xf32>
      %c0_81 = arith.constant 0 : index
      %c0_82 = arith.constant 0 : index
      %143 = vector.load %arg10[%c0_81, %c0_82] : memref<10x128xf32, #tpu.memory_space<vmem>>, vector<10x32xf32>
      tpu.vector_store %arg10[%c0_81, %c0_82], %142 {strides = array<i32>} : memref<10x128xf32, #tpu.memory_space<vmem>>, vector<10x32xf32>,
      %c0_83 = arith.constant 0 : index
      %c1_84 = arith.constant 1 : index
      %144 = vector.load %arg8[%c0_83, %c1_84] : memref<10x4xf32, #tpu.memory_space<vmem>>, vector<10x1xf32>
      %cst_85 = arith.constant -5.000000e+08 : f32
      %145 = vector.broadcast %cst_85 : f32 to vector<10x1xf32>
      %146 = arith.cmpf ogt, %144, %145 : vector<10x1xf32>
      %c0_86 = arith.constant 0 : index
      %c1_87 = arith.constant 1 : index
      %147 = vector.load %arg9[%c0_86, %c1_87] : memref<10x4xf32, #tpu.memory_space<vmem>>, vector<10x1xf32>
      %cst_88 = arith.constant 1.000000e-30 : f32
      %148 = vector.broadcast %cst_88 : f32 to vector<10x1xf32>
      %149 = arith.maximumf %147, %148 : vector<10x1xf32>
      %cst_89 = arith.constant 1.000000e+00 : f32
      %150 = vector.broadcast %cst_89 : f32 to vector<10x1xf32>
      %151 = arith.divf %150, %149 : vector<10x1xf32>
      %cst_90 = arith.constant 0.000000e+00 : f32
      %152 = vector.broadcast %cst_90 : f32 to vector<10x1xf32>
      %153 = arith.select %146, %151, %152 : vector<10x1xi1>, vector<10x1xf32>
      %c0_91 = arith.constant 0 : index
      %c32_92 = arith.constant 32 : index
      %154 = vector.load %arg10[%c0_91, %c32_92] : memref<10x128xf32, #tpu.memory_space<vmem>>, vector<10x32xf32>
      %155 = vector.broadcast %153 : vector<10x1xf32> to vector<10x32xf32>
      %156 = arith.mulf %154, %155 : vector<10x32xf32>
      %c0_93 = arith.constant 0 : index
      %c32_94 = arith.constant 32 : index
      %157 = vector.load %arg10[%c0_93, %c32_94] : memref<10x128xf32, #tpu.memory_space<vmem>>, vector<10x32xf32>
      tpu.vector_store %arg10[%c0_93, %c32_94], %156 {strides = array<i32>} : memref<10x128xf32, #tpu.memory_space<vmem>>, vector<10x32xf32>,
      %c0_95 = arith.constant 0 : index
      %c2_96 = arith.constant 2 : index
      %158 = vector.load %arg8[%c0_95, %c2_96] : memref<10x4xf32, #tpu.memory_space<vmem>>, vector<10x1xf32>
      %cst_97 = arith.constant -5.000000e+08 : f32
      %159 = vector.broadcast %cst_97 : f32 to vector<10x1xf32>
      %160 = arith.cmpf ogt, %158, %159 : vector<10x1xf32>
      %c0_98 = arith.constant 0 : index
      %c2_99 = arith.constant 2 : index
      %161 = vector.load %arg9[%c0_98, %c2_99] : memref<10x4xf32, #tpu.memory_space<vmem>>, vector<10x1xf32>
      %cst_100 = arith.constant 1.000000e-30 : f32
      %162 = vector.broadcast %cst_100 : f32 to vector<10x1xf32>
      %163 = arith.maximumf %161, %162 : vector<10x1xf32>
      %cst_101 = arith.constant 1.000000e+00 : f32
      %164 = vector.broadcast %cst_101 : f32 to vector<10x1xf32>
      %165 = arith.divf %164, %163 : vector<10x1xf32>
      %cst_102 = arith.constant 0.000000e+00 : f32
      %166 = vector.broadcast %cst_102 : f32 to vector<10x1xf32>
      %167 = arith.select %160, %165, %166 : vector<10x1xi1>, vector<10x1xf32>
      %c0_103 = arith.constant 0 : index
      %c64_104 = arith.constant 64 : index
      %168 = vector.load %arg10[%c0_103, %c64_104] : memref<10x128xf32, #tpu.memory_space<vmem>>, vector<10x32xf32>
      %169 = vector.broadcast %167 : vector<10x1xf32> to vector<10x32xf32>
      %170 = arith.mulf %168, %169 : vector<10x32xf32>
      %c0_105 = arith.constant 0 : index
      %c64_106 = arith.constant 64 : index
      %171 = vector.load %arg10[%c0_105, %c64_106] : memref<10x128xf32, #tpu.memory_space<vmem>>, vector<10x32xf32>
      tpu.vector_store %arg10[%c0_105, %c64_106], %170 {strides = array<i32>} : memref<10x128xf32, #tpu.memory_space<vmem>>, vector<10x32xf32>,
      %c0_107 = arith.constant 0 : index
      %c3_108 = arith.constant 3 : index
      %172 = vector.load %arg8[%c0_107, %c3_108] : memref<10x4xf32, #tpu.memory_space<vmem>>, vector<10x1xf32>
      %cst_109 = arith.constant -5.000000e+08 : f32
      %173 = vector.broadcast %cst_109 : f32 to vector<10x1xf32>
      %174 = arith.cmpf ogt, %172, %173 : vector<10x1xf32>
      %c0_110 = arith.constant 0 : index
      %c3_111 = arith.constant 3 : index
      %175 = vector.load %arg9[%c0_110, %c3_111] : memref<10x4xf32, #tpu.memory_space<vmem>>, vector<10x1xf32>
      %cst_112 = arith.constant 1.000000e-30 : f32
      %176 = vector.broadcast %cst_112 : f32 to vector<10x1xf32>
      %177 = arith.maximumf %175, %176 : vector<10x1xf32>
      %cst_113 = arith.constant 1.000000e+00 : f32
      %178 = vector.broadcast %cst_113 : f32 to vector<10x1xf32>
      %179 = arith.divf %178, %177 : vector<10x1xf32>
      %cst_114 = arith.constant 0.000000e+00 : f32
      %180 = vector.broadcast %cst_114 : f32 to vector<10x1xf32>
      %181 = arith.select %174, %179, %180 : vector<10x1xi1>, vector<10x1xf32>
      %c0_115 = arith.constant 0 : index
      %c96_116 = arith.constant 96 : index
      %182 = vector.load %arg10[%c0_115, %c96_116] : memref<10x128xf32, #tpu.memory_space<vmem>>, vector<10x32xf32>
      %183 = vector.broadcast %181 : vector<10x1xf32> to vector<10x32xf32>
      %184 = arith.mulf %182, %183 : vector<10x32xf32>
      %c0_117 = arith.constant 0 : index
      %c96_118 = arith.constant 96 : index
      %185 = vector.load %arg10[%c0_117, %c96_118] : memref<10x128xf32, #tpu.memory_space<vmem>>, vector<10x32xf32>
      tpu.vector_store %arg10[%c0_117, %c96_118], %184 {strides = array<i32>} : memref<10x128xf32, #tpu.memory_space<vmem>>, vector<10x32xf32>,
      %c0_119 = arith.constant 0 : index
      %c0_120 = arith.constant 0 : index
      %186 = vector.load %arg10[%c0_119, %c0_120] : memref<10x128xf32, #tpu.memory_space<vmem>>, vector<10x128xf32>
      %187 = arith.truncf %186 : vector<10x128xf32> to vector<10x128xbf16>
      %c0_121 = arith.constant 0 : index
      %c0_122 = arith.constant 0 : index
      %c0_123 = arith.constant 0 : index
      %188 = vector.load %arg7[%c0_121, %c0_122, %c0_123] : memref<1x10x128xbf16, #tpu.memory_space<vmem>>, vector<1x10x128xbf16>
      %189 = vector.shape_cast %188 : vector<1x10x128xbf16> to vector<10x128xbf16>
      %190 = vector.shape_cast %187 : vector<10x128xbf16> to vector<1x10x128xbf16>
      tpu.vector_store %arg7[%c0_121, %c0_122, %c0_123], %190 {strides = array<i32>} : memref<1x10x128xbf16, #tpu.memory_space<vmem>>, vector<1x10x128xbf16>,
    } else {
    }
    return
  }
  func.func @transform_0(%arg0: i32, %arg1: i32, %arg2: i32) -> (i32, i32, i32) {
    %c0_i32 = arith.constant 0 : i32
    %c0_i32_0 = arith.constant 0 : i32
    return %arg0, %arg1, %c0_i32 : i32, i32, i32
  }
  func.func @transform_1(%arg0: i32, %arg1: i32, %arg2: i32) -> (i32, i32, i32) {
    %c0_i32 = arith.constant 0 : i32
    %c0_i32_0 = arith.constant 0 : i32
    return %arg0, %arg2, %c0_i32 : i32, i32, i32
  }
  func.func @transform_2(%arg0: i32, %arg1: i32, %arg2: i32) -> (i32, i32, i32) {
    %c0_i32 = arith.constant 0 : i32
    %c0_i32_0 = arith.constant 0 : i32
    return %arg0, %arg2, %c0_i32 : i32, i32, i32
  }
  func.func @transform_3(%arg0: i32, %arg1: i32, %arg2: i32) -> (i32, i32, i32) {
    %c0_i32 = arith.constant 0 : i32
    %c0_i32_0 = arith.constant 0 : i32
    return %arg0, %c0_i32, %arg2 : i32, i32, i32
  }
  func.func @transform_4(%arg0: i32, %arg1: i32, %arg2: i32) -> (i32, i32, i32) {
    %c0_i32 = arith.constant 0 : i32
    %c0_i32_0 = arith.constant 0 : i32
    return %arg0, %arg1, %c0_i32 : i32, i32, i32
  }
}

module attributes {stable_mosaic.version = 11 : i64} {
  func.func @_proj_add_ln_kernel(%arg0: i32, %arg1: memref<20x128xbf16, #tpu.memory_space<vmem>>, %arg2: memref<128x128xbf16, #tpu.memory_space<vmem>>, %arg3: memref<1x128xf32, #tpu.memory_space<vmem>>, %arg4: memref<20x128xbf16, #tpu.memory_space<vmem>>, %arg5: memref<1x128xf32, #tpu.memory_space<vmem>>, %arg6: memref<1x128xf32, #tpu.memory_space<vmem>>, %arg7: memref<20x128xbf16, #tpu.memory_space<vmem>>) attributes {dimension_semantics = [#tpu.dimension_semantics<parallel>], iteration_bounds = array<i64: 1>, scalar_prefetch = 0 : i64, scratch_operands = 0 : i64, tpu.core_type = #tpu.core_type<tc>, window_params = [{transform_indices = @transform_0, window_bounds = array<i64: 20, 128>}, {pipeline_mode = #tpu.pipeline_mode<synchronous>, transform_indices = @transform_1, window_bounds = array<i64: 128, 128>}, {pipeline_mode = #tpu.pipeline_mode<synchronous>, transform_indices = @transform_2, window_bounds = array<i64: 1, 128>}, {transform_indices = @transform_3, window_bounds = array<i64: 20, 128>}, {pipeline_mode = #tpu.pipeline_mode<synchronous>, transform_indices = @transform_4, window_bounds = array<i64: 1, 128>}, {pipeline_mode = #tpu.pipeline_mode<synchronous>, transform_indices = @transform_5, window_bounds = array<i64: 1, 128>}, {transform_indices = @transform_6, window_bounds = array<i64: 20, 128>}]} {
    %c0 = arith.constant 0 : index
    %c0_0 = arith.constant 0 : index
    %0 = vector.load %arg1[%c0, %c0_0] : memref<20x128xbf16, #tpu.memory_space<vmem>>, vector<20x128xbf16>
    %c0_1 = arith.constant 0 : index
    %c0_2 = arith.constant 0 : index
    %1 = vector.load %arg2[%c0_1, %c0_2] : memref<128x128xbf16, #tpu.memory_space<vmem>>, vector<128x128xbf16>
    %cst = arith.constant dense<0.000000e+00> : vector<20x128xf32>
    %2 = tpu.matmul %0, %1, %cst {dimension_numbers = #tpu.dot_dimension_numbers<[1], [0], [0], [1], [0, 0, 1, 1], [], []>} : vector<20x128xbf16>, vector<128x128xbf16>, vector<20x128xf32> -> vector<20x128xf32>
    %c0_3 = arith.constant 0 : index
    %c0_4 = arith.constant 0 : index
    %3 = vector.load %arg3[%c0_3, %c0_4] : memref<1x128xf32, #tpu.memory_space<vmem>>, vector<1x128xf32>
    %4 = vector.broadcast %3 : vector<1x128xf32> to vector<20x128xf32>
    %5 = arith.addf %2, %4 : vector<20x128xf32>
    %c0_5 = arith.constant 0 : index
    %c0_6 = arith.constant 0 : index
    %6 = vector.load %arg4[%c0_5, %c0_6] : memref<20x128xbf16, #tpu.memory_space<vmem>>, vector<20x128xbf16>
    %7 = arith.extf %6 : vector<20x128xbf16> to vector<20x128xf32>
    %8 = arith.addf %5, %7 : vector<20x128xf32>
    %cst_7 = arith.constant dense<0.000000e+00> : vector<20xf32>
    %9 = vector.multi_reduction <add>, %8, %cst_7 [1] : vector<20x128xf32> to vector<20xf32>
    %10 = vector.shape_cast %9 : vector<20xf32> to vector<20x1xf32>
    %cst_8 = arith.constant 1.280000e+02 : f32
    %11 = vector.broadcast %cst_8 : f32 to vector<20x1xf32>
    %12 = arith.divf %10, %11 : vector<20x1xf32>
    %13 = vector.broadcast %12 : vector<20x1xf32> to vector<20x128xf32>
    %14 = arith.subf %8, %13 : vector<20x128xf32>
    %15 = arith.mulf %14, %14 : vector<20x128xf32>
    %cst_9 = arith.constant dense<0.000000e+00> : vector<20xf32>
    %16 = vector.multi_reduction <add>, %15, %cst_9 [1] : vector<20x128xf32> to vector<20xf32>
    %17 = vector.shape_cast %16 : vector<20xf32> to vector<20x1xf32>
    %cst_10 = arith.constant 1.280000e+02 : f32
    %18 = vector.broadcast %cst_10 : f32 to vector<20x1xf32>
    %19 = arith.divf %17, %18 : vector<20x1xf32>
    %20 = vector.broadcast %12 : vector<20x1xf32> to vector<20x128xf32>
    %21 = arith.subf %8, %20 : vector<20x128xf32>
    %cst_11 = arith.constant 9.99999997E-7 : f32
    %22 = vector.broadcast %cst_11 : f32 to vector<20x1xf32>
    %23 = arith.addf %19, %22 : vector<20x1xf32>
    %24 = math.rsqrt %23 : vector<20x1xf32>
    %25 = vector.broadcast %24 : vector<20x1xf32> to vector<20x128xf32>
    %26 = arith.mulf %21, %25 : vector<20x128xf32>
    %c0_12 = arith.constant 0 : index
    %c0_13 = arith.constant 0 : index
    %27 = vector.load %arg5[%c0_12, %c0_13] : memref<1x128xf32, #tpu.memory_space<vmem>>, vector<1x128xf32>
    %28 = vector.broadcast %27 : vector<1x128xf32> to vector<20x128xf32>
    %29 = arith.mulf %26, %28 : vector<20x128xf32>
    %c0_14 = arith.constant 0 : index
    %c0_15 = arith.constant 0 : index
    %30 = vector.load %arg6[%c0_14, %c0_15] : memref<1x128xf32, #tpu.memory_space<vmem>>, vector<1x128xf32>
    %31 = vector.broadcast %30 : vector<1x128xf32> to vector<20x128xf32>
    %32 = arith.addf %29, %31 : vector<20x128xf32>
    %33 = arith.truncf %32 : vector<20x128xf32> to vector<20x128xbf16>
    %c0_16 = arith.constant 0 : index
    %c0_17 = arith.constant 0 : index
    %34 = vector.load %arg7[%c0_16, %c0_17] : memref<20x128xbf16, #tpu.memory_space<vmem>>, vector<20x128xbf16>
    tpu.vector_store %arg7[%c0_16, %c0_17], %33 {strides = array<i32>} : memref<20x128xbf16, #tpu.memory_space<vmem>>, vector<20x128xbf16>,
    return
  }
  func.func @transform_0(%arg0: i32) -> (i32, i32) {
    %c0_i32 = arith.constant 0 : i32
    %c0_i32_0 = arith.constant 0 : i32
    return %arg0, %c0_i32 : i32, i32
  }
  func.func @transform_1(%arg0: i32) -> (i32, i32) {
    %c0_i32 = arith.constant 0 : i32
    %c0_i32_0 = arith.constant 0 : i32
    %c0_i32_1 = arith.constant 0 : i32
    return %c0_i32, %c0_i32_0 : i32, i32
  }
  func.func @transform_2(%arg0: i32) -> (i32, i32) {
    %c0_i32 = arith.constant 0 : i32
    %c0_i32_0 = arith.constant 0 : i32
    %c0_i32_1 = arith.constant 0 : i32
    return %c0_i32, %c0_i32_0 : i32, i32
  }
  func.func @transform_3(%arg0: i32) -> (i32, i32) {
    %c0_i32 = arith.constant 0 : i32
    %c0_i32_0 = arith.constant 0 : i32
    return %arg0, %c0_i32 : i32, i32
  }
  func.func @transform_4(%arg0: i32) -> (i32, i32) {
    %c0_i32 = arith.constant 0 : i32
    %c0_i32_0 = arith.constant 0 : i32
    %c0_i32_1 = arith.constant 0 : i32
    return %c0_i32, %c0_i32_0 : i32, i32
  }
  func.func @transform_5(%arg0: i32) -> (i32, i32) {
    %c0_i32 = arith.constant 0 : i32
    %c0_i32_0 = arith.constant 0 : i32
    %c0_i32_1 = arith.constant 0 : i32
    return %c0_i32, %c0_i32_0 : i32, i32
  }
  func.func @transform_6(%arg0: i32) -> (i32, i32) {
    %c0_i32 = arith.constant 0 : i32
    %c0_i32_0 = arith.constant 0 : i32
    return %arg0, %c0_i32 : i32, i32
  }
}

module attributes {stable_mosaic.version = 11 : i64} {
  func.func @_ffn_ln_kernel(%arg0: i32, %arg1: i32, %arg2: memref<20x128xbf16, #tpu.memory_space<vmem>>, %arg3: memref<128x256xbf16, #tpu.memory_space<vmem>>, %arg4: memref<1x256xf32, #tpu.memory_space<vmem>>, %arg5: memref<256x128xbf16, #tpu.memory_space<vmem>>, %arg6: memref<1x128xf32, #tpu.memory_space<vmem>>, %arg7: memref<1x128xf32, #tpu.memory_space<vmem>>, %arg8: memref<1x128xf32, #tpu.memory_space<vmem>>, %arg9: memref<20x128xbf16, #tpu.memory_space<vmem>>, %arg10: memref<20x128xf32, #tpu.memory_space<vmem>>) attributes {dimension_semantics = [#tpu.dimension_semantics<parallel>, #tpu.dimension_semantics<arbitrary>], iteration_bounds = array<i64: 1, 1>, scalar_prefetch = 0 : i64, scratch_operands = 1 : i64, tpu.core_type = #tpu.core_type<tc>, window_params = [{transform_indices = @transform_0, window_bounds = array<i64: 20, 128>}, {transform_indices = @transform_1, window_bounds = array<i64: 128, 256>}, {transform_indices = @transform_2, window_bounds = array<i64: 1, 256>}, {transform_indices = @transform_3, window_bounds = array<i64: 256, 128>}, {pipeline_mode = #tpu.pipeline_mode<synchronous>, transform_indices = @transform_4, window_bounds = array<i64: 1, 128>}, {pipeline_mode = #tpu.pipeline_mode<synchronous>, transform_indices = @transform_5, window_bounds = array<i64: 1, 128>}, {pipeline_mode = #tpu.pipeline_mode<synchronous>, transform_indices = @transform_6, window_bounds = array<i64: 1, 128>}, {transform_indices = @transform_7, window_bounds = array<i64: 20, 128>}]} {
    %c0_i32 = arith.constant 0 : i32
    %0 = arith.cmpi eq, %arg1, %c0_i32 : i32
    %1 = arith.extui %0 : i1 to i32
    %c0_i32_0 = arith.constant 0 : i32
    %2 = arith.cmpi ne, %1, %c0_i32_0 : i32
    scf.if %2 {
      %cst_16 = arith.constant 0.000000e+00 : f32
      %20 = vector.broadcast %cst_16 : f32 to vector<20x128xf32>
      %c0_17 = arith.constant 0 : index
      %c0_18 = arith.constant 0 : index
      %21 = vector.load %arg10[%c0_17, %c0_18] : memref<20x128xf32, #tpu.memory_space<vmem>>, vector<20x128xf32>
      tpu.vector_store %arg10[%c0_17, %c0_18], %20 {strides = array<i32>} : memref<20x128xf32, #tpu.memory_space<vmem>>, vector<20x128xf32>,
    } else {
    }
    %c0 = arith.constant 0 : index
    %c0_1 = arith.constant 0 : index
    %3 = vector.load %arg2[%c0, %c0_1] : memref<20x128xbf16, #tpu.memory_space<vmem>>, vector<20x128xbf16>
    %c0_2 = arith.constant 0 : index
    %c0_3 = arith.constant 0 : index
    %4 = vector.load %arg3[%c0_2, %c0_3] : memref<128x256xbf16, #tpu.memory_space<vmem>>, vector<128x256xbf16>
    %cst = arith.constant dense<0.000000e+00> : vector<20x256xf32>
    %5 = tpu.matmul %3, %4, %cst {dimension_numbers = #tpu.dot_dimension_numbers<[1], [0], [0], [1], [0, 0, 1, 1], [], []>} : vector<20x128xbf16>, vector<128x256xbf16>, vector<20x256xf32> -> vector<20x256xf32>
    %c0_4 = arith.constant 0 : index
    %c0_5 = arith.constant 0 : index
    %6 = vector.load %arg4[%c0_4, %c0_5] : memref<1x256xf32, #tpu.memory_space<vmem>>, vector<1x256xf32>
    %7 = vector.broadcast %6 : vector<1x256xf32> to vector<20x256xf32>
    %8 = arith.addf %5, %7 : vector<20x256xf32>
    %cst_6 = arith.constant 0.000000e+00 : f32
    %9 = vector.broadcast %cst_6 : f32 to vector<20x256xf32>
    %10 = arith.maximumf %8, %9 : vector<20x256xf32>
    %c0_7 = arith.constant 0 : index
    %c0_8 = arith.constant 0 : index
    %11 = vector.load %arg5[%c0_7, %c0_8] : memref<256x128xbf16, #tpu.memory_space<vmem>>, vector<256x128xbf16>
    %c0_9 = arith.constant 0 : index
    %c0_10 = arith.constant 0 : index
    %12 = vector.load %arg10[%c0_9, %c0_10] : memref<20x128xf32, #tpu.memory_space<vmem>>, vector<20x128xf32>
    %13 = arith.truncf %10 : vector<20x256xf32> to vector<20x256xbf16>
    %cst_11 = arith.constant dense<0.000000e+00> : vector<20x128xf32>
    %14 = tpu.matmul %13, %11, %cst_11 {dimension_numbers = #tpu.dot_dimension_numbers<[1], [0], [0], [1], [0, 0, 1, 1], [], []>} : vector<20x256xbf16>, vector<256x128xbf16>, vector<20x128xf32> -> vector<20x128xf32>
    %15 = arith.addf %12, %14 : vector<20x128xf32>
    %c0_12 = arith.constant 0 : index
    %c0_13 = arith.constant 0 : index
    %16 = vector.load %arg10[%c0_12, %c0_13] : memref<20x128xf32, #tpu.memory_space<vmem>>, vector<20x128xf32>
    tpu.vector_store %arg10[%c0_12, %c0_13], %15 {strides = array<i32>} : memref<20x128xf32, #tpu.memory_space<vmem>>, vector<20x128xf32>,
    %c0_i32_14 = arith.constant 0 : i32
    %17 = arith.cmpi eq, %arg1, %c0_i32_14 : i32
    %18 = arith.extui %17 : i1 to i32
    %c0_i32_15 = arith.constant 0 : i32
    %19 = arith.cmpi ne, %18, %c0_i32_15 : i32
    scf.if %19 {
      %c0_16 = arith.constant 0 : index
      %c0_17 = arith.constant 0 : index
      %20 = vector.load %arg10[%c0_16, %c0_17] : memref<20x128xf32, #tpu.memory_space<vmem>>, vector<20x128xf32>
      %c0_18 = arith.constant 0 : index
      %c0_19 = arith.constant 0 : index
      %21 = vector.load %arg6[%c0_18, %c0_19] : memref<1x128xf32, #tpu.memory_space<vmem>>, vector<1x128xf32>
      %22 = vector.broadcast %21 : vector<1x128xf32> to vector<20x128xf32>
      %23 = arith.addf %20, %22 : vector<20x128xf32>
      %c0_20 = arith.constant 0 : index
      %c0_21 = arith.constant 0 : index
      %24 = vector.load %arg2[%c0_20, %c0_21] : memref<20x128xbf16, #tpu.memory_space<vmem>>, vector<20x128xbf16>
      %25 = arith.extf %24 : vector<20x128xbf16> to vector<20x128xf32>
      %26 = arith.addf %23, %25 : vector<20x128xf32>
      %cst_22 = arith.constant dense<0.000000e+00> : vector<20xf32>
      %27 = vector.multi_reduction <add>, %26, %cst_22 [1] : vector<20x128xf32> to vector<20xf32>
      %28 = vector.shape_cast %27 : vector<20xf32> to vector<20x1xf32>
      %cst_23 = arith.constant 1.280000e+02 : f32
      %29 = vector.broadcast %cst_23 : f32 to vector<20x1xf32>
      %30 = arith.divf %28, %29 : vector<20x1xf32>
      %31 = vector.broadcast %30 : vector<20x1xf32> to vector<20x128xf32>
      %32 = arith.subf %26, %31 : vector<20x128xf32>
      %33 = arith.mulf %32, %32 : vector<20x128xf32>
      %cst_24 = arith.constant dense<0.000000e+00> : vector<20xf32>
      %34 = vector.multi_reduction <add>, %33, %cst_24 [1] : vector<20x128xf32> to vector<20xf32>
      %35 = vector.shape_cast %34 : vector<20xf32> to vector<20x1xf32>
      %cst_25 = arith.constant 1.280000e+02 : f32
      %36 = vector.broadcast %cst_25 : f32 to vector<20x1xf32>
      %37 = arith.divf %35, %36 : vector<20x1xf32>
      %38 = vector.broadcast %30 : vector<20x1xf32> to vector<20x128xf32>
      %39 = arith.subf %26, %38 : vector<20x128xf32>
      %cst_26 = arith.constant 9.99999997E-7 : f32
      %40 = vector.broadcast %cst_26 : f32 to vector<20x1xf32>
      %41 = arith.addf %37, %40 : vector<20x1xf32>
      %42 = math.rsqrt %41 : vector<20x1xf32>
      %43 = vector.broadcast %42 : vector<20x1xf32> to vector<20x128xf32>
      %44 = arith.mulf %39, %43 : vector<20x128xf32>
      %c0_27 = arith.constant 0 : index
      %c0_28 = arith.constant 0 : index
      %45 = vector.load %arg7[%c0_27, %c0_28] : memref<1x128xf32, #tpu.memory_space<vmem>>, vector<1x128xf32>
      %46 = vector.broadcast %45 : vector<1x128xf32> to vector<20x128xf32>
      %47 = arith.mulf %44, %46 : vector<20x128xf32>
      %c0_29 = arith.constant 0 : index
      %c0_30 = arith.constant 0 : index
      %48 = vector.load %arg8[%c0_29, %c0_30] : memref<1x128xf32, #tpu.memory_space<vmem>>, vector<1x128xf32>
      %49 = vector.broadcast %48 : vector<1x128xf32> to vector<20x128xf32>
      %50 = arith.addf %47, %49 : vector<20x128xf32>
      %51 = arith.truncf %50 : vector<20x128xf32> to vector<20x128xbf16>
      %c0_31 = arith.constant 0 : index
      %c0_32 = arith.constant 0 : index
      %52 = vector.load %arg9[%c0_31, %c0_32] : memref<20x128xbf16, #tpu.memory_space<vmem>>, vector<20x128xbf16>
      tpu.vector_store %arg9[%c0_31, %c0_32], %51 {strides = array<i32>} : memref<20x128xbf16, #tpu.memory_space<vmem>>, vector<20x128xbf16>,
    } else {
    }
    return
  }
  func.func @transform_0(%arg0: i32, %arg1: i32) -> (i32, i32) {
    %c0_i32 = arith.constant 0 : i32
    %c0_i32_0 = arith.constant 0 : i32
    return %arg0, %c0_i32 : i32, i32
  }
  func.func @transform_1(%arg0: i32, %arg1: i32) -> (i32, i32) {
    %c0_i32 = arith.constant 0 : i32
    %c0_i32_0 = arith.constant 0 : i32
    return %c0_i32, %arg1 : i32, i32
  }
  func.func @transform_2(%arg0: i32, %arg1: i32) -> (i32, i32) {
    %c0_i32 = arith.constant 0 : i32
    %c0_i32_0 = arith.constant 0 : i32
    return %c0_i32, %arg1 : i32, i32
  }
  func.func @transform_3(%arg0: i32, %arg1: i32) -> (i32, i32) {
    %c0_i32 = arith.constant 0 : i32
    %c0_i32_0 = arith.constant 0 : i32
    return %arg1, %c0_i32 : i32, i32
  }
  func.func @transform_4(%arg0: i32, %arg1: i32) -> (i32, i32) {
    %c0_i32 = arith.constant 0 : i32
    %c0_i32_0 = arith.constant 0 : i32
    %c0_i32_1 = arith.constant 0 : i32
    return %c0_i32, %c0_i32_0 : i32, i32
  }
  func.func @transform_5(%arg0: i32, %arg1: i32) -> (i32, i32) {
    %c0_i32 = arith.constant 0 : i32
    %c0_i32_0 = arith.constant 0 : i32
    %c0_i32_1 = arith.constant 0 : i32
    return %c0_i32, %c0_i32_0 : i32, i32
  }
  func.func @transform_6(%arg0: i32, %arg1: i32) -> (i32, i32) {
    %c0_i32 = arith.constant 0 : i32
    %c0_i32_0 = arith.constant 0 : i32
    %c0_i32_1 = arith.constant 0 : i32
    return %c0_i32, %c0_i32_0 : i32, i32
  }
  func.func @transform_7(%arg0: i32, %arg1: i32) -> (i32, i32) {
    %c0_i32 = arith.constant 0 : i32
    %c0_i32_0 = arith.constant 0 : i32
    return %arg0, %c0_i32 : i32, i32
  }
}

module attributes {stable_mosaic.version = 11 : i64} {
  func.func @kernel(%arg0: i32, %arg1: memref<20x128xbf16, #tpu.memory_space<vmem>>, %arg2: memref<128x128xbf16, #tpu.memory_space<vmem>>, %arg3: memref<128x128xbf16, #tpu.memory_space<vmem>>, %arg4: memref<1x128xf32, #tpu.memory_space<vmem>>, %arg5: memref<1x128xf32, #tpu.memory_space<vmem>>, %arg6: memref<20x128xbf16, #tpu.memory_space<vmem>>, %arg7: memref<20x128xbf16, #tpu.memory_space<vmem>>) attributes {dimension_semantics = [#tpu.dimension_semantics<parallel>], iteration_bounds = array<i64: 1>, scalar_prefetch = 0 : i64, scratch_operands = 0 : i64, tpu.core_type = #tpu.core_type<tc>, window_params = [{transform_indices = @transform_0, window_bounds = array<i64: 20, 128>}, {pipeline_mode = #tpu.pipeline_mode<synchronous>, transform_indices = @transform_1, window_bounds = array<i64: 128, 128>}, {pipeline_mode = #tpu.pipeline_mode<synchronous>, transform_indices = @transform_2, window_bounds = array<i64: 128, 128>}, {pipeline_mode = #tpu.pipeline_mode<synchronous>, transform_indices = @transform_3, window_bounds = array<i64: 1, 128>}, {pipeline_mode = #tpu.pipeline_mode<synchronous>, transform_indices = @transform_4, window_bounds = array<i64: 1, 128>}, {transform_indices = @transform_5, window_bounds = array<i64: 20, 128>}, {transform_indices = @transform_6, window_bounds = array<i64: 20, 128>}]} {
    %c0 = arith.constant 0 : index
    %c0_0 = arith.constant 0 : index
    %0 = vector.load %arg1[%c0, %c0_0] : memref<20x128xbf16, #tpu.memory_space<vmem>>, vector<20x128xbf16>
    %c0_1 = arith.constant 0 : index
    %c0_2 = arith.constant 0 : index
    %1 = vector.load %arg2[%c0_1, %c0_2] : memref<128x128xbf16, #tpu.memory_space<vmem>>, vector<128x128xbf16>
    %cst = arith.constant dense<0.000000e+00> : vector<20x128xf32>
    %2 = tpu.matmul %0, %1, %cst {dimension_numbers = #tpu.dot_dimension_numbers<[1], [0], [0], [1], [0, 0, 1, 1], [], []>} : vector<20x128xbf16>, vector<128x128xbf16>, vector<20x128xf32> -> vector<20x128xf32>
    %c0_3 = arith.constant 0 : index
    %c0_4 = arith.constant 0 : index
    %3 = vector.load %arg4[%c0_3, %c0_4] : memref<1x128xf32, #tpu.memory_space<vmem>>, vector<1x128xf32>
    %4 = vector.broadcast %3 : vector<1x128xf32> to vector<20x128xf32>
    %5 = arith.addf %2, %4 : vector<20x128xf32>
    %6 = arith.truncf %5 : vector<20x128xf32> to vector<20x128xbf16>
    %c0_5 = arith.constant 0 : index
    %c0_6 = arith.constant 0 : index
    %7 = vector.load %arg6[%c0_5, %c0_6] : memref<20x128xbf16, #tpu.memory_space<vmem>>, vector<20x128xbf16>
    tpu.vector_store %arg6[%c0_5, %c0_6], %6 {strides = array<i32>} : memref<20x128xbf16, #tpu.memory_space<vmem>>, vector<20x128xbf16>,
    %c0_7 = arith.constant 0 : index
    %c0_8 = arith.constant 0 : index
    %8 = vector.load %arg3[%c0_7, %c0_8] : memref<128x128xbf16, #tpu.memory_space<vmem>>, vector<128x128xbf16>
    %cst_9 = arith.constant dense<0.000000e+00> : vector<20x128xf32>
    %9 = tpu.matmul %0, %8, %cst_9 {dimension_numbers = #tpu.dot_dimension_numbers<[1], [0], [0], [1], [0, 0, 1, 1], [], []>} : vector<20x128xbf16>, vector<128x128xbf16>, vector<20x128xf32> -> vector<20x128xf32>
    %c0_10 = arith.constant 0 : index
    %c0_11 = arith.constant 0 : index
    %10 = vector.load %arg5[%c0_10, %c0_11] : memref<1x128xf32, #tpu.memory_space<vmem>>, vector<1x128xf32>
    %11 = vector.broadcast %10 : vector<1x128xf32> to vector<20x128xf32>
    %12 = arith.addf %9, %11 : vector<20x128xf32>
    %13 = arith.truncf %12 : vector<20x128xf32> to vector<20x128xbf16>
    %c0_12 = arith.constant 0 : index
    %c0_13 = arith.constant 0 : index
    %14 = vector.load %arg7[%c0_12, %c0_13] : memref<20x128xbf16, #tpu.memory_space<vmem>>, vector<20x128xbf16>
    tpu.vector_store %arg7[%c0_12, %c0_13], %13 {strides = array<i32>} : memref<20x128xbf16, #tpu.memory_space<vmem>>, vector<20x128xbf16>,
    return
  }
  func.func @transform_0(%arg0: i32) -> (i32, i32) {
    %c0_i32 = arith.constant 0 : i32
    %c0_i32_0 = arith.constant 0 : i32
    return %arg0, %c0_i32 : i32, i32
  }
  func.func @transform_1(%arg0: i32) -> (i32, i32) {
    %c0_i32 = arith.constant 0 : i32
    %c0_i32_0 = arith.constant 0 : i32
    %c0_i32_1 = arith.constant 0 : i32
    return %c0_i32, %c0_i32_0 : i32, i32
  }
  func.func @transform_2(%arg0: i32) -> (i32, i32) {
    %c0_i32 = arith.constant 0 : i32
    %c0_i32_0 = arith.constant 0 : i32
    %c0_i32_1 = arith.constant 0 : i32
    return %c0_i32, %c0_i32_0 : i32, i32
  }
  func.func @transform_3(%arg0: i32) -> (i32, i32) {
    %c0_i32 = arith.constant 0 : i32
    %c0_i32_0 = arith.constant 0 : i32
    %c0_i32_1 = arith.constant 0 : i32
    return %c0_i32, %c0_i32_0 : i32, i32
  }
  func.func @transform_4(%arg0: i32) -> (i32, i32) {
    %c0_i32 = arith.constant 0 : i32
    %c0_i32_0 = arith.constant 0 : i32
    %c0_i32_1 = arith.constant 0 : i32
    return %c0_i32, %c0_i32_0 : i32, i32
  }
  func.func @transform_5(%arg0: i32) -> (i32, i32) {
    %c0_i32 = arith.constant 0 : i32
    %c0_i32_0 = arith.constant 0 : i32
    return %arg0, %c0_i32 : i32, i32
  }
  func.func @transform_6(%arg0: i32) -> (i32, i32) {
    %c0_i32 = arith.constant 0 : i32
    %c0_i32_0 = arith.constant 0 : i32
    return %arg0, %c0_i32 : i32, i32
  }
}

module attributes {stable_mosaic.version = 11 : i64} {
  func.func @kernel(%arg0: i32, %arg1: memref<16x128xbf16, #tpu.memory_space<vmem>>, %arg2: memref<128x128xbf16, #tpu.memory_space<vmem>>, %arg3: memref<128x128xbf16, #tpu.memory_space<vmem>>, %arg4: memref<128x128xbf16, #tpu.memory_space<vmem>>, %arg5: memref<1x128xf32, #tpu.memory_space<vmem>>, %arg6: memref<1x128xf32, #tpu.memory_space<vmem>>, %arg7: memref<1x128xf32, #tpu.memory_space<vmem>>, %arg8: memref<16x128xbf16, #tpu.memory_space<vmem>>, %arg9: memref<16x128xbf16, #tpu.memory_space<vmem>>, %arg10: memref<16x128xbf16, #tpu.memory_space<vmem>>) attributes {dimension_semantics = [#tpu.dimension_semantics<parallel>], iteration_bounds = array<i64: 1>, scalar_prefetch = 0 : i64, scratch_operands = 0 : i64, tpu.core_type = #tpu.core_type<tc>, window_params = [{transform_indices = @transform_0, window_bounds = array<i64: 16, 128>}, {pipeline_mode = #tpu.pipeline_mode<synchronous>, transform_indices = @transform_1, window_bounds = array<i64: 128, 128>}, {pipeline_mode = #tpu.pipeline_mode<synchronous>, transform_indices = @transform_2, window_bounds = array<i64: 128, 128>}, {pipeline_mode = #tpu.pipeline_mode<synchronous>, transform_indices = @transform_3, window_bounds = array<i64: 128, 128>}, {pipeline_mode = #tpu.pipeline_mode<synchronous>, transform_indices = @transform_4, window_bounds = array<i64: 1, 128>}, {pipeline_mode = #tpu.pipeline_mode<synchronous>, transform_indices = @transform_5, window_bounds = array<i64: 1, 128>}, {pipeline_mode = #tpu.pipeline_mode<synchronous>, transform_indices = @transform_6, window_bounds = array<i64: 1, 128>}, {transform_indices = @transform_7, window_bounds = array<i64: 16, 128>}, {transform_indices = @transform_8, window_bounds = array<i64: 16, 128>}, {transform_indices = @transform_9, window_bounds = array<i64: 16, 128>}]} {
    %c0 = arith.constant 0 : index
    %c0_0 = arith.constant 0 : index
    %0 = vector.load %arg1[%c0, %c0_0] : memref<16x128xbf16, #tpu.memory_space<vmem>>, vector<16x128xbf16>
    %c0_1 = arith.constant 0 : index
    %c0_2 = arith.constant 0 : index
    %1 = vector.load %arg2[%c0_1, %c0_2] : memref<128x128xbf16, #tpu.memory_space<vmem>>, vector<128x128xbf16>
    %cst = arith.constant dense<0.000000e+00> : vector<16x128xf32>
    %2 = tpu.matmul %0, %1, %cst {dimension_numbers = #tpu.dot_dimension_numbers<[1], [0], [0], [1], [0, 0, 1, 1], [], []>} : vector<16x128xbf16>, vector<128x128xbf16>, vector<16x128xf32> -> vector<16x128xf32>
    %c0_3 = arith.constant 0 : index
    %c0_4 = arith.constant 0 : index
    %3 = vector.load %arg5[%c0_3, %c0_4] : memref<1x128xf32, #tpu.memory_space<vmem>>, vector<1x128xf32>
    %4 = vector.broadcast %3 : vector<1x128xf32> to vector<16x128xf32>
    %5 = arith.addf %2, %4 : vector<16x128xf32>
    %6 = arith.truncf %5 : vector<16x128xf32> to vector<16x128xbf16>
    %c0_5 = arith.constant 0 : index
    %c0_6 = arith.constant 0 : index
    %7 = vector.load %arg8[%c0_5, %c0_6] : memref<16x128xbf16, #tpu.memory_space<vmem>>, vector<16x128xbf16>
    tpu.vector_store %arg8[%c0_5, %c0_6], %6 {strides = array<i32>} : memref<16x128xbf16, #tpu.memory_space<vmem>>, vector<16x128xbf16>,
    %c0_7 = arith.constant 0 : index
    %c0_8 = arith.constant 0 : index
    %8 = vector.load %arg3[%c0_7, %c0_8] : memref<128x128xbf16, #tpu.memory_space<vmem>>, vector<128x128xbf16>
    %cst_9 = arith.constant dense<0.000000e+00> : vector<16x128xf32>
    %9 = tpu.matmul %0, %8, %cst_9 {dimension_numbers = #tpu.dot_dimension_numbers<[1], [0], [0], [1], [0, 0, 1, 1], [], []>} : vector<16x128xbf16>, vector<128x128xbf16>, vector<16x128xf32> -> vector<16x128xf32>
    %c0_10 = arith.constant 0 : index
    %c0_11 = arith.constant 0 : index
    %10 = vector.load %arg6[%c0_10, %c0_11] : memref<1x128xf32, #tpu.memory_space<vmem>>, vector<1x128xf32>
    %11 = vector.broadcast %10 : vector<1x128xf32> to vector<16x128xf32>
    %12 = arith.addf %9, %11 : vector<16x128xf32>
    %13 = arith.truncf %12 : vector<16x128xf32> to vector<16x128xbf16>
    %c0_12 = arith.constant 0 : index
    %c0_13 = arith.constant 0 : index
    %14 = vector.load %arg9[%c0_12, %c0_13] : memref<16x128xbf16, #tpu.memory_space<vmem>>, vector<16x128xbf16>
    tpu.vector_store %arg9[%c0_12, %c0_13], %13 {strides = array<i32>} : memref<16x128xbf16, #tpu.memory_space<vmem>>, vector<16x128xbf16>,
    %c0_14 = arith.constant 0 : index
    %c0_15 = arith.constant 0 : index
    %15 = vector.load %arg4[%c0_14, %c0_15] : memref<128x128xbf16, #tpu.memory_space<vmem>>, vector<128x128xbf16>
    %cst_16 = arith.constant dense<0.000000e+00> : vector<16x128xf32>
    %16 = tpu.matmul %0, %15, %cst_16 {dimension_numbers = #tpu.dot_dimension_numbers<[1], [0], [0], [1], [0, 0, 1, 1], [], []>} : vector<16x128xbf16>, vector<128x128xbf16>, vector<16x128xf32> -> vector<16x128xf32>
    %c0_17 = arith.constant 0 : index
    %c0_18 = arith.constant 0 : index
    %17 = vector.load %arg7[%c0_17, %c0_18] : memref<1x128xf32, #tpu.memory_space<vmem>>, vector<1x128xf32>
    %18 = vector.broadcast %17 : vector<1x128xf32> to vector<16x128xf32>
    %19 = arith.addf %16, %18 : vector<16x128xf32>
    %20 = arith.truncf %19 : vector<16x128xf32> to vector<16x128xbf16>
    %c0_19 = arith.constant 0 : index
    %c0_20 = arith.constant 0 : index
    %21 = vector.load %arg10[%c0_19, %c0_20] : memref<16x128xbf16, #tpu.memory_space<vmem>>, vector<16x128xbf16>
    tpu.vector_store %arg10[%c0_19, %c0_20], %20 {strides = array<i32>} : memref<16x128xbf16, #tpu.memory_space<vmem>>, vector<16x128xbf16>,
    return
  }
  func.func @transform_0(%arg0: i32) -> (i32, i32) {
    %c0_i32 = arith.constant 0 : i32
    %c0_i32_0 = arith.constant 0 : i32
    return %arg0, %c0_i32 : i32, i32
  }
  func.func @transform_1(%arg0: i32) -> (i32, i32) {
    %c0_i32 = arith.constant 0 : i32
    %c0_i32_0 = arith.constant 0 : i32
    %c0_i32_1 = arith.constant 0 : i32
    return %c0_i32, %c0_i32_0 : i32, i32
  }
  func.func @transform_2(%arg0: i32) -> (i32, i32) {
    %c0_i32 = arith.constant 0 : i32
    %c0_i32_0 = arith.constant 0 : i32
    %c0_i32_1 = arith.constant 0 : i32
    return %c0_i32, %c0_i32_0 : i32, i32
  }
  func.func @transform_3(%arg0: i32) -> (i32, i32) {
    %c0_i32 = arith.constant 0 : i32
    %c0_i32_0 = arith.constant 0 : i32
    %c0_i32_1 = arith.constant 0 : i32
    return %c0_i32, %c0_i32_0 : i32, i32
  }
  func.func @transform_4(%arg0: i32) -> (i32, i32) {
    %c0_i32 = arith.constant 0 : i32
    %c0_i32_0 = arith.constant 0 : i32
    %c0_i32_1 = arith.constant 0 : i32
    return %c0_i32, %c0_i32_0 : i32, i32
  }
  func.func @transform_5(%arg0: i32) -> (i32, i32) {
    %c0_i32 = arith.constant 0 : i32
    %c0_i32_0 = arith.constant 0 : i32
    %c0_i32_1 = arith.constant 0 : i32
    return %c0_i32, %c0_i32_0 : i32, i32
  }
  func.func @transform_6(%arg0: i32) -> (i32, i32) {
    %c0_i32 = arith.constant 0 : i32
    %c0_i32_0 = arith.constant 0 : i32
    %c0_i32_1 = arith.constant 0 : i32
    return %c0_i32, %c0_i32_0 : i32, i32
  }
  func.func @transform_7(%arg0: i32) -> (i32, i32) {
    %c0_i32 = arith.constant 0 : i32
    %c0_i32_0 = arith.constant 0 : i32
    return %arg0, %c0_i32 : i32, i32
  }
  func.func @transform_8(%arg0: i32) -> (i32, i32) {
    %c0_i32 = arith.constant 0 : i32
    %c0_i32_0 = arith.constant 0 : i32
    return %arg0, %c0_i32 : i32, i32
  }
  func.func @transform_9(%arg0: i32) -> (i32, i32) {
    %c0_i32 = arith.constant 0 : i32
    %c0_i32_0 = arith.constant 0 : i32
    return %arg0, %c0_i32 : i32, i32
  }
}

module attributes {stable_mosaic.version = 11 : i64} {
  func.func @_proj_add_ln_kernel(%arg0: i32, %arg1: memref<16x128xbf16, #tpu.memory_space<vmem>>, %arg2: memref<128x128xbf16, #tpu.memory_space<vmem>>, %arg3: memref<1x128xf32, #tpu.memory_space<vmem>>, %arg4: memref<16x128xbf16, #tpu.memory_space<vmem>>, %arg5: memref<1x128xf32, #tpu.memory_space<vmem>>, %arg6: memref<1x128xf32, #tpu.memory_space<vmem>>, %arg7: memref<16x128xbf16, #tpu.memory_space<vmem>>) attributes {dimension_semantics = [#tpu.dimension_semantics<parallel>], iteration_bounds = array<i64: 1>, scalar_prefetch = 0 : i64, scratch_operands = 0 : i64, tpu.core_type = #tpu.core_type<tc>, window_params = [{transform_indices = @transform_0, window_bounds = array<i64: 16, 128>}, {pipeline_mode = #tpu.pipeline_mode<synchronous>, transform_indices = @transform_1, window_bounds = array<i64: 128, 128>}, {pipeline_mode = #tpu.pipeline_mode<synchronous>, transform_indices = @transform_2, window_bounds = array<i64: 1, 128>}, {transform_indices = @transform_3, window_bounds = array<i64: 16, 128>}, {pipeline_mode = #tpu.pipeline_mode<synchronous>, transform_indices = @transform_4, window_bounds = array<i64: 1, 128>}, {pipeline_mode = #tpu.pipeline_mode<synchronous>, transform_indices = @transform_5, window_bounds = array<i64: 1, 128>}, {transform_indices = @transform_6, window_bounds = array<i64: 16, 128>}]} {
    %c0 = arith.constant 0 : index
    %c0_0 = arith.constant 0 : index
    %0 = vector.load %arg1[%c0, %c0_0] : memref<16x128xbf16, #tpu.memory_space<vmem>>, vector<16x128xbf16>
    %c0_1 = arith.constant 0 : index
    %c0_2 = arith.constant 0 : index
    %1 = vector.load %arg2[%c0_1, %c0_2] : memref<128x128xbf16, #tpu.memory_space<vmem>>, vector<128x128xbf16>
    %cst = arith.constant dense<0.000000e+00> : vector<16x128xf32>
    %2 = tpu.matmul %0, %1, %cst {dimension_numbers = #tpu.dot_dimension_numbers<[1], [0], [0], [1], [0, 0, 1, 1], [], []>} : vector<16x128xbf16>, vector<128x128xbf16>, vector<16x128xf32> -> vector<16x128xf32>
    %c0_3 = arith.constant 0 : index
    %c0_4 = arith.constant 0 : index
    %3 = vector.load %arg3[%c0_3, %c0_4] : memref<1x128xf32, #tpu.memory_space<vmem>>, vector<1x128xf32>
    %4 = vector.broadcast %3 : vector<1x128xf32> to vector<16x128xf32>
    %5 = arith.addf %2, %4 : vector<16x128xf32>
    %c0_5 = arith.constant 0 : index
    %c0_6 = arith.constant 0 : index
    %6 = vector.load %arg4[%c0_5, %c0_6] : memref<16x128xbf16, #tpu.memory_space<vmem>>, vector<16x128xbf16>
    %7 = arith.extf %6 : vector<16x128xbf16> to vector<16x128xf32>
    %8 = arith.addf %5, %7 : vector<16x128xf32>
    %cst_7 = arith.constant dense<0.000000e+00> : vector<16xf32>
    %9 = vector.multi_reduction <add>, %8, %cst_7 [1] : vector<16x128xf32> to vector<16xf32>
    %10 = vector.shape_cast %9 : vector<16xf32> to vector<16x1xf32>
    %cst_8 = arith.constant 1.280000e+02 : f32
    %11 = vector.broadcast %cst_8 : f32 to vector<16x1xf32>
    %12 = arith.divf %10, %11 : vector<16x1xf32>
    %13 = vector.broadcast %12 : vector<16x1xf32> to vector<16x128xf32>
    %14 = arith.subf %8, %13 : vector<16x128xf32>
    %15 = arith.mulf %14, %14 : vector<16x128xf32>
    %cst_9 = arith.constant dense<0.000000e+00> : vector<16xf32>
    %16 = vector.multi_reduction <add>, %15, %cst_9 [1] : vector<16x128xf32> to vector<16xf32>
    %17 = vector.shape_cast %16 : vector<16xf32> to vector<16x1xf32>
    %cst_10 = arith.constant 1.280000e+02 : f32
    %18 = vector.broadcast %cst_10 : f32 to vector<16x1xf32>
    %19 = arith.divf %17, %18 : vector<16x1xf32>
    %20 = vector.broadcast %12 : vector<16x1xf32> to vector<16x128xf32>
    %21 = arith.subf %8, %20 : vector<16x128xf32>
    %cst_11 = arith.constant 9.99999997E-7 : f32
    %22 = vector.broadcast %cst_11 : f32 to vector<16x1xf32>
    %23 = arith.addf %19, %22 : vector<16x1xf32>
    %24 = math.rsqrt %23 : vector<16x1xf32>
    %25 = vector.broadcast %24 : vector<16x1xf32> to vector<16x128xf32>
    %26 = arith.mulf %21, %25 : vector<16x128xf32>
    %c0_12 = arith.constant 0 : index
    %c0_13 = arith.constant 0 : index
    %27 = vector.load %arg5[%c0_12, %c0_13] : memref<1x128xf32, #tpu.memory_space<vmem>>, vector<1x128xf32>
    %28 = vector.broadcast %27 : vector<1x128xf32> to vector<16x128xf32>
    %29 = arith.mulf %26, %28 : vector<16x128xf32>
    %c0_14 = arith.constant 0 : index
    %c0_15 = arith.constant 0 : index
    %30 = vector.load %arg6[%c0_14, %c0_15] : memref<1x128xf32, #tpu.memory_space<vmem>>, vector<1x128xf32>
    %31 = vector.broadcast %30 : vector<1x128xf32> to vector<16x128xf32>
    %32 = arith.addf %29, %31 : vector<16x128xf32>
    %33 = arith.truncf %32 : vector<16x128xf32> to vector<16x128xbf16>
    %c0_16 = arith.constant 0 : index
    %c0_17 = arith.constant 0 : index
    %34 = vector.load %arg7[%c0_16, %c0_17] : memref<16x128xbf16, #tpu.memory_space<vmem>>, vector<16x128xbf16>
    tpu.vector_store %arg7[%c0_16, %c0_17], %33 {strides = array<i32>} : memref<16x128xbf16, #tpu.memory_space<vmem>>, vector<16x128xbf16>,
    return
  }
  func.func @transform_0(%arg0: i32) -> (i32, i32) {
    %c0_i32 = arith.constant 0 : i32
    %c0_i32_0 = arith.constant 0 : i32
    return %arg0, %c0_i32 : i32, i32
  }
  func.func @transform_1(%arg0: i32) -> (i32, i32) {
    %c0_i32 = arith.constant 0 : i32
    %c0_i32_0 = arith.constant 0 : i32
    %c0_i32_1 = arith.constant 0 : i32
    return %c0_i32, %c0_i32_0 : i32, i32
  }
  func.func @transform_2(%arg0: i32) -> (i32, i32) {
    %c0_i32 = arith.constant 0 : i32
    %c0_i32_0 = arith.constant 0 : i32
    %c0_i32_1 = arith.constant 0 : i32
    return %c0_i32, %c0_i32_0 : i32, i32
  }
  func.func @transform_3(%arg0: i32) -> (i32, i32) {
    %c0_i32 = arith.constant 0 : i32
    %c0_i32_0 = arith.constant 0 : i32
    return %arg0, %c0_i32 : i32, i32
  }
  func.func @transform_4(%arg0: i32) -> (i32, i32) {
    %c0_i32 = arith.constant 0 : i32
    %c0_i32_0 = arith.constant 0 : i32
    %c0_i32_1 = arith.constant 0 : i32
    return %c0_i32, %c0_i32_0 : i32, i32
  }
  func.func @transform_5(%arg0: i32) -> (i32, i32) {
    %c0_i32 = arith.constant 0 : i32
    %c0_i32_0 = arith.constant 0 : i32
    %c0_i32_1 = arith.constant 0 : i32
    return %c0_i32, %c0_i32_0 : i32, i32
  }
  func.func @transform_6(%arg0: i32) -> (i32, i32) {
    %c0_i32 = arith.constant 0 : i32
    %c0_i32_0 = arith.constant 0 : i32
    return %arg0, %c0_i32 : i32, i32
  }
}

module attributes {stable_mosaic.version = 11 : i64} {
  func.func @_flash_attn_kernel(%arg0: i32, %arg1: i32, %arg2: i32, %arg3: memref<1x8x128xbf16, #tpu.memory_space<vmem>>, %arg4: memref<1x8x128xbf16, #tpu.memory_space<vmem>>, %arg5: memref<1x8x128xbf16, #tpu.memory_space<vmem>>, %arg6: memref<1x1x8xf32, #tpu.memory_space<vmem>>, %arg7: memref<1x8x128xbf16, #tpu.memory_space<vmem>>, %arg8: memref<8x4xf32, #tpu.memory_space<vmem>>, %arg9: memref<8x4xf32, #tpu.memory_space<vmem>>, %arg10: memref<8x128xf32, #tpu.memory_space<vmem>>) attributes {dimension_semantics = [#tpu.dimension_semantics<parallel>, #tpu.dimension_semantics<parallel>, #tpu.dimension_semantics<arbitrary>], iteration_bounds = array<i64: 2, 1, 1>, scalar_prefetch = 0 : i64, scratch_operands = 3 : i64, tpu.core_type = #tpu.core_type<tc>, window_params = [{transform_indices = @transform_0, window_bounds = array<i64: 1, 8, 128>}, {transform_indices = @transform_1, window_bounds = array<i64: 1, 8, 128>}, {transform_indices = @transform_2, window_bounds = array<i64: 1, 8, 128>}, {transform_indices = @transform_3, window_bounds = array<i64: 1, 1, 8>}, {transform_indices = @transform_4, window_bounds = array<i64: 1, 8, 128>}]} {
    %c8_i32 = arith.constant 8 : i32
    %0 = arith.muli %arg2, %c8_i32 : i32
    %c8_i32_0 = arith.constant 8 : i32
    %1 = arith.muli %arg1, %c8_i32_0 : i32
    %c0_i32 = arith.constant 0 : i32
    %2 = arith.cmpi eq, %arg2, %c0_i32 : i32
    %3 = arith.extui %2 : i1 to i32
    %c0_i32_1 = arith.constant 0 : i32
    %4 = arith.cmpi ne, %3, %c0_i32_1 : i32
    scf.if %4 {
      %cst = arith.constant -1.000000e+09 : f32
      %21 = vector.broadcast %cst : f32 to vector<8x4xf32>
      %c0 = arith.constant 0 : index
      %c0_9 = arith.constant 0 : index
      %22 = vector.load %arg8[%c0, %c0_9] : memref<8x4xf32, #tpu.memory_space<vmem>>, vector<8x4xf32>
      tpu.vector_store %arg8[%c0, %c0_9], %21 {strides = array<i32>} : memref<8x4xf32, #tpu.memory_space<vmem>>, vector<8x4xf32>,
      %cst_10 = arith.constant 0.000000e+00 : f32
      %23 = vector.broadcast %cst_10 : f32 to vector<8x4xf32>
      %c0_11 = arith.constant 0 : index
      %c0_12 = arith.constant 0 : index
      %24 = vector.load %arg9[%c0_11, %c0_12] : memref<8x4xf32, #tpu.memory_space<vmem>>, vector<8x4xf32>
      tpu.vector_store %arg9[%c0_11, %c0_12], %23 {strides = array<i32>} : memref<8x4xf32, #tpu.memory_space<vmem>>, vector<8x4xf32>,
      %cst_13 = arith.constant 0.000000e+00 : f32
      %25 = vector.broadcast %cst_13 : f32 to vector<8x128xf32>
      %c0_14 = arith.constant 0 : index
      %c0_15 = arith.constant 0 : index
      %26 = vector.load %arg10[%c0_14, %c0_15] : memref<8x128xf32, #tpu.memory_space<vmem>>, vector<8x128xf32>
      tpu.vector_store %arg10[%c0_14, %c0_15], %25 {strides = array<i32>} : memref<8x128xf32, #tpu.memory_space<vmem>>, vector<8x128xf32>,
    } else {
    }
    %c8_i32_2 = arith.constant 8 : i32
    %5 = arith.addi %1, %c8_i32_2 : i32
    %c1_i32 = arith.constant 1 : i32
    %6 = arith.subi %5, %c1_i32 : i32
    %7 = arith.cmpi sle, %0, %6 : i32
    %c8_i32_3 = arith.constant 8 : i32
    %8 = arith.addi %0, %c8_i32_3 : i32
    %c1_i32_4 = arith.constant 1 : i32
    %9 = arith.subi %8, %c1_i32_4 : i32
    %10 = arith.cmpi sgt, %9, %1 : i32
    %11 = arith.andi %7, %10 : i1
    %12 = arith.extui %11 : i1 to i32
    %c0_i32_5 = arith.constant 0 : i32
    %13 = arith.cmpi ne, %12, %c0_i32_5 : i32
    scf.if %13 {
      %c0 = arith.constant 0 : index
      %c0_9 = arith.constant 0 : index
      %c0_10 = arith.constant 0 : index
      %21 = vector.load %arg3[%c0, %c0_9, %c0_10] : memref<1x8x128xbf16, #tpu.memory_space<vmem>>, vector<1x8x128xbf16>
      %22 = vector.shape_cast %21 : vector<1x8x128xbf16> to vector<8x128xbf16>
      %c0_11 = arith.constant 0 : index
      %c0_12 = arith.constant 0 : index
      %c0_13 = arith.constant 0 : index
      %23 = vector.load %arg4[%c0_11, %c0_12, %c0_13] : memref<1x8x128xbf16, #tpu.memory_space<vmem>>, vector<1x8x128xbf16>
      %24 = vector.shape_cast %23 : vector<1x8x128xbf16> to vector<8x128xbf16>
      %c0_14 = arith.constant 0 : index
      %c0_15 = arith.constant 0 : index
      %c0_16 = arith.constant 0 : index
      %25 = vector.load %arg5[%c0_14, %c0_15, %c0_16] : memref<1x8x128xbf16, #tpu.memory_space<vmem>>, vector<1x8x128xbf16>
      %26 = vector.shape_cast %25 : vector<1x8x128xbf16> to vector<8x128xbf16>
      %c0_17 = arith.constant 0 : index
      %c0_18 = arith.constant 0 : index
      %c0_19 = arith.constant 0 : index
      %27 = vector.load %arg6[%c0_17, %c0_18, %c0_19] : memref<1x1x8xf32, #tpu.memory_space<vmem>>, vector<1x1x8xf32>
      %28 = vector.shape_cast %27 : vector<1x1x8xf32> to vector<1x8xf32>
      %29 = tpu.iota {dimensions = array<i32: 1>} : vector<8x8xi32>
      %30 = vector.broadcast %0 : i32 to vector<8x8xi32>
      %31 = arith.addi %30, %29 : vector<8x8xi32>
      %32 = tpu.iota {dimensions = array<i32: 0>} : vector<8x8xi32>
      %33 = vector.broadcast %1 : i32 to vector<8x8xi32>
      %34 = arith.addi %33, %32 : vector<8x8xi32>
      %35 = arith.cmpi sgt, %31, %34 : vector<8x8xi32>
      %36 = vector.extract_strided_slice %22 {offsets = [0, 0], sizes = [8, 32], strides = [1, 1]} : vector<8x128xbf16> to vector<8x32xbf16>
      %37 = vector.extract_strided_slice %24 {offsets = [0, 0], sizes = [8, 32], strides = [1, 1]} : vector<8x128xbf16> to vector<8x32xbf16>
      %cst = arith.constant dense<0.000000e+00> : vector<8x8xf32>
      %38 = tpu.matmul %36, %37, %cst {dimension_numbers = #tpu.dot_dimension_numbers<[1], [1], [0], [0], [0, 0, 1, 0], [], []>} : vector<8x32xbf16>, vector<8x32xbf16>, vector<8x8xf32> -> vector<8x8xf32>
      %39 = vector.broadcast %28 : vector<1x8xf32> to vector<8x8xf32>
      %40 = arith.addf %38, %39 : vector<8x8xf32>
      %cst_20 = arith.constant -1.000000e+09 : f32
      %41 = vector.broadcast %cst_20 : f32 to vector<8x8xf32>
      %42 = arith.select %35, %41, %40 : vector<8x8xi1>, vector<8x8xf32>
      %c0_21 = arith.constant 0 : index
      %c0_22 = arith.constant 0 : index
      %43 = vector.load %arg8[%c0_21, %c0_22] : memref<8x4xf32, #tpu.memory_space<vmem>>, vector<8x1xf32>
      %cst_23 = arith.constant dense<0xFF800000> : vector<8xf32>
      %44 = vector.multi_reduction <maximumf>, %42, %cst_23 [1] : vector<8x8xf32> to vector<8xf32>
      %45 = vector.shape_cast %44 : vector<8xf32> to vector<8x1xf32>
      %46 = arith.maximumf %43, %45 : vector<8x1xf32>
      %47 = arith.subf %43, %46 : vector<8x1xf32>
      %48 = math.exp %47 : vector<8x1xf32>
      %49 = vector.broadcast %46 : vector<8x1xf32> to vector<8x8xf32>
      %50 = arith.subf %42, %49 : vector<8x8xf32>
      %51 = math.exp %50 : vector<8x8xf32>
      %c0_24 = arith.constant 0 : index
      %c0_25 = arith.constant 0 : index
      %52 = vector.load %arg9[%c0_24, %c0_25] : memref<8x4xf32, #tpu.memory_space<vmem>>, vector<8x1xf32>
      %53 = arith.mulf %48, %52 : vector<8x1xf32>
      %cst_26 = arith.constant dense<0.000000e+00> : vector<8xf32>
      %54 = vector.multi_reduction <add>, %51, %cst_26 [1] : vector<8x8xf32> to vector<8xf32>
      %55 = vector.shape_cast %54 : vector<8xf32> to vector<8x1xf32>
      %56 = arith.addf %53, %55 : vector<8x1xf32>
      %c0_27 = arith.constant 0 : index
      %c0_28 = arith.constant 0 : index
      %57 = vector.load %arg9[%c0_27, %c0_28] : memref<8x4xf32, #tpu.memory_space<vmem>>, vector<8x1xf32>
      tpu.vector_store %arg9[%c0_27, %c0_28], %56 {strides = array<i32>} : memref<8x4xf32, #tpu.memory_space<vmem>>, vector<8x1xf32>,
      %c0_29 = arith.constant 0 : index
      %c0_30 = arith.constant 0 : index
      %58 = vector.load %arg10[%c0_29, %c0_30] : memref<8x128xf32, #tpu.memory_space<vmem>>, vector<8x32xf32>
      %59 = vector.broadcast %48 : vector<8x1xf32> to vector<8x32xf32>
      %60 = arith.mulf %59, %58 : vector<8x32xf32>
      %61 = arith.truncf %51 : vector<8x8xf32> to vector<8x8xbf16>
      %62 = vector.extract_strided_slice %26 {offsets = [0, 0], sizes = [8, 32], strides = [1, 1]} : vector<8x128xbf16> to vector<8x32xbf16>
      %cst_31 = arith.constant dense<0.000000e+00> : vector<8x32xf32>
      %63 = tpu.matmul %61, %62, %cst_31 {dimension_numbers = #tpu.dot_dimension_numbers<[1], [0], [0], [1], [0, 0, 1, 1], [], []>} : vector<8x8xbf16>, vector<8x32xbf16>, vector<8x32xf32> -> vector<8x32xf32>
      %64 = arith.addf %60, %63 : vector<8x32xf32>
      %c0_32 = arith.constant 0 : index
      %c0_33 = arith.constant 0 : index
      %65 = vector.load %arg10[%c0_32, %c0_33] : memref<8x128xf32, #tpu.memory_space<vmem>>, vector<8x32xf32>
      tpu.vector_store %arg10[%c0_32, %c0_33], %64 {strides = array<i32>} : memref<8x128xf32, #tpu.memory_space<vmem>>, vector<8x32xf32>,
      %c0_34 = arith.constant 0 : index
      %c0_35 = arith.constant 0 : index
      %66 = vector.load %arg8[%c0_34, %c0_35] : memref<8x4xf32, #tpu.memory_space<vmem>>, vector<8x1xf32>
      tpu.vector_store %arg8[%c0_34, %c0_35], %46 {strides = array<i32>} : memref<8x4xf32, #tpu.memory_space<vmem>>, vector<8x1xf32>,
      %67 = vector.extract_strided_slice %22 {offsets = [0, 32], sizes = [8, 32], strides = [1, 1]} : vector<8x128xbf16> to vector<8x32xbf16>
      %68 = vector.extract_strided_slice %24 {offsets = [0, 32], sizes = [8, 32], strides = [1, 1]} : vector<8x128xbf16> to vector<8x32xbf16>
      %cst_36 = arith.constant dense<0.000000e+00> : vector<8x8xf32>
      %69 = tpu.matmul %67, %68, %cst_36 {dimension_numbers = #tpu.dot_dimension_numbers<[1], [1], [0], [0], [0, 0, 1, 0], [], []>} : vector<8x32xbf16>, vector<8x32xbf16>, vector<8x8xf32> -> vector<8x8xf32>
      %70 = vector.broadcast %28 : vector<1x8xf32> to vector<8x8xf32>
      %71 = arith.addf %69, %70 : vector<8x8xf32>
      %cst_37 = arith.constant -1.000000e+09 : f32
      %72 = vector.broadcast %cst_37 : f32 to vector<8x8xf32>
      %73 = arith.select %35, %72, %71 : vector<8x8xi1>, vector<8x8xf32>
      %c0_38 = arith.constant 0 : index
      %c1 = arith.constant 1 : index
      %74 = vector.load %arg8[%c0_38, %c1] : memref<8x4xf32, #tpu.memory_space<vmem>>, vector<8x1xf32>
      %cst_39 = arith.constant dense<0xFF800000> : vector<8xf32>
      %75 = vector.multi_reduction <maximumf>, %73, %cst_39 [1] : vector<8x8xf32> to vector<8xf32>
      %76 = vector.shape_cast %75 : vector<8xf32> to vector<8x1xf32>
      %77 = arith.maximumf %74, %76 : vector<8x1xf32>
      %78 = arith.subf %74, %77 : vector<8x1xf32>
      %79 = math.exp %78 : vector<8x1xf32>
      %80 = vector.broadcast %77 : vector<8x1xf32> to vector<8x8xf32>
      %81 = arith.subf %73, %80 : vector<8x8xf32>
      %82 = math.exp %81 : vector<8x8xf32>
      %c0_40 = arith.constant 0 : index
      %c1_41 = arith.constant 1 : index
      %83 = vector.load %arg9[%c0_40, %c1_41] : memref<8x4xf32, #tpu.memory_space<vmem>>, vector<8x1xf32>
      %84 = arith.mulf %79, %83 : vector<8x1xf32>
      %cst_42 = arith.constant dense<0.000000e+00> : vector<8xf32>
      %85 = vector.multi_reduction <add>, %82, %cst_42 [1] : vector<8x8xf32> to vector<8xf32>
      %86 = vector.shape_cast %85 : vector<8xf32> to vector<8x1xf32>
      %87 = arith.addf %84, %86 : vector<8x1xf32>
      %c0_43 = arith.constant 0 : index
      %c1_44 = arith.constant 1 : index
      %88 = vector.load %arg9[%c0_43, %c1_44] : memref<8x4xf32, #tpu.memory_space<vmem>>, vector<8x1xf32>
      tpu.vector_store %arg9[%c0_43, %c1_44], %87 {strides = array<i32>} : memref<8x4xf32, #tpu.memory_space<vmem>>, vector<8x1xf32>,
      %c0_45 = arith.constant 0 : index
      %c32 = arith.constant 32 : index
      %89 = vector.load %arg10[%c0_45, %c32] : memref<8x128xf32, #tpu.memory_space<vmem>>, vector<8x32xf32>
      %90 = vector.broadcast %79 : vector<8x1xf32> to vector<8x32xf32>
      %91 = arith.mulf %90, %89 : vector<8x32xf32>
      %92 = arith.truncf %82 : vector<8x8xf32> to vector<8x8xbf16>
      %93 = vector.extract_strided_slice %26 {offsets = [0, 32], sizes = [8, 32], strides = [1, 1]} : vector<8x128xbf16> to vector<8x32xbf16>
      %cst_46 = arith.constant dense<0.000000e+00> : vector<8x32xf32>
      %94 = tpu.matmul %92, %93, %cst_46 {dimension_numbers = #tpu.dot_dimension_numbers<[1], [0], [0], [1], [0, 0, 1, 1], [], []>} : vector<8x8xbf16>, vector<8x32xbf16>, vector<8x32xf32> -> vector<8x32xf32>
      %95 = arith.addf %91, %94 : vector<8x32xf32>
      %c0_47 = arith.constant 0 : index
      %c32_48 = arith.constant 32 : index
      %96 = vector.load %arg10[%c0_47, %c32_48] : memref<8x128xf32, #tpu.memory_space<vmem>>, vector<8x32xf32>
      tpu.vector_store %arg10[%c0_47, %c32_48], %95 {strides = array<i32>} : memref<8x128xf32, #tpu.memory_space<vmem>>, vector<8x32xf32>,
      %c0_49 = arith.constant 0 : index
      %c1_50 = arith.constant 1 : index
      %97 = vector.load %arg8[%c0_49, %c1_50] : memref<8x4xf32, #tpu.memory_space<vmem>>, vector<8x1xf32>
      tpu.vector_store %arg8[%c0_49, %c1_50], %77 {strides = array<i32>} : memref<8x4xf32, #tpu.memory_space<vmem>>, vector<8x1xf32>,
      %98 = vector.extract_strided_slice %22 {offsets = [0, 64], sizes = [8, 32], strides = [1, 1]} : vector<8x128xbf16> to vector<8x32xbf16>
      %99 = vector.extract_strided_slice %24 {offsets = [0, 64], sizes = [8, 32], strides = [1, 1]} : vector<8x128xbf16> to vector<8x32xbf16>
      %cst_51 = arith.constant dense<0.000000e+00> : vector<8x8xf32>
      %100 = tpu.matmul %98, %99, %cst_51 {dimension_numbers = #tpu.dot_dimension_numbers<[1], [1], [0], [0], [0, 0, 1, 0], [], []>} : vector<8x32xbf16>, vector<8x32xbf16>, vector<8x8xf32> -> vector<8x8xf32>
      %101 = vector.broadcast %28 : vector<1x8xf32> to vector<8x8xf32>
      %102 = arith.addf %100, %101 : vector<8x8xf32>
      %cst_52 = arith.constant -1.000000e+09 : f32
      %103 = vector.broadcast %cst_52 : f32 to vector<8x8xf32>
      %104 = arith.select %35, %103, %102 : vector<8x8xi1>, vector<8x8xf32>
      %c0_53 = arith.constant 0 : index
      %c2 = arith.constant 2 : index
      %105 = vector.load %arg8[%c0_53, %c2] : memref<8x4xf32, #tpu.memory_space<vmem>>, vector<8x1xf32>
      %cst_54 = arith.constant dense<0xFF800000> : vector<8xf32>
      %106 = vector.multi_reduction <maximumf>, %104, %cst_54 [1] : vector<8x8xf32> to vector<8xf32>
      %107 = vector.shape_cast %106 : vector<8xf32> to vector<8x1xf32>
      %108 = arith.maximumf %105, %107 : vector<8x1xf32>
      %109 = arith.subf %105, %108 : vector<8x1xf32>
      %110 = math.exp %109 : vector<8x1xf32>
      %111 = vector.broadcast %108 : vector<8x1xf32> to vector<8x8xf32>
      %112 = arith.subf %104, %111 : vector<8x8xf32>
      %113 = math.exp %112 : vector<8x8xf32>
      %c0_55 = arith.constant 0 : index
      %c2_56 = arith.constant 2 : index
      %114 = vector.load %arg9[%c0_55, %c2_56] : memref<8x4xf32, #tpu.memory_space<vmem>>, vector<8x1xf32>
      %115 = arith.mulf %110, %114 : vector<8x1xf32>
      %cst_57 = arith.constant dense<0.000000e+00> : vector<8xf32>
      %116 = vector.multi_reduction <add>, %113, %cst_57 [1] : vector<8x8xf32> to vector<8xf32>
      %117 = vector.shape_cast %116 : vector<8xf32> to vector<8x1xf32>
      %118 = arith.addf %115, %117 : vector<8x1xf32>
      %c0_58 = arith.constant 0 : index
      %c2_59 = arith.constant 2 : index
      %119 = vector.load %arg9[%c0_58, %c2_59] : memref<8x4xf32, #tpu.memory_space<vmem>>, vector<8x1xf32>
      tpu.vector_store %arg9[%c0_58, %c2_59], %118 {strides = array<i32>} : memref<8x4xf32, #tpu.memory_space<vmem>>, vector<8x1xf32>,
      %c0_60 = arith.constant 0 : index
      %c64 = arith.constant 64 : index
      %120 = vector.load %arg10[%c0_60, %c64] : memref<8x128xf32, #tpu.memory_space<vmem>>, vector<8x32xf32>
      %121 = vector.broadcast %110 : vector<8x1xf32> to vector<8x32xf32>
      %122 = arith.mulf %121, %120 : vector<8x32xf32>
      %123 = arith.truncf %113 : vector<8x8xf32> to vector<8x8xbf16>
      %124 = vector.extract_strided_slice %26 {offsets = [0, 64], sizes = [8, 32], strides = [1, 1]} : vector<8x128xbf16> to vector<8x32xbf16>
      %cst_61 = arith.constant dense<0.000000e+00> : vector<8x32xf32>
      %125 = tpu.matmul %123, %124, %cst_61 {dimension_numbers = #tpu.dot_dimension_numbers<[1], [0], [0], [1], [0, 0, 1, 1], [], []>} : vector<8x8xbf16>, vector<8x32xbf16>, vector<8x32xf32> -> vector<8x32xf32>
      %126 = arith.addf %122, %125 : vector<8x32xf32>
      %c0_62 = arith.constant 0 : index
      %c64_63 = arith.constant 64 : index
      %127 = vector.load %arg10[%c0_62, %c64_63] : memref<8x128xf32, #tpu.memory_space<vmem>>, vector<8x32xf32>
      tpu.vector_store %arg10[%c0_62, %c64_63], %126 {strides = array<i32>} : memref<8x128xf32, #tpu.memory_space<vmem>>, vector<8x32xf32>,
      %c0_64 = arith.constant 0 : index
      %c2_65 = arith.constant 2 : index
      %128 = vector.load %arg8[%c0_64, %c2_65] : memref<8x4xf32, #tpu.memory_space<vmem>>, vector<8x1xf32>
      tpu.vector_store %arg8[%c0_64, %c2_65], %108 {strides = array<i32>} : memref<8x4xf32, #tpu.memory_space<vmem>>, vector<8x1xf32>,
      %129 = vector.extract_strided_slice %22 {offsets = [0, 96], sizes = [8, 32], strides = [1, 1]} : vector<8x128xbf16> to vector<8x32xbf16>
      %130 = vector.extract_strided_slice %24 {offsets = [0, 96], sizes = [8, 32], strides = [1, 1]} : vector<8x128xbf16> to vector<8x32xbf16>
      %cst_66 = arith.constant dense<0.000000e+00> : vector<8x8xf32>
      %131 = tpu.matmul %129, %130, %cst_66 {dimension_numbers = #tpu.dot_dimension_numbers<[1], [1], [0], [0], [0, 0, 1, 0], [], []>} : vector<8x32xbf16>, vector<8x32xbf16>, vector<8x8xf32> -> vector<8x8xf32>
      %132 = vector.broadcast %28 : vector<1x8xf32> to vector<8x8xf32>
      %133 = arith.addf %131, %132 : vector<8x8xf32>
      %cst_67 = arith.constant -1.000000e+09 : f32
      %134 = vector.broadcast %cst_67 : f32 to vector<8x8xf32>
      %135 = arith.select %35, %134, %133 : vector<8x8xi1>, vector<8x8xf32>
      %c0_68 = arith.constant 0 : index
      %c3 = arith.constant 3 : index
      %136 = vector.load %arg8[%c0_68, %c3] : memref<8x4xf32, #tpu.memory_space<vmem>>, vector<8x1xf32>
      %cst_69 = arith.constant dense<0xFF800000> : vector<8xf32>
      %137 = vector.multi_reduction <maximumf>, %135, %cst_69 [1] : vector<8x8xf32> to vector<8xf32>
      %138 = vector.shape_cast %137 : vector<8xf32> to vector<8x1xf32>
      %139 = arith.maximumf %136, %138 : vector<8x1xf32>
      %140 = arith.subf %136, %139 : vector<8x1xf32>
      %141 = math.exp %140 : vector<8x1xf32>
      %142 = vector.broadcast %139 : vector<8x1xf32> to vector<8x8xf32>
      %143 = arith.subf %135, %142 : vector<8x8xf32>
      %144 = math.exp %143 : vector<8x8xf32>
      %c0_70 = arith.constant 0 : index
      %c3_71 = arith.constant 3 : index
      %145 = vector.load %arg9[%c0_70, %c3_71] : memref<8x4xf32, #tpu.memory_space<vmem>>, vector<8x1xf32>
      %146 = arith.mulf %141, %145 : vector<8x1xf32>
      %cst_72 = arith.constant dense<0.000000e+00> : vector<8xf32>
      %147 = vector.multi_reduction <add>, %144, %cst_72 [1] : vector<8x8xf32> to vector<8xf32>
      %148 = vector.shape_cast %147 : vector<8xf32> to vector<8x1xf32>
      %149 = arith.addf %146, %148 : vector<8x1xf32>
      %c0_73 = arith.constant 0 : index
      %c3_74 = arith.constant 3 : index
      %150 = vector.load %arg9[%c0_73, %c3_74] : memref<8x4xf32, #tpu.memory_space<vmem>>, vector<8x1xf32>
      tpu.vector_store %arg9[%c0_73, %c3_74], %149 {strides = array<i32>} : memref<8x4xf32, #tpu.memory_space<vmem>>, vector<8x1xf32>,
      %c0_75 = arith.constant 0 : index
      %c96 = arith.constant 96 : index
      %151 = vector.load %arg10[%c0_75, %c96] : memref<8x128xf32, #tpu.memory_space<vmem>>, vector<8x32xf32>
      %152 = vector.broadcast %141 : vector<8x1xf32> to vector<8x32xf32>
      %153 = arith.mulf %152, %151 : vector<8x32xf32>
      %154 = arith.truncf %144 : vector<8x8xf32> to vector<8x8xbf16>
      %155 = vector.extract_strided_slice %26 {offsets = [0, 96], sizes = [8, 32], strides = [1, 1]} : vector<8x128xbf16> to vector<8x32xbf16>
      %cst_76 = arith.constant dense<0.000000e+00> : vector<8x32xf32>
      %156 = tpu.matmul %154, %155, %cst_76 {dimension_numbers = #tpu.dot_dimension_numbers<[1], [0], [0], [1], [0, 0, 1, 1], [], []>} : vector<8x8xbf16>, vector<8x32xbf16>, vector<8x32xf32> -> vector<8x32xf32>
      %157 = arith.addf %153, %156 : vector<8x32xf32>
      %c0_77 = arith.constant 0 : index
      %c96_78 = arith.constant 96 : index
      %158 = vector.load %arg10[%c0_77, %c96_78] : memref<8x128xf32, #tpu.memory_space<vmem>>, vector<8x32xf32>
      tpu.vector_store %arg10[%c0_77, %c96_78], %157 {strides = array<i32>} : memref<8x128xf32, #tpu.memory_space<vmem>>, vector<8x32xf32>,
      %c0_79 = arith.constant 0 : index
      %c3_80 = arith.constant 3 : index
      %159 = vector.load %arg8[%c0_79, %c3_80] : memref<8x4xf32, #tpu.memory_space<vmem>>, vector<8x1xf32>
      tpu.vector_store %arg8[%c0_79, %c3_80], %139 {strides = array<i32>} : memref<8x4xf32, #tpu.memory_space<vmem>>, vector<8x1xf32>,
    } else {
    }
    %true = arith.constant true
    %14 = arith.xori %10, %true : i1
    %15 = arith.andi %7, %14 : i1
    %16 = arith.extui %15 : i1 to i32
    %c0_i32_6 = arith.constant 0 : i32
    %17 = arith.cmpi ne, %16, %c0_i32_6 : i32
    scf.if %17 {
      %c0 = arith.constant 0 : index
      %c0_9 = arith.constant 0 : index
      %c0_10 = arith.constant 0 : index
      %21 = vector.load %arg3[%c0, %c0_9, %c0_10] : memref<1x8x128xbf16, #tpu.memory_space<vmem>>, vector<1x8x128xbf16>
      %22 = vector.shape_cast %21 : vector<1x8x128xbf16> to vector<8x128xbf16>
      %c0_11 = arith.constant 0 : index
      %c0_12 = arith.constant 0 : index
      %c0_13 = arith.constant 0 : index
      %23 = vector.load %arg4[%c0_11, %c0_12, %c0_13] : memref<1x8x128xbf16, #tpu.memory_space<vmem>>, vector<1x8x128xbf16>
      %24 = vector.shape_cast %23 : vector<1x8x128xbf16> to vector<8x128xbf16>
      %c0_14 = arith.constant 0 : index
      %c0_15 = arith.constant 0 : index
      %c0_16 = arith.constant 0 : index
      %25 = vector.load %arg5[%c0_14, %c0_15, %c0_16] : memref<1x8x128xbf16, #tpu.memory_space<vmem>>, vector<1x8x128xbf16>
      %26 = vector.shape_cast %25 : vector<1x8x128xbf16> to vector<8x128xbf16>
      %c0_17 = arith.constant 0 : index
      %c0_18 = arith.constant 0 : index
      %c0_19 = arith.constant 0 : index
      %27 = vector.load %arg6[%c0_17, %c0_18, %c0_19] : memref<1x1x8xf32, #tpu.memory_space<vmem>>, vector<1x1x8xf32>
      %28 = vector.shape_cast %27 : vector<1x1x8xf32> to vector<1x8xf32>
      %29 = vector.extract_strided_slice %22 {offsets = [0, 0], sizes = [8, 32], strides = [1, 1]} : vector<8x128xbf16> to vector<8x32xbf16>
      %30 = vector.extract_strided_slice %24 {offsets = [0, 0], sizes = [8, 32], strides = [1, 1]} : vector<8x128xbf16> to vector<8x32xbf16>
      %cst = arith.constant dense<0.000000e+00> : vector<8x8xf32>
      %31 = tpu.matmul %29, %30, %cst {dimension_numbers = #tpu.dot_dimension_numbers<[1], [1], [0], [0], [0, 0, 1, 0], [], []>} : vector<8x32xbf16>, vector<8x32xbf16>, vector<8x8xf32> -> vector<8x8xf32>
      %32 = vector.broadcast %28 : vector<1x8xf32> to vector<8x8xf32>
      %33 = arith.addf %31, %32 : vector<8x8xf32>
      %c0_20 = arith.constant 0 : index
      %c0_21 = arith.constant 0 : index
      %34 = vector.load %arg8[%c0_20, %c0_21] : memref<8x4xf32, #tpu.memory_space<vmem>>, vector<8x1xf32>
      %cst_22 = arith.constant dense<0xFF800000> : vector<8xf32>
      %35 = vector.multi_reduction <maximumf>, %33, %cst_22 [1] : vector<8x8xf32> to vector<8xf32>
      %36 = vector.shape_cast %35 : vector<8xf32> to vector<8x1xf32>
      %37 = arith.maximumf %34, %36 : vector<8x1xf32>
      %38 = arith.subf %34, %37 : vector<8x1xf32>
      %39 = math.exp %38 : vector<8x1xf32>
      %40 = vector.broadcast %37 : vector<8x1xf32> to vector<8x8xf32>
      %41 = arith.subf %33, %40 : vector<8x8xf32>
      %42 = math.exp %41 : vector<8x8xf32>
      %c0_23 = arith.constant 0 : index
      %c0_24 = arith.constant 0 : index
      %43 = vector.load %arg9[%c0_23, %c0_24] : memref<8x4xf32, #tpu.memory_space<vmem>>, vector<8x1xf32>
      %44 = arith.mulf %39, %43 : vector<8x1xf32>
      %cst_25 = arith.constant dense<0.000000e+00> : vector<8xf32>
      %45 = vector.multi_reduction <add>, %42, %cst_25 [1] : vector<8x8xf32> to vector<8xf32>
      %46 = vector.shape_cast %45 : vector<8xf32> to vector<8x1xf32>
      %47 = arith.addf %44, %46 : vector<8x1xf32>
      %c0_26 = arith.constant 0 : index
      %c0_27 = arith.constant 0 : index
      %48 = vector.load %arg9[%c0_26, %c0_27] : memref<8x4xf32, #tpu.memory_space<vmem>>, vector<8x1xf32>
      tpu.vector_store %arg9[%c0_26, %c0_27], %47 {strides = array<i32>} : memref<8x4xf32, #tpu.memory_space<vmem>>, vector<8x1xf32>,
      %c0_28 = arith.constant 0 : index
      %c0_29 = arith.constant 0 : index
      %49 = vector.load %arg10[%c0_28, %c0_29] : memref<8x128xf32, #tpu.memory_space<vmem>>, vector<8x32xf32>
      %50 = vector.broadcast %39 : vector<8x1xf32> to vector<8x32xf32>
      %51 = arith.mulf %50, %49 : vector<8x32xf32>
      %52 = arith.truncf %42 : vector<8x8xf32> to vector<8x8xbf16>
      %53 = vector.extract_strided_slice %26 {offsets = [0, 0], sizes = [8, 32], strides = [1, 1]} : vector<8x128xbf16> to vector<8x32xbf16>
      %cst_30 = arith.constant dense<0.000000e+00> : vector<8x32xf32>
      %54 = tpu.matmul %52, %53, %cst_30 {dimension_numbers = #tpu.dot_dimension_numbers<[1], [0], [0], [1], [0, 0, 1, 1], [], []>} : vector<8x8xbf16>, vector<8x32xbf16>, vector<8x32xf32> -> vector<8x32xf32>
      %55 = arith.addf %51, %54 : vector<8x32xf32>
      %c0_31 = arith.constant 0 : index
      %c0_32 = arith.constant 0 : index
      %56 = vector.load %arg10[%c0_31, %c0_32] : memref<8x128xf32, #tpu.memory_space<vmem>>, vector<8x32xf32>
      tpu.vector_store %arg10[%c0_31, %c0_32], %55 {strides = array<i32>} : memref<8x128xf32, #tpu.memory_space<vmem>>, vector<8x32xf32>,
      %c0_33 = arith.constant 0 : index
      %c0_34 = arith.constant 0 : index
      %57 = vector.load %arg8[%c0_33, %c0_34] : memref<8x4xf32, #tpu.memory_space<vmem>>, vector<8x1xf32>
      tpu.vector_store %arg8[%c0_33, %c0_34], %37 {strides = array<i32>} : memref<8x4xf32, #tpu.memory_space<vmem>>, vector<8x1xf32>,
      %58 = vector.extract_strided_slice %22 {offsets = [0, 32], sizes = [8, 32], strides = [1, 1]} : vector<8x128xbf16> to vector<8x32xbf16>
      %59 = vector.extract_strided_slice %24 {offsets = [0, 32], sizes = [8, 32], strides = [1, 1]} : vector<8x128xbf16> to vector<8x32xbf16>
      %cst_35 = arith.constant dense<0.000000e+00> : vector<8x8xf32>
      %60 = tpu.matmul %58, %59, %cst_35 {dimension_numbers = #tpu.dot_dimension_numbers<[1], [1], [0], [0], [0, 0, 1, 0], [], []>} : vector<8x32xbf16>, vector<8x32xbf16>, vector<8x8xf32> -> vector<8x8xf32>
      %61 = vector.broadcast %28 : vector<1x8xf32> to vector<8x8xf32>
      %62 = arith.addf %60, %61 : vector<8x8xf32>
      %c0_36 = arith.constant 0 : index
      %c1 = arith.constant 1 : index
      %63 = vector.load %arg8[%c0_36, %c1] : memref<8x4xf32, #tpu.memory_space<vmem>>, vector<8x1xf32>
      %cst_37 = arith.constant dense<0xFF800000> : vector<8xf32>
      %64 = vector.multi_reduction <maximumf>, %62, %cst_37 [1] : vector<8x8xf32> to vector<8xf32>
      %65 = vector.shape_cast %64 : vector<8xf32> to vector<8x1xf32>
      %66 = arith.maximumf %63, %65 : vector<8x1xf32>
      %67 = arith.subf %63, %66 : vector<8x1xf32>
      %68 = math.exp %67 : vector<8x1xf32>
      %69 = vector.broadcast %66 : vector<8x1xf32> to vector<8x8xf32>
      %70 = arith.subf %62, %69 : vector<8x8xf32>
      %71 = math.exp %70 : vector<8x8xf32>
      %c0_38 = arith.constant 0 : index
      %c1_39 = arith.constant 1 : index
      %72 = vector.load %arg9[%c0_38, %c1_39] : memref<8x4xf32, #tpu.memory_space<vmem>>, vector<8x1xf32>
      %73 = arith.mulf %68, %72 : vector<8x1xf32>
      %cst_40 = arith.constant dense<0.000000e+00> : vector<8xf32>
      %74 = vector.multi_reduction <add>, %71, %cst_40 [1] : vector<8x8xf32> to vector<8xf32>
      %75 = vector.shape_cast %74 : vector<8xf32> to vector<8x1xf32>
      %76 = arith.addf %73, %75 : vector<8x1xf32>
      %c0_41 = arith.constant 0 : index
      %c1_42 = arith.constant 1 : index
      %77 = vector.load %arg9[%c0_41, %c1_42] : memref<8x4xf32, #tpu.memory_space<vmem>>, vector<8x1xf32>
      tpu.vector_store %arg9[%c0_41, %c1_42], %76 {strides = array<i32>} : memref<8x4xf32, #tpu.memory_space<vmem>>, vector<8x1xf32>,
      %c0_43 = arith.constant 0 : index
      %c32 = arith.constant 32 : index
      %78 = vector.load %arg10[%c0_43, %c32] : memref<8x128xf32, #tpu.memory_space<vmem>>, vector<8x32xf32>
      %79 = vector.broadcast %68 : vector<8x1xf32> to vector<8x32xf32>
      %80 = arith.mulf %79, %78 : vector<8x32xf32>
      %81 = arith.truncf %71 : vector<8x8xf32> to vector<8x8xbf16>
      %82 = vector.extract_strided_slice %26 {offsets = [0, 32], sizes = [8, 32], strides = [1, 1]} : vector<8x128xbf16> to vector<8x32xbf16>
      %cst_44 = arith.constant dense<0.000000e+00> : vector<8x32xf32>
      %83 = tpu.matmul %81, %82, %cst_44 {dimension_numbers = #tpu.dot_dimension_numbers<[1], [0], [0], [1], [0, 0, 1, 1], [], []>} : vector<8x8xbf16>, vector<8x32xbf16>, vector<8x32xf32> -> vector<8x32xf32>
      %84 = arith.addf %80, %83 : vector<8x32xf32>
      %c0_45 = arith.constant 0 : index
      %c32_46 = arith.constant 32 : index
      %85 = vector.load %arg10[%c0_45, %c32_46] : memref<8x128xf32, #tpu.memory_space<vmem>>, vector<8x32xf32>
      tpu.vector_store %arg10[%c0_45, %c32_46], %84 {strides = array<i32>} : memref<8x128xf32, #tpu.memory_space<vmem>>, vector<8x32xf32>,
      %c0_47 = arith.constant 0 : index
      %c1_48 = arith.constant 1 : index
      %86 = vector.load %arg8[%c0_47, %c1_48] : memref<8x4xf32, #tpu.memory_space<vmem>>, vector<8x1xf32>
      tpu.vector_store %arg8[%c0_47, %c1_48], %66 {strides = array<i32>} : memref<8x4xf32, #tpu.memory_space<vmem>>, vector<8x1xf32>,
      %87 = vector.extract_strided_slice %22 {offsets = [0, 64], sizes = [8, 32], strides = [1, 1]} : vector<8x128xbf16> to vector<8x32xbf16>
      %88 = vector.extract_strided_slice %24 {offsets = [0, 64], sizes = [8, 32], strides = [1, 1]} : vector<8x128xbf16> to vector<8x32xbf16>
      %cst_49 = arith.constant dense<0.000000e+00> : vector<8x8xf32>
      %89 = tpu.matmul %87, %88, %cst_49 {dimension_numbers = #tpu.dot_dimension_numbers<[1], [1], [0], [0], [0, 0, 1, 0], [], []>} : vector<8x32xbf16>, vector<8x32xbf16>, vector<8x8xf32> -> vector<8x8xf32>
      %90 = vector.broadcast %28 : vector<1x8xf32> to vector<8x8xf32>
      %91 = arith.addf %89, %90 : vector<8x8xf32>
      %c0_50 = arith.constant 0 : index
      %c2 = arith.constant 2 : index
      %92 = vector.load %arg8[%c0_50, %c2] : memref<8x4xf32, #tpu.memory_space<vmem>>, vector<8x1xf32>
      %cst_51 = arith.constant dense<0xFF800000> : vector<8xf32>
      %93 = vector.multi_reduction <maximumf>, %91, %cst_51 [1] : vector<8x8xf32> to vector<8xf32>
      %94 = vector.shape_cast %93 : vector<8xf32> to vector<8x1xf32>
      %95 = arith.maximumf %92, %94 : vector<8x1xf32>
      %96 = arith.subf %92, %95 : vector<8x1xf32>
      %97 = math.exp %96 : vector<8x1xf32>
      %98 = vector.broadcast %95 : vector<8x1xf32> to vector<8x8xf32>
      %99 = arith.subf %91, %98 : vector<8x8xf32>
      %100 = math.exp %99 : vector<8x8xf32>
      %c0_52 = arith.constant 0 : index
      %c2_53 = arith.constant 2 : index
      %101 = vector.load %arg9[%c0_52, %c2_53] : memref<8x4xf32, #tpu.memory_space<vmem>>, vector<8x1xf32>
      %102 = arith.mulf %97, %101 : vector<8x1xf32>
      %cst_54 = arith.constant dense<0.000000e+00> : vector<8xf32>
      %103 = vector.multi_reduction <add>, %100, %cst_54 [1] : vector<8x8xf32> to vector<8xf32>
      %104 = vector.shape_cast %103 : vector<8xf32> to vector<8x1xf32>
      %105 = arith.addf %102, %104 : vector<8x1xf32>
      %c0_55 = arith.constant 0 : index
      %c2_56 = arith.constant 2 : index
      %106 = vector.load %arg9[%c0_55, %c2_56] : memref<8x4xf32, #tpu.memory_space<vmem>>, vector<8x1xf32>
      tpu.vector_store %arg9[%c0_55, %c2_56], %105 {strides = array<i32>} : memref<8x4xf32, #tpu.memory_space<vmem>>, vector<8x1xf32>,
      %c0_57 = arith.constant 0 : index
      %c64 = arith.constant 64 : index
      %107 = vector.load %arg10[%c0_57, %c64] : memref<8x128xf32, #tpu.memory_space<vmem>>, vector<8x32xf32>
      %108 = vector.broadcast %97 : vector<8x1xf32> to vector<8x32xf32>
      %109 = arith.mulf %108, %107 : vector<8x32xf32>
      %110 = arith.truncf %100 : vector<8x8xf32> to vector<8x8xbf16>
      %111 = vector.extract_strided_slice %26 {offsets = [0, 64], sizes = [8, 32], strides = [1, 1]} : vector<8x128xbf16> to vector<8x32xbf16>
      %cst_58 = arith.constant dense<0.000000e+00> : vector<8x32xf32>
      %112 = tpu.matmul %110, %111, %cst_58 {dimension_numbers = #tpu.dot_dimension_numbers<[1], [0], [0], [1], [0, 0, 1, 1], [], []>} : vector<8x8xbf16>, vector<8x32xbf16>, vector<8x32xf32> -> vector<8x32xf32>
      %113 = arith.addf %109, %112 : vector<8x32xf32>
      %c0_59 = arith.constant 0 : index
      %c64_60 = arith.constant 64 : index
      %114 = vector.load %arg10[%c0_59, %c64_60] : memref<8x128xf32, #tpu.memory_space<vmem>>, vector<8x32xf32>
      tpu.vector_store %arg10[%c0_59, %c64_60], %113 {strides = array<i32>} : memref<8x128xf32, #tpu.memory_space<vmem>>, vector<8x32xf32>,
      %c0_61 = arith.constant 0 : index
      %c2_62 = arith.constant 2 : index
      %115 = vector.load %arg8[%c0_61, %c2_62] : memref<8x4xf32, #tpu.memory_space<vmem>>, vector<8x1xf32>
      tpu.vector_store %arg8[%c0_61, %c2_62], %95 {strides = array<i32>} : memref<8x4xf32, #tpu.memory_space<vmem>>, vector<8x1xf32>,
      %116 = vector.extract_strided_slice %22 {offsets = [0, 96], sizes = [8, 32], strides = [1, 1]} : vector<8x128xbf16> to vector<8x32xbf16>
      %117 = vector.extract_strided_slice %24 {offsets = [0, 96], sizes = [8, 32], strides = [1, 1]} : vector<8x128xbf16> to vector<8x32xbf16>
      %cst_63 = arith.constant dense<0.000000e+00> : vector<8x8xf32>
      %118 = tpu.matmul %116, %117, %cst_63 {dimension_numbers = #tpu.dot_dimension_numbers<[1], [1], [0], [0], [0, 0, 1, 0], [], []>} : vector<8x32xbf16>, vector<8x32xbf16>, vector<8x8xf32> -> vector<8x8xf32>
      %119 = vector.broadcast %28 : vector<1x8xf32> to vector<8x8xf32>
      %120 = arith.addf %118, %119 : vector<8x8xf32>
      %c0_64 = arith.constant 0 : index
      %c3 = arith.constant 3 : index
      %121 = vector.load %arg8[%c0_64, %c3] : memref<8x4xf32, #tpu.memory_space<vmem>>, vector<8x1xf32>
      %cst_65 = arith.constant dense<0xFF800000> : vector<8xf32>
      %122 = vector.multi_reduction <maximumf>, %120, %cst_65 [1] : vector<8x8xf32> to vector<8xf32>
      %123 = vector.shape_cast %122 : vector<8xf32> to vector<8x1xf32>
      %124 = arith.maximumf %121, %123 : vector<8x1xf32>
      %125 = arith.subf %121, %124 : vector<8x1xf32>
      %126 = math.exp %125 : vector<8x1xf32>
      %127 = vector.broadcast %124 : vector<8x1xf32> to vector<8x8xf32>
      %128 = arith.subf %120, %127 : vector<8x8xf32>
      %129 = math.exp %128 : vector<8x8xf32>
      %c0_66 = arith.constant 0 : index
      %c3_67 = arith.constant 3 : index
      %130 = vector.load %arg9[%c0_66, %c3_67] : memref<8x4xf32, #tpu.memory_space<vmem>>, vector<8x1xf32>
      %131 = arith.mulf %126, %130 : vector<8x1xf32>
      %cst_68 = arith.constant dense<0.000000e+00> : vector<8xf32>
      %132 = vector.multi_reduction <add>, %129, %cst_68 [1] : vector<8x8xf32> to vector<8xf32>
      %133 = vector.shape_cast %132 : vector<8xf32> to vector<8x1xf32>
      %134 = arith.addf %131, %133 : vector<8x1xf32>
      %c0_69 = arith.constant 0 : index
      %c3_70 = arith.constant 3 : index
      %135 = vector.load %arg9[%c0_69, %c3_70] : memref<8x4xf32, #tpu.memory_space<vmem>>, vector<8x1xf32>
      tpu.vector_store %arg9[%c0_69, %c3_70], %134 {strides = array<i32>} : memref<8x4xf32, #tpu.memory_space<vmem>>, vector<8x1xf32>,
      %c0_71 = arith.constant 0 : index
      %c96 = arith.constant 96 : index
      %136 = vector.load %arg10[%c0_71, %c96] : memref<8x128xf32, #tpu.memory_space<vmem>>, vector<8x32xf32>
      %137 = vector.broadcast %126 : vector<8x1xf32> to vector<8x32xf32>
      %138 = arith.mulf %137, %136 : vector<8x32xf32>
      %139 = arith.truncf %129 : vector<8x8xf32> to vector<8x8xbf16>
      %140 = vector.extract_strided_slice %26 {offsets = [0, 96], sizes = [8, 32], strides = [1, 1]} : vector<8x128xbf16> to vector<8x32xbf16>
      %cst_72 = arith.constant dense<0.000000e+00> : vector<8x32xf32>
      %141 = tpu.matmul %139, %140, %cst_72 {dimension_numbers = #tpu.dot_dimension_numbers<[1], [0], [0], [1], [0, 0, 1, 1], [], []>} : vector<8x8xbf16>, vector<8x32xbf16>, vector<8x32xf32> -> vector<8x32xf32>
      %142 = arith.addf %138, %141 : vector<8x32xf32>
      %c0_73 = arith.constant 0 : index
      %c96_74 = arith.constant 96 : index
      %143 = vector.load %arg10[%c0_73, %c96_74] : memref<8x128xf32, #tpu.memory_space<vmem>>, vector<8x32xf32>
      tpu.vector_store %arg10[%c0_73, %c96_74], %142 {strides = array<i32>} : memref<8x128xf32, #tpu.memory_space<vmem>>, vector<8x32xf32>,
      %c0_75 = arith.constant 0 : index
      %c3_76 = arith.constant 3 : index
      %144 = vector.load %arg8[%c0_75, %c3_76] : memref<8x4xf32, #tpu.memory_space<vmem>>, vector<8x1xf32>
      tpu.vector_store %arg8[%c0_75, %c3_76], %124 {strides = array<i32>} : memref<8x4xf32, #tpu.memory_space<vmem>>, vector<8x1xf32>,
    } else {
    }
    %c0_i32_7 = arith.constant 0 : i32
    %18 = arith.cmpi eq, %arg2, %c0_i32_7 : i32
    %19 = arith.extui %18 : i1 to i32
    %c0_i32_8 = arith.constant 0 : i32
    %20 = arith.cmpi ne, %19, %c0_i32_8 : i32
    scf.if %20 {
      %c0 = arith.constant 0 : index
      %c0_9 = arith.constant 0 : index
      %21 = vector.load %arg8[%c0, %c0_9] : memref<8x4xf32, #tpu.memory_space<vmem>>, vector<8x1xf32>
      %cst = arith.constant -5.000000e+08 : f32
      %22 = vector.broadcast %cst : f32 to vector<8x1xf32>
      %23 = arith.cmpf ogt, %21, %22 : vector<8x1xf32>
      %c0_10 = arith.constant 0 : index
      %c0_11 = arith.constant 0 : index
      %24 = vector.load %arg9[%c0_10, %c0_11] : memref<8x4xf32, #tpu.memory_space<vmem>>, vector<8x1xf32>
      %cst_12 = arith.constant 1.000000e-30 : f32
      %25 = vector.broadcast %cst_12 : f32 to vector<8x1xf32>
      %26 = arith.maximumf %24, %25 : vector<8x1xf32>
      %cst_13 = arith.constant 1.000000e+00 : f32
      %27 = vector.broadcast %cst_13 : f32 to vector<8x1xf32>
      %28 = arith.divf %27, %26 : vector<8x1xf32>
      %cst_14 = arith.constant 0.000000e+00 : f32
      %29 = vector.broadcast %cst_14 : f32 to vector<8x1xf32>
      %30 = arith.select %23, %28, %29 : vector<8x1xi1>, vector<8x1xf32>
      %c0_15 = arith.constant 0 : index
      %c0_16 = arith.constant 0 : index
      %31 = vector.load %arg10[%c0_15, %c0_16] : memref<8x128xf32, #tpu.memory_space<vmem>>, vector<8x32xf32>
      %32 = vector.broadcast %30 : vector<8x1xf32> to vector<8x32xf32>
      %33 = arith.mulf %31, %32 : vector<8x32xf32>
      %c0_17 = arith.constant 0 : index
      %c0_18 = arith.constant 0 : index
      %34 = vector.load %arg10[%c0_17, %c0_18] : memref<8x128xf32, #tpu.memory_space<vmem>>, vector<8x32xf32>
      tpu.vector_store %arg10[%c0_17, %c0_18], %33 {strides = array<i32>} : memref<8x128xf32, #tpu.memory_space<vmem>>, vector<8x32xf32>,
      %c0_19 = arith.constant 0 : index
      %c1 = arith.constant 1 : index
      %35 = vector.load %arg8[%c0_19, %c1] : memref<8x4xf32, #tpu.memory_space<vmem>>, vector<8x1xf32>
      %cst_20 = arith.constant -5.000000e+08 : f32
      %36 = vector.broadcast %cst_20 : f32 to vector<8x1xf32>
      %37 = arith.cmpf ogt, %35, %36 : vector<8x1xf32>
      %c0_21 = arith.constant 0 : index
      %c1_22 = arith.constant 1 : index
      %38 = vector.load %arg9[%c0_21, %c1_22] : memref<8x4xf32, #tpu.memory_space<vmem>>, vector<8x1xf32>
      %cst_23 = arith.constant 1.000000e-30 : f32
      %39 = vector.broadcast %cst_23 : f32 to vector<8x1xf32>
      %40 = arith.maximumf %38, %39 : vector<8x1xf32>
      %cst_24 = arith.constant 1.000000e+00 : f32
      %41 = vector.broadcast %cst_24 : f32 to vector<8x1xf32>
      %42 = arith.divf %41, %40 : vector<8x1xf32>
      %cst_25 = arith.constant 0.000000e+00 : f32
      %43 = vector.broadcast %cst_25 : f32 to vector<8x1xf32>
      %44 = arith.select %37, %42, %43 : vector<8x1xi1>, vector<8x1xf32>
      %c0_26 = arith.constant 0 : index
      %c32 = arith.constant 32 : index
      %45 = vector.load %arg10[%c0_26, %c32] : memref<8x128xf32, #tpu.memory_space<vmem>>, vector<8x32xf32>
      %46 = vector.broadcast %44 : vector<8x1xf32> to vector<8x32xf32>
      %47 = arith.mulf %45, %46 : vector<8x32xf32>
      %c0_27 = arith.constant 0 : index
      %c32_28 = arith.constant 32 : index
      %48 = vector.load %arg10[%c0_27, %c32_28] : memref<8x128xf32, #tpu.memory_space<vmem>>, vector<8x32xf32>
      tpu.vector_store %arg10[%c0_27, %c32_28], %47 {strides = array<i32>} : memref<8x128xf32, #tpu.memory_space<vmem>>, vector<8x32xf32>,
      %c0_29 = arith.constant 0 : index
      %c2 = arith.constant 2 : index
      %49 = vector.load %arg8[%c0_29, %c2] : memref<8x4xf32, #tpu.memory_space<vmem>>, vector<8x1xf32>
      %cst_30 = arith.constant -5.000000e+08 : f32
      %50 = vector.broadcast %cst_30 : f32 to vector<8x1xf32>
      %51 = arith.cmpf ogt, %49, %50 : vector<8x1xf32>
      %c0_31 = arith.constant 0 : index
      %c2_32 = arith.constant 2 : index
      %52 = vector.load %arg9[%c0_31, %c2_32] : memref<8x4xf32, #tpu.memory_space<vmem>>, vector<8x1xf32>
      %cst_33 = arith.constant 1.000000e-30 : f32
      %53 = vector.broadcast %cst_33 : f32 to vector<8x1xf32>
      %54 = arith.maximumf %52, %53 : vector<8x1xf32>
      %cst_34 = arith.constant 1.000000e+00 : f32
      %55 = vector.broadcast %cst_34 : f32 to vector<8x1xf32>
      %56 = arith.divf %55, %54 : vector<8x1xf32>
      %cst_35 = arith.constant 0.000000e+00 : f32
      %57 = vector.broadcast %cst_35 : f32 to vector<8x1xf32>
      %58 = arith.select %51, %56, %57 : vector<8x1xi1>, vector<8x1xf32>
      %c0_36 = arith.constant 0 : index
      %c64 = arith.constant 64 : index
      %59 = vector.load %arg10[%c0_36, %c64] : memref<8x128xf32, #tpu.memory_space<vmem>>, vector<8x32xf32>
      %60 = vector.broadcast %58 : vector<8x1xf32> to vector<8x32xf32>
      %61 = arith.mulf %59, %60 : vector<8x32xf32>
      %c0_37 = arith.constant 0 : index
      %c64_38 = arith.constant 64 : index
      %62 = vector.load %arg10[%c0_37, %c64_38] : memref<8x128xf32, #tpu.memory_space<vmem>>, vector<8x32xf32>
      tpu.vector_store %arg10[%c0_37, %c64_38], %61 {strides = array<i32>} : memref<8x128xf32, #tpu.memory_space<vmem>>, vector<8x32xf32>,
      %c0_39 = arith.constant 0 : index
      %c3 = arith.constant 3 : index
      %63 = vector.load %arg8[%c0_39, %c3] : memref<8x4xf32, #tpu.memory_space<vmem>>, vector<8x1xf32>
      %cst_40 = arith.constant -5.000000e+08 : f32
      %64 = vector.broadcast %cst_40 : f32 to vector<8x1xf32>
      %65 = arith.cmpf ogt, %63, %64 : vector<8x1xf32>
      %c0_41 = arith.constant 0 : index
      %c3_42 = arith.constant 3 : index
      %66 = vector.load %arg9[%c0_41, %c3_42] : memref<8x4xf32, #tpu.memory_space<vmem>>, vector<8x1xf32>
      %cst_43 = arith.constant 1.000000e-30 : f32
      %67 = vector.broadcast %cst_43 : f32 to vector<8x1xf32>
      %68 = arith.maximumf %66, %67 : vector<8x1xf32>
      %cst_44 = arith.constant 1.000000e+00 : f32
      %69 = vector.broadcast %cst_44 : f32 to vector<8x1xf32>
      %70 = arith.divf %69, %68 : vector<8x1xf32>
      %cst_45 = arith.constant 0.000000e+00 : f32
      %71 = vector.broadcast %cst_45 : f32 to vector<8x1xf32>
      %72 = arith.select %65, %70, %71 : vector<8x1xi1>, vector<8x1xf32>
      %c0_46 = arith.constant 0 : index
      %c96 = arith.constant 96 : index
      %73 = vector.load %arg10[%c0_46, %c96] : memref<8x128xf32, #tpu.memory_space<vmem>>, vector<8x32xf32>
      %74 = vector.broadcast %72 : vector<8x1xf32> to vector<8x32xf32>
      %75 = arith.mulf %73, %74 : vector<8x32xf32>
      %c0_47 = arith.constant 0 : index
      %c96_48 = arith.constant 96 : index
      %76 = vector.load %arg10[%c0_47, %c96_48] : memref<8x128xf32, #tpu.memory_space<vmem>>, vector<8x32xf32>
      tpu.vector_store %arg10[%c0_47, %c96_48], %75 {strides = array<i32>} : memref<8x128xf32, #tpu.memory_space<vmem>>, vector<8x32xf32>,
      %c0_49 = arith.constant 0 : index
      %c0_50 = arith.constant 0 : index
      %77 = vector.load %arg10[%c0_49, %c0_50] : memref<8x128xf32, #tpu.memory_space<vmem>>, vector<8x128xf32>
      %78 = arith.truncf %77 : vector<8x128xf32> to vector<8x128xbf16>
      %c0_51 = arith.constant 0 : index
      %c0_52 = arith.constant 0 : index
      %c0_53 = arith.constant 0 : index
      %79 = vector.load %arg7[%c0_51, %c0_52, %c0_53] : memref<1x8x128xbf16, #tpu.memory_space<vmem>>, vector<1x8x128xbf16>
      %80 = vector.shape_cast %79 : vector<1x8x128xbf16> to vector<8x128xbf16>
      %81 = vector.shape_cast %78 : vector<8x128xbf16> to vector<1x8x128xbf16>
      tpu.vector_store %arg7[%c0_51, %c0_52, %c0_53], %81 {strides = array<i32>} : memref<1x8x128xbf16, #tpu.memory_space<vmem>>, vector<1x8x128xbf16>,
    } else {
    }
    return
  }
  func.func @transform_0(%arg0: i32, %arg1: i32, %arg2: i32) -> (i32, i32, i32) {
    %c0_i32 = arith.constant 0 : i32
    %c0_i32_0 = arith.constant 0 : i32
    return %arg0, %arg1, %c0_i32 : i32, i32, i32
  }
  func.func @transform_1(%arg0: i32, %arg1: i32, %arg2: i32) -> (i32, i32, i32) {
    %c0_i32 = arith.constant 0 : i32
    %c0_i32_0 = arith.constant 0 : i32
    return %arg0, %arg2, %c0_i32 : i32, i32, i32
  }
  func.func @transform_2(%arg0: i32, %arg1: i32, %arg2: i32) -> (i32, i32, i32) {
    %c0_i32 = arith.constant 0 : i32
    %c0_i32_0 = arith.constant 0 : i32
    return %arg0, %arg2, %c0_i32 : i32, i32, i32
  }
  func.func @transform_3(%arg0: i32, %arg1: i32, %arg2: i32) -> (i32, i32, i32) {
    %c0_i32 = arith.constant 0 : i32
    %c0_i32_0 = arith.constant 0 : i32
    return %arg0, %c0_i32, %arg2 : i32, i32, i32
  }
  func.func @transform_4(%arg0: i32, %arg1: i32, %arg2: i32) -> (i32, i32, i32) {
    %c0_i32 = arith.constant 0 : i32
    %c0_i32_0 = arith.constant 0 : i32
    return %arg0, %arg1, %c0_i32 : i32, i32, i32
  }
}

module attributes {stable_mosaic.version = 11 : i64} {
  func.func @kernel(%arg0: i32, %arg1: memref<16x128xbf16, #tpu.memory_space<vmem>>, %arg2: memref<128x128xbf16, #tpu.memory_space<vmem>>, %arg3: memref<1x128xf32, #tpu.memory_space<vmem>>, %arg4: memref<16x128xbf16, #tpu.memory_space<vmem>>) attributes {dimension_semantics = [#tpu.dimension_semantics<parallel>], iteration_bounds = array<i64: 1>, scalar_prefetch = 0 : i64, scratch_operands = 0 : i64, tpu.core_type = #tpu.core_type<tc>, window_params = [{transform_indices = @transform_0, window_bounds = array<i64: 16, 128>}, {pipeline_mode = #tpu.pipeline_mode<synchronous>, transform_indices = @transform_1, window_bounds = array<i64: 128, 128>}, {pipeline_mode = #tpu.pipeline_mode<synchronous>, transform_indices = @transform_2, window_bounds = array<i64: 1, 128>}, {transform_indices = @transform_3, window_bounds = array<i64: 16, 128>}]} {
    %c0 = arith.constant 0 : index
    %c0_0 = arith.constant 0 : index
    %0 = vector.load %arg1[%c0, %c0_0] : memref<16x128xbf16, #tpu.memory_space<vmem>>, vector<16x128xbf16>
    %c0_1 = arith.constant 0 : index
    %c0_2 = arith.constant 0 : index
    %1 = vector.load %arg2[%c0_1, %c0_2] : memref<128x128xbf16, #tpu.memory_space<vmem>>, vector<128x128xbf16>
    %cst = arith.constant dense<0.000000e+00> : vector<16x128xf32>
    %2 = tpu.matmul %0, %1, %cst {dimension_numbers = #tpu.dot_dimension_numbers<[1], [0], [0], [1], [0, 0, 1, 1], [], []>} : vector<16x128xbf16>, vector<128x128xbf16>, vector<16x128xf32> -> vector<16x128xf32>
    %c0_3 = arith.constant 0 : index
    %c0_4 = arith.constant 0 : index
    %3 = vector.load %arg3[%c0_3, %c0_4] : memref<1x128xf32, #tpu.memory_space<vmem>>, vector<1x128xf32>
    %4 = vector.broadcast %3 : vector<1x128xf32> to vector<16x128xf32>
    %5 = arith.addf %2, %4 : vector<16x128xf32>
    %6 = arith.truncf %5 : vector<16x128xf32> to vector<16x128xbf16>
    %c0_5 = arith.constant 0 : index
    %c0_6 = arith.constant 0 : index
    %7 = vector.load %arg4[%c0_5, %c0_6] : memref<16x128xbf16, #tpu.memory_space<vmem>>, vector<16x128xbf16>
    tpu.vector_store %arg4[%c0_5, %c0_6], %6 {strides = array<i32>} : memref<16x128xbf16, #tpu.memory_space<vmem>>, vector<16x128xbf16>,
    return
  }
  func.func @transform_0(%arg0: i32) -> (i32, i32) {
    %c0_i32 = arith.constant 0 : i32
    %c0_i32_0 = arith.constant 0 : i32
    return %arg0, %c0_i32 : i32, i32
  }
  func.func @transform_1(%arg0: i32) -> (i32, i32) {
    %c0_i32 = arith.constant 0 : i32
    %c0_i32_0 = arith.constant 0 : i32
    %c0_i32_1 = arith.constant 0 : i32
    return %c0_i32, %c0_i32_0 : i32, i32
  }
  func.func @transform_2(%arg0: i32) -> (i32, i32) {
    %c0_i32 = arith.constant 0 : i32
    %c0_i32_0 = arith.constant 0 : i32
    %c0_i32_1 = arith.constant 0 : i32
    return %c0_i32, %c0_i32_0 : i32, i32
  }
  func.func @transform_3(%arg0: i32) -> (i32, i32) {
    %c0_i32 = arith.constant 0 : i32
    %c0_i32_0 = arith.constant 0 : i32
    return %arg0, %c0_i32 : i32, i32
  }
}

module attributes {stable_mosaic.version = 11 : i64} {
  func.func @_flash_attn_kernel(%arg0: i32, %arg1: i32, %arg2: i32, %arg3: memref<1x8x128xbf16, #tpu.memory_space<vmem>>, %arg4: memref<1x10x128xbf16, #tpu.memory_space<vmem>>, %arg5: memref<1x10x128xbf16, #tpu.memory_space<vmem>>, %arg6: memref<1x1x10xf32, #tpu.memory_space<vmem>>, %arg7: memref<1x8x128xbf16, #tpu.memory_space<vmem>>, %arg8: memref<8x4xf32, #tpu.memory_space<vmem>>, %arg9: memref<8x4xf32, #tpu.memory_space<vmem>>, %arg10: memref<8x128xf32, #tpu.memory_space<vmem>>) attributes {dimension_semantics = [#tpu.dimension_semantics<parallel>, #tpu.dimension_semantics<parallel>, #tpu.dimension_semantics<arbitrary>], iteration_bounds = array<i64: 2, 1, 1>, scalar_prefetch = 0 : i64, scratch_operands = 3 : i64, tpu.core_type = #tpu.core_type<tc>, window_params = [{transform_indices = @transform_0, window_bounds = array<i64: 1, 8, 128>}, {transform_indices = @transform_1, window_bounds = array<i64: 1, 10, 128>}, {transform_indices = @transform_2, window_bounds = array<i64: 1, 10, 128>}, {transform_indices = @transform_3, window_bounds = array<i64: 1, 1, 10>}, {transform_indices = @transform_4, window_bounds = array<i64: 1, 8, 128>}]} {
    %c0_i32 = arith.constant 0 : i32
    %0 = arith.cmpi eq, %arg2, %c0_i32 : i32
    %1 = arith.extui %0 : i1 to i32
    %c0_i32_0 = arith.constant 0 : i32
    %2 = arith.cmpi ne, %1, %c0_i32_0 : i32
    scf.if %2 {
      %cst_71 = arith.constant -1.000000e+09 : f32
      %130 = vector.broadcast %cst_71 : f32 to vector<8x4xf32>
      %c0_72 = arith.constant 0 : index
      %c0_73 = arith.constant 0 : index
      %131 = vector.load %arg8[%c0_72, %c0_73] : memref<8x4xf32, #tpu.memory_space<vmem>>, vector<8x4xf32>
      tpu.vector_store %arg8[%c0_72, %c0_73], %130 {strides = array<i32>} : memref<8x4xf32, #tpu.memory_space<vmem>>, vector<8x4xf32>,
      %cst_74 = arith.constant 0.000000e+00 : f32
      %132 = vector.broadcast %cst_74 : f32 to vector<8x4xf32>
      %c0_75 = arith.constant 0 : index
      %c0_76 = arith.constant 0 : index
      %133 = vector.load %arg9[%c0_75, %c0_76] : memref<8x4xf32, #tpu.memory_space<vmem>>, vector<8x4xf32>
      tpu.vector_store %arg9[%c0_75, %c0_76], %132 {strides = array<i32>} : memref<8x4xf32, #tpu.memory_space<vmem>>, vector<8x4xf32>,
      %cst_77 = arith.constant 0.000000e+00 : f32
      %134 = vector.broadcast %cst_77 : f32 to vector<8x128xf32>
      %c0_78 = arith.constant 0 : index
      %c0_79 = arith.constant 0 : index
      %135 = vector.load %arg10[%c0_78, %c0_79] : memref<8x128xf32, #tpu.memory_space<vmem>>, vector<8x128xf32>
      tpu.vector_store %arg10[%c0_78, %c0_79], %134 {strides = array<i32>} : memref<8x128xf32, #tpu.memory_space<vmem>>, vector<8x128xf32>,
    } else {
    }
    %c0 = arith.constant 0 : index
    %c0_1 = arith.constant 0 : index
    %c0_2 = arith.constant 0 : index
    %3 = vector.load %arg3[%c0, %c0_1, %c0_2] : memref<1x8x128xbf16, #tpu.memory_space<vmem>>, vector<1x8x128xbf16>
    %4 = vector.shape_cast %3 : vector<1x8x128xbf16> to vector<8x128xbf16>
    %c0_3 = arith.constant 0 : index
    %c0_4 = arith.constant 0 : index
    %c0_5 = arith.constant 0 : index
    %5 = vector.load %arg4[%c0_3, %c0_4, %c0_5] : memref<1x10x128xbf16, #tpu.memory_space<vmem>>, vector<1x10x128xbf16>
    %6 = vector.shape_cast %5 : vector<1x10x128xbf16> to vector<10x128xbf16>
    %c0_6 = arith.constant 0 : index
    %c0_7 = arith.constant 0 : index
    %c0_8 = arith.constant 0 : index
    %7 = vector.load %arg5[%c0_6, %c0_7, %c0_8] : memref<1x10x128xbf16, #tpu.memory_space<vmem>>, vector<1x10x128xbf16>
    %8 = vector.shape_cast %7 : vector<1x10x128xbf16> to vector<10x128xbf16>
    %c0_9 = arith.constant 0 : index
    %c0_10 = arith.constant 0 : index
    %c0_11 = arith.constant 0 : index
    %9 = vector.load %arg6[%c0_9, %c0_10, %c0_11] : memref<1x1x10xf32, #tpu.memory_space<vmem>>, vector<1x1x10xf32>
    %10 = vector.shape_cast %9 : vector<1x1x10xf32> to vector<1x10xf32>
    %11 = vector.extract_strided_slice %4 {offsets = [0, 0], sizes = [8, 32], strides = [1, 1]} : vector<8x128xbf16> to vector<8x32xbf16>
    %12 = vector.extract_strided_slice %6 {offsets = [0, 0], sizes = [10, 32], strides = [1, 1]} : vector<10x128xbf16> to vector<10x32xbf16>
    %cst = arith.constant dense<0.000000e+00> : vector<8x10xf32>
    %13 = tpu.matmul %11, %12, %cst {dimension_numbers = #tpu.dot_dimension_numbers<[1], [1], [0], [0], [0, 0, 1, 0], [], []>} : vector<8x32xbf16>, vector<10x32xbf16>, vector<8x10xf32> -> vector<8x10xf32>
    %14 = vector.broadcast %10 : vector<1x10xf32> to vector<8x10xf32>
    %15 = arith.addf %13, %14 : vector<8x10xf32>
    %c0_12 = arith.constant 0 : index
    %c0_13 = arith.constant 0 : index
    %16 = vector.load %arg8[%c0_12, %c0_13] : memref<8x4xf32, #tpu.memory_space<vmem>>, vector<8x1xf32>
    %cst_14 = arith.constant dense<0xFF800000> : vector<8xf32>
    %17 = vector.multi_reduction <maximumf>, %15, %cst_14 [1] : vector<8x10xf32> to vector<8xf32>
    %18 = vector.shape_cast %17 : vector<8xf32> to vector<8x1xf32>
    %19 = arith.maximumf %16, %18 : vector<8x1xf32>
    %20 = arith.subf %16, %19 : vector<8x1xf32>
    %21 = math.exp %20 : vector<8x1xf32>
    %22 = vector.broadcast %19 : vector<8x1xf32> to vector<8x10xf32>
    %23 = arith.subf %15, %22 : vector<8x10xf32>
    %24 = math.exp %23 : vector<8x10xf32>
    %c0_15 = arith.constant 0 : index
    %c0_16 = arith.constant 0 : index
    %25 = vector.load %arg9[%c0_15, %c0_16] : memref<8x4xf32, #tpu.memory_space<vmem>>, vector<8x1xf32>
    %26 = arith.mulf %21, %25 : vector<8x1xf32>
    %cst_17 = arith.constant dense<0.000000e+00> : vector<8xf32>
    %27 = vector.multi_reduction <add>, %24, %cst_17 [1] : vector<8x10xf32> to vector<8xf32>
    %28 = vector.shape_cast %27 : vector<8xf32> to vector<8x1xf32>
    %29 = arith.addf %26, %28 : vector<8x1xf32>
    %c0_18 = arith.constant 0 : index
    %c0_19 = arith.constant 0 : index
    %30 = vector.load %arg9[%c0_18, %c0_19] : memref<8x4xf32, #tpu.memory_space<vmem>>, vector<8x1xf32>
    tpu.vector_store %arg9[%c0_18, %c0_19], %29 {strides = array<i32>} : memref<8x4xf32, #tpu.memory_space<vmem>>, vector<8x1xf32>,
    %c0_20 = arith.constant 0 : index
    %c0_21 = arith.constant 0 : index
    %31 = vector.load %arg10[%c0_20, %c0_21] : memref<8x128xf32, #tpu.memory_space<vmem>>, vector<8x32xf32>
    %32 = vector.broadcast %21 : vector<8x1xf32> to vector<8x32xf32>
    %33 = arith.mulf %32, %31 : vector<8x32xf32>
    %34 = arith.truncf %24 : vector<8x10xf32> to vector<8x10xbf16>
    %35 = vector.extract_strided_slice %8 {offsets = [0, 0], sizes = [10, 32], strides = [1, 1]} : vector<10x128xbf16> to vector<10x32xbf16>
    %cst_22 = arith.constant dense<0.000000e+00> : vector<8x32xf32>
    %36 = tpu.matmul %34, %35, %cst_22 {dimension_numbers = #tpu.dot_dimension_numbers<[1], [0], [0], [1], [0, 0, 1, 1], [], []>} : vector<8x10xbf16>, vector<10x32xbf16>, vector<8x32xf32> -> vector<8x32xf32>
    %37 = arith.addf %33, %36 : vector<8x32xf32>
    %c0_23 = arith.constant 0 : index
    %c0_24 = arith.constant 0 : index
    %38 = vector.load %arg10[%c0_23, %c0_24] : memref<8x128xf32, #tpu.memory_space<vmem>>, vector<8x32xf32>
    tpu.vector_store %arg10[%c0_23, %c0_24], %37 {strides = array<i32>} : memref<8x128xf32, #tpu.memory_space<vmem>>, vector<8x32xf32>,
    %c0_25 = arith.constant 0 : index
    %c0_26 = arith.constant 0 : index
    %39 = vector.load %arg8[%c0_25, %c0_26] : memref<8x4xf32, #tpu.memory_space<vmem>>, vector<8x1xf32>
    tpu.vector_store %arg8[%c0_25, %c0_26], %19 {strides = array<i32>} : memref<8x4xf32, #tpu.memory_space<vmem>>, vector<8x1xf32>,
    %40 = vector.extract_strided_slice %4 {offsets = [0, 32], sizes = [8, 32], strides = [1, 1]} : vector<8x128xbf16> to vector<8x32xbf16>
    %41 = vector.extract_strided_slice %6 {offsets = [0, 32], sizes = [10, 32], strides = [1, 1]} : vector<10x128xbf16> to vector<10x32xbf16>
    %cst_27 = arith.constant dense<0.000000e+00> : vector<8x10xf32>
    %42 = tpu.matmul %40, %41, %cst_27 {dimension_numbers = #tpu.dot_dimension_numbers<[1], [1], [0], [0], [0, 0, 1, 0], [], []>} : vector<8x32xbf16>, vector<10x32xbf16>, vector<8x10xf32> -> vector<8x10xf32>
    %43 = vector.broadcast %10 : vector<1x10xf32> to vector<8x10xf32>
    %44 = arith.addf %42, %43 : vector<8x10xf32>
    %c0_28 = arith.constant 0 : index
    %c1 = arith.constant 1 : index
    %45 = vector.load %arg8[%c0_28, %c1] : memref<8x4xf32, #tpu.memory_space<vmem>>, vector<8x1xf32>
    %cst_29 = arith.constant dense<0xFF800000> : vector<8xf32>
    %46 = vector.multi_reduction <maximumf>, %44, %cst_29 [1] : vector<8x10xf32> to vector<8xf32>
    %47 = vector.shape_cast %46 : vector<8xf32> to vector<8x1xf32>
    %48 = arith.maximumf %45, %47 : vector<8x1xf32>
    %49 = arith.subf %45, %48 : vector<8x1xf32>
    %50 = math.exp %49 : vector<8x1xf32>
    %51 = vector.broadcast %48 : vector<8x1xf32> to vector<8x10xf32>
    %52 = arith.subf %44, %51 : vector<8x10xf32>
    %53 = math.exp %52 : vector<8x10xf32>
    %c0_30 = arith.constant 0 : index
    %c1_31 = arith.constant 1 : index
    %54 = vector.load %arg9[%c0_30, %c1_31] : memref<8x4xf32, #tpu.memory_space<vmem>>, vector<8x1xf32>
    %55 = arith.mulf %50, %54 : vector<8x1xf32>
    %cst_32 = arith.constant dense<0.000000e+00> : vector<8xf32>
    %56 = vector.multi_reduction <add>, %53, %cst_32 [1] : vector<8x10xf32> to vector<8xf32>
    %57 = vector.shape_cast %56 : vector<8xf32> to vector<8x1xf32>
    %58 = arith.addf %55, %57 : vector<8x1xf32>
    %c0_33 = arith.constant 0 : index
    %c1_34 = arith.constant 1 : index
    %59 = vector.load %arg9[%c0_33, %c1_34] : memref<8x4xf32, #tpu.memory_space<vmem>>, vector<8x1xf32>
    tpu.vector_store %arg9[%c0_33, %c1_34], %58 {strides = array<i32>} : memref<8x4xf32, #tpu.memory_space<vmem>>, vector<8x1xf32>,
    %c0_35 = arith.constant 0 : index
    %c32 = arith.constant 32 : index
    %60 = vector.load %arg10[%c0_35, %c32] : memref<8x128xf32, #tpu.memory_space<vmem>>, vector<8x32xf32>
    %61 = vector.broadcast %50 : vector<8x1xf32> to vector<8x32xf32>
    %62 = arith.mulf %61, %60 : vector<8x32xf32>
    %63 = arith.truncf %53 : vector<8x10xf32> to vector<8x10xbf16>
    %64 = vector.extract_strided_slice %8 {offsets = [0, 32], sizes = [10, 32], strides = [1, 1]} : vector<10x128xbf16> to vector<10x32xbf16>
    %cst_36 = arith.constant dense<0.000000e+00> : vector<8x32xf32>
    %65 = tpu.matmul %63, %64, %cst_36 {dimension_numbers = #tpu.dot_dimension_numbers<[1], [0], [0], [1], [0, 0, 1, 1], [], []>} : vector<8x10xbf16>, vector<10x32xbf16>, vector<8x32xf32> -> vector<8x32xf32>
    %66 = arith.addf %62, %65 : vector<8x32xf32>
    %c0_37 = arith.constant 0 : index
    %c32_38 = arith.constant 32 : index
    %67 = vector.load %arg10[%c0_37, %c32_38] : memref<8x128xf32, #tpu.memory_space<vmem>>, vector<8x32xf32>
    tpu.vector_store %arg10[%c0_37, %c32_38], %66 {strides = array<i32>} : memref<8x128xf32, #tpu.memory_space<vmem>>, vector<8x32xf32>,
    %c0_39 = arith.constant 0 : index
    %c1_40 = arith.constant 1 : index
    %68 = vector.load %arg8[%c0_39, %c1_40] : memref<8x4xf32, #tpu.memory_space<vmem>>, vector<8x1xf32>
    tpu.vector_store %arg8[%c0_39, %c1_40], %48 {strides = array<i32>} : memref<8x4xf32, #tpu.memory_space<vmem>>, vector<8x1xf32>,
    %69 = vector.extract_strided_slice %4 {offsets = [0, 64], sizes = [8, 32], strides = [1, 1]} : vector<8x128xbf16> to vector<8x32xbf16>
    %70 = vector.extract_strided_slice %6 {offsets = [0, 64], sizes = [10, 32], strides = [1, 1]} : vector<10x128xbf16> to vector<10x32xbf16>
    %cst_41 = arith.constant dense<0.000000e+00> : vector<8x10xf32>
    %71 = tpu.matmul %69, %70, %cst_41 {dimension_numbers = #tpu.dot_dimension_numbers<[1], [1], [0], [0], [0, 0, 1, 0], [], []>} : vector<8x32xbf16>, vector<10x32xbf16>, vector<8x10xf32> -> vector<8x10xf32>
    %72 = vector.broadcast %10 : vector<1x10xf32> to vector<8x10xf32>
    %73 = arith.addf %71, %72 : vector<8x10xf32>
    %c0_42 = arith.constant 0 : index
    %c2 = arith.constant 2 : index
    %74 = vector.load %arg8[%c0_42, %c2] : memref<8x4xf32, #tpu.memory_space<vmem>>, vector<8x1xf32>
    %cst_43 = arith.constant dense<0xFF800000> : vector<8xf32>
    %75 = vector.multi_reduction <maximumf>, %73, %cst_43 [1] : vector<8x10xf32> to vector<8xf32>
    %76 = vector.shape_cast %75 : vector<8xf32> to vector<8x1xf32>
    %77 = arith.maximumf %74, %76 : vector<8x1xf32>
    %78 = arith.subf %74, %77 : vector<8x1xf32>
    %79 = math.exp %78 : vector<8x1xf32>
    %80 = vector.broadcast %77 : vector<8x1xf32> to vector<8x10xf32>
    %81 = arith.subf %73, %80 : vector<8x10xf32>
    %82 = math.exp %81 : vector<8x10xf32>
    %c0_44 = arith.constant 0 : index
    %c2_45 = arith.constant 2 : index
    %83 = vector.load %arg9[%c0_44, %c2_45] : memref<8x4xf32, #tpu.memory_space<vmem>>, vector<8x1xf32>
    %84 = arith.mulf %79, %83 : vector<8x1xf32>
    %cst_46 = arith.constant dense<0.000000e+00> : vector<8xf32>
    %85 = vector.multi_reduction <add>, %82, %cst_46 [1] : vector<8x10xf32> to vector<8xf32>
    %86 = vector.shape_cast %85 : vector<8xf32> to vector<8x1xf32>
    %87 = arith.addf %84, %86 : vector<8x1xf32>
    %c0_47 = arith.constant 0 : index
    %c2_48 = arith.constant 2 : index
    %88 = vector.load %arg9[%c0_47, %c2_48] : memref<8x4xf32, #tpu.memory_space<vmem>>, vector<8x1xf32>
    tpu.vector_store %arg9[%c0_47, %c2_48], %87 {strides = array<i32>} : memref<8x4xf32, #tpu.memory_space<vmem>>, vector<8x1xf32>,
    %c0_49 = arith.constant 0 : index
    %c64 = arith.constant 64 : index
    %89 = vector.load %arg10[%c0_49, %c64] : memref<8x128xf32, #tpu.memory_space<vmem>>, vector<8x32xf32>
    %90 = vector.broadcast %79 : vector<8x1xf32> to vector<8x32xf32>
    %91 = arith.mulf %90, %89 : vector<8x32xf32>
    %92 = arith.truncf %82 : vector<8x10xf32> to vector<8x10xbf16>
    %93 = vector.extract_strided_slice %8 {offsets = [0, 64], sizes = [10, 32], strides = [1, 1]} : vector<10x128xbf16> to vector<10x32xbf16>
    %cst_50 = arith.constant dense<0.000000e+00> : vector<8x32xf32>
    %94 = tpu.matmul %92, %93, %cst_50 {dimension_numbers = #tpu.dot_dimension_numbers<[1], [0], [0], [1], [0, 0, 1, 1], [], []>} : vector<8x10xbf16>, vector<10x32xbf16>, vector<8x32xf32> -> vector<8x32xf32>
    %95 = arith.addf %91, %94 : vector<8x32xf32>
    %c0_51 = arith.constant 0 : index
    %c64_52 = arith.constant 64 : index
    %96 = vector.load %arg10[%c0_51, %c64_52] : memref<8x128xf32, #tpu.memory_space<vmem>>, vector<8x32xf32>
    tpu.vector_store %arg10[%c0_51, %c64_52], %95 {strides = array<i32>} : memref<8x128xf32, #tpu.memory_space<vmem>>, vector<8x32xf32>,
    %c0_53 = arith.constant 0 : index
    %c2_54 = arith.constant 2 : index
    %97 = vector.load %arg8[%c0_53, %c2_54] : memref<8x4xf32, #tpu.memory_space<vmem>>, vector<8x1xf32>
    tpu.vector_store %arg8[%c0_53, %c2_54], %77 {strides = array<i32>} : memref<8x4xf32, #tpu.memory_space<vmem>>, vector<8x1xf32>,
    %98 = vector.extract_strided_slice %4 {offsets = [0, 96], sizes = [8, 32], strides = [1, 1]} : vector<8x128xbf16> to vector<8x32xbf16>
    %99 = vector.extract_strided_slice %6 {offsets = [0, 96], sizes = [10, 32], strides = [1, 1]} : vector<10x128xbf16> to vector<10x32xbf16>
    %cst_55 = arith.constant dense<0.000000e+00> : vector<8x10xf32>
    %100 = tpu.matmul %98, %99, %cst_55 {dimension_numbers = #tpu.dot_dimension_numbers<[1], [1], [0], [0], [0, 0, 1, 0], [], []>} : vector<8x32xbf16>, vector<10x32xbf16>, vector<8x10xf32> -> vector<8x10xf32>
    %101 = vector.broadcast %10 : vector<1x10xf32> to vector<8x10xf32>
    %102 = arith.addf %100, %101 : vector<8x10xf32>
    %c0_56 = arith.constant 0 : index
    %c3 = arith.constant 3 : index
    %103 = vector.load %arg8[%c0_56, %c3] : memref<8x4xf32, #tpu.memory_space<vmem>>, vector<8x1xf32>
    %cst_57 = arith.constant dense<0xFF800000> : vector<8xf32>
    %104 = vector.multi_reduction <maximumf>, %102, %cst_57 [1] : vector<8x10xf32> to vector<8xf32>
    %105 = vector.shape_cast %104 : vector<8xf32> to vector<8x1xf32>
    %106 = arith.maximumf %103, %105 : vector<8x1xf32>
    %107 = arith.subf %103, %106 : vector<8x1xf32>
    %108 = math.exp %107 : vector<8x1xf32>
    %109 = vector.broadcast %106 : vector<8x1xf32> to vector<8x10xf32>
    %110 = arith.subf %102, %109 : vector<8x10xf32>
    %111 = math.exp %110 : vector<8x10xf32>
    %c0_58 = arith.constant 0 : index
    %c3_59 = arith.constant 3 : index
    %112 = vector.load %arg9[%c0_58, %c3_59] : memref<8x4xf32, #tpu.memory_space<vmem>>, vector<8x1xf32>
    %113 = arith.mulf %108, %112 : vector<8x1xf32>
    %cst_60 = arith.constant dense<0.000000e+00> : vector<8xf32>
    %114 = vector.multi_reduction <add>, %111, %cst_60 [1] : vector<8x10xf32> to vector<8xf32>
    %115 = vector.shape_cast %114 : vector<8xf32> to vector<8x1xf32>
    %116 = arith.addf %113, %115 : vector<8x1xf32>
    %c0_61 = arith.constant 0 : index
    %c3_62 = arith.constant 3 : index
    %117 = vector.load %arg9[%c0_61, %c3_62] : memref<8x4xf32, #tpu.memory_space<vmem>>, vector<8x1xf32>
    tpu.vector_store %arg9[%c0_61, %c3_62], %116 {strides = array<i32>} : memref<8x4xf32, #tpu.memory_space<vmem>>, vector<8x1xf32>,
    %c0_63 = arith.constant 0 : index
    %c96 = arith.constant 96 : index
    %118 = vector.load %arg10[%c0_63, %c96] : memref<8x128xf32, #tpu.memory_space<vmem>>, vector<8x32xf32>
    %119 = vector.broadcast %108 : vector<8x1xf32> to vector<8x32xf32>
    %120 = arith.mulf %119, %118 : vector<8x32xf32>
    %121 = arith.truncf %111 : vector<8x10xf32> to vector<8x10xbf16>
    %122 = vector.extract_strided_slice %8 {offsets = [0, 96], sizes = [10, 32], strides = [1, 1]} : vector<10x128xbf16> to vector<10x32xbf16>
    %cst_64 = arith.constant dense<0.000000e+00> : vector<8x32xf32>
    %123 = tpu.matmul %121, %122, %cst_64 {dimension_numbers = #tpu.dot_dimension_numbers<[1], [0], [0], [1], [0, 0, 1, 1], [], []>} : vector<8x10xbf16>, vector<10x32xbf16>, vector<8x32xf32> -> vector<8x32xf32>
    %124 = arith.addf %120, %123 : vector<8x32xf32>
    %c0_65 = arith.constant 0 : index
    %c96_66 = arith.constant 96 : index
    %125 = vector.load %arg10[%c0_65, %c96_66] : memref<8x128xf32, #tpu.memory_space<vmem>>, vector<8x32xf32>
    tpu.vector_store %arg10[%c0_65, %c96_66], %124 {strides = array<i32>} : memref<8x128xf32, #tpu.memory_space<vmem>>, vector<8x32xf32>,
    %c0_67 = arith.constant 0 : index
    %c3_68 = arith.constant 3 : index
    %126 = vector.load %arg8[%c0_67, %c3_68] : memref<8x4xf32, #tpu.memory_space<vmem>>, vector<8x1xf32>
    tpu.vector_store %arg8[%c0_67, %c3_68], %106 {strides = array<i32>} : memref<8x4xf32, #tpu.memory_space<vmem>>, vector<8x1xf32>,
    %c0_i32_69 = arith.constant 0 : i32
    %127 = arith.cmpi eq, %arg2, %c0_i32_69 : i32
    %128 = arith.extui %127 : i1 to i32
    %c0_i32_70 = arith.constant 0 : i32
    %129 = arith.cmpi ne, %128, %c0_i32_70 : i32
    scf.if %129 {
      %c0_71 = arith.constant 0 : index
      %c0_72 = arith.constant 0 : index
      %130 = vector.load %arg8[%c0_71, %c0_72] : memref<8x4xf32, #tpu.memory_space<vmem>>, vector<8x1xf32>
      %cst_73 = arith.constant -5.000000e+08 : f32
      %131 = vector.broadcast %cst_73 : f32 to vector<8x1xf32>
      %132 = arith.cmpf ogt, %130, %131 : vector<8x1xf32>
      %c0_74 = arith.constant 0 : index
      %c0_75 = arith.constant 0 : index
      %133 = vector.load %arg9[%c0_74, %c0_75] : memref<8x4xf32, #tpu.memory_space<vmem>>, vector<8x1xf32>
      %cst_76 = arith.constant 1.000000e-30 : f32
      %134 = vector.broadcast %cst_76 : f32 to vector<8x1xf32>
      %135 = arith.maximumf %133, %134 : vector<8x1xf32>
      %cst_77 = arith.constant 1.000000e+00 : f32
      %136 = vector.broadcast %cst_77 : f32 to vector<8x1xf32>
      %137 = arith.divf %136, %135 : vector<8x1xf32>
      %cst_78 = arith.constant 0.000000e+00 : f32
      %138 = vector.broadcast %cst_78 : f32 to vector<8x1xf32>
      %139 = arith.select %132, %137, %138 : vector<8x1xi1>, vector<8x1xf32>
      %c0_79 = arith.constant 0 : index
      %c0_80 = arith.constant 0 : index
      %140 = vector.load %arg10[%c0_79, %c0_80] : memref<8x128xf32, #tpu.memory_space<vmem>>, vector<8x32xf32>
      %141 = vector.broadcast %139 : vector<8x1xf32> to vector<8x32xf32>
      %142 = arith.mulf %140, %141 : vector<8x32xf32>
      %c0_81 = arith.constant 0 : index
      %c0_82 = arith.constant 0 : index
      %143 = vector.load %arg10[%c0_81, %c0_82] : memref<8x128xf32, #tpu.memory_space<vmem>>, vector<8x32xf32>
      tpu.vector_store %arg10[%c0_81, %c0_82], %142 {strides = array<i32>} : memref<8x128xf32, #tpu.memory_space<vmem>>, vector<8x32xf32>,
      %c0_83 = arith.constant 0 : index
      %c1_84 = arith.constant 1 : index
      %144 = vector.load %arg8[%c0_83, %c1_84] : memref<8x4xf32, #tpu.memory_space<vmem>>, vector<8x1xf32>
      %cst_85 = arith.constant -5.000000e+08 : f32
      %145 = vector.broadcast %cst_85 : f32 to vector<8x1xf32>
      %146 = arith.cmpf ogt, %144, %145 : vector<8x1xf32>
      %c0_86 = arith.constant 0 : index
      %c1_87 = arith.constant 1 : index
      %147 = vector.load %arg9[%c0_86, %c1_87] : memref<8x4xf32, #tpu.memory_space<vmem>>, vector<8x1xf32>
      %cst_88 = arith.constant 1.000000e-30 : f32
      %148 = vector.broadcast %cst_88 : f32 to vector<8x1xf32>
      %149 = arith.maximumf %147, %148 : vector<8x1xf32>
      %cst_89 = arith.constant 1.000000e+00 : f32
      %150 = vector.broadcast %cst_89 : f32 to vector<8x1xf32>
      %151 = arith.divf %150, %149 : vector<8x1xf32>
      %cst_90 = arith.constant 0.000000e+00 : f32
      %152 = vector.broadcast %cst_90 : f32 to vector<8x1xf32>
      %153 = arith.select %146, %151, %152 : vector<8x1xi1>, vector<8x1xf32>
      %c0_91 = arith.constant 0 : index
      %c32_92 = arith.constant 32 : index
      %154 = vector.load %arg10[%c0_91, %c32_92] : memref<8x128xf32, #tpu.memory_space<vmem>>, vector<8x32xf32>
      %155 = vector.broadcast %153 : vector<8x1xf32> to vector<8x32xf32>
      %156 = arith.mulf %154, %155 : vector<8x32xf32>
      %c0_93 = arith.constant 0 : index
      %c32_94 = arith.constant 32 : index
      %157 = vector.load %arg10[%c0_93, %c32_94] : memref<8x128xf32, #tpu.memory_space<vmem>>, vector<8x32xf32>
      tpu.vector_store %arg10[%c0_93, %c32_94], %156 {strides = array<i32>} : memref<8x128xf32, #tpu.memory_space<vmem>>, vector<8x32xf32>,
      %c0_95 = arith.constant 0 : index
      %c2_96 = arith.constant 2 : index
      %158 = vector.load %arg8[%c0_95, %c2_96] : memref<8x4xf32, #tpu.memory_space<vmem>>, vector<8x1xf32>
      %cst_97 = arith.constant -5.000000e+08 : f32
      %159 = vector.broadcast %cst_97 : f32 to vector<8x1xf32>
      %160 = arith.cmpf ogt, %158, %159 : vector<8x1xf32>
      %c0_98 = arith.constant 0 : index
      %c2_99 = arith.constant 2 : index
      %161 = vector.load %arg9[%c0_98, %c2_99] : memref<8x4xf32, #tpu.memory_space<vmem>>, vector<8x1xf32>
      %cst_100 = arith.constant 1.000000e-30 : f32
      %162 = vector.broadcast %cst_100 : f32 to vector<8x1xf32>
      %163 = arith.maximumf %161, %162 : vector<8x1xf32>
      %cst_101 = arith.constant 1.000000e+00 : f32
      %164 = vector.broadcast %cst_101 : f32 to vector<8x1xf32>
      %165 = arith.divf %164, %163 : vector<8x1xf32>
      %cst_102 = arith.constant 0.000000e+00 : f32
      %166 = vector.broadcast %cst_102 : f32 to vector<8x1xf32>
      %167 = arith.select %160, %165, %166 : vector<8x1xi1>, vector<8x1xf32>
      %c0_103 = arith.constant 0 : index
      %c64_104 = arith.constant 64 : index
      %168 = vector.load %arg10[%c0_103, %c64_104] : memref<8x128xf32, #tpu.memory_space<vmem>>, vector<8x32xf32>
      %169 = vector.broadcast %167 : vector<8x1xf32> to vector<8x32xf32>
      %170 = arith.mulf %168, %169 : vector<8x32xf32>
      %c0_105 = arith.constant 0 : index
      %c64_106 = arith.constant 64 : index
      %171 = vector.load %arg10[%c0_105, %c64_106] : memref<8x128xf32, #tpu.memory_space<vmem>>, vector<8x32xf32>
      tpu.vector_store %arg10[%c0_105, %c64_106], %170 {strides = array<i32>} : memref<8x128xf32, #tpu.memory_space<vmem>>, vector<8x32xf32>,
      %c0_107 = arith.constant 0 : index
      %c3_108 = arith.constant 3 : index
      %172 = vector.load %arg8[%c0_107, %c3_108] : memref<8x4xf32, #tpu.memory_space<vmem>>, vector<8x1xf32>
      %cst_109 = arith.constant -5.000000e+08 : f32
      %173 = vector.broadcast %cst_109 : f32 to vector<8x1xf32>
      %174 = arith.cmpf ogt, %172, %173 : vector<8x1xf32>
      %c0_110 = arith.constant 0 : index
      %c3_111 = arith.constant 3 : index
      %175 = vector.load %arg9[%c0_110, %c3_111] : memref<8x4xf32, #tpu.memory_space<vmem>>, vector<8x1xf32>
      %cst_112 = arith.constant 1.000000e-30 : f32
      %176 = vector.broadcast %cst_112 : f32 to vector<8x1xf32>
      %177 = arith.maximumf %175, %176 : vector<8x1xf32>
      %cst_113 = arith.constant 1.000000e+00 : f32
      %178 = vector.broadcast %cst_113 : f32 to vector<8x1xf32>
      %179 = arith.divf %178, %177 : vector<8x1xf32>
      %cst_114 = arith.constant 0.000000e+00 : f32
      %180 = vector.broadcast %cst_114 : f32 to vector<8x1xf32>
      %181 = arith.select %174, %179, %180 : vector<8x1xi1>, vector<8x1xf32>
      %c0_115 = arith.constant 0 : index
      %c96_116 = arith.constant 96 : index
      %182 = vector.load %arg10[%c0_115, %c96_116] : memref<8x128xf32, #tpu.memory_space<vmem>>, vector<8x32xf32>
      %183 = vector.broadcast %181 : vector<8x1xf32> to vector<8x32xf32>
      %184 = arith.mulf %182, %183 : vector<8x32xf32>
      %c0_117 = arith.constant 0 : index
      %c96_118 = arith.constant 96 : index
      %185 = vector.load %arg10[%c0_117, %c96_118] : memref<8x128xf32, #tpu.memory_space<vmem>>, vector<8x32xf32>
      tpu.vector_store %arg10[%c0_117, %c96_118], %184 {strides = array<i32>} : memref<8x128xf32, #tpu.memory_space<vmem>>, vector<8x32xf32>,
      %c0_119 = arith.constant 0 : index
      %c0_120 = arith.constant 0 : index
      %186 = vector.load %arg10[%c0_119, %c0_120] : memref<8x128xf32, #tpu.memory_space<vmem>>, vector<8x128xf32>
      %187 = arith.truncf %186 : vector<8x128xf32> to vector<8x128xbf16>
      %c0_121 = arith.constant 0 : index
      %c0_122 = arith.constant 0 : index
      %c0_123 = arith.constant 0 : index
      %188 = vector.load %arg7[%c0_121, %c0_122, %c0_123] : memref<1x8x128xbf16, #tpu.memory_space<vmem>>, vector<1x8x128xbf16>
      %189 = vector.shape_cast %188 : vector<1x8x128xbf16> to vector<8x128xbf16>
      %190 = vector.shape_cast %187 : vector<8x128xbf16> to vector<1x8x128xbf16>
      tpu.vector_store %arg7[%c0_121, %c0_122, %c0_123], %190 {strides = array<i32>} : memref<1x8x128xbf16, #tpu.memory_space<vmem>>, vector<1x8x128xbf16>,
    } else {
    }
    return
  }
  func.func @transform_0(%arg0: i32, %arg1: i32, %arg2: i32) -> (i32, i32, i32) {
    %c0_i32 = arith.constant 0 : i32
    %c0_i32_0 = arith.constant 0 : i32
    return %arg0, %arg1, %c0_i32 : i32, i32, i32
  }
  func.func @transform_1(%arg0: i32, %arg1: i32, %arg2: i32) -> (i32, i32, i32) {
    %c0_i32 = arith.constant 0 : i32
    %c0_i32_0 = arith.constant 0 : i32
    return %arg0, %arg2, %c0_i32 : i32, i32, i32
  }
  func.func @transform_2(%arg0: i32, %arg1: i32, %arg2: i32) -> (i32, i32, i32) {
    %c0_i32 = arith.constant 0 : i32
    %c0_i32_0 = arith.constant 0 : i32
    return %arg0, %arg2, %c0_i32 : i32, i32, i32
  }
  func.func @transform_3(%arg0: i32, %arg1: i32, %arg2: i32) -> (i32, i32, i32) {
    %c0_i32 = arith.constant 0 : i32
    %c0_i32_0 = arith.constant 0 : i32
    return %arg0, %c0_i32, %arg2 : i32, i32, i32
  }
  func.func @transform_4(%arg0: i32, %arg1: i32, %arg2: i32) -> (i32, i32, i32) {
    %c0_i32 = arith.constant 0 : i32
    %c0_i32_0 = arith.constant 0 : i32
    return %arg0, %arg1, %c0_i32 : i32, i32, i32
  }
}

module attributes {stable_mosaic.version = 11 : i64} {
  func.func @_ffn_ln_kernel(%arg0: i32, %arg1: i32, %arg2: memref<16x128xbf16, #tpu.memory_space<vmem>>, %arg3: memref<128x256xbf16, #tpu.memory_space<vmem>>, %arg4: memref<1x256xf32, #tpu.memory_space<vmem>>, %arg5: memref<256x128xbf16, #tpu.memory_space<vmem>>, %arg6: memref<1x128xf32, #tpu.memory_space<vmem>>, %arg7: memref<1x128xf32, #tpu.memory_space<vmem>>, %arg8: memref<1x128xf32, #tpu.memory_space<vmem>>, %arg9: memref<16x128xbf16, #tpu.memory_space<vmem>>, %arg10: memref<16x128xf32, #tpu.memory_space<vmem>>) attributes {dimension_semantics = [#tpu.dimension_semantics<parallel>, #tpu.dimension_semantics<arbitrary>], iteration_bounds = array<i64: 1, 1>, scalar_prefetch = 0 : i64, scratch_operands = 1 : i64, tpu.core_type = #tpu.core_type<tc>, window_params = [{transform_indices = @transform_0, window_bounds = array<i64: 16, 128>}, {transform_indices = @transform_1, window_bounds = array<i64: 128, 256>}, {transform_indices = @transform_2, window_bounds = array<i64: 1, 256>}, {transform_indices = @transform_3, window_bounds = array<i64: 256, 128>}, {pipeline_mode = #tpu.pipeline_mode<synchronous>, transform_indices = @transform_4, window_bounds = array<i64: 1, 128>}, {pipeline_mode = #tpu.pipeline_mode<synchronous>, transform_indices = @transform_5, window_bounds = array<i64: 1, 128>}, {pipeline_mode = #tpu.pipeline_mode<synchronous>, transform_indices = @transform_6, window_bounds = array<i64: 1, 128>}, {transform_indices = @transform_7, window_bounds = array<i64: 16, 128>}]} {
    %c0_i32 = arith.constant 0 : i32
    %0 = arith.cmpi eq, %arg1, %c0_i32 : i32
    %1 = arith.extui %0 : i1 to i32
    %c0_i32_0 = arith.constant 0 : i32
    %2 = arith.cmpi ne, %1, %c0_i32_0 : i32
    scf.if %2 {
      %cst_16 = arith.constant 0.000000e+00 : f32
      %20 = vector.broadcast %cst_16 : f32 to vector<16x128xf32>
      %c0_17 = arith.constant 0 : index
      %c0_18 = arith.constant 0 : index
      %21 = vector.load %arg10[%c0_17, %c0_18] : memref<16x128xf32, #tpu.memory_space<vmem>>, vector<16x128xf32>
      tpu.vector_store %arg10[%c0_17, %c0_18], %20 {strides = array<i32>} : memref<16x128xf32, #tpu.memory_space<vmem>>, vector<16x128xf32>,
    } else {
    }
    %c0 = arith.constant 0 : index
    %c0_1 = arith.constant 0 : index
    %3 = vector.load %arg2[%c0, %c0_1] : memref<16x128xbf16, #tpu.memory_space<vmem>>, vector<16x128xbf16>
    %c0_2 = arith.constant 0 : index
    %c0_3 = arith.constant 0 : index
    %4 = vector.load %arg3[%c0_2, %c0_3] : memref<128x256xbf16, #tpu.memory_space<vmem>>, vector<128x256xbf16>
    %cst = arith.constant dense<0.000000e+00> : vector<16x256xf32>
    %5 = tpu.matmul %3, %4, %cst {dimension_numbers = #tpu.dot_dimension_numbers<[1], [0], [0], [1], [0, 0, 1, 1], [], []>} : vector<16x128xbf16>, vector<128x256xbf16>, vector<16x256xf32> -> vector<16x256xf32>
    %c0_4 = arith.constant 0 : index
    %c0_5 = arith.constant 0 : index
    %6 = vector.load %arg4[%c0_4, %c0_5] : memref<1x256xf32, #tpu.memory_space<vmem>>, vector<1x256xf32>
    %7 = vector.broadcast %6 : vector<1x256xf32> to vector<16x256xf32>
    %8 = arith.addf %5, %7 : vector<16x256xf32>
    %cst_6 = arith.constant 0.000000e+00 : f32
    %9 = vector.broadcast %cst_6 : f32 to vector<16x256xf32>
    %10 = arith.maximumf %8, %9 : vector<16x256xf32>
    %c0_7 = arith.constant 0 : index
    %c0_8 = arith.constant 0 : index
    %11 = vector.load %arg5[%c0_7, %c0_8] : memref<256x128xbf16, #tpu.memory_space<vmem>>, vector<256x128xbf16>
    %c0_9 = arith.constant 0 : index
    %c0_10 = arith.constant 0 : index
    %12 = vector.load %arg10[%c0_9, %c0_10] : memref<16x128xf32, #tpu.memory_space<vmem>>, vector<16x128xf32>
    %13 = arith.truncf %10 : vector<16x256xf32> to vector<16x256xbf16>
    %cst_11 = arith.constant dense<0.000000e+00> : vector<16x128xf32>
    %14 = tpu.matmul %13, %11, %cst_11 {dimension_numbers = #tpu.dot_dimension_numbers<[1], [0], [0], [1], [0, 0, 1, 1], [], []>} : vector<16x256xbf16>, vector<256x128xbf16>, vector<16x128xf32> -> vector<16x128xf32>
    %15 = arith.addf %12, %14 : vector<16x128xf32>
    %c0_12 = arith.constant 0 : index
    %c0_13 = arith.constant 0 : index
    %16 = vector.load %arg10[%c0_12, %c0_13] : memref<16x128xf32, #tpu.memory_space<vmem>>, vector<16x128xf32>
    tpu.vector_store %arg10[%c0_12, %c0_13], %15 {strides = array<i32>} : memref<16x128xf32, #tpu.memory_space<vmem>>, vector<16x128xf32>,
    %c0_i32_14 = arith.constant 0 : i32
    %17 = arith.cmpi eq, %arg1, %c0_i32_14 : i32
    %18 = arith.extui %17 : i1 to i32
    %c0_i32_15 = arith.constant 0 : i32
    %19 = arith.cmpi ne, %18, %c0_i32_15 : i32
    scf.if %19 {
      %c0_16 = arith.constant 0 : index
      %c0_17 = arith.constant 0 : index
      %20 = vector.load %arg10[%c0_16, %c0_17] : memref<16x128xf32, #tpu.memory_space<vmem>>, vector<16x128xf32>
      %c0_18 = arith.constant 0 : index
      %c0_19 = arith.constant 0 : index
      %21 = vector.load %arg6[%c0_18, %c0_19] : memref<1x128xf32, #tpu.memory_space<vmem>>, vector<1x128xf32>
      %22 = vector.broadcast %21 : vector<1x128xf32> to vector<16x128xf32>
      %23 = arith.addf %20, %22 : vector<16x128xf32>
      %c0_20 = arith.constant 0 : index
      %c0_21 = arith.constant 0 : index
      %24 = vector.load %arg2[%c0_20, %c0_21] : memref<16x128xbf16, #tpu.memory_space<vmem>>, vector<16x128xbf16>
      %25 = arith.extf %24 : vector<16x128xbf16> to vector<16x128xf32>
      %26 = arith.addf %23, %25 : vector<16x128xf32>
      %cst_22 = arith.constant dense<0.000000e+00> : vector<16xf32>
      %27 = vector.multi_reduction <add>, %26, %cst_22 [1] : vector<16x128xf32> to vector<16xf32>
      %28 = vector.shape_cast %27 : vector<16xf32> to vector<16x1xf32>
      %cst_23 = arith.constant 1.280000e+02 : f32
      %29 = vector.broadcast %cst_23 : f32 to vector<16x1xf32>
      %30 = arith.divf %28, %29 : vector<16x1xf32>
      %31 = vector.broadcast %30 : vector<16x1xf32> to vector<16x128xf32>
      %32 = arith.subf %26, %31 : vector<16x128xf32>
      %33 = arith.mulf %32, %32 : vector<16x128xf32>
      %cst_24 = arith.constant dense<0.000000e+00> : vector<16xf32>
      %34 = vector.multi_reduction <add>, %33, %cst_24 [1] : vector<16x128xf32> to vector<16xf32>
      %35 = vector.shape_cast %34 : vector<16xf32> to vector<16x1xf32>
      %cst_25 = arith.constant 1.280000e+02 : f32
      %36 = vector.broadcast %cst_25 : f32 to vector<16x1xf32>
      %37 = arith.divf %35, %36 : vector<16x1xf32>
      %38 = vector.broadcast %30 : vector<16x1xf32> to vector<16x128xf32>
      %39 = arith.subf %26, %38 : vector<16x128xf32>
      %cst_26 = arith.constant 9.99999997E-7 : f32
      %40 = vector.broadcast %cst_26 : f32 to vector<16x1xf32>
      %41 = arith.addf %37, %40 : vector<16x1xf32>
      %42 = math.rsqrt %41 : vector<16x1xf32>
      %43 = vector.broadcast %42 : vector<16x1xf32> to vector<16x128xf32>
      %44 = arith.mulf %39, %43 : vector<16x128xf32>
      %c0_27 = arith.constant 0 : index
      %c0_28 = arith.constant 0 : index
      %45 = vector.load %arg7[%c0_27, %c0_28] : memref<1x128xf32, #tpu.memory_space<vmem>>, vector<1x128xf32>
      %46 = vector.broadcast %45 : vector<1x128xf32> to vector<16x128xf32>
      %47 = arith.mulf %44, %46 : vector<16x128xf32>
      %c0_29 = arith.constant 0 : index
      %c0_30 = arith.constant 0 : index
      %48 = vector.load %arg8[%c0_29, %c0_30] : memref<1x128xf32, #tpu.memory_space<vmem>>, vector<1x128xf32>
      %49 = vector.broadcast %48 : vector<1x128xf32> to vector<16x128xf32>
      %50 = arith.addf %47, %49 : vector<16x128xf32>
      %51 = arith.truncf %50 : vector<16x128xf32> to vector<16x128xbf16>
      %c0_31 = arith.constant 0 : index
      %c0_32 = arith.constant 0 : index
      %52 = vector.load %arg9[%c0_31, %c0_32] : memref<16x128xbf16, #tpu.memory_space<vmem>>, vector<16x128xbf16>
      tpu.vector_store %arg9[%c0_31, %c0_32], %51 {strides = array<i32>} : memref<16x128xbf16, #tpu.memory_space<vmem>>, vector<16x128xbf16>,
    } else {
    }
    return
  }
  func.func @transform_0(%arg0: i32, %arg1: i32) -> (i32, i32) {
    %c0_i32 = arith.constant 0 : i32
    %c0_i32_0 = arith.constant 0 : i32
    return %arg0, %c0_i32 : i32, i32
  }
  func.func @transform_1(%arg0: i32, %arg1: i32) -> (i32, i32) {
    %c0_i32 = arith.constant 0 : i32
    %c0_i32_0 = arith.constant 0 : i32
    return %c0_i32, %arg1 : i32, i32
  }
  func.func @transform_2(%arg0: i32, %arg1: i32) -> (i32, i32) {
    %c0_i32 = arith.constant 0 : i32
    %c0_i32_0 = arith.constant 0 : i32
    return %c0_i32, %arg1 : i32, i32
  }
  func.func @transform_3(%arg0: i32, %arg1: i32) -> (i32, i32) {
    %c0_i32 = arith.constant 0 : i32
    %c0_i32_0 = arith.constant 0 : i32
    return %arg1, %c0_i32 : i32, i32
  }
  func.func @transform_4(%arg0: i32, %arg1: i32) -> (i32, i32) {
    %c0_i32 = arith.constant 0 : i32
    %c0_i32_0 = arith.constant 0 : i32
    %c0_i32_1 = arith.constant 0 : i32
    return %c0_i32, %c0_i32_0 : i32, i32
  }
  func.func @transform_5(%arg0: i32, %arg1: i32) -> (i32, i32) {
    %c0_i32 = arith.constant 0 : i32
    %c0_i32_0 = arith.constant 0 : i32
    %c0_i32_1 = arith.constant 0 : i32
    return %c0_i32, %c0_i32_0 : i32, i32
  }
  func.func @transform_6(%arg0: i32, %arg1: i32) -> (i32, i32) {
    %c0_i32 = arith.constant 0 : i32
    %c0_i32_0 = arith.constant 0 : i32
    %c0_i32_1 = arith.constant 0 : i32
    return %c0_i32, %c0_i32_0 : i32, i32
  }
  func.func @transform_7(%arg0: i32, %arg1: i32) -> (i32, i32) {
    %c0_i32 = arith.constant 0 : i32
    %c0_i32_0 = arith.constant 0 : i32
    return %arg0, %c0_i32 : i32, i32
  }
}

module attributes {stable_mosaic.version = 11 : i64} {
  func.func @kernel(%arg0: i32, %arg1: memref<16x128xbf16, #tpu.memory_space<vmem>>, %arg2: memref<128x128xbf16, #tpu.memory_space<vmem>>, %arg3: memref<128x128xbf16, #tpu.memory_space<vmem>>, %arg4: memref<128x128xbf16, #tpu.memory_space<vmem>>, %arg5: memref<1x128xf32, #tpu.memory_space<vmem>>, %arg6: memref<1x128xf32, #tpu.memory_space<vmem>>, %arg7: memref<1x128xf32, #tpu.memory_space<vmem>>, %arg8: memref<16x128xbf16, #tpu.memory_space<vmem>>, %arg9: memref<16x128xbf16, #tpu.memory_space<vmem>>, %arg10: memref<16x128xbf16, #tpu.memory_space<vmem>>) attributes {dimension_semantics = [#tpu.dimension_semantics<parallel>], iteration_bounds = array<i64: 1>, scalar_prefetch = 0 : i64, scratch_operands = 0 : i64, tpu.core_type = #tpu.core_type<tc>, window_params = [{transform_indices = @transform_0, window_bounds = array<i64: 16, 128>}, {pipeline_mode = #tpu.pipeline_mode<synchronous>, transform_indices = @transform_1, window_bounds = array<i64: 128, 128>}, {pipeline_mode = #tpu.pipeline_mode<synchronous>, transform_indices = @transform_2, window_bounds = array<i64: 128, 128>}, {pipeline_mode = #tpu.pipeline_mode<synchronous>, transform_indices = @transform_3, window_bounds = array<i64: 128, 128>}, {pipeline_mode = #tpu.pipeline_mode<synchronous>, transform_indices = @transform_4, window_bounds = array<i64: 1, 128>}, {pipeline_mode = #tpu.pipeline_mode<synchronous>, transform_indices = @transform_5, window_bounds = array<i64: 1, 128>}, {pipeline_mode = #tpu.pipeline_mode<synchronous>, transform_indices = @transform_6, window_bounds = array<i64: 1, 128>}, {transform_indices = @transform_7, window_bounds = array<i64: 16, 128>}, {transform_indices = @transform_8, window_bounds = array<i64: 16, 128>}, {transform_indices = @transform_9, window_bounds = array<i64: 16, 128>}]} {
    %c0 = arith.constant 0 : index
    %c0_0 = arith.constant 0 : index
    %0 = vector.load %arg1[%c0, %c0_0] : memref<16x128xbf16, #tpu.memory_space<vmem>>, vector<16x128xbf16>
    %c0_1 = arith.constant 0 : index
    %c0_2 = arith.constant 0 : index
    %1 = vector.load %arg2[%c0_1, %c0_2] : memref<128x128xbf16, #tpu.memory_space<vmem>>, vector<128x128xbf16>
    %cst = arith.constant dense<0.000000e+00> : vector<16x128xf32>
    %2 = tpu.matmul %0, %1, %cst {dimension_numbers = #tpu.dot_dimension_numbers<[1], [0], [0], [1], [0, 0, 1, 1], [], []>} : vector<16x128xbf16>, vector<128x128xbf16>, vector<16x128xf32> -> vector<16x128xf32>
    %c0_3 = arith.constant 0 : index
    %c0_4 = arith.constant 0 : index
    %3 = vector.load %arg5[%c0_3, %c0_4] : memref<1x128xf32, #tpu.memory_space<vmem>>, vector<1x128xf32>
    %4 = vector.broadcast %3 : vector<1x128xf32> to vector<16x128xf32>
    %5 = arith.addf %2, %4 : vector<16x128xf32>
    %6 = arith.truncf %5 : vector<16x128xf32> to vector<16x128xbf16>
    %c0_5 = arith.constant 0 : index
    %c0_6 = arith.constant 0 : index
    %7 = vector.load %arg8[%c0_5, %c0_6] : memref<16x128xbf16, #tpu.memory_space<vmem>>, vector<16x128xbf16>
    tpu.vector_store %arg8[%c0_5, %c0_6], %6 {strides = array<i32>} : memref<16x128xbf16, #tpu.memory_space<vmem>>, vector<16x128xbf16>,
    %c0_7 = arith.constant 0 : index
    %c0_8 = arith.constant 0 : index
    %8 = vector.load %arg3[%c0_7, %c0_8] : memref<128x128xbf16, #tpu.memory_space<vmem>>, vector<128x128xbf16>
    %cst_9 = arith.constant dense<0.000000e+00> : vector<16x128xf32>
    %9 = tpu.matmul %0, %8, %cst_9 {dimension_numbers = #tpu.dot_dimension_numbers<[1], [0], [0], [1], [0, 0, 1, 1], [], []>} : vector<16x128xbf16>, vector<128x128xbf16>, vector<16x128xf32> -> vector<16x128xf32>
    %c0_10 = arith.constant 0 : index
    %c0_11 = arith.constant 0 : index
    %10 = vector.load %arg6[%c0_10, %c0_11] : memref<1x128xf32, #tpu.memory_space<vmem>>, vector<1x128xf32>
    %11 = vector.broadcast %10 : vector<1x128xf32> to vector<16x128xf32>
    %12 = arith.addf %9, %11 : vector<16x128xf32>
    %13 = arith.truncf %12 : vector<16x128xf32> to vector<16x128xbf16>
    %c0_12 = arith.constant 0 : index
    %c0_13 = arith.constant 0 : index
    %14 = vector.load %arg9[%c0_12, %c0_13] : memref<16x128xbf16, #tpu.memory_space<vmem>>, vector<16x128xbf16>
    tpu.vector_store %arg9[%c0_12, %c0_13], %13 {strides = array<i32>} : memref<16x128xbf16, #tpu.memory_space<vmem>>, vector<16x128xbf16>,
    %c0_14 = arith.constant 0 : index
    %c0_15 = arith.constant 0 : index
    %15 = vector.load %arg4[%c0_14, %c0_15] : memref<128x128xbf16, #tpu.memory_space<vmem>>, vector<128x128xbf16>
    %cst_16 = arith.constant dense<0.000000e+00> : vector<16x128xf32>
    %16 = tpu.matmul %0, %15, %cst_16 {dimension_numbers = #tpu.dot_dimension_numbers<[1], [0], [0], [1], [0, 0, 1, 1], [], []>} : vector<16x128xbf16>, vector<128x128xbf16>, vector<16x128xf32> -> vector<16x128xf32>
    %c0_17 = arith.constant 0 : index
    %c0_18 = arith.constant 0 : index
    %17 = vector.load %arg7[%c0_17, %c0_18] : memref<1x128xf32, #tpu.memory_space<vmem>>, vector<1x128xf32>
    %18 = vector.broadcast %17 : vector<1x128xf32> to vector<16x128xf32>
    %19 = arith.addf %16, %18 : vector<16x128xf32>
    %20 = arith.truncf %19 : vector<16x128xf32> to vector<16x128xbf16>
    %c0_19 = arith.constant 0 : index
    %c0_20 = arith.constant 0 : index
    %21 = vector.load %arg10[%c0_19, %c0_20] : memref<16x128xbf16, #tpu.memory_space<vmem>>, vector<16x128xbf16>
    tpu.vector_store %arg10[%c0_19, %c0_20], %20 {strides = array<i32>} : memref<16x128xbf16, #tpu.memory_space<vmem>>, vector<16x128xbf16>,
    return
  }
  func.func @transform_0(%arg0: i32) -> (i32, i32) {
    %c0_i32 = arith.constant 0 : i32
    %c0_i32_0 = arith.constant 0 : i32
    return %arg0, %c0_i32 : i32, i32
  }
  func.func @transform_1(%arg0: i32) -> (i32, i32) {
    %c0_i32 = arith.constant 0 : i32
    %c0_i32_0 = arith.constant 0 : i32
    %c0_i32_1 = arith.constant 0 : i32
    return %c0_i32, %c0_i32_0 : i32, i32
  }
  func.func @transform_2(%arg0: i32) -> (i32, i32) {
    %c0_i32 = arith.constant 0 : i32
    %c0_i32_0 = arith.constant 0 : i32
    %c0_i32_1 = arith.constant 0 : i32
    return %c0_i32, %c0_i32_0 : i32, i32
  }
  func.func @transform_3(%arg0: i32) -> (i32, i32) {
    %c0_i32 = arith.constant 0 : i32
    %c0_i32_0 = arith.constant 0 : i32
    %c0_i32_1 = arith.constant 0 : i32
    return %c0_i32, %c0_i32_0 : i32, i32
  }
  func.func @transform_4(%arg0: i32) -> (i32, i32) {
    %c0_i32 = arith.constant 0 : i32
    %c0_i32_0 = arith.constant 0 : i32
    %c0_i32_1 = arith.constant 0 : i32
    return %c0_i32, %c0_i32_0 : i32, i32
  }
  func.func @transform_5(%arg0: i32) -> (i32, i32) {
    %c0_i32 = arith.constant 0 : i32
    %c0_i32_0 = arith.constant 0 : i32
    %c0_i32_1 = arith.constant 0 : i32
    return %c0_i32, %c0_i32_0 : i32, i32
  }
  func.func @transform_6(%arg0: i32) -> (i32, i32) {
    %c0_i32 = arith.constant 0 : i32
    %c0_i32_0 = arith.constant 0 : i32
    %c0_i32_1 = arith.constant 0 : i32
    return %c0_i32, %c0_i32_0 : i32, i32
  }
  func.func @transform_7(%arg0: i32) -> (i32, i32) {
    %c0_i32 = arith.constant 0 : i32
    %c0_i32_0 = arith.constant 0 : i32
    return %arg0, %c0_i32 : i32, i32
  }
  func.func @transform_8(%arg0: i32) -> (i32, i32) {
    %c0_i32 = arith.constant 0 : i32
    %c0_i32_0 = arith.constant 0 : i32
    return %arg0, %c0_i32 : i32, i32
  }
  func.func @transform_9(%arg0: i32) -> (i32, i32) {
    %c0_i32 = arith.constant 0 : i32
    %c0_i32_0 = arith.constant 0 : i32
    return %arg0, %c0_i32 : i32, i32
  }
}

module attributes {stable_mosaic.version = 11 : i64} {
  func.func @kernel(%arg0: i32, %arg1: memref<20x128xbf16, #tpu.memory_space<vmem>>, %arg2: memref<128x128xbf16, #tpu.memory_space<vmem>>, %arg3: memref<128x128xbf16, #tpu.memory_space<vmem>>, %arg4: memref<1x128xf32, #tpu.memory_space<vmem>>, %arg5: memref<1x128xf32, #tpu.memory_space<vmem>>, %arg6: memref<20x128xbf16, #tpu.memory_space<vmem>>, %arg7: memref<20x128xbf16, #tpu.memory_space<vmem>>) attributes {dimension_semantics = [#tpu.dimension_semantics<parallel>], iteration_bounds = array<i64: 1>, scalar_prefetch = 0 : i64, scratch_operands = 0 : i64, tpu.core_type = #tpu.core_type<tc>, window_params = [{transform_indices = @transform_0, window_bounds = array<i64: 20, 128>}, {pipeline_mode = #tpu.pipeline_mode<synchronous>, transform_indices = @transform_1, window_bounds = array<i64: 128, 128>}, {pipeline_mode = #tpu.pipeline_mode<synchronous>, transform_indices = @transform_2, window_bounds = array<i64: 128, 128>}, {pipeline_mode = #tpu.pipeline_mode<synchronous>, transform_indices = @transform_3, window_bounds = array<i64: 1, 128>}, {pipeline_mode = #tpu.pipeline_mode<synchronous>, transform_indices = @transform_4, window_bounds = array<i64: 1, 128>}, {transform_indices = @transform_5, window_bounds = array<i64: 20, 128>}, {transform_indices = @transform_6, window_bounds = array<i64: 20, 128>}]} {
    %c0 = arith.constant 0 : index
    %c0_0 = arith.constant 0 : index
    %0 = vector.load %arg1[%c0, %c0_0] : memref<20x128xbf16, #tpu.memory_space<vmem>>, vector<20x128xbf16>
    %c0_1 = arith.constant 0 : index
    %c0_2 = arith.constant 0 : index
    %1 = vector.load %arg2[%c0_1, %c0_2] : memref<128x128xbf16, #tpu.memory_space<vmem>>, vector<128x128xbf16>
    %cst = arith.constant dense<0.000000e+00> : vector<20x128xf32>
    %2 = tpu.matmul %0, %1, %cst {dimension_numbers = #tpu.dot_dimension_numbers<[1], [0], [0], [1], [0, 0, 1, 1], [], []>} : vector<20x128xbf16>, vector<128x128xbf16>, vector<20x128xf32> -> vector<20x128xf32>
    %c0_3 = arith.constant 0 : index
    %c0_4 = arith.constant 0 : index
    %3 = vector.load %arg4[%c0_3, %c0_4] : memref<1x128xf32, #tpu.memory_space<vmem>>, vector<1x128xf32>
    %4 = vector.broadcast %3 : vector<1x128xf32> to vector<20x128xf32>
    %5 = arith.addf %2, %4 : vector<20x128xf32>
    %6 = arith.truncf %5 : vector<20x128xf32> to vector<20x128xbf16>
    %c0_5 = arith.constant 0 : index
    %c0_6 = arith.constant 0 : index
    %7 = vector.load %arg6[%c0_5, %c0_6] : memref<20x128xbf16, #tpu.memory_space<vmem>>, vector<20x128xbf16>
    tpu.vector_store %arg6[%c0_5, %c0_6], %6 {strides = array<i32>} : memref<20x128xbf16, #tpu.memory_space<vmem>>, vector<20x128xbf16>,
    %c0_7 = arith.constant 0 : index
    %c0_8 = arith.constant 0 : index
    %8 = vector.load %arg3[%c0_7, %c0_8] : memref<128x128xbf16, #tpu.memory_space<vmem>>, vector<128x128xbf16>
    %cst_9 = arith.constant dense<0.000000e+00> : vector<20x128xf32>
    %9 = tpu.matmul %0, %8, %cst_9 {dimension_numbers = #tpu.dot_dimension_numbers<[1], [0], [0], [1], [0, 0, 1, 1], [], []>} : vector<20x128xbf16>, vector<128x128xbf16>, vector<20x128xf32> -> vector<20x128xf32>
    %c0_10 = arith.constant 0 : index
    %c0_11 = arith.constant 0 : index
    %10 = vector.load %arg5[%c0_10, %c0_11] : memref<1x128xf32, #tpu.memory_space<vmem>>, vector<1x128xf32>
    %11 = vector.broadcast %10 : vector<1x128xf32> to vector<20x128xf32>
    %12 = arith.addf %9, %11 : vector<20x128xf32>
    %13 = arith.truncf %12 : vector<20x128xf32> to vector<20x128xbf16>
    %c0_12 = arith.constant 0 : index
    %c0_13 = arith.constant 0 : index
    %14 = vector.load %arg7[%c0_12, %c0_13] : memref<20x128xbf16, #tpu.memory_space<vmem>>, vector<20x128xbf16>
    tpu.vector_store %arg7[%c0_12, %c0_13], %13 {strides = array<i32>} : memref<20x128xbf16, #tpu.memory_space<vmem>>, vector<20x128xbf16>,
    return
  }
  func.func @transform_0(%arg0: i32) -> (i32, i32) {
    %c0_i32 = arith.constant 0 : i32
    %c0_i32_0 = arith.constant 0 : i32
    return %arg0, %c0_i32 : i32, i32
  }
  func.func @transform_1(%arg0: i32) -> (i32, i32) {
    %c0_i32 = arith.constant 0 : i32
    %c0_i32_0 = arith.constant 0 : i32
    %c0_i32_1 = arith.constant 0 : i32
    return %c0_i32, %c0_i32_0 : i32, i32
  }
  func.func @transform_2(%arg0: i32) -> (i32, i32) {
    %c0_i32 = arith.constant 0 : i32
    %c0_i32_0 = arith.constant 0 : i32
    %c0_i32_1 = arith.constant 0 : i32
    return %c0_i32, %c0_i32_0 : i32, i32
  }
  func.func @transform_3(%arg0: i32) -> (i32, i32) {
    %c0_i32 = arith.constant 0 : i32
    %c0_i32_0 = arith.constant 0 : i32
    %c0_i32_1 = arith.constant 0 : i32
    return %c0_i32, %c0_i32_0 : i32, i32
  }
  func.func @transform_4(%arg0: i32) -> (i32, i32) {
    %c0_i32 = arith.constant 0 : i32
    %c0_i32_0 = arith.constant 0 : i32
    %c0_i32_1 = arith.constant 0 : i32
    return %c0_i32, %c0_i32_0 : i32, i32
  }
  func.func @transform_5(%arg0: i32) -> (i32, i32) {
    %c0_i32 = arith.constant 0 : i32
    %c0_i32_0 = arith.constant 0 : i32
    return %arg0, %c0_i32 : i32, i32
  }
  func.func @transform_6(%arg0: i32) -> (i32, i32) {
    %c0_i32 = arith.constant 0 : i32
    %c0_i32_0 = arith.constant 0 : i32
    return %arg0, %c0_i32 : i32, i32
  }
}

module attributes {stable_mosaic.version = 11 : i64} {
  func.func @_vocab_proj_kernel(%arg0: i32, %arg1: i32, %arg2: memref<16x128xbf16, #tpu.memory_space<vmem>>, %arg3: memref<128x256xbf16, #tpu.memory_space<vmem>>, %arg4: memref<1x256xf32, #tpu.memory_space<vmem>>, %arg5: memref<16x1xi32, #tpu.memory_space<vmem>>, %arg6: memref<16x256xf32, #tpu.memory_space<vmem>>, %arg7: memref<16x1xf32, #tpu.memory_space<vmem>>, %arg8: memref<16x1xf32, #tpu.memory_space<vmem>>, %arg9: memref<16x1xf32, #tpu.memory_space<vmem>>, %arg10: memref<16x1xf32, #tpu.memory_space<vmem>>, %arg11: memref<16x1xf32, #tpu.memory_space<vmem>>, %arg12: memref<16x1xf32, #tpu.memory_space<vmem>>, %arg13: memref<16x1xf32, #tpu.memory_space<vmem>>) attributes {dimension_semantics = [#tpu.dimension_semantics<parallel>, #tpu.dimension_semantics<arbitrary>], iteration_bounds = array<i64: 1, 1>, scalar_prefetch = 0 : i64, scratch_operands = 4 : i64, tpu.core_type = #tpu.core_type<tc>, window_params = [{transform_indices = @transform_0, window_bounds = array<i64: 16, 128>}, {transform_indices = @transform_1, window_bounds = array<i64: 128, 256>}, {transform_indices = @transform_2, window_bounds = array<i64: 1, 256>}, {transform_indices = @transform_3, window_bounds = array<i64: 16, 1>}, {transform_indices = @transform_4, window_bounds = array<i64: 16, 256>}, {transform_indices = @transform_5, window_bounds = array<i64: 16, 1>}, {transform_indices = @transform_6, window_bounds = array<i64: 16, 1>}, {transform_indices = @transform_7, window_bounds = array<i64: 16, 1>}]} {
    %c0_i32 = arith.constant 0 : i32
    %0 = arith.cmpi eq, %arg1, %c0_i32 : i32
    %1 = arith.extui %0 : i1 to i32
    %c0_i32_0 = arith.constant 0 : i32
    %2 = arith.cmpi ne, %1, %c0_i32_0 : i32
    scf.if %2 {
      %cst_33 = arith.constant -1.000000e+09 : f32
      %48 = vector.broadcast %cst_33 : f32 to vector<16x1xf32>
      %c0_34 = arith.constant 0 : index
      %c0_35 = arith.constant 0 : index
      %49 = vector.load %arg10[%c0_34, %c0_35] : memref<16x1xf32, #tpu.memory_space<vmem>>, vector<16x1xf32>
      tpu.vector_store %arg10[%c0_34, %c0_35], %48 {strides = array<i32>} : memref<16x1xf32, #tpu.memory_space<vmem>>, vector<16x1xf32>,
      %cst_36 = arith.constant 0.000000e+00 : f32
      %50 = vector.broadcast %cst_36 : f32 to vector<16x1xf32>
      %c0_37 = arith.constant 0 : index
      %c0_38 = arith.constant 0 : index
      %51 = vector.load %arg11[%c0_37, %c0_38] : memref<16x1xf32, #tpu.memory_space<vmem>>, vector<16x1xf32>
      tpu.vector_store %arg11[%c0_37, %c0_38], %50 {strides = array<i32>} : memref<16x1xf32, #tpu.memory_space<vmem>>, vector<16x1xf32>,
      %cst_39 = arith.constant 0.000000e+00 : f32
      %52 = vector.broadcast %cst_39 : f32 to vector<16x1xf32>
      %c0_40 = arith.constant 0 : index
      %c0_41 = arith.constant 0 : index
      %53 = vector.load %arg12[%c0_40, %c0_41] : memref<16x1xf32, #tpu.memory_space<vmem>>, vector<16x1xf32>
      tpu.vector_store %arg12[%c0_40, %c0_41], %52 {strides = array<i32>} : memref<16x1xf32, #tpu.memory_space<vmem>>, vector<16x1xf32>,
      %cst_42 = arith.constant 0.000000e+00 : f32
      %54 = vector.broadcast %cst_42 : f32 to vector<16x1xf32>
      %c0_43 = arith.constant 0 : index
      %c0_44 = arith.constant 0 : index
      %55 = vector.load %arg13[%c0_43, %c0_44] : memref<16x1xf32, #tpu.memory_space<vmem>>, vector<16x1xf32>
      tpu.vector_store %arg13[%c0_43, %c0_44], %54 {strides = array<i32>} : memref<16x1xf32, #tpu.memory_space<vmem>>, vector<16x1xf32>,
    } else {
    }
    %c0 = arith.constant 0 : index
    %c0_1 = arith.constant 0 : index
    %3 = vector.load %arg2[%c0, %c0_1] : memref<16x128xbf16, #tpu.memory_space<vmem>>, vector<16x128xbf16>
    %c0_2 = arith.constant 0 : index
    %c0_3 = arith.constant 0 : index
    %4 = vector.load %arg3[%c0_2, %c0_3] : memref<128x256xbf16, #tpu.memory_space<vmem>>, vector<128x256xbf16>
    %cst = arith.constant dense<0.000000e+00> : vector<16x256xf32>
    %5 = tpu.matmul %3, %4, %cst {dimension_numbers = #tpu.dot_dimension_numbers<[1], [0], [0], [1], [0, 0, 1, 1], [], []>} : vector<16x128xbf16>, vector<128x256xbf16>, vector<16x256xf32> -> vector<16x256xf32>
    %c0_4 = arith.constant 0 : index
    %c0_5 = arith.constant 0 : index
    %6 = vector.load %arg4[%c0_4, %c0_5] : memref<1x256xf32, #tpu.memory_space<vmem>>, vector<1x256xf32>
    %7 = vector.broadcast %6 : vector<1x256xf32> to vector<16x256xf32>
    %8 = arith.addf %5, %7 : vector<16x256xf32>
    %c0_6 = arith.constant 0 : index
    %c0_7 = arith.constant 0 : index
    %9 = vector.load %arg6[%c0_6, %c0_7] : memref<16x256xf32, #tpu.memory_space<vmem>>, vector<16x256xf32>
    tpu.vector_store %arg6[%c0_6, %c0_7], %8 {strides = array<i32>} : memref<16x256xf32, #tpu.memory_space<vmem>>, vector<16x256xf32>,
    %c256_i32 = arith.constant 256 : i32
    %10 = arith.muli %arg1, %c256_i32 : i32
    %11 = tpu.iota {dimensions = array<i32: 1>} : vector<16x256xi32>
    %12 = vector.broadcast %10 : i32 to vector<16x256xi32>
    %13 = arith.addi %12, %11 : vector<16x256xi32>
    %c0_8 = arith.constant 0 : index
    %c0_9 = arith.constant 0 : index
    %14 = vector.load %arg10[%c0_8, %c0_9] : memref<16x1xf32, #tpu.memory_space<vmem>>, vector<16x1xf32>
    %cst_10 = arith.constant dense<0xFF800000> : vector<16xf32>
    %15 = vector.multi_reduction <maximumf>, %8, %cst_10 [1] : vector<16x256xf32> to vector<16xf32>
    %16 = vector.shape_cast %15 : vector<16xf32> to vector<16x1xf32>
    %17 = arith.maximumf %14, %16 : vector<16x1xf32>
    %c0_11 = arith.constant 0 : index
    %c0_12 = arith.constant 0 : index
    %18 = vector.load %arg11[%c0_11, %c0_12] : memref<16x1xf32, #tpu.memory_space<vmem>>, vector<16x1xf32>
    %19 = arith.subf %14, %17 : vector<16x1xf32>
    %20 = math.exp %19 : vector<16x1xf32>
    %21 = arith.mulf %18, %20 : vector<16x1xf32>
    %22 = vector.broadcast %17 : vector<16x1xf32> to vector<16x256xf32>
    %23 = arith.subf %8, %22 : vector<16x256xf32>
    %24 = math.exp %23 : vector<16x256xf32>
    %cst_13 = arith.constant dense<0.000000e+00> : vector<16xf32>
    %25 = vector.multi_reduction <add>, %24, %cst_13 [1] : vector<16x256xf32> to vector<16xf32>
    %26 = vector.shape_cast %25 : vector<16xf32> to vector<16x1xf32>
    %27 = arith.addf %21, %26 : vector<16x1xf32>
    %c0_14 = arith.constant 0 : index
    %c0_15 = arith.constant 0 : index
    %28 = vector.load %arg11[%c0_14, %c0_15] : memref<16x1xf32, #tpu.memory_space<vmem>>, vector<16x1xf32>
    tpu.vector_store %arg11[%c0_14, %c0_15], %27 {strides = array<i32>} : memref<16x1xf32, #tpu.memory_space<vmem>>, vector<16x1xf32>,
    %c0_16 = arith.constant 0 : index
    %c0_17 = arith.constant 0 : index
    %29 = vector.load %arg10[%c0_16, %c0_17] : memref<16x1xf32, #tpu.memory_space<vmem>>, vector<16x1xf32>
    tpu.vector_store %arg10[%c0_16, %c0_17], %17 {strides = array<i32>} : memref<16x1xf32, #tpu.memory_space<vmem>>, vector<16x1xf32>,
    %c0_18 = arith.constant 0 : index
    %c0_19 = arith.constant 0 : index
    %30 = vector.load %arg12[%c0_18, %c0_19] : memref<16x1xf32, #tpu.memory_space<vmem>>, vector<16x1xf32>
    %cst_20 = arith.constant dense<0.000000e+00> : vector<16xf32>
    %31 = vector.multi_reduction <add>, %8, %cst_20 [1] : vector<16x256xf32> to vector<16xf32>
    %32 = vector.shape_cast %31 : vector<16xf32> to vector<16x1xf32>
    %33 = arith.addf %30, %32 : vector<16x1xf32>
    %c0_21 = arith.constant 0 : index
    %c0_22 = arith.constant 0 : index
    %34 = vector.load %arg12[%c0_21, %c0_22] : memref<16x1xf32, #tpu.memory_space<vmem>>, vector<16x1xf32>
    tpu.vector_store %arg12[%c0_21, %c0_22], %33 {strides = array<i32>} : memref<16x1xf32, #tpu.memory_space<vmem>>, vector<16x1xf32>,
    %c0_23 = arith.constant 0 : index
    %c0_24 = arith.constant 0 : index
    %35 = vector.load %arg13[%c0_23, %c0_24] : memref<16x1xf32, #tpu.memory_space<vmem>>, vector<16x1xf32>
    %c0_25 = arith.constant 0 : index
    %c0_26 = arith.constant 0 : index
    %36 = vector.load %arg5[%c0_25, %c0_26] : memref<16x1xi32, #tpu.memory_space<vmem>>, vector<16x1xi32>
    %37 = vector.broadcast %36 : vector<16x1xi32> to vector<16x256xi32>
    %38 = arith.cmpi eq, %13, %37 : vector<16x256xi32>
    %cst_27 = arith.constant 0.000000e+00 : f32
    %39 = vector.broadcast %cst_27 : f32 to vector<16x256xf32>
    %40 = arith.select %38, %8, %39 : vector<16x256xi1>, vector<16x256xf32>
    %cst_28 = arith.constant dense<0.000000e+00> : vector<16xf32>
    %41 = vector.multi_reduction <add>, %40, %cst_28 [1] : vector<16x256xf32> to vector<16xf32>
    %42 = vector.shape_cast %41 : vector<16xf32> to vector<16x1xf32>
    %43 = arith.addf %35, %42 : vector<16x1xf32>
    %c0_29 = arith.constant 0 : index
    %c0_30 = arith.constant 0 : index
    %44 = vector.load %arg13[%c0_29, %c0_30] : memref<16x1xf32, #tpu.memory_space<vmem>>, vector<16x1xf32>
    tpu.vector_store %arg13[%c0_29, %c0_30], %43 {strides = array<i32>} : memref<16x1xf32, #tpu.memory_space<vmem>>, vector<16x1xf32>,
    %c0_i32_31 = arith.constant 0 : i32
    %45 = arith.cmpi eq, %arg1, %c0_i32_31 : i32
    %46 = arith.extui %45 : i1 to i32
    %c0_i32_32 = arith.constant 0 : i32
    %47 = arith.cmpi ne, %46, %c0_i32_32 : i32
    scf.if %47 {
      %c0_33 = arith.constant 0 : index
      %c0_34 = arith.constant 0 : index
      %48 = vector.load %arg10[%c0_33, %c0_34] : memref<16x1xf32, #tpu.memory_space<vmem>>, vector<16x1xf32>
      %c0_35 = arith.constant 0 : index
      %c0_36 = arith.constant 0 : index
      %49 = vector.load %arg11[%c0_35, %c0_36] : memref<16x1xf32, #tpu.memory_space<vmem>>, vector<16x1xf32>
      %50 = math.log %49 : vector<16x1xf32>
      %51 = arith.addf %48, %50 : vector<16x1xf32>
      %c0_37 = arith.constant 0 : index
      %c0_38 = arith.constant 0 : index
      %52 = vector.load %arg7[%c0_37, %c0_38] : memref<16x1xf32, #tpu.memory_space<vmem>>, vector<16x1xf32>
      tpu.vector_store %arg7[%c0_37, %c0_38], %51 {strides = array<i32>} : memref<16x1xf32, #tpu.memory_space<vmem>>, vector<16x1xf32>,
      %c0_39 = arith.constant 0 : index
      %c0_40 = arith.constant 0 : index
      %53 = vector.load %arg12[%c0_39, %c0_40] : memref<16x1xf32, #tpu.memory_space<vmem>>, vector<16x1xf32>
      %c0_41 = arith.constant 0 : index
      %c0_42 = arith.constant 0 : index
      %54 = vector.load %arg8[%c0_41, %c0_42] : memref<16x1xf32, #tpu.memory_space<vmem>>, vector<16x1xf32>
      tpu.vector_store %arg8[%c0_41, %c0_42], %53 {strides = array<i32>} : memref<16x1xf32, #tpu.memory_space<vmem>>, vector<16x1xf32>,
      %c0_43 = arith.constant 0 : index
      %c0_44 = arith.constant 0 : index
      %55 = vector.load %arg13[%c0_43, %c0_44] : memref<16x1xf32, #tpu.memory_space<vmem>>, vector<16x1xf32>
      %c0_45 = arith.constant 0 : index
      %c0_46 = arith.constant 0 : index
      %56 = vector.load %arg9[%c0_45, %c0_46] : memref<16x1xf32, #tpu.memory_space<vmem>>, vector<16x1xf32>
      tpu.vector_store %arg9[%c0_45, %c0_46], %55 {strides = array<i32>} : memref<16x1xf32, #tpu.memory_space<vmem>>, vector<16x1xf32>,
    } else {
    }
    return
  }
  func.func @transform_0(%arg0: i32, %arg1: i32) -> (i32, i32) {
    %c0_i32 = arith.constant 0 : i32
    %c0_i32_0 = arith.constant 0 : i32
    return %arg0, %c0_i32 : i32, i32
  }
  func.func @transform_1(%arg0: i32, %arg1: i32) -> (i32, i32) {
    %c0_i32 = arith.constant 0 : i32
    %c0_i32_0 = arith.constant 0 : i32
    return %c0_i32, %arg1 : i32, i32
  }
  func.func @transform_2(%arg0: i32, %arg1: i32) -> (i32, i32) {
    %c0_i32 = arith.constant 0 : i32
    %c0_i32_0 = arith.constant 0 : i32
    return %c0_i32, %arg1 : i32, i32
  }
  func.func @transform_3(%arg0: i32, %arg1: i32) -> (i32, i32) {
    %c0_i32 = arith.constant 0 : i32
    %c0_i32_0 = arith.constant 0 : i32
    return %arg0, %c0_i32 : i32, i32
  }
  func.func @transform_4(%arg0: i32, %arg1: i32) -> (i32, i32) {
    %c0_i32 = arith.constant 0 : i32
    return %arg0, %arg1 : i32, i32
  }
  func.func @transform_5(%arg0: i32, %arg1: i32) -> (i32, i32) {
    %c0_i32 = arith.constant 0 : i32
    %c0_i32_0 = arith.constant 0 : i32
    return %arg0, %c0_i32 : i32, i32
  }
  func.func @transform_6(%arg0: i32, %arg1: i32) -> (i32, i32) {
    %c0_i32 = arith.constant 0 : i32
    %c0_i32_0 = arith.constant 0 : i32
    return %arg0, %c0_i32 : i32, i32
  }
  func.func @transform_7(%arg0: i32, %arg1: i32) -> (i32, i32) {
    %c0_i32 = arith.constant 0 : i32
    %c0_i32_0 = arith.constant 0 : i32
    return %arg0, %c0_i32 : i32, i32
  }
}

</mosaic_0001>

<llo_original>
// kernel: transformer_forward.25
$region0: #{transformer_forward.25}
  #allocation0 [shape = 'u32[]', space=smem, size = 0x4, offset = 0x4, fixed_abs, tag = 'smem constant byte address 0x4 - core index']
  #allocation1 [shape = 'u32[72,128]{1,0:T(1,128)}', space=vmem, size = 0x9000, scoped, tag = 'internal scratch']
  %s0 = inlined_call_operand.vmem [shape: bf16[20,128], index: 0, kind: input, shape index: {}]
  %s1 = inlined_call_operand.vmem [shape: bf16[128,128], index: 1, kind: input, shape index: {}]
  %s2 = inlined_call_operand.vmem [shape: bf16[128,128], index: 2, kind: input, shape index: {}]
  %s3 = inlined_call_operand.vmem [shape: bf16[128,128], index: 3, kind: input, shape index: {}]
  %s4 = inlined_call_operand.vmem [shape: f32[1,128], index: 4, kind: input, shape index: {}]
  %s5 = inlined_call_operand.vmem [shape: f32[1,128], index: 5, kind: input, shape index: {}]
  %s6 = inlined_call_operand.vmem [shape: f32[1,128], index: 6, kind: input, shape index: {}]
  %s7 = inlined_call_operand.vmem [shape: bf16[20,128], index: 7, kind: output, shape index: {0}]
  %s8 = inlined_call_operand.vmem [shape: bf16[20,128], index: 8, kind: output, shape index: {1}]
  %s9 = inlined_call_operand.vmem [shape: bf16[20,128], index: 9, kind: output, shape index: {2}]
  %10 = xla_tuple %s7, %s8, %s9
  %s11 = sld [smem:[#allocation0]]
  $region54: #{transformer_forward.25} parent=0
    _
  %s13 = ssub.s32 1, %s11
  %s14 = scalar_select 0, %s13, %s11
  // Predicated region
  $region2: #{transformer_forward.25} parent=0 // pred_check
    _
  $region3: #{transformer_forward.25} parent=0 // pred_check_branch
    %16 = sbr.rel (0) target = $region5
  $region4: #{transformer_forward.25} parent=0 // pred_region
    _
  $region5: #{transformer_forward.25} parent=0 // pred_fallthru
    _
  // Predicated region
  $region6: #{transformer_forward.25} parent=0 // pred_check
    _
  $region7: #{transformer_forward.25} parent=0 // pred_check_branch
    %18 = sbr.rel (0) target = $region9
  $region8: #{transformer_forward.25} parent=0 // pred_region
    _
  $region9: #{transformer_forward.25} parent=0 // pred_fallthru
    _
  // Predicated region
  $region10: #{transformer_forward.25} parent=0 // pred_check
    _
  $region11: #{transformer_forward.25} parent=0 // pred_check_branch
    %20 = sbr.rel (0) target = $region13
  $region12: #{transformer_forward.25} parent=0 // pred_region
    _
  $region13: #{transformer_forward.25} parent=0 // pred_fallthru
    _
  // Predicated region
  $region14: #{transformer_forward.25} parent=0 // pred_check
    _
  $region15: #{transformer_forward.25} parent=0 // pred_check_branch
    %22 = sbr.rel (0) target = $region17
  $region16: #{transformer_forward.25} parent=0 // pred_region
    _
  $region17: #{transformer_forward.25} parent=0 // pred_fallthru
    _
  // Predicated region
  $region18: #{transformer_forward.25} parent=0 // pred_check
    _
  $region19: #{transformer_forward.25} parent=0 // pred_check_branch
    %24 = sbr.rel (0) target = $region21
  $region20: #{transformer_forward.25} parent=0 // pred_region
    _
  $region21: #{transformer_forward.25} parent=0 // pred_fallthru
    _
  // Predicated region
  $region22: #{transformer_forward.25} parent=0 // pred_check
    _
  $region23: #{transformer_forward.25} parent=0 // pred_check_branch
    %26 = sbr.rel (0) target = $region25
  $region24: #{transformer_forward.25} parent=0 // pred_region
    _
  $region25: #{transformer_forward.25} parent=0 // pred_fallthru
    _
  // Predicated region
  $region26: #{transformer_forward.25} parent=0 // pred_check
    _
  $region27: #{transformer_forward.25} parent=0 // pred_check_branch
    %28 = sbr.rel (0) target = $region29
  $region28: #{transformer_forward.25} parent=0 // pred_region
    _
  $region29: #{transformer_forward.25} parent=0 // pred_fallthru
    _
  %v29 = vld [vmem:[%s0] sm:$0xf]
  %v30 = vld [vmem:[%s0 + $0x4] sm:$0xf]
  %v31 = vld [vmem:[%s0 + $0x8] sm:$0x3]
  %v32 = vld [vmem:[%s1] sm:$0xf]
  %v33 = vld [vmem:[%s1 + $0x4] sm:$0xf]
  %v34 = vld [vmem:[%s1 + $0x8] sm:$0xf]
  %v35 = vld [vmem:[%s1 + $0xc] sm:$0xf]
  %v36 = vld [vmem:[%s1 + $0x10] sm:$0xf]
  %v37 = vld [vmem:[%s1 + $0x14] sm:$0xf]
  %v38 = vld [vmem:[%s1 + $0x18] sm:$0xf]
  %v39 = vld [vmem:[%s1 + $0x1c] sm:$0xf]
  %v40 = vld [vmem:[%s1 + $0x20] sm:$0xf]
  %v41 = vld [vmem:[%s1 + $0x24] sm:$0xf]
  %v42 = vld [vmem:[%s1 + $0x28] sm:$0xf]
  %v43 = vld [vmem:[%s1 + $0x2c] sm:$0xf]
  %v44 = vld [vmem:[%s1 + $0x30] sm:$0xf]
  %v45 = vld [vmem:[%s1 + $0x34] sm:$0xf]
  %v46 = vld [vmem:[%s1 + $0x38] sm:$0xf]
  %v47 = vld [vmem:[%s1 + $0x3c] sm:$0xf]
  %v48 = vld [vmem:[%s4] sm:$0x1]
  %v50 = vperm.slane %v48, 0
  %v55 = vunpack.c.l.b16 %v29
  %v56 = vunpack.c.l.b16 %v30
  %v57 = vunpack.c.l.b16 %v31
  %v58 = vpack.c.b16 %v56, %v55
  %v59 = vpack.c.b16 %v57, %v57
  %v78 = vunpack.c.l.b16 %v32
  %v79 = vunpack.c.l.b16 %v33
  %v80 = vunpack.c.l.b16 %v34
  %v81 = vunpack.c.l.b16 %v35
  %v82 = vunpack.c.l.b16 %v36
  %v83 = vunpack.c.l.b16 %v37
  %v84 = vunpack.c.l.b16 %v38
  %v85 = vunpack.c.l.b16 %v39
  %v86 = vunpack.c.l.b16 %v40
  %v87 = vunpack.c.l.b16 %v41
  %v88 = vunpack.c.l.b16 %v42
  %v89 = vunpack.c.l.b16 %v43
  %v90 = vunpack.c.l.b16 %v44
  %v91 = vunpack.c.l.b16 %v45
  %v92 = vunpack.c.l.b16 %v46
  %v93 = vunpack.c.l.b16 %v47
  %v94 = vpack.c.b16 %v79, %v78
  %v95 = vpack.c.b16 %v81, %v80
  %v96 = vpack.c.b16 %v83, %v82
  %v97 = vpack.c.b16 %v85, %v84
  %v98 = vpack.c.b16 %v87, %v86
  %v99 = vpack.c.b16 %v89, %v88
  %v100 = vpack.c.b16 %v91, %v90
  %v101 = vpack.c.b16 %v93, %v92
  %110 = vmatpush.bf16.msra.mxu0 %v101
  %111 = vmatpush.bf16.msra.mxu0 %v100
  %112 = vmatpush.bf16.msra.mxu0 %v99
  %113 = vmatpush.bf16.msra.mxu0 %v98
  %114 = vmatpush.bf16.msra.mxu0 %v97
  %115 = vmatpush.bf16.msra.mxu0 %v96
  %116 = vmatpush.bf16.msra.mxu0 %v95
  %117 = vmatpush.bf16.msra.mxu0 %v94
  %118 = vmatmul.bf16.gmra.mxu0 %v58
  %v119 = vpop.f32.mrf.mxu0
  %v120 = vadd.f32 %v50, %v119
  %v121 = vpop.f32.mrf.mxu0
  %v122 = vadd.f32 %v50, %v121
  %123 = vmatmul.bf16.gmra.mxu0 %v59
  %v124 = vpop.f32.mrf.mxu0
  %v125 = vadd.f32 %v50, %v124
  %v126 = vpop.f32.mrf.mxu0
  %127 = vdwg.mxu0
  %v128 = vpack.c.bf16 %v120, %v120
  %v129 = vpack.c.bf16 %v122, %v122
  %v130 = vpack.c.bf16 %v125, %v125
  %131 = vst [vmem:[%s7] sm:$0xf] %v128
  %132 = vst [vmem:[%s7 + $0x4] sm:$0xf] %v129
  %133 = vst [vmem:[%s7 + $0x8] sm:$0x3] %v130
  %v134 = vld [vmem:[%s2] sm:$0xf]
  %v135 = vld [vmem:[%s2 + $0x4] sm:$0xf]
  %v136 = vld [vmem:[%s2 + $0x8] sm:$0xf]
  %v137 = vld [vmem:[%s2 + $0xc] sm:$0xf]
  %v138 = vld [vmem:[%s2 + $0x10] sm:$0xf]
  %v139 = vld [vmem:[%s2 + $0x14] sm:$0xf]
  %v140 = vld [vmem:[%s2 + $0x18] sm:$0xf]
  %v141 = vld [vmem:[%s2 + $0x1c] sm:$0xf]
  %v142 = vld [vmem:[%s2 + $0x20] sm:$0xf]
  %v143 = vld [vmem:[%s2 + $0x24] sm:$0xf]
  %v144 = vld [vmem:[%s2 + $0x28] sm:$0xf]
  %v145 = vld [vmem:[%s2 + $0x2c] sm:$0xf]
  %v146 = vld [vmem:[%s2 + $0x30] sm:$0xf]
  %v147 = vld [vmem:[%s2 + $0x34] sm:$0xf]
  %v148 = vld [vmem:[%s2 + $0x38] sm:$0xf]
  %v149 = vld [vmem:[%s2 + $0x3c] sm:$0xf]
  %v150 = vld [vmem:[%s5] sm:$0x1]
  %v152 = vperm.slane %v150, 0
  %v170 = vunpack.c.l.b16 %v134
  %v171 = vunpack.c.l.b16 %v135
  %v172 = vunpack.c.l.b16 %v136
  %v173 = vunpack.c.l.b16 %v137
  %v174 = vunpack.c.l.b16 %v138
  %v175 = vunpack.c.l.b16 %v139
  %v176 = vunpack.c.l.b16 %v140
  %v177 = vunpack.c.l.b16 %v141
  %v178 = vunpack.c.l.b16 %v142
  %v179 = vunpack.c.l.b16 %v143
  %v180 = vunpack.c.l.b16 %v144
  %v181 = vunpack.c.l.b16 %v145
  %v182 = vunpack.c.l.b16 %v146
  %v183 = vunpack.c.l.b16 %v147
  %v184 = vunpack.c.l.b16 %v148
  %v185 = vunpack.c.l.b16 %v149
  %v186 = vpack.c.b16 %v171, %v170
  %v187 = vpack.c.b16 %v173, %v172
  %v188 = vpack.c.b16 %v175, %v174
  %v189 = vpack.c.b16 %v177, %v176
  %v190 = vpack.c.b16 %v179, %v178
  %v191 = vpack.c.b16 %v181, %v180
  %v192 = vpack.c.b16 %v183, %v182
  %v193 = vpack.c.b16 %v185, %v184
  %202 = vmatpush.bf16.msra.mxu0 %v193
  %203 = vmatpush.bf16.msra.mxu0 %v192
  %204 = vmatpush.bf16.msra.mxu0 %v191
  %205 = vmatpush.bf16.msra.mxu0 %v190
  %206 = vmatpush.bf16.msra.mxu0 %v189
  %207 = vmatpush.bf16.msra.mxu0 %v188
  %208 = vmatpush.bf16.msra.mxu0 %v187
  %209 = vmatpush.bf16.msra.mxu0 %v186
  %210 = vmatmul.bf16.gmra.mxu0 %v58
  %v211 = vpop.f32.mrf.mxu0
  %v212 = vadd.f32 %v152, %v211
  %v213 = vpop.f32.mrf.mxu0
  %v214 = vadd.f32 %v152, %v213
  %215 = vmatmul.bf16.gmra.mxu0 %v59
  %v216 = vpop.f32.mrf.mxu0
  %v217 = vadd.f32 %v152, %v216
  %v218 = vpop.f32.mrf.mxu0
  %219 = vdwg.mxu0
  %v220 = vpack.c.bf16 %v212, %v212
  %v221 = vpack.c.bf16 %v214, %v214
  %v222 = vpack.c.bf16 %v217, %v217
  %223 = vst [vmem:[%s8] sm:$0xf] %v220
  %224 = vst [vmem:[%s8 + $0x4] sm:$0xf] %v221
  %225 = vst [vmem:[%s8 + $0x8] sm:$0x3] %v222
  %v226 = vld [vmem:[%s3] sm:$0xf]
  %v227 = vld [vmem:[%s3 + $0x4] sm:$0xf]
  %v228 = vld [vmem:[%s3 + $0x8] sm:$0xf]
  %v229 = vld [vmem:[%s3 + $0xc] sm:$0xf]
  %v230 = vld [vmem:[%s3 + $0x10] sm:$0xf]
  %v231 = vld [vmem:[%s3 + $0x14] sm:$0xf]
  %v232 = vld [vmem:[%s3 + $0x18] sm:$0xf]
  %v233 = vld [vmem:[%s3 + $0x1c] sm:$0xf]
  %v234 = vld [vmem:[%s3 + $0x20] sm:$0xf]
  %v235 = vld [vmem:[%s3 + $0x24] sm:$0xf]
  %v236 = vld [vmem:[%s3 + $0x28] sm:$0xf]
  %v237 = vld [vmem:[%s3 + $0x2c] sm:$0xf]
  %v238 = vld [vmem:[%s3 + $0x30] sm:$0xf]
  %v239 = vld [vmem:[%s3 + $0x34] sm:$0xf]
  %v240 = vld [vmem:[%s3 + $0x38] sm:$0xf]
  %v241 = vld [vmem:[%s3 + $0x3c] sm:$0xf]
  %v242 = vld [vmem:[%s6] sm:$0x1]
  %v244 = vperm.slane %v242, 0
  %v262 = vunpack.c.l.b16 %v226
  %v263 = vunpack.c.l.b16 %v227
  %v264 = vunpack.c.l.b16 %v228
  %v265 = vunpack.c.l.b16 %v229
  %v266 = vunpack.c.l.b16 %v230
  %v267 = vunpack.c.l.b16 %v231
  %v268 = vunpack.c.l.b16 %v232
  %v269 = vunpack.c.l.b16 %v233
  %v270 = vunpack.c.l.b16 %v234
  %v271 = vunpack.c.l.b16 %v235
  %v272 = vunpack.c.l.b16 %v236
  %v273 = vunpack.c.l.b16 %v237
  %v274 = vunpack.c.l.b16 %v238
  %v275 = vunpack.c.l.b16 %v239
  %v276 = vunpack.c.l.b16 %v240
  %v277 = vunpack.c.l.b16 %v241
  %v278 = vpack.c.b16 %v263, %v262
  %v279 = vpack.c.b16 %v265, %v264
  %v280 = vpack.c.b16 %v267, %v266
  %v281 = vpack.c.b16 %v269, %v268
  %v282 = vpack.c.b16 %v271, %v270
  %v283 = vpack.c.b16 %v273, %v272
  %v284 = vpack.c.b16 %v275, %v274
  %v285 = vpack.c.b16 %v277, %v276
  %294 = vmatpush.bf16.msra.mxu0 %v285
  %295 = vmatpush.bf16.msra.mxu0 %v284
  %296 = vmatpush.bf16.msra.mxu0 %v283
  %297 = vmatpush.bf16.msra.mxu0 %v282
  %298 = vmatpush.bf16.msra.mxu0 %v281
  %299 = vmatpush.bf16.msra.mxu0 %v280
  %300 = vmatpush.bf16.msra.mxu0 %v279
  %301 = vmatpush.bf16.msra.mxu0 %v278
  %302 = vmatmul.bf16.gmra.mxu0 %v58
  %v303 = vpop.f32.mrf.mxu0
  %v304 = vadd.f32 %v244, %v303
  %v305 = vpop.f32.mrf.mxu0
  %v306 = vadd.f32 %v244, %v305
  %307 = vmatmul.bf16.gmra.mxu0 %v59
  %v308 = vpop.f32.mrf.mxu0
  %v309 = vadd.f32 %v244, %v308
  %v310 = vpop.f32.mrf.mxu0
  %311 = vdwg.mxu0
  %v312 = vpack.c.bf16 %v304, %v304
  %v313 = vpack.c.bf16 %v306, %v306
  %v314 = vpack.c.bf16 %v309, %v309
  %315 = vst [vmem:[%s9] sm:$0xf] %v312
  %316 = vst [vmem:[%s9 + $0x4] sm:$0xf] %v313
  %317 = vst [vmem:[%s9 + $0x8] sm:$0x3] %v314
  // Predicated region
  $region30: #{transformer_forward.25} parent=0 // pred_check
    _
  $region31: #{transformer_forward.25} parent=0 // pred_check_branch
    %319 = sbr.rel (0) target = $region33
  $region32: #{transformer_forward.25} parent=0 // pred_region
    _
  $region33: #{transformer_forward.25} parent=0 // pred_fallthru
    _
  // Predicated region
  $region34: #{transformer_forward.25} parent=0 // pred_check
    _
  $region35: #{transformer_forward.25} parent=0 // pred_check_branch
    %321 = sbr.rel (0) target = $region37
  $region36: #{transformer_forward.25} parent=0 // pred_region
    _
  $region37: #{transformer_forward.25} parent=0 // pred_fallthru
    _
  // Predicated region
  $region38: #{transformer_forward.25} parent=0 // pred_check
    _
  $region39: #{transformer_forward.25} parent=0 // pred_check_branch
    %323 = sbr.rel (0) target = $region41
  $region40: #{transformer_forward.25} parent=0 // pred_region
    _
  $region41: #{transformer_forward.25} parent=0 // pred_fallthru
    _
  // Predicated region
  $region42: #{transformer_forward.25} parent=0 // pred_check
    _
  $region43: #{transformer_forward.25} parent=0 // pred_check_branch
    %325 = sbr.rel (0) target = $region45
  $region44: #{transformer_forward.25} parent=0 // pred_region
    _
  $region45: #{transformer_forward.25} parent=0 // pred_fallthru
    _
  // Predicated region
  $region46: #{transformer_forward.25} parent=0 // pred_check
    _
  $region47: #{transformer_forward.25} parent=0 // pred_check_branch
    %327 = sbr.rel (0) target = $region49
  $region48: #{transformer_forward.25} parent=0 // pred_region
    _
  $region49: #{transformer_forward.25} parent=0 // pred_fallthru
    _
  // Predicated region
  $region50: #{transformer_forward.25} parent=0 // pred_check
    _
  $region51: #{transformer_forward.25} parent=0 // pred_check_branch
    %329 = sbr.rel (0) target = $region53
  $region52: #{transformer_forward.25} parent=0 // pred_region
    _
  $region53: #{transformer_forward.25} parent=0 // pred_fallthru
    _

// kernel: transformer_forward.27
$region0: #{transformer_forward.27}
  #allocation0 [shape = 'u32[]', space=smem, size = 0x4, offset = 0x4, fixed_abs, tag = 'smem constant byte address 0x4 - core index']
  #allocation1 [shape = 'u32[72,128]{1,0:T(1,128)}', space=vmem, size = 0x9000, scoped, tag = 'internal scratch']
  %s0 = inlined_call_operand.vmem [shape: bf16[20,128], index: 0, kind: input, shape index: {}]
  %s1 = inlined_call_operand.vmem [shape: bf16[128,128], index: 1, kind: input, shape index: {}]
  %s2 = inlined_call_operand.vmem [shape: f32[1,128], index: 2, kind: input, shape index: {}]
  %s3 = inlined_call_operand.vmem [shape: bf16[20,128], index: 3, kind: input, shape index: {}]
  %s4 = inlined_call_operand.vmem [shape: f32[1,128], index: 4, kind: input, shape index: {}]
  %s5 = inlined_call_operand.vmem [shape: f32[1,128], index: 5, kind: input, shape index: {}]
  %s6 = inlined_call_operand.vmem [shape: bf16[20,128], index: 6, kind: output, shape index: {}]
  %s7 = sld [smem:[#allocation0]]
  $region34: #{transformer_forward.27} parent=0
    _
  %s9 = ssub.s32 1, %s7
  %s10 = scalar_select 0, %s9, %s7
  // Predicated region
  $region2: #{transformer_forward.27} parent=0 // pred_check
    _
  $region3: #{transformer_forward.27} parent=0 // pred_check_branch
    %12 = sbr.rel (0) target = $region5
  $region4: #{transformer_forward.27} parent=0 // pred_region
    _
  $region5: #{transformer_forward.27} parent=0 // pred_fallthru
    _
  // Predicated region
  $region6: #{transformer_forward.27} parent=0 // pred_check
    _
  $region7: #{transformer_forward.27} parent=0 // pred_check_branch
    %14 = sbr.rel (0) target = $region9
  $region8: #{transformer_forward.27} parent=0 // pred_region
    _
  $region9: #{transformer_forward.27} parent=0 // pred_fallthru
    _
  // Predicated region
  $region10: #{transformer_forward.27} parent=0 // pred_check
    _
  $region11: #{transformer_forward.27} parent=0 // pred_check_branch
    %16 = sbr.rel (0) target = $region13
  $region12: #{transformer_forward.27} parent=0 // pred_region
    _
  $region13: #{transformer_forward.27} parent=0 // pred_fallthru
    _
  // Predicated region
  $region14: #{transformer_forward.27} parent=0 // pred_check
    _
  $region15: #{transformer_forward.27} parent=0 // pred_check_branch
    %18 = sbr.rel (0) target = $region17
  $region16: #{transformer_forward.27} parent=0 // pred_region
    _
  $region17: #{transformer_forward.27} parent=0 // pred_fallthru
    _
  // Predicated region
  $region18: #{transformer_forward.27} parent=0 // pred_check
    _
  $region19: #{transformer_forward.27} parent=0 // pred_check_branch
    %20 = sbr.rel (0) target = $region21
  $region20: #{transformer_forward.27} parent=0 // pred_region
    _
  $region21: #{transformer_forward.27} parent=0 // pred_fallthru
    _
  // Predicated region
  $region22: #{transformer_forward.27} parent=0 // pred_check
    _
  $region23: #{transformer_forward.27} parent=0 // pred_check_branch
    %22 = sbr.rel (0) target = $region25
  $region24: #{transformer_forward.27} parent=0 // pred_region
    _
  $region25: #{transformer_forward.27} parent=0 // pred_fallthru
    _
  %v23 = vld [vmem:[%s0] sm:$0xf]
  %v24 = vld [vmem:[%s0 + $0x4] sm:$0xf]
  %v25 = vld [vmem:[%s0 + $0x8] sm:$0x3]
  %v26 = vld [vmem:[%s1] sm:$0xf]
  %v27 = vld [vmem:[%s1 + $0x4] sm:$0xf]
  %v28 = vld [vmem:[%s1 + $0x8] sm:$0xf]
  %v29 = vld [vmem:[%s1 + $0xc] sm:$0xf]
  %v30 = vld [vmem:[%s1 + $0x10] sm:$0xf]
  %v31 = vld [vmem:[%s1 + $0x14] sm:$0xf]
  %v32 = vld [vmem:[%s1 + $0x18] sm:$0xf]
  %v33 = vld [vmem:[%s1 + $0x1c] sm:$0xf]
  %v34 = vld [vmem:[%s1 + $0x20] sm:$0xf]
  %v35 = vld [vmem:[%s1 + $0x24] sm:$0xf]
  %v36 = vld [vmem:[%s1 + $0x28] sm:$0xf]
  %v37 = vld [vmem:[%s1 + $0x2c] sm:$0xf]
  %v38 = vld [vmem:[%s1 + $0x30] sm:$0xf]
  %v39 = vld [vmem:[%s1 + $0x34] sm:$0xf]
  %v40 = vld [vmem:[%s1 + $0x38] sm:$0xf]
  %v41 = vld [vmem:[%s1 + $0x3c] sm:$0xf]
  %v42 = vld [vmem:[%s2] sm:$0x1]
  %v44 = vperm.slane %v42, 0
  %v49 = vunpack.c.l.b16 %v23
  %v50 = vunpack.c.l.b16 %v24
  %v51 = vunpack.c.l.b16 %v25
  %v52 = vpack.c.b16 %v50, %v49
  %v53 = vpack.c.b16 %v51, %v51
  %v72 = vunpack.c.l.b16 %v26
  %v73 = vunpack.c.l.b16 %v27
  %v74 = vunpack.c.l.b16 %v28
  %v75 = vunpack.c.l.b16 %v29
  %v76 = vunpack.c.l.b16 %v30
  %v77 = vunpack.c.l.b16 %v31
  %v78 = vunpack.c.l.b16 %v32
  %v79 = vunpack.c.l.b16 %v33
  %v80 = vunpack.c.l.b16 %v34
  %v81 = vunpack.c.l.b16 %v35
  %v82 = vunpack.c.l.b16 %v36
  %v83 = vunpack.c.l.b16 %v37
  %v84 = vunpack.c.l.b16 %v38
  %v85 = vunpack.c.l.b16 %v39
  %v86 = vunpack.c.l.b16 %v40
  %v87 = vunpack.c.l.b16 %v41
  %v88 = vpack.c.b16 %v73, %v72
  %v89 = vpack.c.b16 %v75, %v74
  %v90 = vpack.c.b16 %v77, %v76
  %v91 = vpack.c.b16 %v79, %v78
  %v92 = vpack.c.b16 %v81, %v80
  %v93 = vpack.c.b16 %v83, %v82
  %v94 = vpack.c.b16 %v85, %v84
  %v95 = vpack.c.b16 %v87, %v86
  %104 = vmatpush.bf16.msra.mxu0 %v95
  %105 = vmatpush.bf16.msra.mxu0 %v94
  %106 = vmatpush.bf16.msra.mxu0 %v93
  %107 = vmatpush.bf16.msra.mxu0 %v92
  %108 = vmatpush.bf16.msra.mxu0 %v91
  %109 = vmatpush.bf16.msra.mxu0 %v90
  %110 = vmatpush.bf16.msra.mxu0 %v89
  %111 = vmatpush.bf16.msra.mxu0 %v88
  %112 = vmatmul.bf16.gmra.mxu0 %v52
  %v113 = vpop.f32.mrf.mxu0
  %v114 = vadd.f32 %v44, %v113
  %v115 = vpop.f32.mrf.mxu0
  %v116 = vadd.f32 %v44, %v115
  %117 = vmatmul.bf16.gmra.mxu0 %v53
  %v118 = vpop.f32.mrf.mxu0
  %v119 = vadd.f32 %v44, %v118
  %v120 = vpop.f32.mrf.mxu0
  %121 = vdwg.mxu0
  %v122 = vld [vmem:[%s3] sm:$0xf]
  %v123 = vld [vmem:[%s3 + $0x4] sm:$0xf]
  %v124 = vld [vmem:[%s3 + $0x8] sm:$0x3]
  %v125 = vunpack.c.l.bf16 %v122
  %v126 = vunpack.c.l.bf16 %v123
  %v127 = vunpack.c.l.bf16 %v124
  %v128 = vadd.f32 %v114, %v125
  %v129 = vadd.f32 %v116, %v126
  %v130 = vadd.f32 %v119, %v127
  %131 = vadd.xlane.f32.xlu0 %v128
  %v132 = vpop.xlane.xlu0 %131
  %133 = vadd.xlane.f32.xlu0 %v129
  %v134 = vpop.xlane.xlu0 %133
  %vm135 = vcmask 1043456
  %v136 = vsel %vm135, %v130, 0.0
  %137 = vadd.xlane.f32.xlu0 %v136
  %v138 = vpop.xlane.xlu0 %137
  %v139 = vrcp.pop 128.0
  %v140 = vmul.f32 128.0, %v139
  %v141 = vsub.f32 1.0, %v140
  %v142 = vmul.f32 %v139, %v141
  %v143 = vadd.f32 %v139, %v142
  %vm144 = vweird.f32 %v139
  %v145 = vsel %vm144, %v139, %v143
  %v146 = vmul.f32 %v132, %v145
  %v147 = vmul.f32 %v134, %v145
  %v148 = vmul.f32 %v138, %v145
  %v149 = vsub.f32 %v128, %v146
  %v150 = vsub.f32 %v129, %v147
  %v151 = vsub.f32 %v130, %v148
  %v152 = vmul.f32 %v149, %v149
  %v153 = vmul.f32 %v150, %v150
  %v154 = vmul.f32 %v151, %v151
  %155 = vadd.xlane.f32.xlu0 %v152
  %v156 = vpop.xlane.xlu0 %155
  %157 = vadd.xlane.f32.xlu0 %v153
  %v158 = vpop.xlane.xlu0 %157
  %v159 = vsel %vm135, %v154, 0.0
  %160 = vadd.xlane.f32.xlu0 %v159
  %v161 = vpop.xlane.xlu0 %160
  %v162 = vmul.f32 %v156, %v145
  %v163 = vmul.f32 %v158, %v145
  %v164 = vmul.f32 %v161, %v145
  %v165 = vadd.f32 %v162, 1e-06
  %v166 = vadd.f32 %v163, 1e-06
  %v167 = vadd.f32 %v164, 1e-06
  %v168 = vrsqrt.pop %v165
  %v169 = vmul.f32 %v168, %v165
  %v170 = vmul.f32 %v169, %v168
  %v171 = vmul.f32 0.5, %v170
  %v172 = vsub.f32 1.5, %v171
  %v173 = vmul.f32 %v168, %v172
  %vm174 = vweird.f32 %v165
  %vm175 = vweird.f32 %v168
  %vm176 = vmor %vm174, %vm175
  %v177 = vsel %vm176, %v168, %v173
  %v178 = vrsqrt.pop %v166
  %v179 = vmul.f32 %v178, %v166
  %v180 = vmul.f32 %v179, %v178
  %v181 = vmul.f32 0.5, %v180
  %v182 = vsub.f32 1.5, %v181
  %v183 = vmul.f32 %v178, %v182
  %vm184 = vweird.f32 %v166
  %vm185 = vweird.f32 %v178
  %vm186 = vmor %vm184, %vm185
  %v187 = vsel %vm186, %v178, %v183
  %v188 = vrsqrt.pop %v167
  %v189 = vmul.f32 %v188, %v167
  %v190 = vmul.f32 %v189, %v188
  %v191 = vmul.f32 0.5, %v190
  %v192 = vsub.f32 1.5, %v191
  %v193 = vmul.f32 %v188, %v192
  %vm194 = vweird.f32 %v167
  %vm195 = vweird.f32 %v188
  %vm196 = vmor %vm194, %vm195
  %v197 = vsel %vm196, %v188, %v193
  %v198 = vmul.f32 %v149, %v177
  %v199 = vmul.f32 %v150, %v187
  %v200 = vmul.f32 %v151, %v197
  %v201 = vld [vmem:[%s4] sm:$0x1]
  %v203 = vperm.slane %v201, 0
  %v205 = vmul.f32 %v198, %v203
  %v206 = vmul.f32 %v199, %v203
  %v207 = vmul.f32 %v200, %v203
  %v208 = vld [vmem:[%s5] sm:$0x1]
  %v210 = vperm.slane %v208, 0
  %v212 = vadd.f32 %v205, %v210
  %v213 = vadd.f32 %v206, %v210
  %v214 = vadd.f32 %v207, %v210
  %v215 = vpack.c.bf16 %v212, %v212
  %v216 = vpack.c.bf16 %v213, %v213
  %v217 = vpack.c.bf16 %v214, %v214
  %218 = vst [vmem:[%s6] sm:$0xf] %v215
  %219 = vst [vmem:[%s6 + $0x4] sm:$0xf] %v216
  %220 = vst [vmem:[%s6 + $0x8] sm:$0x3] %v217
  // Predicated region
  $region26: #{transformer_forward.27} parent=0 // pred_check
    _
  $region27: #{transformer_forward.27} parent=0 // pred_check_branch
    %222 = sbr.rel (0) target = $region29
  $region28: #{transformer_forward.27} parent=0 // pred_region
    _
  $region29: #{transformer_forward.27} parent=0 // pred_fallthru
    _
  // Predicated region
  $region30: #{transformer_forward.27} parent=0 // pred_check
    _
  $region31: #{transformer_forward.27} parent=0 // pred_check_branch
    %224 = sbr.rel (0) target = $region33
  $region32: #{transformer_forward.27} parent=0 // pred_region
    _
  $region33: #{transformer_forward.27} parent=0 // pred_fallthru
    _

// kernel: transformer_forward.26
$region0: #{transformer_forward.26}
  #allocation0 [shape = 'u32[]', space=smem, size = 0x4, offset = 0x4, fixed_abs, tag = 'smem constant byte address 0x4 - core index']
  #allocation1 [shape = 'u32[72,128]{1,0:T(1,128)}', space=vmem, size = 0x9000, scoped, tag = 'internal scratch']
  #allocation2 [shape = 'f32[10,4]{1,0:T(8,128)}', space=vmem, size = 0x2000, scoped, tag = 'scratch operand']
  #allocation3 [shape = 'f32[10,4]{1,0:T(8,128)}', space=vmem, size = 0x2000, scoped, tag = 'scratch operand']
  #allocation4 [shape = 'f32[10,128]{1,0:T(8,128)}', space=vmem, size = 0x2000, scoped, tag = 'scratch operand']
  %s0 = inlined_call_operand.vmem [shape: bf16[2,10,128], index: 0, kind: input, shape index: {}]
  %s1 = inlined_call_operand.vmem [shape: bf16[2,10,128], index: 1, kind: input, shape index: {}]
  %s2 = inlined_call_operand.vmem [shape: bf16[2,10,128], index: 2, kind: input, shape index: {}]
  %s3 = inlined_call_operand.vmem [shape: f32[2,1,10], index: 3, kind: input, shape index: {}]
  %s4 = inlined_call_operand.vmem [shape: bf16[2,10,128], index: 4, kind: output, shape index: {}]
  %s5 = sld [smem:[#allocation0]]
  $region57: #{transformer_forward.26} parent=0
    _
  %s7 = ssub.s32 1, %s5
  %s8 = scalar_select 0, %s7, %s5
  loop: start=0, step=1, limit=4
  $region2: #{transformer_forward.26} parent=0 // loop_pre_header
    _
  $region3: #{transformer_forward.26} parent=0 // loop_header
    %s10 = sphi 0, %s14
    %p11 = scmp.ge.s32.totalorder %s10, 4
    %s17 = sphi 0, %s36
    %s18 = sphi 0, %s32
    %s19 = sphi 0, %s28
    %s20 = sphi 0, %s17
    %s21 = sphi 0, %s18
    %s22 = sphi 0, %s19
    %s23 = sphi 0, %s20
    %s24 = sphi 0, %s21
    %s25 = sphi 0, %s22
    %s41 = sphi 0, %s43
    %s44 = sphi 0, %s41
    %s45 = sphi 0, %s44
    %s61 = sphi 0, %s45
    %s69 = sphi 0, %s71
    %s72 = sphi 0, %s69
    %s73 = sphi 0, %s72
    %s89 = sphi 0, %s73
    %s97 = sphi 0, %s99
    %s100 = sphi 0, %s97
    %s101 = sphi 0, %s100
    %s117 = sphi 0, %s101
    %s125 = sphi 0, %s127
    %s128 = sphi 0, %s125
    %s129 = sphi 0, %s128
    %s145 = sphi 0, %s129
    %s153 = sphi 0, %s155
    %s156 = sphi 0, %s153
    %s157 = sphi 0, %s156
    %s173 = sphi 0, %s157
  $region4: #{transformer_forward.26} parent=0 // loop_header_branch
    %13 = sbr.rel (%p11) target = $region8
  $region5: #{transformer_forward.26} parent=0 // loop_body
    %s15 = ssub.s32 %s10, 1
    %s16 = ssub.s32 %s10, 2
    %s26 = sadd.s32 1, %s19
    %p27 = scmp.ge.s32.totalorder %s26, 1
    %s28 = scalar_select %p27, 0, %s26
    %s29 = sadd.s32 1, %s18
    %s30 = scalar_select %p27, %s29, %s18
    %p31 = scmp.ge.s32.totalorder %s30, 1
    %s32 = scalar_select %p31, 0, %s30
    %s33 = sadd.s32 1, %s17
    %s34 = scalar_select %p31, %s33, %s17
    %p35 = scmp.ge.s32.totalorder %s34, 2
    %s36 = scalar_select %p35, 0, %s34
    %s37 = ssub.s32 %s17, %s36
    %s38 = ssub.s32 %s18, %s32
    %s39 = sor.u32 %s37, %s38
    %p40 = scmp.eq.s32.totalorder %s39, 0
    %s42 = sadd.s32 %s41, 1
    %s43 = scalar_select %p40, %s41, %s42
    %p46 = pneg %p40
    %p47 = scmp.eq.s32.totalorder %s10, 1
    %p48 = por %p46, %p47
    %p49 = scmp.ne.s32.totalorder %s41, %s44
    %p50 = scmp.eq.s32.totalorder %s10, 0
    %p51 = por %p49, %p50
    %p52 = scmp.ne.s32.totalorder %s41, %s44
    %p53 = scmp.eq.s32.totalorder %s15, 1
    %p54 = por %p52, %p53
    %p55 = scmp.ne.s32.totalorder %s44, %s45
    %p56 = scmp.eq.s32.totalorder %s15, 0
    %p57 = por %p55, %p56
    %p58 = scmp.ne.s32.totalorder %s44, %s45
    %p59 = scmp.eq.s32.totalorder %s16, 1
    %p60 = por %p58, %p59
    %p62 = scmp.ne.s32.totalorder %s45, %s61
    %p63 = scmp.eq.s32.totalorder %s16, 0
    %p64 = por %p62, %p63
    %s65 = ssub.s32 %s17, %s36
    %s66 = ssub.s32 %s19, %s28
    %s67 = sor.u32 %s65, %s66
    %p68 = scmp.eq.s32.totalorder %s67, 0
    %s70 = sadd.s32 %s69, 1
    %s71 = scalar_select %p68, %s69, %s70
    %p74 = pneg %p68
    %p75 = scmp.eq.s32.totalorder %s10, 1
    %p76 = por %p74, %p75
    %p77 = scmp.ne.s32.totalorder %s69, %s72
    %p78 = scmp.eq.s32.totalorder %s10, 0
    %p79 = por %p77, %p78
    %p80 = scmp.ne.s32.totalorder %s69, %s72
    %p81 = scmp.eq.s32.totalorder %s15, 1
    %p82 = por %p80, %p81
    %p83 = scmp.ne.s32.totalorder %s72, %s73
    %p84 = scmp.eq.s32.totalorder %s15, 0
    %p85 = por %p83, %p84
    %p86 = scmp.ne.s32.totalorder %s72, %s73
    %p87 = scmp.eq.s32.totalorder %s16, 1
    %p88 = por %p86, %p87
    %p90 = scmp.ne.s32.totalorder %s73, %s89
    %p91 = scmp.eq.s32.totalorder %s16, 0
    %p92 = por %p90, %p91
    %s93 = ssub.s32 %s17, %s36
    %s94 = ssub.s32 %s19, %s28
    %s95 = sor.u32 %s93, %s94
    %p96 = scmp.eq.s32.totalorder %s95, 0
    %s98 = sadd.s32 %s97, 1
    %s99 = scalar_select %p96, %s97, %s98
    %p102 = pneg %p96
    %p103 = scmp.eq.s32.totalorder %s10, 1
    %p104 = por %p102, %p103
    %p105 = scmp.ne.s32.totalorder %s97, %s100
    %p106 = scmp.eq.s32.totalorder %s10, 0
    %p107 = por %p105, %p106
    %p108 = scmp.ne.s32.totalorder %s97, %s100
    %p109 = scmp.eq.s32.totalorder %s15, 1
    %p110 = por %p108, %p109
    %p111 = scmp.ne.s32.totalorder %s100, %s101
    %p112 = scmp.eq.s32.totalorder %s15, 0
    %p113 = por %p111, %p112
    %p114 = scmp.ne.s32.totalorder %s100, %s101
    %p115 = scmp.eq.s32.totalorder %s16, 1
    %p116 = por %p114, %p115
    %p118 = scmp.ne.s32.totalorder %s101, %s117
    %p119 = scmp.eq.s32.totalorder %s16, 0
    %p120 = por %p118, %p119
    %s121 = ssub.s32 %s17, %s36
    %s122 = ssub.s32 %s19, %s28
    %s123 = sor.u32 %s121, %s122
    %p124 = scmp.eq.s32.totalorder %s123, 0
    %s126 = sadd.s32 %s125, 1
    %s127 = scalar_select %p124, %s125, %s126
    %p130 = pneg %p124
    %p131 = scmp.eq.s32.totalorder %s10, 1
    %p132 = por %p130, %p131
    %p133 = scmp.ne.s32.totalorder %s125, %s128
    %p134 = scmp.eq.s32.totalorder %s10, 0
    %p135 = por %p133, %p134
    %p136 = scmp.ne.s32.totalorder %s125, %s128
    %p137 = scmp.eq.s32.totalorder %s15, 1
    %p138 = por %p136, %p137
    %p139 = scmp.ne.s32.totalorder %s128, %s129
    %p140 = scmp.eq.s32.totalorder %s15, 0
    %p141 = por %p139, %p140
    %p142 = scmp.ne.s32.totalorder %s128, %s129
    %p143 = scmp.eq.s32.totalorder %s16, 1
    %p144 = por %p142, %p143
    %p146 = scmp.ne.s32.totalorder %s129, %s145
    %p147 = scmp.eq.s32.totalorder %s16, 0
    %p148 = por %p146, %p147
    %s149 = ssub.s32 %s17, %s36
    %s150 = ssub.s32 %s18, %s32
    %s151 = sor.u32 %s149, %s150
    %p152 = scmp.eq.s32.totalorder %s151, 0
    %s154 = sadd.s32 %s153, 1
    %s155 = scalar_select %p152, %s153, %s154
    %p158 = pneg %p152
    %p159 = scmp.eq.s32.totalorder %s10, 1
    %p160 = por %p158, %p159
    %p161 = scmp.ne.s32.totalorder %s153, %s156
    %p162 = scmp.eq.s32.totalorder %s10, 0
    %p163 = por %p161, %p162
    %p164 = scmp.ne.s32.totalorder %s153, %s156
    %p165 = scmp.eq.s32.totalorder %s15, 1
    %p166 = por %p164, %p165
    %p167 = scmp.ne.s32.totalorder %s156, %s157
    %p168 = scmp.eq.s32.totalorder %s15, 0
    %p169 = por %p167, %p168
    %p170 = scmp.ne.s32.totalorder %s156, %s157
    %p171 = scmp.eq.s32.totalorder %s16, 1
    %p172 = por %p170, %p171
    %p174 = scmp.ne.s32.totalorder %s157, %s173
    %p175 = scmp.eq.s32.totalorder %s16, 0
    %p176 = por %p174, %p175
    %p177 = scmp.le.s32.totalorder 1, %s10
    %p178 = scmp.lt.s32.totalorder %s10, 3
    %p179 = pnand %p177, %p178
    %p180 = pneg %p179
    // Predicated region
    $region9: #{transformer_forward.26} parent=5 // pred_check
      _
    $region10: #{transformer_forward.26} parent=5 // pred_check_branch
      %182 = sbr.rel (%p179) target = $region12
    $region11: #{transformer_forward.26} parent=5 // pred_region
      %s183 = ssub.s32 %s10, 1
    $region12: #{transformer_forward.26} parent=5 // pred_fallthru
      _
    %p184 = scmp.lt.s32.totalorder %s10, 2
    // Predicated region
    $region13: #{transformer_forward.26} parent=5 // pred_check
      %p185 = pneg %p184
    $region14: #{transformer_forward.26} parent=5 // pred_check_branch
      %187 = sbr.rel (%p185) target = $region16
    $region15: #{transformer_forward.26} parent=5 // pred_region
      // Predicated region
      $region17: #{transformer_forward.26} parent=15 // pred_check
        %p188 = pneg %p51
      $region18: #{transformer_forward.26} parent=15 // pred_check_branch
        %190 = sbr.rel (%p188) target = $region20
      $region19: #{transformer_forward.26} parent=15 // pred_region
        %s191 = smul.u32 2, %s18
        %p192 = scmp.lt.s32.totalorder %s17, 1
        %s193 = scalar_select %p192, %s17, 1
        %p194 = scmp.lt.s32.totalorder %s191, 1
        %s195 = scalar_select %p194, %s191, 1
        %s196 = smul.addr %s193, 2
        %s197 = sadd.s32 %s195, %s196
        %s198 = smul.addr %s197, 4
        %s199 = scalar_lea.vmem %s0, %s198
        %s200 = smul.u32 2, %s18
      $region20: #{transformer_forward.26} parent=15 // pred_fallthru
        _
      // Predicated region
      $region21: #{transformer_forward.26} parent=15 // pred_check
        %p201 = pneg %p79
      $region22: #{transformer_forward.26} parent=15 // pred_check_branch
        %203 = sbr.rel (%p201) target = $region24
      $region23: #{transformer_forward.26} parent=15 // pred_region
        %s204 = smul.u32 2, %s19
        %p205 = scmp.lt.s32.totalorder %s17, 1
        %s206 = scalar_select %p205, %s17, 1
        %p207 = scmp.lt.s32.totalorder %s204, 1
        %s208 = scalar_select %p207, %s204, 1
        %s209 = smul.addr %s206, 2
        %s210 = sadd.s32 %s208, %s209
        %s211 = smul.addr %s210, 4
        %s212 = scalar_lea.vmem %s1, %s211
        %s213 = smul.u32 2, %s19
      $region24: #{transformer_forward.26} parent=15 // pred_fallthru
        _
      // Predicated region
      $region25: #{transformer_forward.26} parent=15 // pred_check
        %p214 = pneg %p107
      $region26: #{transformer_forward.26} parent=15 // pred_check_branch
        %216 = sbr.rel (%p214) target = $region28
      $region27: #{transformer_forward.26} parent=15 // pred_region
        %s217 = smul.u32 2, %s19
        %p218 = scmp.lt.s32.totalorder %s17, 1
        %s219 = scalar_select %p218, %s17, 1
        %p220 = scmp.lt.s32.totalorder %s217, 1
        %s221 = scalar_select %p220, %s217, 1
        %s222 = smul.addr %s219, 2
        %s223 = sadd.s32 %s221, %s222
        %s224 = smul.addr %s223, 4
        %s225 = scalar_lea.vmem %s2, %s224
        %s226 = smul.u32 2, %s19
      $region28: #{transformer_forward.26} parent=15 // pred_fallthru
        _
      // Predicated region
      $region29: #{transformer_forward.26} parent=15 // pred_check
        %p227 = pneg %p135
      $region30: #{transformer_forward.26} parent=15 // pred_check_branch
        %229 = sbr.rel (%p227) target = $region32
      $region31: #{transformer_forward.26} parent=15 // pred_region
        %p230 = scmp.lt.s32.totalorder %s17, 1
        %s231 = scalar_select %p230, %s17, 1
        %p232 = scmp.lt.s32.totalorder %s19, 0
        %s233 = scalar_select %p232, %s19, 0
        %s234 = sadd.s32 %s233, %s231
        %s235 = scalar_lea.vmem %s3, %s234
      $region32: #{transformer_forward.26} parent=15 // pred_fallthru
        _
    $region16: #{transformer_forward.26} parent=5 // pred_fallthru
      _
    %p236 = scmp.le.s32.totalorder 1, %s10
    %p237 = scmp.lt.s32.totalorder %s10, 3
    %p238 = pnand %p236, %p237
    %p239 = pneg %p238
    // Predicated region
    $region33: #{transformer_forward.26} parent=5 // pred_check
      _
    $region34: #{transformer_forward.26} parent=5 // pred_check_branch
      %241 = sbr.rel (%p238) target = $region36
    $region35: #{transformer_forward.26} parent=5 // pred_region
      %s242 = ssub.s32 %s10, 1
      %s243 = smul.u32 2, %s21
      %p244 = scmp.lt.s32.totalorder %s20, 1
      %s245 = scalar_select %p244, %s20, 1
      %p246 = scmp.lt.s32.totalorder %s243, 1
      %s247 = scalar_select %p246, %s243, 1
      %s248 = smul.addr %s245, 2
      %s249 = sadd.s32 %s247, %s248
      %s250 = smul.addr %s249, 4
      %s251 = scalar_lea.vmem %s0, %s250
      %p252 = pneg %p57
      %p253 = pneg %p54
      %s254 = smul.u32 2, %s22
      %p255 = scmp.lt.s32.totalorder %s20, 1
      %s256 = scalar_select %p255, %s20, 1
      %p257 = scmp.lt.s32.totalorder %s254, 1
      %s258 = scalar_select %p257, %s254, 1
      %s259 = smul.addr %s256, 2
      %s260 = sadd.s32 %s258, %s259
      %s261 = smul.addr %s260, 4
      %s262 = scalar_lea.vmem %s1, %s261
      %p263 = pneg %p85
      %p264 = pneg %p82
      %s265 = smul.u32 2, %s22
      %p266 = scmp.lt.s32.totalorder %s20, 1
      %s267 = scalar_select %p266, %s20, 1
      %p268 = scmp.lt.s32.totalorder %s265, 1
      %s269 = scalar_select %p268, %s265, 1
      %s270 = smul.addr %s267, 2
      %s271 = sadd.s32 %s269, %s270
      %s272 = smul.addr %s271, 4
      %s273 = scalar_lea.vmem %s2, %s272
      %p274 = pneg %p113
      %p275 = pneg %p110
      %p276 = scmp.lt.s32.totalorder %s20, 1
      %s277 = scalar_select %p276, %s20, 1
      %p278 = scmp.lt.s32.totalorder %s22, 0
      %s279 = scalar_select %p278, %s22, 0
      %s280 = sadd.s32 %s279, %s277
      %s281 = scalar_lea.vmem %s3, %s280
      %p282 = pneg %p141
      %p283 = pneg %p138
      %p284 = pneg %p169
      %p285 = pneg %p166
      %s286 = smul.u32 2, %s21
      %p287 = scmp.lt.s32.totalorder %s20, 1
      %s288 = scalar_select %p287, %s20, 1
      %p289 = scmp.lt.s32.totalorder %s286, 1
      %s290 = scalar_select %p289, %s286, 1
      %s291 = smul.addr %s288, 2
      %s292 = sadd.s32 %s290, %s291
      %s293 = smul.addr %s292, 4
      %s294 = scalar_lea.vmem %s4, %s293
      %s295 = smul.u32 2, %s21
      %p296 = scmp.lt.s32.totalorder %s20, 1
      %s297 = scalar_select %p296, %s20, 1
      %p298 = scmp.lt.s32.totalorder %s295, 1
      %s299 = scalar_select %p298, %s295, 1
      %s300 = smul.addr %s297, 2
      %s301 = sadd.s32 %s299, %s300
      %s302 = smul.addr %s301, 4
      %s303 = scalar_lea.vmem %s0, %s302
      %s304 = smul.u32 2, %s21
      %s305 = smul.u32 2, %s22
      %p306 = scmp.lt.s32.totalorder %s20, 1
      %s307 = scalar_select %p306, %s20, 1
      %p308 = scmp.lt.s32.totalorder %s305, 1
      %s309 = scalar_select %p308, %s305, 1
      %s310 = smul.addr %s307, 2
      %s311 = sadd.s32 %s309, %s310
      %s312 = smul.addr %s311, 4
      %s313 = scalar_lea.vmem %s1, %s312
      %s314 = smul.u32 2, %s22
      %s315 = smul.u32 2, %s22
      %p316 = scmp.lt.s32.totalorder %s20, 1
      %s317 = scalar_select %p316, %s20, 1
      %p318 = scmp.lt.s32.totalorder %s315, 1
      %s319 = scalar_select %p318, %s315, 1
      %s320 = smul.addr %s317, 2
      %s321 = sadd.s32 %s319, %s320
      %s322 = smul.addr %s321, 4
      %s323 = scalar_lea.vmem %s2, %s322
      %s324 = smul.u32 2, %s22
      %p325 = scmp.lt.s32.totalorder %s20, 1
      %s326 = scalar_select %p325, %s20, 1
      %p327 = scmp.lt.s32.totalorder %s22, 0
      %s328 = scalar_select %p327, %s22, 0
      %s329 = sadd.s32 %s328, %s326
      %s330 = scalar_lea.vmem %s3, %s329
      %s331 = smul.u32 2, %s21
      %p332 = scmp.lt.s32.totalorder %s20, 1
      %s333 = scalar_select %p332, %s20, 1
      %p334 = scmp.lt.s32.totalorder %s331, 1
      %s335 = scalar_select %p334, %s331, 1
      %s336 = smul.addr %s333, 2
      %s337 = sadd.s32 %s335, %s336
      %s338 = smul.addr %s337, 4
      %s339 = scalar_lea.vmem %s4, %s338
      %s340 = smul.u32 2, %s21
      %p342 = scmp.eq.s32.totalorder %s22, 0
      // Predicated region
      $region37: #{transformer_forward.26} parent=35 // pred_check
        %p343 = pneg %p342
      $region38: #{transformer_forward.26} parent=35 // pred_check_branch
        %345 = sbr.rel (%p343) target = $region40
      $region39: #{transformer_forward.26} parent=35 // pred_region
        %vm346 = vcmask 31744
        %347 = vst.msk [vmem:[#allocation2] sm:$0xff] %vm346, -1e+09
        %vm348 = vcmask 25600
        %349 = vst.msk [vmem:[#allocation2 + $0x8] sm:$0x3] %vm348, -1e+09
        %350 = vst.msk [vmem:[#allocation3] sm:$0xff] %vm346, 0.0
        %351 = vst.msk [vmem:[#allocation3 + $0x8] sm:$0x3] %vm348, 0.0
        %352 = vst [vmem:[#allocation4] sm:$0xff] 0.0
        %353 = vst [vmem:[#allocation4 + $0x8] sm:$0x3] 0.0
      $region40: #{transformer_forward.26} parent=35 // pred_fallthru
        _
      %v354 = vld [vmem:[%s303] sm:$0xf]
      %v355 = vld [vmem:[%s303 + $0x4] sm:$0x1]
      %v356 = vld [vmem:[%s313] sm:$0xf]
      %v357 = vld [vmem:[%s313 + $0x4] sm:$0x1]
      %v358 = vld [vmem:[%s323] sm:$0xf]
      %v359 = vld [vmem:[%s323 + $0x4] sm:$0x1]
      %v360 = vld [vmem:[%s330] sm:$0x1]
      %v362 = vperm.slane %v360, 0
      %v366 = vunpack.c.l.b16 %v354
      %v367 = vunpack.c.l.b16 %v355
      %v368 = vpack.c.b16 %v367, %v366
      %v371 = vunpack.c.l.b16 %v356
      %v372 = vunpack.c.l.b16 %v357
      %v373 = vpack.c.b16 %v372, %v371
      %vm374 = vcmask 261120
      %v376 = vsel %vm374, %v368, 0
      %v379 = vsel %vm374, %v373, 0
      %381 = vmatpush.bf16.xpose.msra.mxu0 0
      %382 = vmatpush.bf16.xpose.msra.mxu0 0
      %383 = vmatpush.bf16.xpose.msra.mxu0 0
      %384 = vmatpush.bf16.xpose.msra.mxu0 0
      %385 = vmatpush.bf16.xpose.msra.mxu0 0
      %386 = vmatpush.bf16.xpose.msra.mxu0 0
      %387 = vmatpush.bf16.xpose.msra.mxu0 0
      %388 = vmatpush.bf16.xpose.msra.mxu0 %v379
      %389 = vmatmul.bf16.gmra.mxu0 %v376
      %v390 = vpop.f32.mrf.mxu0
      %v391 = vadd.f32 %v362, %v390
      %v392 = vpop.f32.mrf.mxu0
      %v393 = vadd.f32 %v362, %v392
      %394 = vdwg.mxu0
      %v395 = vld [vmem:[#allocation2] sm:$0xff]
      %v396 = vld [vmem:[#allocation2 + $0x8] sm:$0x3]
      %vm397 = vcmask 80896
      %v398 = vsel %vm397, %v391, -inf
      %399 = vmax.xlane.f32.xlu0 %v398
      %v400 = vpop.xlane.xlu0 %399
      %vm401 = vcmask 74752
      %v402 = vsel %vm401, %v393, -inf
      %403 = vmax.xlane.f32.xlu0 %v402
      %v404 = vpop.xlane.xlu0 %403
      %v405 = vmax.f32 %v395, %v400
      %v406 = vmax.f32 %v396, %v404
      %v407 = vsub.f32 %v395, %v405
      %v408 = vsub.f32 %v396, %v406
      %v409 = vmul.f32 %v407, 1.442695
      %v410 = vpow.pop %v409
      %v411 = vmul.f32 %v408, 1.442695
      %v412 = vpow.pop %v411
      %414 = vset.pattern.permute.xlu0 0
      %415 = vperm.xlu0 %414, %v405
      %v416 = vpop.permute.xlu0 %415
      %419 = vset.pattern.permute.xlu0 0
      %420 = vperm.xlu0 %419, %v406
      %v421 = vpop.permute.xlu0 %420
      %v423 = vsub.f32 %v391, %v416
      %v424 = vsub.f32 %v393, %v421
      %v425 = vmul.f32 %v423, 1.442695
      %v426 = vpow.pop %v425
      %v427 = vmul.f32 %v424, 1.442695
      %v428 = vpow.pop %v427
      %v429 = vld [vmem:[#allocation3] sm:$0xff]
      %v430 = vld [vmem:[#allocation3 + $0x8] sm:$0x3]
      %v431 = vmul.f32 %v410, %v429
      %v432 = vmul.f32 %v412, %v430
      %v433 = vsel %vm397, %v426, 0.0
      %434 = vadd.xlane.f32.xlu0 %v433
      %v435 = vpop.xlane.xlu0 %434
      %v436 = vsel %vm401, %v428, 0.0
      %437 = vadd.xlane.f32.xlu0 %v436
      %v438 = vpop.xlane.xlu0 %437
      %v439 = vadd.f32 %v431, %v435
      %v440 = vadd.f32 %v432, %v438
      %vm441 = vcmask 7168
      %442 = vst.msk [vmem:[#allocation3] sm:$0xff] %vm441, %v439
      %vm443 = vcmask 1024
      %444 = vst.msk [vmem:[#allocation3 + $0x8] sm:$0x3] %vm443, %v440
      %v445 = vld [vmem:[#allocation4] sm:$0xff]
      %v446 = vld [vmem:[#allocation4 + $0x8] sm:$0x3]
      %448 = vset.pattern.permute.xlu0 0
      %449 = vperm.xlu0 %448, %v410
      %v450 = vpop.permute.xlu0 %449
      %453 = vset.pattern.permute.xlu0 0
      %454 = vperm.xlu0 %453, %v412
      %v455 = vpop.permute.xlu0 %454
      %v457 = vmul.f32 %v450, %v445
      %v458 = vmul.f32 %v455, %v446
      %v459 = vpack.c.bf16 %v428, %v426
      %v462 = vunpack.c.l.b16 %v358
      %v463 = vunpack.c.l.b16 %v359
      %v464 = vpack.c.b16 %v463, %v462
      %v466 = vsel %vm397, %v459, 0
      %vm468 = vcmask 1044480
      %v470 = vsel %vm468, %v464, 0
      %472 = vmatpush.bf16.msra.mxu0 0
      %473 = vmatpush.bf16.msra.mxu0 0
      %474 = vmatpush.bf16.msra.mxu0 0
      %475 = vmatpush.bf16.msra.mxu0 0
      %476 = vmatpush.bf16.msra.mxu0 0
      %477 = vmatpush.bf16.msra.mxu0 0
      %478 = vmatpush.bf16.msra.mxu0 0
      %479 = vmatpush.bf16.msra.mxu0 %v470
      %480 = vmatmul.bf16.gmra.mxu0 %v466
      %v481 = vpop.f32.mrf.mxu0
      %v482 = vadd.f32 0.0, %v481
      %v483 = vpop.f32.mrf.mxu0
      %v484 = vadd.f32 0.0, %v483
      %485 = vdwg.mxu0
      %v486 = vadd.f32 %v457, %v482
      %v487 = vadd.f32 %v458, %v484
      %488 = vst.msk [vmem:[#allocation4] sm:$0xff] %vm374, %v486
      %vm489 = vcmask 254976
      %490 = vst.msk [vmem:[#allocation4 + $0x8] sm:$0x3] %vm489, %v487
      %491 = vst.msk [vmem:[#allocation2] sm:$0xff] %vm441, %v405
      %492 = vst.msk [vmem:[#allocation2 + $0x8] sm:$0x3] %vm443, %v406
      %493 = vrot.lane.b32.xlu0 %v368, 96
      %v494 = vpop.permute.xlu0 %493
      %495 = vrot.lane.b32.xlu0 %v373, 96
      %v496 = vpop.permute.xlu0 %495
      %v498 = vsel %vm374, %v494, 0
      %v501 = vsel %vm374, %v496, 0
      %503 = vmatpush.bf16.xpose.msra.mxu0 0
      %504 = vmatpush.bf16.xpose.msra.mxu0 0
      %505 = vmatpush.bf16.xpose.msra.mxu0 0
      %506 = vmatpush.bf16.xpose.msra.mxu0 0
      %507 = vmatpush.bf16.xpose.msra.mxu0 0
      %508 = vmatpush.bf16.xpose.msra.mxu0 0
      %509 = vmatpush.bf16.xpose.msra.mxu0 0
      %510 = vmatpush.bf16.xpose.msra.mxu0 %v501
      %511 = vmatmul.bf16.gmra.mxu0 %v498
      %v512 = vpop.f32.mrf.mxu0
      %v513 = vadd.f32 %v362, %v512
      %v514 = vpop.f32.mrf.mxu0
      %v515 = vadd.f32 %v362, %v514
      %516 = vdwg.mxu0
      %v517 = vld [vmem:[#allocation2] sm:$0xff]
      %v518 = vld [vmem:[#allocation2 + $0x8] sm:$0x3]
      %v519 = vsel %vm397, %v513, -inf
      %520 = vmax.xlane.f32.xlu0 %v519
      %v521 = vpop.xlane.xlu0 %520
      %v522 = vsel %vm401, %v515, -inf
      %523 = vmax.xlane.f32.xlu0 %v522
      %v524 = vpop.xlane.xlu0 %523
      %v525 = vmax.f32 %v517, %v521
      %v526 = vmax.f32 %v518, %v524
      %v527 = vsub.f32 %v517, %v525
      %v528 = vsub.f32 %v518, %v526
      %v529 = vmul.f32 %v527, 1.442695
      %v530 = vpow.pop %v529
      %v531 = vmul.f32 %v528, 1.442695
      %v532 = vpow.pop %v531
      %534 = vset.pattern.permute.xlu0 1
      %535 = vperm.xlu0 %534, %v525
      %v536 = vpop.permute.xlu0 %535
      %539 = vset.pattern.permute.xlu0 1
      %540 = vperm.xlu0 %539, %v526
      %v541 = vpop.permute.xlu0 %540
      %v543 = vsub.f32 %v513, %v536
      %v544 = vsub.f32 %v515, %v541
      %v545 = vmul.f32 %v543, 1.442695
      %v546 = vpow.pop %v545
      %v547 = vmul.f32 %v544, 1.442695
      %v548 = vpow.pop %v547
      %v549 = vld [vmem:[#allocation3] sm:$0xff]
      %v550 = vld [vmem:[#allocation3 + $0x8] sm:$0x3]
      %v551 = vmul.f32 %v530, %v549
      %v552 = vmul.f32 %v532, %v550
      %v553 = vsel %vm397, %v546, 0.0
      %554 = vadd.xlane.f32.xlu0 %v553
      %v555 = vpop.xlane.xlu0 %554
      %v556 = vsel %vm401, %v548, 0.0
      %557 = vadd.xlane.f32.xlu0 %v556
      %v558 = vpop.xlane.xlu0 %557
      %v559 = vadd.f32 %v551, %v555
      %v560 = vadd.f32 %v552, %v558
      %vm561 = vcmask 15368
      %562 = vst.msk [vmem:[#allocation3] sm:$0xff] %vm561, %v559
      %vm563 = vcmask 9224
      %564 = vst.msk [vmem:[#allocation3 + $0x8] sm:$0x3] %vm563, %v560
      %v565 = vld [vmem:[#allocation4] sm:$0xff]
      %v566 = vld [vmem:[#allocation4 + $0x8] sm:$0x3]
      %568 = vset.pattern.permute.xlu0 1
      %569 = vperm.xlu0 %568, %v530
      %v570 = vpop.permute.xlu0 %569
      %573 = vset.pattern.permute.xlu0 1
      %574 = vperm.xlu0 %573, %v532
      %v575 = vpop.permute.xlu0 %574
      %v577 = vmul.f32 %v570, %v565
      %v578 = vmul.f32 %v575, %v566
      %v579 = vpack.c.bf16 %v548, %v546
      %580 = vrot.lane.b32.xlu0 %v464, 96
      %v581 = vpop.permute.xlu0 %580
      %v583 = vsel %vm397, %v579, 0
      %v586 = vsel %vm468, %v581, 0
      %588 = vmatpush.bf16.msra.mxu0 0
      %589 = vmatpush.bf16.msra.mxu0 0
      %590 = vmatpush.bf16.msra.mxu0 0
      %591 = vmatpush.bf16.msra.mxu0 0
      %592 = vmatpush.bf16.msra.mxu0 0
      %593 = vmatpush.bf16.msra.mxu0 0
      %594 = vmatpush.bf16.msra.mxu0 0
      %595 = vmatpush.bf16.msra.mxu0 %v586
      %596 = vmatmul.bf16.gmra.mxu0 %v583
      %v597 = vpop.f32.mrf.mxu0
      %v598 = vadd.f32 0.0, %v597
      %v599 = vpop.f32.mrf.mxu0
      %v600 = vadd.f32 0.0, %v599
      %601 = vdwg.mxu0
      %604 = vrot.lane.b32.xlu0 %v598, 32
      %v605 = vpop.permute.xlu0 %604
      %606 = vrot.lane.b32.xlu0 %v600, 32
      %v607 = vpop.permute.xlu0 %606
      %v610 = vadd.f32 %v577, %v605
      %v611 = vadd.f32 %v578, %v607
      %vm612 = vcmask 523520
      %613 = vst.msk [vmem:[#allocation4] sm:$0xff] %vm612, %v610
      %vm614 = vcmask 517376
      %615 = vst.msk [vmem:[#allocation4 + $0x8] sm:$0x3] %vm614, %v611
      %616 = vst.msk [vmem:[#allocation2] sm:$0xff] %vm561, %v525
      %617 = vst.msk [vmem:[#allocation2 + $0x8] sm:$0x3] %vm563, %v526
      %618 = vrot.lane.b32.xlu0 %v368, 64
      %v619 = vpop.permute.xlu0 %618
      %620 = vrot.lane.b32.xlu0 %v373, 64
      %v621 = vpop.permute.xlu0 %620
      %v623 = vsel %vm374, %v619, 0
      %v626 = vsel %vm374, %v621, 0
      %628 = vmatpush.bf16.xpose.msra.mxu0 0
      %629 = vmatpush.bf16.xpose.msra.mxu0 0
      %630 = vmatpush.bf16.xpose.msra.mxu0 0
      %631 = vmatpush.bf16.xpose.msra.mxu0 0
      %632 = vmatpush.bf16.xpose.msra.mxu0 0
      %633 = vmatpush.bf16.xpose.msra.mxu0 0
      %634 = vmatpush.bf16.xpose.msra.mxu0 0
      %635 = vmatpush.bf16.xpose.msra.mxu0 %v626
      %636 = vmatmul.bf16.gmra.mxu0 %v623
      %v637 = vpop.f32.mrf.mxu0
      %v638 = vadd.f32 %v362, %v637
      %v639 = vpop.f32.mrf.mxu0
      %v640 = vadd.f32 %v362, %v639
      %641 = vdwg.mxu0
      %v642 = vld [vmem:[#allocation2] sm:$0xff]
      %v643 = vld [vmem:[#allocation2 + $0x8] sm:$0x3]
      %v644 = vsel %vm397, %v638, -inf
      %645 = vmax.xlane.f32.xlu0 %v644
      %v646 = vpop.xlane.xlu0 %645
      %v647 = vsel %vm401, %v640, -inf
      %648 = vmax.xlane.f32.xlu0 %v647
      %v649 = vpop.xlane.xlu0 %648
      %v650 = vmax.f32 %v642, %v646
      %v651 = vmax.f32 %v643, %v649
      %v652 = vsub.f32 %v642, %v650
      %v653 = vsub.f32 %v643, %v651
      %v654 = vmul.f32 %v652, 1.442695
      %v655 = vpow.pop %v654
      %v656 = vmul.f32 %v653, 1.442695
      %v657 = vpow.pop %v656
      %659 = vset.pattern.permute.xlu0 2
      %660 = vperm.xlu0 %659, %v650
      %v661 = vpop.permute.xlu0 %660
      %664 = vset.pattern.permute.xlu0 2
      %665 = vperm.xlu0 %664, %v651
      %v666 = vpop.permute.xlu0 %665
      %v668 = vsub.f32 %v638, %v661
      %v669 = vsub.f32 %v640, %v666
      %v670 = vmul.f32 %v668, 1.442695
      %v671 = vpow.pop %v670
      %v672 = vmul.f32 %v669, 1.442695
      %v673 = vpow.pop %v672
      %v674 = vld [vmem:[#allocation3] sm:$0xff]
      %v675 = vld [vmem:[#allocation3 + $0x8] sm:$0x3]
      %v676 = vmul.f32 %v655, %v674
      %v677 = vmul.f32 %v657, %v675
      %v678 = vsel %vm397, %v671, 0.0
      %679 = vadd.xlane.f32.xlu0 %v678
      %v680 = vpop.xlane.xlu0 %679
      %v681 = vsel %vm401, %v673, 0.0
      %682 = vadd.xlane.f32.xlu0 %v681
      %v683 = vpop.xlane.xlu0 %682
      %v684 = vadd.f32 %v676, %v680
      %v685 = vadd.f32 %v677, %v683
      %vm686 = vcmask 23568
      %687 = vst.msk [vmem:[#allocation3] sm:$0xff] %vm686, %v684
      %vm688 = vcmask 17424
      %689 = vst.msk [vmem:[#allocation3 + $0x8] sm:$0x3] %vm688, %v685
      %v690 = vld [vmem:[#allocation4] sm:$0xff]
      %v691 = vld [vmem:[#allocation4 + $0x8] sm:$0x3]
      %693 = vset.pattern.permute.xlu0 2
      %694 = vperm.xlu0 %693, %v655
      %v695 = vpop.permute.xlu0 %694
      %698 = vset.pattern.permute.xlu0 2
      %699 = vperm.xlu0 %698, %v657
      %v700 = vpop.permute.xlu0 %699
      %v702 = vmul.f32 %v695, %v690
      %v703 = vmul.f32 %v700, %v691
      %v704 = vpack.c.bf16 %v673, %v671
      %705 = vrot.lane.b32.xlu0 %v464, 64
      %v706 = vpop.permute.xlu0 %705
      %v708 = vsel %vm397, %v704, 0
      %v711 = vsel %vm468, %v706, 0
      %713 = vmatpush.bf16.msra.mxu0 0
      %714 = vmatpush.bf16.msra.mxu0 0
      %715 = vmatpush.bf16.msra.mxu0 0
      %716 = vmatpush.bf16.msra.mxu0 0
      %717 = vmatpush.bf16.msra.mxu0 0
      %718 = vmatpush.bf16.msra.mxu0 0
      %719 = vmatpush.bf16.msra.mxu0 0
      %720 = vmatpush.bf16.msra.mxu0 %v711
      %721 = vmatmul.bf16.gmra.mxu0 %v708
      %v722 = vpop.f32.mrf.mxu0
      %v723 = vadd.f32 0.0, %v722
      %v724 = vpop.f32.mrf.mxu0
      %v725 = vadd.f32 0.0, %v724
      %726 = vdwg.mxu0
      %729 = vrot.lane.b32.xlu0 %v723, 64
      %v730 = vpop.permute.xlu0 %729
      %731 = vrot.lane.b32.xlu0 %v725, 64
      %v732 = vpop.permute.xlu0 %731
      %v735 = vadd.f32 %v702, %v730
      %v736 = vadd.f32 %v703, %v732
      %vm737 = vcmask 785920
      %738 = vst.msk [vmem:[#allocation4] sm:$0xff] %vm737, %v735
      %vm739 = vcmask 779776
      %740 = vst.msk [vmem:[#allocation4 + $0x8] sm:$0x3] %vm739, %v736
      %741 = vst.msk [vmem:[#allocation2] sm:$0xff] %vm686, %v650
      %742 = vst.msk [vmem:[#allocation2 + $0x8] sm:$0x3] %vm688, %v651
      %743 = vrot.lane.b32.xlu0 %v368, 32
      %v744 = vpop.permute.xlu0 %743
      %745 = vrot.lane.b32.xlu0 %v373, 32
      %v746 = vpop.permute.xlu0 %745
      %v748 = vsel %vm374, %v744, 0
      %v751 = vsel %vm374, %v746, 0
      %753 = vmatpush.bf16.xpose.msra.mxu0 0
      %754 = vmatpush.bf16.xpose.msra.mxu0 0
      %755 = vmatpush.bf16.xpose.msra.mxu0 0
      %756 = vmatpush.bf16.xpose.msra.mxu0 0
      %757 = vmatpush.bf16.xpose.msra.mxu0 0
      %758 = vmatpush.bf16.xpose.msra.mxu0 0
      %759 = vmatpush.bf16.xpose.msra.mxu0 0
      %760 = vmatpush.bf16.xpose.msra.mxu0 %v751
      %761 = vmatmul.bf16.gmra.mxu0 %v748
      %v762 = vpop.f32.mrf.mxu0
      %v763 = vadd.f32 %v362, %v762
      %v764 = vpop.f32.mrf.mxu0
      %v765 = vadd.f32 %v362, %v764
      %766 = vdwg.mxu0
      %v767 = vld [vmem:[#allocation2] sm:$0xff]
      %v768 = vld [vmem:[#allocation2 + $0x8] sm:$0x3]
      %v769 = vsel %vm397, %v763, -inf
      %770 = vmax.xlane.f32.xlu0 %v769
      %v771 = vpop.xlane.xlu0 %770
      %v772 = vsel %vm401, %v765, -inf
      %773 = vmax.xlane.f32.xlu0 %v772
      %v774 = vpop.xlane.xlu0 %773
      %v775 = vmax.f32 %v767, %v771
      %v776 = vmax.f32 %v768, %v774
      %v777 = vsub.f32 %v767, %v775
      %v778 = vsub.f32 %v768, %v776
      %v779 = vmul.f32 %v777, 1.442695
      %v780 = vpow.pop %v779
      %v781 = vmul.f32 %v778, 1.442695
      %v782 = vpow.pop %v781
      %784 = vset.pattern.permute.xlu0 3
      %785 = vperm.xlu0 %784, %v775
      %v786 = vpop.permute.xlu0 %785
      %789 = vset.pattern.permute.xlu0 3
      %790 = vperm.xlu0 %789, %v776
      %v791 = vpop.permute.xlu0 %790
      %v793 = vsub.f32 %v763, %v786
      %v794 = vsub.f32 %v765, %v791
      %v795 = vmul.f32 %v793, 1.442695
      %v796 = vpow.pop %v795
      %v797 = vmul.f32 %v794, 1.442695
      %v798 = vpow.pop %v797
      %v799 = vld [vmem:[#allocation3] sm:$0xff]
      %v800 = vld [vmem:[#allocation3 + $0x8] sm:$0x3]
      %v801 = vmul.f32 %v780, %v799
      %v802 = vmul.f32 %v782, %v800
      %v803 = vsel %vm397, %v796, 0.0
      %804 = vadd.xlane.f32.xlu0 %v803
      %v805 = vpop.xlane.xlu0 %804
      %v806 = vsel %vm401, %v798, 0.0
      %807 = vadd.xlane.f32.xlu0 %v806
      %v808 = vpop.xlane.xlu0 %807
      %v809 = vadd.f32 %v801, %v805
      %v810 = vadd.f32 %v802, %v808
      %vm811 = vcmask 31768
      %812 = vst.msk [vmem:[#allocation3] sm:$0xff] %vm811, %v809
      %vm813 = vcmask 25624
      %814 = vst.msk [vmem:[#allocation3 + $0x8] sm:$0x3] %vm813, %v810
      %v815 = vld [vmem:[#allocation4] sm:$0xff]
      %v816 = vld [vmem:[#allocation4 + $0x8] sm:$0x3]
      %818 = vset.pattern.permute.xlu0 3
      %819 = vperm.xlu0 %818, %v780
      %v820 = vpop.permute.xlu0 %819
      %823 = vset.pattern.permute.xlu0 3
      %824 = vperm.xlu0 %823, %v782
      %v825 = vpop.permute.xlu0 %824
      %v827 = vmul.f32 %v820, %v815
      %v828 = vmul.f32 %v825, %v816
      %v829 = vpack.c.bf16 %v798, %v796
      %830 = vrot.lane.b32.xlu0 %v464, 32
      %v831 = vpop.permute.xlu0 %830
      %v833 = vsel %vm397, %v829, 0
      %v836 = vsel %vm468, %v831, 0
      %838 = vmatpush.bf16.msra.mxu0 0
      %839 = vmatpush.bf16.msra.mxu0 0
      %840 = vmatpush.bf16.msra.mxu0 0
      %841 = vmatpush.bf16.msra.mxu0 0
      %842 = vmatpush.bf16.msra.mxu0 0
      %843 = vmatpush.bf16.msra.mxu0 0
      %844 = vmatpush.bf16.msra.mxu0 0
      %845 = vmatpush.bf16.msra.mxu0 %v836
      %846 = vmatmul.bf16.gmra.mxu0 %v833
      %v847 = vpop.f32.mrf.mxu0
      %v848 = vadd.f32 0.0, %v847
      %v849 = vpop.f32.mrf.mxu0
      %v850 = vadd.f32 0.0, %v849
      %851 = vdwg.mxu0
      %854 = vrot.lane.b32.xlu0 %v848, 96
      %v855 = vpop.permute.xlu0 %854
      %856 = vrot.lane.b32.xlu0 %v850, 96
      %v857 = vpop.permute.xlu0 %856
      %v860 = vadd.f32 %v827, %v855
      %v861 = vadd.f32 %v828, %v857
      %vm862 = vcmask 1048320
      %863 = vst.msk [vmem:[#allocation4] sm:$0xff] %vm862, %v860
      %vm864 = vcmask 1042176
      %865 = vst.msk [vmem:[#allocation4 + $0x8] sm:$0x3] %vm864, %v861
      %866 = vst.msk [vmem:[#allocation2] sm:$0xff] %vm811, %v775
      %867 = vst.msk [vmem:[#allocation2 + $0x8] sm:$0x3] %vm813, %v776
      // Predicated region
      $region41: #{transformer_forward.26} parent=35 // pred_check
        %p868 = pneg %p342
      $region42: #{transformer_forward.26} parent=35 // pred_check_branch
        %870 = sbr.rel (%p868) target = $region44
      $region43: #{transformer_forward.26} parent=35 // pred_region
        %v871 = vld [vmem:[#allocation2] sm:$0xff]
        %v872 = vld [vmem:[#allocation2 + $0x8] sm:$0x3]
        %vm873 = vcmp.gt.f32.partialorder %v871, -5e+08
        %vm874 = vcmp.gt.f32.partialorder %v872, -5e+08
        %v875 = vld [vmem:[#allocation3] sm:$0xff]
        %v876 = vld [vmem:[#allocation3 + $0x8] sm:$0x3]
        %v877 = vmax.f32 %v875, 1e-30
        %v878 = vmax.f32 %v876, 1e-30
        %v879 = vrcp.pop %v877
        %v880 = vmul.f32 %v877, %v879
        %v881 = vsub.f32 1.0, %v880
        %v882 = vmul.f32 %v879, %v881
        %v883 = vadd.f32 %v879, %v882
        %vm884 = vweird.f32 %v877
        %vm885 = vweird.f32 %v879
        %vm886 = vmor %vm884, %vm885
        %v887 = vsel %vm886, %v879, %v883
        %v888 = vand.u32 2147483647, %v877
        %vm889 = vcmp.eq.f32.partialorder %v888, 8.507059e+37
        %v890 = vand.u32 %v877, 2147483648
        %v891 = vor.u32 1.1754944e-38, %v890
        %v892 = vsel %vm889, %v891, %v887
        %v893 = vmul.f32 1.0, %v892
        %v894 = vrcp.pop %v878
        %v895 = vmul.f32 %v878, %v894
        %v896 = vsub.f32 1.0, %v895
        %v897 = vmul.f32 %v894, %v896
        %v898 = vadd.f32 %v894, %v897
        %vm899 = vweird.f32 %v878
        %vm900 = vweird.f32 %v894
        %vm901 = vmor %vm899, %vm900
        %v902 = vsel %vm901, %v894, %v898
        %v903 = vand.u32 2147483647, %v878
        %vm904 = vcmp.eq.f32.partialorder %v903, 8.507059e+37
        %v905 = vand.u32 %v878, 2147483648
        %v906 = vor.u32 1.1754944e-38, %v905
        %v907 = vsel %vm904, %v906, %v902
        %v908 = vmul.f32 1.0, %v907
        %v909 = vsel %vm873, %v893, 0.0
        %v910 = vsel %vm874, %v908, 0.0
        %v911 = vld [vmem:[#allocation4] sm:$0xff]
        %v912 = vld [vmem:[#allocation4 + $0x8] sm:$0x3]
        %914 = vset.pattern.permute.xlu0 0
        %915 = vperm.xlu0 %914, %v909
        %v916 = vpop.permute.xlu0 %915
        %919 = vset.pattern.permute.xlu0 0
        %920 = vperm.xlu0 %919, %v910
        %v921 = vpop.permute.xlu0 %920
        %v923 = vmul.f32 %v911, %v916
        %v924 = vmul.f32 %v912, %v921
        %925 = vst.msk [vmem:[#allocation4] sm:$0xff] %vm374, %v923
        %926 = vst.msk [vmem:[#allocation4 + $0x8] sm:$0x3] %vm489, %v924
        %v927 = vld [vmem:[#allocation2] sm:$0xff]
        %v928 = vld [vmem:[#allocation2 + $0x8] sm:$0x3]
        %vm929 = vcmp.gt.f32.partialorder %v927, -5e+08
        %vm930 = vcmp.gt.f32.partialorder %v928, -5e+08
        %v931 = vld [vmem:[#allocation3] sm:$0xff]
        %v932 = vld [vmem:[#allocation3 + $0x8] sm:$0x3]
        %v933 = vmax.f32 %v931, 1e-30
        %v934 = vmax.f32 %v932, 1e-30
        %v935 = vrcp.pop %v933
        %v936 = vmul.f32 %v933, %v935
        %v937 = vsub.f32 1.0, %v936
        %v938 = vmul.f32 %v935, %v937
        %v939 = vadd.f32 %v935, %v938
        %vm940 = vweird.f32 %v933
        %vm941 = vweird.f32 %v935
        %vm942 = vmor %vm940, %vm941
        %v943 = vsel %vm942, %v935, %v939
        %v944 = vand.u32 2147483647, %v933
        %vm945 = vcmp.eq.f32.partialorder %v944, 8.507059e+37
        %v946 = vand.u32 %v933, 2147483648
        %v947 = vor.u32 1.1754944e-38, %v946
        %v948 = vsel %vm945, %v947, %v943
        %v949 = vmul.f32 1.0, %v948
        %v950 = vrcp.pop %v934
        %v951 = vmul.f32 %v934, %v950
        %v952 = vsub.f32 1.0, %v951
        %v953 = vmul.f32 %v950, %v952
        %v954 = vadd.f32 %v950, %v953
        %vm955 = vweird.f32 %v934
        %vm956 = vweird.f32 %v950
        %vm957 = vmor %vm955, %vm956
        %v958 = vsel %vm957, %v950, %v954
        %v959 = vand.u32 2147483647, %v934
        %vm960 = vcmp.eq.f32.partialorder %v959, 8.507059e+37
        %v961 = vand.u32 %v934, 2147483648
        %v962 = vor.u32 1.1754944e-38, %v961
        %v963 = vsel %vm960, %v962, %v958
        %v964 = vmul.f32 1.0, %v963
        %v965 = vsel %vm929, %v949, 0.0
        %v966 = vsel %vm930, %v964, 0.0
        %v967 = vld [vmem:[#allocation4] sm:$0xff]
        %v968 = vld [vmem:[#allocation4 + $0x8] sm:$0x3]
        %970 = vset.pattern.permute.xlu0 1
        %971 = vperm.xlu0 %970, %v965
        %v972 = vpop.permute.xlu0 %971
        %975 = vset.pattern.permute.xlu0 1
        %976 = vperm.xlu0 %975, %v966
        %v977 = vpop.permute.xlu0 %976
        %v979 = vmul.f32 %v967, %v972
        %v980 = vmul.f32 %v968, %v977
        %981 = vst.msk [vmem:[#allocation4] sm:$0xff] %vm612, %v979
        %982 = vst.msk [vmem:[#allocation4 + $0x8] sm:$0x3] %vm614, %v980
        %v983 = vld [vmem:[#allocation2] sm:$0xff]
        %v984 = vld [vmem:[#allocation2 + $0x8] sm:$0x3]
        %vm985 = vcmp.gt.f32.partialorder %v983, -5e+08
        %vm986 = vcmp.gt.f32.partialorder %v984, -5e+08
        %v987 = vld [vmem:[#allocation3] sm:$0xff]
        %v988 = vld [vmem:[#allocation3 + $0x8] sm:$0x3]
        %v989 = vmax.f32 %v987, 1e-30
        %v990 = vmax.f32 %v988, 1e-30
        %v991 = vrcp.pop %v989
        %v992 = vmul.f32 %v989, %v991
        %v993 = vsub.f32 1.0, %v992
        %v994 = vmul.f32 %v991, %v993
        %v995 = vadd.f32 %v991, %v994
        %vm996 = vweird.f32 %v989
        %vm997 = vweird.f32 %v991
        %vm998 = vmor %vm996, %vm997
        %v999 = vsel %vm998, %v991, %v995
        %v1000 = vand.u32 2147483647, %v989
        %vm1001 = vcmp.eq.f32.partialorder %v1000, 8.507059e+37
        %v1002 = vand.u32 %v989, 2147483648
        %v1003 = vor.u32 1.1754944e-38, %v1002
        %v1004 = vsel %vm1001, %v1003, %v999
        %v1005 = vmul.f32 1.0, %v1004
        %v1006 = vrcp.pop %v990
        %v1007 = vmul.f32 %v990, %v1006
        %v1008 = vsub.f32 1.0, %v1007
        %v1009 = vmul.f32 %v1006, %v1008
        %v1010 = vadd.f32 %v1006, %v1009
        %vm1011 = vweird.f32 %v990
        %vm1012 = vweird.f32 %v1006
        %vm1013 = vmor %vm1011, %vm1012
        %v1014 = vsel %vm1013, %v1006, %v1010
        %v1015 = vand.u32 2147483647, %v990
        %vm1016 = vcmp.eq.f32.partialorder %v1015, 8.507059e+37
        %v1017 = vand.u32 %v990, 2147483648
        %v1018 = vor.u32 1.1754944e-38, %v1017
        %v1019 = vsel %vm1016, %v1018, %v1014
        %v1020 = vmul.f32 1.0, %v1019
        %v1021 = vsel %vm985, %v1005, 0.0
        %v1022 = vsel %vm986, %v1020, 0.0
        %v1023 = vld [vmem:[#allocation4] sm:$0xff]
        %v1024 = vld [vmem:[#allocation4 + $0x8] sm:$0x3]
        %1026 = vset.pattern.permute.xlu0 2
        %1027 = vperm.xlu0 %1026, %v1021
        %v1028 = vpop.permute.xlu0 %1027
        %1031 = vset.pattern.permute.xlu0 2
        %1032 = vperm.xlu0 %1031, %v1022
        %v1033 = vpop.permute.xlu0 %1032
        %v1035 = vmul.f32 %v1023, %v1028
        %v1036 = vmul.f32 %v1024, %v1033
        %1037 = vst.msk [vmem:[#allocation4] sm:$0xff] %vm737, %v1035
        %1038 = vst.msk [vmem:[#allocation4 + $0x8] sm:$0x3] %vm739, %v1036
        %v1039 = vld [vmem:[#allocation2] sm:$0xff]
        %v1040 = vld [vmem:[#allocation2 + $0x8] sm:$0x3]
        %vm1041 = vcmp.gt.f32.partialorder %v1039, -5e+08
        %vm1042 = vcmp.gt.f32.partialorder %v1040, -5e+08
        %v1043 = vld [vmem:[#allocation3] sm:$0xff]
        %v1044 = vld [vmem:[#allocation3 + $0x8] sm:$0x3]
        %v1045 = vmax.f32 %v1043, 1e-30
        %v1046 = vmax.f32 %v1044, 1e-30
        %v1047 = vrcp.pop %v1045
        %v1048 = vmul.f32 %v1045, %v1047
        %v1049 = vsub.f32 1.0, %v1048
        %v1050 = vmul.f32 %v1047, %v1049
        %v1051 = vadd.f32 %v1047, %v1050
        %vm1052 = vweird.f32 %v1045
        %vm1053 = vweird.f32 %v1047
        %vm1054 = vmor %vm1052, %vm1053
        %v1055 = vsel %vm1054, %v1047, %v1051
        %v1056 = vand.u32 2147483647, %v1045
        %vm1057 = vcmp.eq.f32.partialorder %v1056, 8.507059e+37
        %v1058 = vand.u32 %v1045, 2147483648
        %v1059 = vor.u32 1.1754944e-38, %v1058
        %v1060 = vsel %vm1057, %v1059, %v1055
        %v1061 = vmul.f32 1.0, %v1060
        %v1062 = vrcp.pop %v1046
        %v1063 = vmul.f32 %v1046, %v1062
        %v1064 = vsub.f32 1.0, %v1063
        %v1065 = vmul.f32 %v1062, %v1064
        %v1066 = vadd.f32 %v1062, %v1065
        %vm1067 = vweird.f32 %v1046
        %vm1068 = vweird.f32 %v1062
        %vm1069 = vmor %vm1067, %vm1068
        %v1070 = vsel %vm1069, %v1062, %v1066
        %v1071 = vand.u32 2147483647, %v1046
        %vm1072 = vcmp.eq.f32.partialorder %v1071, 8.507059e+37
        %v1073 = vand.u32 %v1046, 2147483648
        %v1074 = vor.u32 1.1754944e-38, %v1073
        %v1075 = vsel %vm1072, %v1074, %v1070
        %v1076 = vmul.f32 1.0, %v1075
        %v1077 = vsel %vm1041, %v1061, 0.0
        %v1078 = vsel %vm1042, %v1076, 0.0
        %v1079 = vld [vmem:[#allocation4] sm:$0xff]
        %v1080 = vld [vmem:[#allocation4 + $0x8] sm:$0x3]
        %1082 = vset.pattern.permute.xlu0 3
        %1083 = vperm.xlu0 %1082, %v1077
        %v1084 = vpop.permute.xlu0 %1083
        %1087 = vset.pattern.permute.xlu0 3
        %1088 = vperm.xlu0 %1087, %v1078
        %v1089 = vpop.permute.xlu0 %1088
        %v1091 = vmul.f32 %v1079, %v1084
        %v1092 = vmul.f32 %v1080, %v1089
        %1093 = vst.msk [vmem:[#allocation4] sm:$0xff] %vm862, %v1091
        %1094 = vst.msk [vmem:[#allocation4 + $0x8] sm:$0x3] %vm864, %v1092
        %v1095 = vld [vmem:[#allocation4] sm:$0xff]
        %v1096 = vld [vmem:[#allocation4 + $0x8] sm:$0x3]
        %v1097 = vpack.c.bf16 %v1095, %v1095
        %v1098 = vpack.c.bf16 %v1096, %v1096
        %1099 = vst [vmem:[%s339] sm:$0xf] %v1097
        %1100 = vst [vmem:[%s339 + $0x4] sm:$0x1] %v1098
      $region44: #{transformer_forward.26} parent=35 // pred_fallthru
        _
      %s1101 = smul.u32 2, %s21
      %p1102 = scmp.lt.s32.totalorder %s20, 1
      %s1103 = scalar_select %p1102, %s20, 1
      %p1104 = scmp.lt.s32.totalorder %s1101, 1
      %s1105 = scalar_select %p1104, %s1101, 1
      %s1106 = smul.addr %s1103, 2
      %s1107 = sadd.s32 %s1105, %s1106
      %s1108 = smul.addr %s1107, 4
      %s1109 = scalar_lea.vmem %s4, %s1108
      // Predicated region
      $region45: #{transformer_forward.26} parent=35 // pred_check
        %p1110 = pneg %p166
      $region46: #{transformer_forward.26} parent=35 // pred_check_branch
        %1112 = sbr.rel (%p1110) target = $region48
      $region47: #{transformer_forward.26} parent=35 // pred_region
        %s1113 = smul.u32 2, %s21
      $region48: #{transformer_forward.26} parent=35 // pred_fallthru
        _
    $region36: #{transformer_forward.26} parent=5 // pred_fallthru
      _
    %p1114 = scmp.le.s32.totalorder 2, %s10
    // Predicated region
    $region49: #{transformer_forward.26} parent=5 // pred_check
      %p1115 = pneg %p1114
    $region50: #{transformer_forward.26} parent=5 // pred_check_branch
      %1117 = sbr.rel (%p1115) target = $region52
    $region51: #{transformer_forward.26} parent=5 // pred_region
      %s1118 = ssub.s32 %s10, 2
      // Predicated region
      $region53: #{transformer_forward.26} parent=51 // pred_check
        %p1119 = pneg %p172
      $region54: #{transformer_forward.26} parent=51 // pred_check_branch
        %1121 = sbr.rel (%p1119) target = $region56
      $region55: #{transformer_forward.26} parent=51 // pred_region
        %s1122 = smul.u32 2, %s24
        %p1123 = scmp.lt.s32.totalorder %s23, 1
        %s1124 = scalar_select %p1123, %s23, 1
        %p1125 = scmp.lt.s32.totalorder %s1122, 1
        %s1126 = scalar_select %p1125, %s1122, 1
        %s1127 = smul.addr %s1124, 2
        %s1128 = sadd.s32 %s1126, %s1127
        %s1129 = smul.addr %s1128, 4
        %s1130 = scalar_lea.vmem %s4, %s1129
      $region56: #{transformer_forward.26} parent=51 // pred_fallthru
        _
    $region52: #{transformer_forward.26} parent=5 // pred_fallthru
      _
  $region6: #{transformer_forward.26} parent=0 // loop_footer
    %s14 = sadd.s32 1, %s10
  $region7: #{transformer_forward.26} parent=0 // loop_footer_branch
    %9 = sbr.rel target = $region3
  $region8: #{transformer_forward.26} parent=0 // loop_exit
    _

// kernel: transformer_forward.28
$region0: #{transformer_forward.28}
  #allocation0 [shape = 'u32[]', space=smem, size = 0x4, offset = 0x4, fixed_abs, tag = 'smem constant byte address 0x4 - core index']
  #allocation1 [shape = 'u32[72,128]{1,0:T(1,128)}', space=vmem, size = 0x9000, scoped, tag = 'internal scratch']
  #allocation2 [shape = 'f32[20,128]{1,0:T(8,128)}', space=vmem, size = 0x3000, scoped, tag = 'scratch operand']
  %s0 = inlined_call_operand.vmem [shape: bf16[20,128], index: 0, kind: input, shape index: {}]
  %s1 = inlined_call_operand.vmem [shape: bf16[128,256], index: 1, kind: input, shape index: {}]
  %s2 = inlined_call_operand.vmem [shape: f32[1,256], index: 2, kind: input, shape index: {}]
  %s3 = inlined_call_operand.vmem [shape: bf16[256,128], index: 3, kind: input, shape index: {}]
  %s4 = inlined_call_operand.vmem [shape: f32[1,128], index: 4, kind: input, shape index: {}]
  %s5 = inlined_call_operand.vmem [shape: f32[1,128], index: 5, kind: input, shape index: {}]
  %s6 = inlined_call_operand.vmem [shape: f32[1,128], index: 6, kind: input, shape index: {}]
  %s7 = inlined_call_operand.vmem [shape: bf16[20,128], index: 7, kind: output, shape index: {}]
  %s8 = sld [smem:[#allocation0]]
  $region46: #{transformer_forward.28} parent=0
    _
  %s10 = ssub.s32 1, %s8
  %s11 = scalar_select 0, %s10, %s8
  // Predicated region
  $region2: #{transformer_forward.28} parent=0 // pred_check
    _
  $region3: #{transformer_forward.28} parent=0 // pred_check_branch
    %13 = sbr.rel (0) target = $region5
  $region4: #{transformer_forward.28} parent=0 // pred_region
    _
  $region5: #{transformer_forward.28} parent=0 // pred_fallthru
    _
  // Predicated region
  $region6: #{transformer_forward.28} parent=0 // pred_check
    _
  $region7: #{transformer_forward.28} parent=0 // pred_check_branch
    %15 = sbr.rel (0) target = $region9
  $region8: #{transformer_forward.28} parent=0 // pred_region
    _
  $region9: #{transformer_forward.28} parent=0 // pred_fallthru
    _
  // Predicated region
  $region10: #{transformer_forward.28} parent=0 // pred_check
    _
  $region11: #{transformer_forward.28} parent=0 // pred_check_branch
    %17 = sbr.rel (0) target = $region13
  $region12: #{transformer_forward.28} parent=0 // pred_region
    _
  $region13: #{transformer_forward.28} parent=0 // pred_fallthru
    _
  // Predicated region
  $region14: #{transformer_forward.28} parent=0 // pred_check
    _
  $region15: #{transformer_forward.28} parent=0 // pred_check_branch
    %19 = sbr.rel (0) target = $region17
  $region16: #{transformer_forward.28} parent=0 // pred_region
    _
  $region17: #{transformer_forward.28} parent=0 // pred_fallthru
    _
  // Predicated region
  $region18: #{transformer_forward.28} parent=0 // pred_check
    _
  $region19: #{transformer_forward.28} parent=0 // pred_check_branch
    %21 = sbr.rel (0) target = $region21
  $region20: #{transformer_forward.28} parent=0 // pred_region
    _
  $region21: #{transformer_forward.28} parent=0 // pred_fallthru
    _
  // Predicated region
  $region22: #{transformer_forward.28} parent=0 // pred_check
    _
  $region23: #{transformer_forward.28} parent=0 // pred_check_branch
    %23 = sbr.rel (0) target = $region25
  $region24: #{transformer_forward.28} parent=0 // pred_region
    _
  $region25: #{transformer_forward.28} parent=0 // pred_fallthru
    _
  // Predicated region
  $region26: #{transformer_forward.28} parent=0 // pred_check
    _
  $region27: #{transformer_forward.28} parent=0 // pred_check_branch
    %25 = sbr.rel (0) target = $region29
  $region28: #{transformer_forward.28} parent=0 // pred_region
    _
  $region29: #{transformer_forward.28} parent=0 // pred_fallthru
    _
  %p26 = scmp.eq.s32.totalorder 0, 0
  // Predicated region
  $region30: #{transformer_forward.28} parent=0 // pred_check
    %p27 = pneg %p26
  $region31: #{transformer_forward.28} parent=0 // pred_check_branch
    %29 = sbr.rel (%p27) target = $region33
  $region32: #{transformer_forward.28} parent=0 // pred_region
    %30 = vst [vmem:[#allocation2] sm:$0xff] 0.0
    %31 = vst [vmem:[#allocation2 + $0x8] sm:$0xff] 0.0
    %32 = vst [vmem:[#allocation2 + $0x10] sm:$0xf] 0.0
  $region33: #{transformer_forward.28} parent=0 // pred_fallthru
    _
  %v33 = vld [vmem:[%s0] sm:$0xf]
  %v34 = vld [vmem:[%s0 + $0x4] sm:$0xf]
  %v35 = vld [vmem:[%s0 + $0x8] sm:$0x3]
  %v36 = vld [vmem:[%s1] sm:$0xff]
  %v37 = vld [vmem:[%s1 + $0x8] sm:$0xff]
  %v38 = vld [vmem:[%s1 + $0x10] sm:$0xff]
  %v39 = vld [vmem:[%s1 + $0x18] sm:$0xff]
  %v40 = vld [vmem:[%s1 + $0x20] sm:$0xff]
  %v41 = vld [vmem:[%s1 + $0x28] sm:$0xff]
  %v42 = vld [vmem:[%s1 + $0x30] sm:$0xff]
  %v43 = vld [vmem:[%s1 + $0x38] sm:$0xff]
  %v44 = vld [vmem:[%s1 + $0x40] sm:$0xff]
  %v45 = vld [vmem:[%s1 + $0x48] sm:$0xff]
  %v46 = vld [vmem:[%s1 + $0x50] sm:$0xff]
  %v47 = vld [vmem:[%s1 + $0x58] sm:$0xff]
  %v48 = vld [vmem:[%s1 + $0x60] sm:$0xff]
  %v49 = vld [vmem:[%s1 + $0x68] sm:$0xff]
  %v50 = vld [vmem:[%s1 + $0x70] sm:$0xff]
  %v51 = vld [vmem:[%s1 + $0x78] sm:$0xff]
  %v52 = vld [vmem:[%s2] sm:$0x3]
  %v54 = vperm.slane %v52, 0
  %v55 = vperm.slane %v52, 1
  %v61 = vunpack.c.l.b16 %v33
  %v62 = vunpack.c.l.b16 %v34
  %v63 = vunpack.c.l.b16 %v35
  %v64 = vpack.c.b16 %v62, %v61
  %v65 = vpack.c.b16 %v63, %v63
  %v84 = vunpack.c.l.b16 %v36
  %v85 = vunpack.c.h.b16 %v36
  %v86 = vunpack.c.l.b16 %v37
  %v87 = vunpack.c.h.b16 %v37
  %v88 = vunpack.c.l.b16 %v38
  %v89 = vunpack.c.h.b16 %v38
  %v90 = vunpack.c.l.b16 %v39
  %v91 = vunpack.c.h.b16 %v39
  %v92 = vunpack.c.l.b16 %v40
  %v93 = vunpack.c.h.b16 %v40
  %v94 = vunpack.c.l.b16 %v41
  %v95 = vunpack.c.h.b16 %v41
  %v96 = vunpack.c.l.b16 %v42
  %v97 = vunpack.c.h.b16 %v42
  %v98 = vunpack.c.l.b16 %v43
  %v99 = vunpack.c.h.b16 %v43
  %v100 = vunpack.c.l.b16 %v44
  %v101 = vunpack.c.h.b16 %v44
  %v102 = vunpack.c.l.b16 %v45
  %v103 = vunpack.c.h.b16 %v45
  %v104 = vunpack.c.l.b16 %v46
  %v105 = vunpack.c.h.b16 %v46
  %v106 = vunpack.c.l.b16 %v47
  %v107 = vunpack.c.h.b16 %v47
  %v108 = vunpack.c.l.b16 %v48
  %v109 = vunpack.c.h.b16 %v48
  %v110 = vunpack.c.l.b16 %v49
  %v111 = vunpack.c.h.b16 %v49
  %v112 = vunpack.c.l.b16 %v50
  %v113 = vunpack.c.h.b16 %v50
  %v114 = vunpack.c.l.b16 %v51
  %v115 = vunpack.c.h.b16 %v51
  %v116 = vpack.c.b16 %v86, %v84
  %v117 = vpack.c.b16 %v87, %v85
  %v118 = vpack.c.b16 %v90, %v88
  %v119 = vpack.c.b16 %v91, %v89
  %v120 = vpack.c.b16 %v94, %v92
  %v121 = vpack.c.b16 %v95, %v93
  %v122 = vpack.c.b16 %v98, %v96
  %v123 = vpack.c.b16 %v99, %v97
  %v124 = vpack.c.b16 %v102, %v100
  %v125 = vpack.c.b16 %v103, %v101
  %v126 = vpack.c.b16 %v106, %v104
  %v127 = vpack.c.b16 %v107, %v105
  %v128 = vpack.c.b16 %v110, %v108
  %v129 = vpack.c.b16 %v111, %v109
  %v130 = vpack.c.b16 %v114, %v112
  %v131 = vpack.c.b16 %v115, %v113
  %148 = vmatpush.bf16.msra.mxu0 %v130
  %149 = vmatpush.bf16.msra.mxu0 %v128
  %150 = vmatpush.bf16.msra.mxu0 %v126
  %151 = vmatpush.bf16.msra.mxu0 %v124
  %152 = vmatpush.bf16.msra.mxu0 %v122
  %153 = vmatpush.bf16.msra.mxu0 %v120
  %154 = vmatpush.bf16.msra.mxu0 %v118
  %155 = vmatpush.bf16.msra.mxu0 %v116
  %156 = vmatmul.bf16.gmra.mxu0 %v64
  %v157 = vpop.f32.mrf.mxu0
  %v158 = vadd.f32 %v54, %v157
  %v159 = vpop.f32.mrf.mxu0
  %v160 = vadd.f32 %v54, %v159
  %161 = vmatmul.bf16.gmra.mxu0 %v65
  %v162 = vpop.f32.mrf.mxu0
  %v163 = vadd.f32 %v54, %v162
  %v164 = vpop.f32.mrf.mxu0
  %165 = vdwg.mxu0
  %166 = vmatpush.bf16.msra.mxu0 %v131
  %167 = vmatpush.bf16.msra.mxu0 %v129
  %168 = vmatpush.bf16.msra.mxu0 %v127
  %169 = vmatpush.bf16.msra.mxu0 %v125
  %170 = vmatpush.bf16.msra.mxu0 %v123
  %171 = vmatpush.bf16.msra.mxu0 %v121
  %172 = vmatpush.bf16.msra.mxu0 %v119
  %173 = vmatpush.bf16.msra.mxu0 %v117
  %174 = vmatmul.bf16.gmra.mxu0 %v64
  %v175 = vpop.f32.mrf.mxu0
  %v176 = vadd.f32 %v55, %v175
  %v177 = vpop.f32.mrf.mxu0
  %v178 = vadd.f32 %v55, %v177
  %179 = vmatmul.bf16.gmra.mxu0 %v65
  %v180 = vpop.f32.mrf.mxu0
  %v181 = vadd.f32 %v55, %v180
  %v182 = vpop.f32.mrf.mxu0
  %183 = vdwg.mxu0
  %v184 = vmax.f32 %v158, 0.0
  %v185 = vmax.f32 %v176, 0.0
  %v186 = vmax.f32 %v160, 0.0
  %v187 = vmax.f32 %v178, 0.0
  %v188 = vmax.f32 %v163, 0.0
  %v189 = vmax.f32 %v181, 0.0
  %v190 = vld [vmem:[%s3] sm:$0xf]
  %v191 = vld [vmem:[%s3 + $0x4] sm:$0xf]
  %v192 = vld [vmem:[%s3 + $0x8] sm:$0xf]
  %v193 = vld [vmem:[%s3 + $0xc] sm:$0xf]
  %v194 = vld [vmem:[%s3 + $0x10] sm:$0xf]
  %v195 = vld [vmem:[%s3 + $0x14] sm:$0xf]
  %v196 = vld [vmem:[%s3 + $0x18] sm:$0xf]
  %v197 = vld [vmem:[%s3 + $0x1c] sm:$0xf]
  %v198 = vld [vmem:[%s3 + $0x20] sm:$0xf]
  %v199 = vld [vmem:[%s3 + $0x24] sm:$0xf]
  %v200 = vld [vmem:[%s3 + $0x28] sm:$0xf]
  %v201 = vld [vmem:[%s3 + $0x2c] sm:$0xf]
  %v202 = vld [vmem:[%s3 + $0x30] sm:$0xf]
  %v203 = vld [vmem:[%s3 + $0x34] sm:$0xf]
  %v204 = vld [vmem:[%s3 + $0x38] sm:$0xf]
  %v205 = vld [vmem:[%s3 + $0x3c] sm:$0xf]
  %v206 = vld [vmem:[%s3 + $0x40] sm:$0xf]
  %v207 = vld [vmem:[%s3 + $0x44] sm:$0xf]
  %v208 = vld [vmem:[%s3 + $0x48] sm:$0xf]
  %v209 = vld [vmem:[%s3 + $0x4c] sm:$0xf]
  %v210 = vld [vmem:[%s3 + $0x50] sm:$0xf]
  %v211 = vld [vmem:[%s3 + $0x54] sm:$0xf]
  %v212 = vld [vmem:[%s3 + $0x58] sm:$0xf]
  %v213 = vld [vmem:[%s3 + $0x5c] sm:$0xf]
  %v214 = vld [vmem:[%s3 + $0x60] sm:$0xf]
  %v215 = vld [vmem:[%s3 + $0x64] sm:$0xf]
  %v216 = vld [vmem:[%s3 + $0x68] sm:$0xf]
  %v217 = vld [vmem:[%s3 + $0x6c] sm:$0xf]
  %v218 = vld [vmem:[%s3 + $0x70] sm:$0xf]
  %v219 = vld [vmem:[%s3 + $0x74] sm:$0xf]
  %v220 = vld [vmem:[%s3 + $0x78] sm:$0xf]
  %v221 = vld [vmem:[%s3 + $0x7c] sm:$0xf]
  %v222 = vld [vmem:[#allocation2] sm:$0xff]
  %v223 = vld [vmem:[#allocation2 + $0x8] sm:$0xff]
  %v224 = vld [vmem:[#allocation2 + $0x10] sm:$0xf]
  %v225 = vpack.c.bf16 %v186, %v184
  %v226 = vpack.c.bf16 %v187, %v185
  %v227 = vpack.c.bf16 %v188, %v188
  %v228 = vpack.c.bf16 %v189, %v189
  %v261 = vunpack.c.l.b16 %v190
  %v262 = vunpack.c.l.b16 %v191
  %v263 = vunpack.c.l.b16 %v192
  %v264 = vunpack.c.l.b16 %v193
  %v265 = vunpack.c.l.b16 %v194
  %v266 = vunpack.c.l.b16 %v195
  %v267 = vunpack.c.l.b16 %v196
  %v268 = vunpack.c.l.b16 %v197
  %v269 = vunpack.c.l.b16 %v198
  %v270 = vunpack.c.l.b16 %v199
  %v271 = vunpack.c.l.b16 %v200
  %v272 = vunpack.c.l.b16 %v201
  %v273 = vunpack.c.l.b16 %v202
  %v274 = vunpack.c.l.b16 %v203
  %v275 = vunpack.c.l.b16 %v204
  %v276 = vunpack.c.l.b16 %v205
  %v277 = vunpack.c.l.b16 %v206
  %v278 = vunpack.c.l.b16 %v207
  %v279 = vunpack.c.l.b16 %v208
  %v280 = vunpack.c.l.b16 %v209
  %v281 = vunpack.c.l.b16 %v210
  %v282 = vunpack.c.l.b16 %v211
  %v283 = vunpack.c.l.b16 %v212
  %v284 = vunpack.c.l.b16 %v213
  %v285 = vunpack.c.l.b16 %v214
  %v286 = vunpack.c.l.b16 %v215
  %v287 = vunpack.c.l.b16 %v216
  %v288 = vunpack.c.l.b16 %v217
  %v289 = vunpack.c.l.b16 %v218
  %v290 = vunpack.c.l.b16 %v219
  %v291 = vunpack.c.l.b16 %v220
  %v292 = vunpack.c.l.b16 %v221
  %v293 = vpack.c.b16 %v262, %v261
  %v294 = vpack.c.b16 %v264, %v263
  %v295 = vpack.c.b16 %v266, %v265
  %v296 = vpack.c.b16 %v268, %v267
  %v297 = vpack.c.b16 %v270, %v269
  %v298 = vpack.c.b16 %v272, %v271
  %v299 = vpack.c.b16 %v274, %v273
  %v300 = vpack.c.b16 %v276, %v275
  %v301 = vpack.c.b16 %v278, %v277
  %v302 = vpack.c.b16 %v280, %v279
  %v303 = vpack.c.b16 %v282, %v281
  %v304 = vpack.c.b16 %v284, %v283
  %v305 = vpack.c.b16 %v286, %v285
  %v306 = vpack.c.b16 %v288, %v287
  %v307 = vpack.c.b16 %v290, %v289
  %v308 = vpack.c.b16 %v292, %v291
  %325 = vmatpush.bf16.msra.mxu0 %v300
  %326 = vmatpush.bf16.msra.mxu0 %v299
  %327 = vmatpush.bf16.msra.mxu0 %v298
  %328 = vmatpush.bf16.msra.mxu0 %v297
  %329 = vmatpush.bf16.msra.mxu0 %v296
  %330 = vmatpush.bf16.msra.mxu0 %v295
  %331 = vmatpush.bf16.msra.mxu0 %v294
  %332 = vmatpush.bf16.msra.mxu0 %v293
  %333 = vmatmul.bf16.gmra.mxu0 %v225
  %v334 = vpop.f32.mrf.mxu0
  %v335 = vadd.f32 0.0, %v334
  %v336 = vpop.f32.mrf.mxu0
  %v337 = vadd.f32 0.0, %v336
  %338 = vmatmul.bf16.gmra.mxu0 %v227
  %v339 = vpop.f32.mrf.mxu0
  %v340 = vadd.f32 0.0, %v339
  %v341 = vpop.f32.mrf.mxu0
  %342 = vdwg.mxu0
  %343 = vmatpush.bf16.msra.mxu0 %v308
  %344 = vmatpush.bf16.msra.mxu0 %v307
  %345 = vmatpush.bf16.msra.mxu0 %v306
  %346 = vmatpush.bf16.msra.mxu0 %v305
  %347 = vmatpush.bf16.msra.mxu0 %v304
  %348 = vmatpush.bf16.msra.mxu0 %v303
  %349 = vmatpush.bf16.msra.mxu0 %v302
  %350 = vmatpush.bf16.msra.mxu0 %v301
  %351 = vmatmul.bf16.gmra.mxu0 %v226
  %v352 = vpop.f32.mrf.mxu0
  %v353 = vadd.f32 %v335, %v352
  %v354 = vpop.f32.mrf.mxu0
  %v355 = vadd.f32 %v337, %v354
  %356 = vmatmul.bf16.gmra.mxu0 %v228
  %v357 = vpop.f32.mrf.mxu0
  %v358 = vadd.f32 %v340, %v357
  %v359 = vpop.f32.mrf.mxu0
  %360 = vdwg.mxu0
  %v361 = vadd.f32 %v222, %v353
  %v362 = vadd.f32 %v223, %v355
  %v363 = vadd.f32 %v224, %v358
  %364 = vst [vmem:[#allocation2] sm:$0xff] %v361
  %365 = vst [vmem:[#allocation2 + $0x8] sm:$0xff] %v362
  %366 = vst [vmem:[#allocation2 + $0x10] sm:$0xf] %v363
  // Predicated region
  $region34: #{transformer_forward.28} parent=0 // pred_check
    %p367 = pneg %p26
  $region35: #{transformer_forward.28} parent=0 // pred_check_branch
    %369 = sbr.rel (%p367) target = $region37
  $region36: #{transformer_forward.28} parent=0 // pred_region
    %v370 = vld [vmem:[#allocation2] sm:$0xff]
    %v371 = vld [vmem:[#allocation2 + $0x8] sm:$0xff]
    %v372 = vld [vmem:[#allocation2 + $0x10] sm:$0xf]
    %v373 = vld [vmem:[%s4] sm:$0x1]
    %v375 = vperm.slane %v373, 0
    %v377 = vadd.f32 %v370, %v375
    %v378 = vadd.f32 %v371, %v375
    %v379 = vadd.f32 %v372, %v375
    %v380 = vld [vmem:[%s0] sm:$0xf]
    %v381 = vld [vmem:[%s0 + $0x4] sm:$0xf]
    %v382 = vld [vmem:[%s0 + $0x8] sm:$0x3]
    %v383 = vunpack.c.l.bf16 %v380
    %v384 = vunpack.c.l.bf16 %v381
    %v385 = vunpack.c.l.bf16 %v382
    %v386 = vadd.f32 %v377, %v383
    %v387 = vadd.f32 %v378, %v384
    %v388 = vadd.f32 %v379, %v385
    %389 = vadd.xlane.f32.xlu0 %v386
    %v390 = vpop.xlane.xlu0 %389
    %391 = vadd.xlane.f32.xlu0 %v387
    %v392 = vpop.xlane.xlu0 %391
    %vm393 = vcmask 1043456
    %v394 = vsel %vm393, %v388, 0.0
    %395 = vadd.xlane.f32.xlu0 %v394
    %v396 = vpop.xlane.xlu0 %395
    %v397 = vrcp.pop 128.0
    %v398 = vmul.f32 128.0, %v397
    %v399 = vsub.f32 1.0, %v398
    %v400 = vmul.f32 %v397, %v399
    %v401 = vadd.f32 %v397, %v400
    %vm402 = vweird.f32 %v397
    %v403 = vsel %vm402, %v397, %v401
    %v404 = vmul.f32 %v390, %v403
    %v405 = vmul.f32 %v392, %v403
    %v406 = vmul.f32 %v396, %v403
    %v407 = vsub.f32 %v386, %v404
    %v408 = vsub.f32 %v387, %v405
    %v409 = vsub.f32 %v388, %v406
    %v410 = vmul.f32 %v407, %v407
    %v411 = vmul.f32 %v408, %v408
    %v412 = vmul.f32 %v409, %v409
    %413 = vadd.xlane.f32.xlu0 %v410
    %v414 = vpop.xlane.xlu0 %413
    %415 = vadd.xlane.f32.xlu0 %v411
    %v416 = vpop.xlane.xlu0 %415
    %v417 = vsel %vm393, %v412, 0.0
    %418 = vadd.xlane.f32.xlu0 %v417
    %v419 = vpop.xlane.xlu0 %418
    %v420 = vmul.f32 %v414, %v403
    %v421 = vmul.f32 %v416, %v403
    %v422 = vmul.f32 %v419, %v403
    %v423 = vadd.f32 %v420, 1e-06
    %v424 = vadd.f32 %v421, 1e-06
    %v425 = vadd.f32 %v422, 1e-06
    %v426 = vrsqrt.pop %v423
    %v427 = vmul.f32 %v426, %v423
    %v428 = vmul.f32 %v427, %v426
    %v429 = vmul.f32 0.5, %v428
    %v430 = vsub.f32 1.5, %v429
    %v431 = vmul.f32 %v426, %v430
    %vm432 = vweird.f32 %v423
    %vm433 = vweird.f32 %v426
    %vm434 = vmor %vm432, %vm433
    %v435 = vsel %vm434, %v426, %v431
    %v436 = vrsqrt.pop %v424
    %v437 = vmul.f32 %v436, %v424
    %v438 = vmul.f32 %v437, %v436
    %v439 = vmul.f32 0.5, %v438
    %v440 = vsub.f32 1.5, %v439
    %v441 = vmul.f32 %v436, %v440
    %vm442 = vweird.f32 %v424
    %vm443 = vweird.f32 %v436
    %vm444 = vmor %vm442, %vm443
    %v445 = vsel %vm444, %v436, %v441
    %v446 = vrsqrt.pop %v425
    %v447 = vmul.f32 %v446, %v425
    %v448 = vmul.f32 %v447, %v446
    %v449 = vmul.f32 0.5, %v448
    %v450 = vsub.f32 1.5, %v449
    %v451 = vmul.f32 %v446, %v450
    %vm452 = vweird.f32 %v425
    %vm453 = vweird.f32 %v446
    %vm454 = vmor %vm452, %vm453
    %v455 = vsel %vm454, %v446, %v451
    %v456 = vmul.f32 %v407, %v435
    %v457 = vmul.f32 %v408, %v445
    %v458 = vmul.f32 %v409, %v455
    %v459 = vld [vmem:[%s5] sm:$0x1]
    %v461 = vperm.slane %v459, 0
    %v463 = vmul.f32 %v456, %v461
    %v464 = vmul.f32 %v457, %v461
    %v465 = vmul.f32 %v458, %v461
    %v466 = vld [vmem:[%s6] sm:$0x1]
    %v468 = vperm.slane %v466, 0
    %v470 = vadd.f32 %v463, %v468
    %v471 = vadd.f32 %v464, %v468
    %v472 = vadd.f32 %v465, %v468
    %v473 = vpack.c.bf16 %v470, %v470
    %v474 = vpack.c.bf16 %v471, %v471
    %v475 = vpack.c.bf16 %v472, %v472
    %476 = vst [vmem:[%s7] sm:$0xf] %v473
    %477 = vst [vmem:[%s7 + $0x4] sm:$0xf] %v474
    %478 = vst [vmem:[%s7 + $0x8] sm:$0x3] %v475
  $region37: #{transformer_forward.28} parent=0 // pred_fallthru
    _
  // Predicated region
  $region38: #{transformer_forward.28} parent=0 // pred_check
    _
  $region39: #{transformer_forward.28} parent=0 // pred_check_branch
    %480 = sbr.rel (0) target = $region41
  $region40: #{transformer_forward.28} parent=0 // pred_region
    _
  $region41: #{transformer_forward.28} parent=0 // pred_fallthru
    _
  // Predicated region
  $region42: #{transformer_forward.28} parent=0 // pred_check
    _
  $region43: #{transformer_forward.28} parent=0 // pred_check_branch
    %482 = sbr.rel (0) target = $region45
  $region44: #{transformer_forward.28} parent=0 // pred_region
    _
  $region45: #{transformer_forward.28} parent=0 // pred_fallthru
    _

// kernel: transformer_forward.37
$region0: #{transformer_forward.37}
  #allocation0 [shape = 'u32[]', space=smem, size = 0x4, offset = 0x4, fixed_abs, tag = 'smem constant byte address 0x4 - core index']
  #allocation1 [shape = 'u32[72,128]{1,0:T(1,128)}', space=vmem, size = 0x9000, scoped, tag = 'internal scratch']
  %s0 = inlined_call_operand.vmem [shape: bf16[20,128], index: 0, kind: input, shape index: {}]
  %s1 = inlined_call_operand.hbm [shape: bf16[128,128], index: 1, kind: input, shape index: {}]
  %s2 = inlined_call_operand.hbm [shape: bf16[128,128], index: 2, kind: input, shape index: {}]
  %s3 = inlined_call_operand.vmem [shape: f32[1,128], index: 3, kind: input, shape index: {}]
  %s4 = inlined_call_operand.vmem [shape: f32[1,128], index: 4, kind: input, shape index: {}]
  %s5 = inlined_call_operand.vmem [shape: bf16[20,128], index: 5, kind: output, shape index: {0}]
  %s6 = inlined_call_operand.vmem [shape: bf16[20,128], index: 6, kind: output, shape index: {1}]
  %7 = xla_tuple %s5, %s6
  %s8 = sld [smem:[#allocation0]]
  $region46: #{transformer_forward.37} parent=0
    _
  %s10 = ssub.s32 1, %s8
  %s11 = scalar_select 0, %s10, %s8
  $region1: #{transformer_forward.37} parent=0
    #allocation2 [shape = 'u8[32768]{0}', space=vmem, size = 0x8000, scoped, tag = 'input window, operand 1, single buffered']
    #allocation3 [shape = 's32[1]{0}', space=sflag, size = 0x4, scoped, tag = 'scoped memory for transformer_forward.37']
    #allocation4 [shape = 'u8[32768]{0}', space=vmem, size = 0x8000, scoped, tag = 'input window, operand 2, single buffered']
    #allocation5 [shape = 's32[1]{0}', space=sflag, size = 0x4, scoped, tag = 'scoped memory for transformer_forward.37']
    %12 = vsyncpa [#allocation3], 0
    %13 = vsyncpa [#allocation5], 0
    // Predicated region
    $region2: #{transformer_forward.37} parent=1 // pred_check
      _
    $region3: #{transformer_forward.37} parent=1 // pred_check_branch
      %15 = sbr.rel (0) target = $region5
    $region4: #{transformer_forward.37} parent=1 // pred_region
      _
    $region5: #{transformer_forward.37} parent=1 // pred_fallthru
      _
    // Predicated region
    $region6: #{transformer_forward.37} parent=1 // pred_check
      _
    $region7: #{transformer_forward.37} parent=1 // pred_check_branch
      %17 = sbr.rel (0) target = $region9
    $region8: #{transformer_forward.37} parent=1 // pred_region
      %19 = vsyncadd [#allocation3], 0
      %s20 = sshll.u32 %s1, 4
      %s21 = int_to_ptr.hbm [resolvable:$true] %s20
      %s22 = sshll.u32 [#allocation2], 4
      %s23 = int_to_ptr.vmem [resolvable:$true] %s22
      %28 = dma.hbm_to_vmem [thread:$0]  %s21, 1024, %s23, [#allocation3], 64, 64, 4
    $region9: #{transformer_forward.37} parent=1 // pred_fallthru
      _
    // Predicated region
    $region10: #{transformer_forward.37} parent=1 // pred_check
      _
    $region11: #{transformer_forward.37} parent=1 // pred_check_branch
      %30 = sbr.rel (0) target = $region13
    $region12: #{transformer_forward.37} parent=1 // pred_region
      %32 = vsyncadd [#allocation5], 0
      %s33 = sshll.u32 %s2, 4
      %s34 = int_to_ptr.hbm [resolvable:$true] %s33
      %s35 = sshll.u32 [#allocation4], 4
      %s36 = int_to_ptr.vmem [resolvable:$true] %s35
      %41 = dma.hbm_to_vmem [thread:$0]  %s34, 1024, %s36, [#allocation5], 64, 64, 4
    $region13: #{transformer_forward.37} parent=1 // pred_fallthru
      _
    // Predicated region
    $region14: #{transformer_forward.37} parent=1 // pred_check
      _
    $region15: #{transformer_forward.37} parent=1 // pred_check_branch
      %43 = sbr.rel (0) target = $region17
    $region16: #{transformer_forward.37} parent=1 // pred_region
      _
    $region17: #{transformer_forward.37} parent=1 // pred_fallthru
      _
    // Predicated region
    $region18: #{transformer_forward.37} parent=1 // pred_check
      _
    $region19: #{transformer_forward.37} parent=1 // pred_check_branch
      %45 = sbr.rel (0) target = $region21
    $region20: #{transformer_forward.37} parent=1 // pred_region
      _
    $region21: #{transformer_forward.37} parent=1 // pred_fallthru
      _
    // Predicated region
    $region22: #{transformer_forward.37} parent=1 // pred_check
      _
    $region23: #{transformer_forward.37} parent=1 // pred_check_branch
      %47 = sbr.rel (0) target = $region25
    $region24: #{transformer_forward.37} parent=1 // pred_region
      %49 = dma.done [#allocation3], 1024
    $region25: #{transformer_forward.37} parent=1 // pred_fallthru
      _
    // Predicated region
    $region26: #{transformer_forward.37} parent=1 // pred_check
      _
    $region27: #{transformer_forward.37} parent=1 // pred_check_branch
      %51 = sbr.rel (0) target = $region29
    $region28: #{transformer_forward.37} parent=1 // pred_region
      %53 = dma.done [#allocation5], 1024
    $region29: #{transformer_forward.37} parent=1 // pred_fallthru
      _
    %v54 = vld [vmem:[%s0] sm:$0xf]
    %v55 = vld [vmem:[%s0 + $0x4] sm:$0xf]
    %v56 = vld [vmem:[%s0 + $0x8] sm:$0x3]
    %v57 = vld [vmem:[#allocation2] sm:$0xf]
    %v58 = vld [vmem:[#allocation2 + $0x4] sm:$0xf]
    %v59 = vld [vmem:[#allocation2 + $0x8] sm:$0xf]
    %v60 = vld [vmem:[#allocation2 + $0xc] sm:$0xf]
    %v61 = vld [vmem:[#allocation2 + $0x10] sm:$0xf]
    %v62 = vld [vmem:[#allocation2 + $0x14] sm:$0xf]
    %v63 = vld [vmem:[#allocation2 + $0x18] sm:$0xf]
    %v64 = vld [vmem:[#allocation2 + $0x1c] sm:$0xf]
    %v65 = vld [vmem:[#allocation2 + $0x20] sm:$0xf]
    %v66 = vld [vmem:[#allocation2 + $0x24] sm:$0xf]
    %v67 = vld [vmem:[#allocation2 + $0x28] sm:$0xf]
    %v68 = vld [vmem:[#allocation2 + $0x2c] sm:$0xf]
    %v69 = vld [vmem:[#allocation2 + $0x30] sm:$0xf]
    %v70 = vld [vmem:[#allocation2 + $0x34] sm:$0xf]
    %v71 = vld [vmem:[#allocation2 + $0x38] sm:$0xf]
    %v72 = vld [vmem:[#allocation2 + $0x3c] sm:$0xf]
    %v73 = vld [vmem:[%s3] sm:$0x1]
    %v75 = vperm.slane %v73, 0
    %v80 = vunpack.c.l.b16 %v54
    %v81 = vunpack.c.l.b16 %v55
    %v82 = vunpack.c.l.b16 %v56
    %v83 = vpack.c.b16 %v81, %v80
    %v84 = vpack.c.b16 %v82, %v82
    %v103 = vunpack.c.l.b16 %v57
    %v104 = vunpack.c.l.b16 %v58
    %v105 = vunpack.c.l.b16 %v59
    %v106 = vunpack.c.l.b16 %v60
    %v107 = vunpack.c.l.b16 %v61
    %v108 = vunpack.c.l.b16 %v62
    %v109 = vunpack.c.l.b16 %v63
    %v110 = vunpack.c.l.b16 %v64
    %v111 = vunpack.c.l.b16 %v65
    %v112 = vunpack.c.l.b16 %v66
    %v113 = vunpack.c.l.b16 %v67
    %v114 = vunpack.c.l.b16 %v68
    %v115 = vunpack.c.l.b16 %v69
    %v116 = vunpack.c.l.b16 %v70
    %v117 = vunpack.c.l.b16 %v71
    %v118 = vunpack.c.l.b16 %v72
    %v119 = vpack.c.b16 %v104, %v103
    %v120 = vpack.c.b16 %v106, %v105
    %v121 = vpack.c.b16 %v108, %v107
    %v122 = vpack.c.b16 %v110, %v109
    %v123 = vpack.c.b16 %v112, %v111
    %v124 = vpack.c.b16 %v114, %v113
    %v125 = vpack.c.b16 %v116, %v115
    %v126 = vpack.c.b16 %v118, %v117
    %135 = vmatpush.bf16.msra.mxu0 %v126
    %136 = vmatpush.bf16.msra.mxu0 %v125
    %137 = vmatpush.bf16.msra.mxu0 %v124
    %138 = vmatpush.bf16.msra.mxu0 %v123
    %139 = vmatpush.bf16.msra.mxu0 %v122
    %140 = vmatpush.bf16.msra.mxu0 %v121
    %141 = vmatpush.bf16.msra.mxu0 %v120
    %142 = vmatpush.bf16.msra.mxu0 %v119
    %143 = vmatmul.bf16.gmra.mxu0 %v83
    %v144 = vpop.f32.mrf.mxu0
    %v145 = vadd.f32 %v75, %v144
    %v146 = vpop.f32.mrf.mxu0
    %v147 = vadd.f32 %v75, %v146
    %148 = vmatmul.bf16.gmra.mxu0 %v84
    %v149 = vpop.f32.mrf.mxu0
    %v150 = vadd.f32 %v75, %v149
    %v151 = vpop.f32.mrf.mxu0
    %152 = vdwg.mxu0
    %v153 = vpack.c.bf16 %v145, %v145
    %v154 = vpack.c.bf16 %v147, %v147
    %v155 = vpack.c.bf16 %v150, %v150
    %156 = vst [vmem:[%s5] sm:$0xf] %v153
    %157 = vst [vmem:[%s5 + $0x4] sm:$0xf] %v154
    %158 = vst [vmem:[%s5 + $0x8] sm:$0x3] %v155
    %v159 = vld [vmem:[#allocation4] sm:$0xf]
    %v160 = vld [vmem:[#allocation4 + $0x4] sm:$0xf]
    %v161 = vld [vmem:[#allocation4 + $0x8] sm:$0xf]
    %v162 = vld [vmem:[#allocation4 + $0xc] sm:$0xf]
    %v163 = vld [vmem:[#allocation4 + $0x10] sm:$0xf]
    %v164 = vld [vmem:[#allocation4 + $0x14] sm:$0xf]
    %v165 = vld [vmem:[#allocation4 + $0x18] sm:$0xf]
    %v166 = vld [vmem:[#allocation4 + $0x1c] sm:$0xf]
    %v167 = vld [vmem:[#allocation4 + $0x20] sm:$0xf]
    %v168 = vld [vmem:[#allocation4 + $0x24] sm:$0xf]
    %v169 = vld [vmem:[#allocation4 + $0x28] sm:$0xf]
    %v170 = vld [vmem:[#allocation4 + $0x2c] sm:$0xf]
    %v171 = vld [vmem:[#allocation4 + $0x30] sm:$0xf]
    %v172 = vld [vmem:[#allocation4 + $0x34] sm:$0xf]
    %v173 = vld [vmem:[#allocation4 + $0x38] sm:$0xf]
    %v174 = vld [vmem:[#allocation4 + $0x3c] sm:$0xf]
    %v175 = vld [vmem:[%s4] sm:$0x1]
    %v177 = vperm.slane %v175, 0
    %v195 = vunpack.c.l.b16 %v159
    %v196 = vunpack.c.l.b16 %v160
    %v197 = vunpack.c.l.b16 %v161
    %v198 = vunpack.c.l.b16 %v162
    %v199 = vunpack.c.l.b16 %v163
    %v200 = vunpack.c.l.b16 %v164
    %v201 = vunpack.c.l.b16 %v165
    %v202 = vunpack.c.l.b16 %v166
    %v203 = vunpack.c.l.b16 %v167
    %v204 = vunpack.c.l.b16 %v168
    %v205 = vunpack.c.l.b16 %v169
    %v206 = vunpack.c.l.b16 %v170
    %v207 = vunpack.c.l.b16 %v171
    %v208 = vunpack.c.l.b16 %v172
    %v209 = vunpack.c.l.b16 %v173
    %v210 = vunpack.c.l.b16 %v174
    %v211 = vpack.c.b16 %v196, %v195
    %v212 = vpack.c.b16 %v198, %v197
    %v213 = vpack.c.b16 %v200, %v199
    %v214 = vpack.c.b16 %v202, %v201
    %v215 = vpack.c.b16 %v204, %v203
    %v216 = vpack.c.b16 %v206, %v205
    %v217 = vpack.c.b16 %v208, %v207
    %v218 = vpack.c.b16 %v210, %v209
    %227 = vmatpush.bf16.msra.mxu0 %v218
    %228 = vmatpush.bf16.msra.mxu0 %v217
    %229 = vmatpush.bf16.msra.mxu0 %v216
    %230 = vmatpush.bf16.msra.mxu0 %v215
    %231 = vmatpush.bf16.msra.mxu0 %v214
    %232 = vmatpush.bf16.msra.mxu0 %v213
    %233 = vmatpush.bf16.msra.mxu0 %v212
    %234 = vmatpush.bf16.msra.mxu0 %v211
    %235 = vmatmul.bf16.gmra.mxu0 %v83
    %v236 = vpop.f32.mrf.mxu0
    %v237 = vadd.f32 %v177, %v236
    %v238 = vpop.f32.mrf.mxu0
    %v239 = vadd.f32 %v177, %v238
    %240 = vmatmul.bf16.gmra.mxu0 %v84
    %v241 = vpop.f32.mrf.mxu0
    %v242 = vadd.f32 %v177, %v241
    %v243 = vpop.f32.mrf.mxu0
    %244 = vdwg.mxu0
    %v245 = vpack.c.bf16 %v237, %v237
    %v246 = vpack.c.bf16 %v239, %v239
    %v247 = vpack.c.bf16 %v242, %v242
    %248 = vst [vmem:[%s6] sm:$0xf] %v245
    %249 = vst [vmem:[%s6 + $0x4] sm:$0xf] %v246
    %250 = vst [vmem:[%s6 + $0x8] sm:$0x3] %v247
    // Predicated region
    $region30: #{transformer_forward.37} parent=1 // pred_check
      _
    $region31: #{transformer_forward.37} parent=1 // pred_check_branch
      %252 = sbr.rel (0) target = $region33
    $region32: #{transformer_forward.37} parent=1 // pred_region
      _
    $region33: #{transformer_forward.37} parent=1 // pred_fallthru
      _
    // Predicated region
    $region34: #{transformer_forward.37} parent=1 // pred_check
      _
    $region35: #{transformer_forward.37} parent=1 // pred_check_branch
      %254 = sbr.rel (0) target = $region37
    $region36: #{transformer_forward.37} parent=1 // pred_region
      _
    $region37: #{transformer_forward.37} parent=1 // pred_fallthru
      _
    // Predicated region
    $region38: #{transformer_forward.37} parent=1 // pred_check
      _
    $region39: #{transformer_forward.37} parent=1 // pred_check_branch
      %256 = sbr.rel (0) target = $region41
    $region40: #{transformer_forward.37} parent=1 // pred_region
      _
    $region41: #{transformer_forward.37} parent=1 // pred_fallthru
      _
    // Predicated region
    $region42: #{transformer_forward.37} parent=1 // pred_check
      _
    $region43: #{transformer_forward.37} parent=1 // pred_check_branch
      %258 = sbr.rel (0) target = $region45
    $region44: #{transformer_forward.37} parent=1 // pred_region
      _
    $region45: #{transformer_forward.37} parent=1 // pred_fallthru
      _
    %259 = vsyncpa [#allocation3], 1
    %260 = vsyncpa [#allocation5], 1

// kernel: transformer_forward.33
$region0: #{transformer_forward.33}
  #allocation0 [shape = 'u32[]', space=smem, size = 0x4, offset = 0x4, fixed_abs, tag = 'smem constant byte address 0x4 - core index']
  #allocation1 [shape = 'u32[72,128]{1,0:T(1,128)}', space=vmem, size = 0x9000, scoped, tag = 'internal scratch']
  %s0 = inlined_call_operand.vmem [shape: bf16[16,128], index: 0, kind: input, shape index: {}]
  %s1 = inlined_call_operand.hbm [shape: bf16[128,128], index: 1, kind: input, shape index: {}]
  %s2 = inlined_call_operand.hbm [shape: bf16[128,128], index: 2, kind: input, shape index: {}]
  %s3 = inlined_call_operand.hbm [shape: bf16[128,128], index: 3, kind: input, shape index: {}]
  %s4 = inlined_call_operand.vmem [shape: f32[1,128], index: 4, kind: input, shape index: {}]
  %s5 = inlined_call_operand.vmem [shape: f32[1,128], index: 5, kind: input, shape index: {}]
  %s6 = inlined_call_operand.vmem [shape: f32[1,128], index: 6, kind: input, shape index: {}]
  %s7 = inlined_call_operand.vmem [shape: bf16[16,128], index: 7, kind: output, shape index: {0}]
  %s8 = inlined_call_operand.vmem [shape: bf16[16,128], index: 8, kind: output, shape index: {1}]
  %s9 = inlined_call_operand.vmem [shape: bf16[16,128], index: 9, kind: output, shape index: {2}]
  %10 = xla_tuple %s7, %s8, %s9
  %s11 = sld [smem:[#allocation0]]
  $region66: #{transformer_forward.33} parent=0
    _
  %s13 = ssub.s32 1, %s11
  %s14 = scalar_select 0, %s13, %s11
  $region1: #{transformer_forward.33} parent=0
    #allocation2 [shape = 'u8[32768]{0}', space=vmem, size = 0x8000, scoped, tag = 'input window, operand 1, single buffered']
    #allocation3 [shape = 's32[1]{0}', space=sflag, size = 0x4, scoped, tag = 'scoped memory for transformer_forward.33']
    #allocation4 [shape = 'u8[32768]{0}', space=vmem, size = 0x8000, scoped, tag = 'input window, operand 2, single buffered']
    #allocation5 [shape = 's32[1]{0}', space=sflag, size = 0x4, scoped, tag = 'scoped memory for transformer_forward.33']
    #allocation6 [shape = 'u8[32768]{0}', space=vmem, size = 0x8000, scoped, tag = 'input window, operand 3, single buffered']
    %15 = vsyncpa [#allocation3], 0
    %16 = vsyncpa [#allocation5], 0
    // Predicated region
    $region2: #{transformer_forward.33} parent=1 // pred_check
      _
    $region3: #{transformer_forward.33} parent=1 // pred_check_branch
      %18 = sbr.rel (0) target = $region5
    $region4: #{transformer_forward.33} parent=1 // pred_region
      _
    $region5: #{transformer_forward.33} parent=1 // pred_fallthru
      _
    // Predicated region
    $region6: #{transformer_forward.33} parent=1 // pred_check
      _
    $region7: #{transformer_forward.33} parent=1 // pred_check_branch
      %20 = sbr.rel (0) target = $region9
    $region8: #{transformer_forward.33} parent=1 // pred_region
      %22 = vsyncadd [#allocation3], 0
      %s23 = sshll.u32 %s1, 4
      %s24 = int_to_ptr.hbm [resolvable:$true] %s23
      %s25 = sshll.u32 [#allocation2], 4
      %s26 = int_to_ptr.vmem [resolvable:$true] %s25
      %31 = dma.hbm_to_vmem [thread:$0]  %s24, 1024, %s26, [#allocation3], 64, 64, 4
    $region9: #{transformer_forward.33} parent=1 // pred_fallthru
      _
    // Predicated region
    $region10: #{transformer_forward.33} parent=1 // pred_check
      _
    $region11: #{transformer_forward.33} parent=1 // pred_check_branch
      %33 = sbr.rel (0) target = $region13
    $region12: #{transformer_forward.33} parent=1 // pred_region
      %35 = vsyncadd [#allocation5], 0
      %s36 = sshll.u32 %s2, 4
      %s37 = int_to_ptr.hbm [resolvable:$true] %s36
      %s38 = sshll.u32 [#allocation4], 4
      %s39 = int_to_ptr.vmem [resolvable:$true] %s38
      %44 = dma.hbm_to_vmem [thread:$0]  %s37, 1024, %s39, [#allocation5], 64, 64, 4
    $region13: #{transformer_forward.33} parent=1 // pred_fallthru
      _
    // Predicated region
    $region14: #{transformer_forward.33} parent=1 // pred_check
      _
    $region15: #{transformer_forward.33} parent=1 // pred_check_branch
      %46 = sbr.rel (0) target = $region17
    $region16: #{transformer_forward.33} parent=1 // pred_region
      %48 = vsyncadd [#allocation5], 0
      %s49 = sshll.u32 %s3, 4
      %s50 = int_to_ptr.hbm [resolvable:$true] %s49
      %s51 = sshll.u32 [#allocation6], 4
      %s52 = int_to_ptr.vmem [resolvable:$true] %s51
      %57 = dma.hbm_to_vmem [thread:$0]  %s50, 1024, %s52, [#allocation5], 64, 64, 4
    $region17: #{transformer_forward.33} parent=1 // pred_fallthru
      _
    // Predicated region
    $region18: #{transformer_forward.33} parent=1 // pred_check
      _
    $region19: #{transformer_forward.33} parent=1 // pred_check_branch
      %59 = sbr.rel (0) target = $region21
    $region20: #{transformer_forward.33} parent=1 // pred_region
      _
    $region21: #{transformer_forward.33} parent=1 // pred_fallthru
      _
    // Predicated region
    $region22: #{transformer_forward.33} parent=1 // pred_check
      _
    $region23: #{transformer_forward.33} parent=1 // pred_check_branch
      %61 = sbr.rel (0) target = $region25
    $region24: #{transformer_forward.33} parent=1 // pred_region
      _
    $region25: #{transformer_forward.33} parent=1 // pred_fallthru
      _
    // Predicated region
    $region26: #{transformer_forward.33} parent=1 // pred_check
      _
    $region27: #{transformer_forward.33} parent=1 // pred_check_branch
      %63 = sbr.rel (0) target = $region29
    $region28: #{transformer_forward.33} parent=1 // pred_region
      _
    $region29: #{transformer_forward.33} parent=1 // pred_fallthru
      _
    // Predicated region
    $region30: #{transformer_forward.33} parent=1 // pred_check
      _
    $region31: #{transformer_forward.33} parent=1 // pred_check_branch
      %65 = sbr.rel (0) target = $region33
    $region32: #{transformer_forward.33} parent=1 // pred_region
      %67 = dma.done [#allocation3], 1024
    $region33: #{transformer_forward.33} parent=1 // pred_fallthru
      _
    // Predicated region
    $region34: #{transformer_forward.33} parent=1 // pred_check
      _
    $region35: #{transformer_forward.33} parent=1 // pred_check_branch
      %69 = sbr.rel (0) target = $region37
    $region36: #{transformer_forward.33} parent=1 // pred_region
      %71 = dma.done [#allocation5], 1024
    $region37: #{transformer_forward.33} parent=1 // pred_fallthru
      _
    // Predicated region
    $region38: #{transformer_forward.33} parent=1 // pred_check
      _
    $region39: #{transformer_forward.33} parent=1 // pred_check_branch
      %73 = sbr.rel (0) target = $region41
    $region40: #{transformer_forward.33} parent=1 // pred_region
      %75 = dma.done [#allocation5], 1024
    $region41: #{transformer_forward.33} parent=1 // pred_fallthru
      _
    %v76 = vld [vmem:[%s0] sm:$0xf]
    %v77 = vld [vmem:[%s0 + $0x4] sm:$0xf]
    %v78 = vld [vmem:[#allocation2] sm:$0xf]
    %v79 = vld [vmem:[#allocation2 + $0x4] sm:$0xf]
    %v80 = vld [vmem:[#allocation2 + $0x8] sm:$0xf]
    %v81 = vld [vmem:[#allocation2 + $0xc] sm:$0xf]
    %v82 = vld [vmem:[#allocation2 + $0x10] sm:$0xf]
    %v83 = vld [vmem:[#allocation2 + $0x14] sm:$0xf]
    %v84 = vld [vmem:[#allocation2 + $0x18] sm:$0xf]
    %v85 = vld [vmem:[#allocation2 + $0x1c] sm:$0xf]
    %v86 = vld [vmem:[#allocation2 + $0x20] sm:$0xf]
    %v87 = vld [vmem:[#allocation2 + $0x24] sm:$0xf]
    %v88 = vld [vmem:[#allocation2 + $0x28] sm:$0xf]
    %v89 = vld [vmem:[#allocation2 + $0x2c] sm:$0xf]
    %v90 = vld [vmem:[#allocation2 + $0x30] sm:$0xf]
    %v91 = vld [vmem:[#allocation2 + $0x34] sm:$0xf]
    %v92 = vld [vmem:[#allocation2 + $0x38] sm:$0xf]
    %v93 = vld [vmem:[#allocation2 + $0x3c] sm:$0xf]
    %v94 = vld [vmem:[%s4] sm:$0x1]
    %v96 = vperm.slane %v94, 0
    %v100 = vunpack.c.l.b16 %v76
    %v101 = vunpack.c.l.b16 %v77
    %v102 = vpack.c.b16 %v101, %v100
    %v120 = vunpack.c.l.b16 %v78
    %v121 = vunpack.c.l.b16 %v79
    %v122 = vunpack.c.l.b16 %v80
    %v123 = vunpack.c.l.b16 %v81
    %v124 = vunpack.c.l.b16 %v82
    %v125 = vunpack.c.l.b16 %v83
    %v126 = vunpack.c.l.b16 %v84
    %v127 = vunpack.c.l.b16 %v85
    %v128 = vunpack.c.l.b16 %v86
    %v129 = vunpack.c.l.b16 %v87
    %v130 = vunpack.c.l.b16 %v88
    %v131 = vunpack.c.l.b16 %v89
    %v132 = vunpack.c.l.b16 %v90
    %v133 = vunpack.c.l.b16 %v91
    %v134 = vunpack.c.l.b16 %v92
    %v135 = vunpack.c.l.b16 %v93
    %v136 = vpack.c.b16 %v121, %v120
    %v137 = vpack.c.b16 %v123, %v122
    %v138 = vpack.c.b16 %v125, %v124
    %v139 = vpack.c.b16 %v127, %v126
    %v140 = vpack.c.b16 %v129, %v128
    %v141 = vpack.c.b16 %v131, %v130
    %v142 = vpack.c.b16 %v133, %v132
    %v143 = vpack.c.b16 %v135, %v134
    %152 = vmatpush.bf16.msra.mxu0 %v143
    %153 = vmatpush.bf16.msra.mxu0 %v142
    %154 = vmatpush.bf16.msra.mxu0 %v141
    %155 = vmatpush.bf16.msra.mxu0 %v140
    %156 = vmatpush.bf16.msra.mxu0 %v139
    %157 = vmatpush.bf16.msra.mxu0 %v138
    %158 = vmatpush.bf16.msra.mxu0 %v137
    %159 = vmatpush.bf16.msra.mxu0 %v136
    %160 = vmatmul.bf16.gmra.mxu0 %v102
    %v161 = vpop.f32.mrf.mxu0
    %v162 = vadd.f32 %v96, %v161
    %v163 = vpop.f32.mrf.mxu0
    %v164 = vadd.f32 %v96, %v163
    %165 = vdwg.mxu0
    %v166 = vpack.c.bf16 %v162, %v162
    %v167 = vpack.c.bf16 %v164, %v164
    %168 = vst [vmem:[%s7] sm:$0xf] %v166
    %169 = vst [vmem:[%s7 + $0x4] sm:$0xf] %v167
    %v170 = vld [vmem:[#allocation4] sm:$0xf]
    %v171 = vld [vmem:[#allocation4 + $0x4] sm:$0xf]
    %v172 = vld [vmem:[#allocation4 + $0x8] sm:$0xf]
    %v173 = vld [vmem:[#allocation4 + $0xc] sm:$0xf]
    %v174 = vld [vmem:[#allocation4 + $0x10] sm:$0xf]
    %v175 = vld [vmem:[#allocation4 + $0x14] sm:$0xf]
    %v176 = vld [vmem:[#allocation4 + $0x18] sm:$0xf]
    %v177 = vld [vmem:[#allocation4 + $0x1c] sm:$0xf]
    %v178 = vld [vmem:[#allocation4 + $0x20] sm:$0xf]
    %v179 = vld [vmem:[#allocation4 + $0x24] sm:$0xf]
    %v180 = vld [vmem:[#allocation4 + $0x28] sm:$0xf]
    %v181 = vld [vmem:[#allocation4 + $0x2c] sm:$0xf]
    %v182 = vld [vmem:[#allocation4 + $0x30] sm:$0xf]
    %v183 = vld [vmem:[#allocation4 + $0x34] sm:$0xf]
    %v184 = vld [vmem:[#allocation4 + $0x38] sm:$0xf]
    %v185 = vld [vmem:[#allocation4 + $0x3c] sm:$0xf]
    %v186 = vld [vmem:[%s5] sm:$0x1]
    %v188 = vperm.slane %v186, 0
    %v206 = vunpack.c.l.b16 %v170
    %v207 = vunpack.c.l.b16 %v171
    %v208 = vunpack.c.l.b16 %v172
    %v209 = vunpack.c.l.b16 %v173
    %v210 = vunpack.c.l.b16 %v174
    %v211 = vunpack.c.l.b16 %v175
    %v212 = vunpack.c.l.b16 %v176
    %v213 = vunpack.c.l.b16 %v177
    %v214 = vunpack.c.l.b16 %v178
    %v215 = vunpack.c.l.b16 %v179
    %v216 = vunpack.c.l.b16 %v180
    %v217 = vunpack.c.l.b16 %v181
    %v218 = vunpack.c.l.b16 %v182
    %v219 = vunpack.c.l.b16 %v183
    %v220 = vunpack.c.l.b16 %v184
    %v221 = vunpack.c.l.b16 %v185
    %v222 = vpack.c.b16 %v207, %v206
    %v223 = vpack.c.b16 %v209, %v208
    %v224 = vpack.c.b16 %v211, %v210
    %v225 = vpack.c.b16 %v213, %v212
    %v226 = vpack.c.b16 %v215, %v214
    %v227 = vpack.c.b16 %v217, %v216
    %v228 = vpack.c.b16 %v219, %v218
    %v229 = vpack.c.b16 %v221, %v220
    %238 = vmatpush.bf16.msra.mxu0 %v229
    %239 = vmatpush.bf16.msra.mxu0 %v228
    %240 = vmatpush.bf16.msra.mxu0 %v227
    %241 = vmatpush.bf16.msra.mxu0 %v226
    %242 = vmatpush.bf16.msra.mxu0 %v225
    %243 = vmatpush.bf16.msra.mxu0 %v224
    %244 = vmatpush.bf16.msra.mxu0 %v223
    %245 = vmatpush.bf16.msra.mxu0 %v222
    %246 = vmatmul.bf16.gmra.mxu0 %v102
    %v247 = vpop.f32.mrf.mxu0
    %v248 = vadd.f32 %v188, %v247
    %v249 = vpop.f32.mrf.mxu0
    %v250 = vadd.f32 %v188, %v249
    %251 = vdwg.mxu0
    %v252 = vpack.c.bf16 %v248, %v248
    %v253 = vpack.c.bf16 %v250, %v250
    %254 = vst [vmem:[%s8] sm:$0xf] %v252
    %255 = vst [vmem:[%s8 + $0x4] sm:$0xf] %v253
    %v256 = vld [vmem:[#allocation6] sm:$0xf]
    %v257 = vld [vmem:[#allocation6 + $0x4] sm:$0xf]
    %v258 = vld [vmem:[#allocation6 + $0x8] sm:$0xf]
    %v259 = vld [vmem:[#allocation6 + $0xc] sm:$0xf]
    %v260 = vld [vmem:[#allocation6 + $0x10] sm:$0xf]
    %v261 = vld [vmem:[#allocation6 + $0x14] sm:$0xf]
    %v262 = vld [vmem:[#allocation6 + $0x18] sm:$0xf]
    %v263 = vld [vmem:[#allocation6 + $0x1c] sm:$0xf]
    %v264 = vld [vmem:[#allocation6 + $0x20] sm:$0xf]
    %v265 = vld [vmem:[#allocation6 + $0x24] sm:$0xf]
    %v266 = vld [vmem:[#allocation6 + $0x28] sm:$0xf]
    %v267 = vld [vmem:[#allocation6 + $0x2c] sm:$0xf]
    %v268 = vld [vmem:[#allocation6 + $0x30] sm:$0xf]
    %v269 = vld [vmem:[#allocation6 + $0x34] sm:$0xf]
    %v270 = vld [vmem:[#allocation6 + $0x38] sm:$0xf]
    %v271 = vld [vmem:[#allocation6 + $0x3c] sm:$0xf]
    %v272 = vld [vmem:[%s6] sm:$0x1]
    %v274 = vperm.slane %v272, 0
    %v292 = vunpack.c.l.b16 %v256
    %v293 = vunpack.c.l.b16 %v257
    %v294 = vunpack.c.l.b16 %v258
    %v295 = vunpack.c.l.b16 %v259
    %v296 = vunpack.c.l.b16 %v260
    %v297 = vunpack.c.l.b16 %v261
    %v298 = vunpack.c.l.b16 %v262
    %v299 = vunpack.c.l.b16 %v263
    %v300 = vunpack.c.l.b16 %v264
    %v301 = vunpack.c.l.b16 %v265
    %v302 = vunpack.c.l.b16 %v266
    %v303 = vunpack.c.l.b16 %v267
    %v304 = vunpack.c.l.b16 %v268
    %v305 = vunpack.c.l.b16 %v269
    %v306 = vunpack.c.l.b16 %v270
    %v307 = vunpack.c.l.b16 %v271
    %v308 = vpack.c.b16 %v293, %v292
    %v309 = vpack.c.b16 %v295, %v294
    %v310 = vpack.c.b16 %v297, %v296
    %v311 = vpack.c.b16 %v299, %v298
    %v312 = vpack.c.b16 %v301, %v300
    %v313 = vpack.c.b16 %v303, %v302
    %v314 = vpack.c.b16 %v305, %v304
    %v315 = vpack.c.b16 %v307, %v306
    %324 = vmatpush.bf16.msra.mxu0 %v315
    %325 = vmatpush.bf16.msra.mxu0 %v314
    %326 = vmatpush.bf16.msra.mxu0 %v313
    %327 = vmatpush.bf16.msra.mxu0 %v312
    %328 = vmatpush.bf16.msra.mxu0 %v311
    %329 = vmatpush.bf16.msra.mxu0 %v310
    %330 = vmatpush.bf16.msra.mxu0 %v309
    %331 = vmatpush.bf16.msra.mxu0 %v308
    %332 = vmatmul.bf16.gmra.mxu0 %v102
    %v333 = vpop.f32.mrf.mxu0
    %v334 = vadd.f32 %v274, %v333
    %v335 = vpop.f32.mrf.mxu0
    %v336 = vadd.f32 %v274, %v335
    %337 = vdwg.mxu0
    %v338 = vpack.c.bf16 %v334, %v334
    %v339 = vpack.c.bf16 %v336, %v336
    %340 = vst [vmem:[%s9] sm:$0xf] %v338
    %341 = vst [vmem:[%s9 + $0x4] sm:$0xf] %v339
    // Predicated region
    $region42: #{transformer_forward.33} parent=1 // pred_check
      _
    $region43: #{transformer_forward.33} parent=1 // pred_check_branch
      %343 = sbr.rel (0) target = $region45
    $region44: #{transformer_forward.33} parent=1 // pred_region
      _
    $region45: #{transformer_forward.33} parent=1 // pred_fallthru
      _
    // Predicated region
    $region46: #{transformer_forward.33} parent=1 // pred_check
      _
    $region47: #{transformer_forward.33} parent=1 // pred_check_branch
      %345 = sbr.rel (0) target = $region49
    $region48: #{transformer_forward.33} parent=1 // pred_region
      _
    $region49: #{transformer_forward.33} parent=1 // pred_fallthru
      _
    // Predicated region
    $region50: #{transformer_forward.33} parent=1 // pred_check
      _
    $region51: #{transformer_forward.33} parent=1 // pred_check_branch
      %347 = sbr.rel (0) target = $region53
    $region52: #{transformer_forward.33} parent=1 // pred_region
      _
    $region53: #{transformer_forward.33} parent=1 // pred_fallthru
      _
    // Predicated region
    $region54: #{transformer_forward.33} parent=1 // pred_check
      _
    $region55: #{transformer_forward.33} parent=1 // pred_check_branch
      %349 = sbr.rel (0) target = $region57
    $region56: #{transformer_forward.33} parent=1 // pred_region
      _
    $region57: #{transformer_forward.33} parent=1 // pred_fallthru
      _
    // Predicated region
    $region58: #{transformer_forward.33} parent=1 // pred_check
      _
    $region59: #{transformer_forward.33} parent=1 // pred_check_branch
      %351 = sbr.rel (0) target = $region61
    $region60: #{transformer_forward.33} parent=1 // pred_region
      _
    $region61: #{transformer_forward.33} parent=1 // pred_fallthru
      _
    // Predicated region
    $region62: #{transformer_forward.33} parent=1 // pred_check
      _
    $region63: #{transformer_forward.33} parent=1 // pred_check_branch
      %353 = sbr.rel (0) target = $region65
    $region64: #{transformer_forward.33} parent=1 // pred_region
      _
    $region65: #{transformer_forward.33} parent=1 // pred_fallthru
      _
    %354 = vsyncpa [#allocation3], 1
    %355 = vsyncpa [#allocation5], 1

// kernel: transformer_forward.35
$region0: #{transformer_forward.35}
  #allocation0 [shape = 'u32[]', space=smem, size = 0x4, offset = 0x4, fixed_abs, tag = 'smem constant byte address 0x4 - core index']
  #allocation1 [shape = 'u32[72,128]{1,0:T(1,128)}', space=vmem, size = 0x9000, scoped, tag = 'internal scratch']
  %s0 = inlined_call_operand.vmem [shape: bf16[16,128], index: 0, kind: input, shape index: {}]
  %s1 = inlined_call_operand.hbm [shape: bf16[128,128], index: 1, kind: input, shape index: {}]
  %s2 = inlined_call_operand.hbm [shape: f32[1,128], index: 2, kind: input, shape index: {}]
  %s3 = inlined_call_operand.vmem [shape: bf16[16,128], index: 3, kind: input, shape index: {}]
  %s4 = inlined_call_operand.hbm [shape: f32[1,128], index: 4, kind: input, shape index: {}]
  %s5 = inlined_call_operand.hbm [shape: f32[1,128], index: 5, kind: input, shape index: {}]
  %s6 = inlined_call_operand.vmem [shape: bf16[16,128], index: 6, kind: output, shape index: {}]
  %s7 = sld [smem:[#allocation0]]
  $region50: #{transformer_forward.35} parent=0
    _
  %s9 = ssub.s32 1, %s7
  %s10 = scalar_select 0, %s9, %s7
  $region1: #{transformer_forward.35} parent=0
    #allocation2 [shape = 'u8[32768]{0}', space=vmem, size = 0x8000, scoped, tag = 'input window, operand 1, single buffered']
    #allocation3 [shape = 's32[1]{0}', space=sflag, size = 0x4, scoped, tag = 'scoped memory for transformer_forward.35']
    #allocation4 [shape = 'u8[512]{0}', space=vmem, size = 0x400, scoped, tag = 'input window, operand 2, single buffered']
    #allocation5 [shape = 's32[1]{0}', space=sflag, size = 0x4, scoped, tag = 'scoped memory for transformer_forward.35']
    #allocation6 [shape = 'u8[512]{0}', space=vmem, size = 0x400, scoped, tag = 'input window, operand 4, single buffered']
    #allocation7 [shape = 'u8[512]{0}', space=vmem, size = 0x400, scoped, tag = 'input window, operand 5, single buffered']
    #allocation8 [shape = 's32[1]{0}', space=sflag, size = 0x4, scoped, tag = 'scoped memory for transformer_forward.35']
    %11 = vsyncpa [#allocation3], 0
    %12 = vsyncpa [#allocation5], 0
    %13 = vsyncpa [#allocation8], 0
    // Predicated region
    $region2: #{transformer_forward.35} parent=1 // pred_check
      _
    $region3: #{transformer_forward.35} parent=1 // pred_check_branch
      %15 = sbr.rel (0) target = $region5
    $region4: #{transformer_forward.35} parent=1 // pred_region
      _
    $region5: #{transformer_forward.35} parent=1 // pred_fallthru
      _
    // Predicated region
    $region6: #{transformer_forward.35} parent=1 // pred_check
      _
    $region7: #{transformer_forward.35} parent=1 // pred_check_branch
      %17 = sbr.rel (0) target = $region9
    $region8: #{transformer_forward.35} parent=1 // pred_region
      %19 = vsyncadd [#allocation3], 0
      %s20 = sshll.u32 %s1, 4
      %s21 = int_to_ptr.hbm [resolvable:$true] %s20
      %s22 = sshll.u32 [#allocation2], 4
      %s23 = int_to_ptr.vmem [resolvable:$true] %s22
      %28 = dma.hbm_to_vmem [thread:$0]  %s21, 1024, %s23, [#allocation3], 64, 64, 4
    $region9: #{transformer_forward.35} parent=1 // pred_fallthru
      _
    // Predicated region
    $region10: #{transformer_forward.35} parent=1 // pred_check
      _
    $region11: #{transformer_forward.35} parent=1 // pred_check_branch
      %30 = sbr.rel (0) target = $region13
    $region12: #{transformer_forward.35} parent=1 // pred_region
      %32 = vsyncadd [#allocation5], 0
      %s34 = sshll.u32 %s2, 4
      %s35 = int_to_ptr.hbm [resolvable:$true] %s34
      %s36 = sshll.u32 [#allocation4], 4
      %s37 = int_to_ptr.vmem [resolvable:$true] %s36
      %39 = dma.hbm_to_vmem [thread:$0]  %s35, 16, %s37, [#allocation5]
    $region13: #{transformer_forward.35} parent=1 // pred_fallthru
      _
    // Predicated region
    $region14: #{transformer_forward.35} parent=1 // pred_check
      _
    $region15: #{transformer_forward.35} parent=1 // pred_check_branch
      %41 = sbr.rel (0) target = $region17
    $region16: #{transformer_forward.35} parent=1 // pred_region
      _
    $region17: #{transformer_forward.35} parent=1 // pred_fallthru
      _
    // Predicated region
    $region18: #{transformer_forward.35} parent=1 // pred_check
      _
    $region19: #{transformer_forward.35} parent=1 // pred_check_branch
      %43 = sbr.rel (0) target = $region21
    $region20: #{transformer_forward.35} parent=1 // pred_region
      %45 = vsyncadd [#allocation5], 0
      %s47 = sshll.u32 %s4, 4
      %s48 = int_to_ptr.hbm [resolvable:$true] %s47
      %s49 = sshll.u32 [#allocation6], 4
      %s50 = int_to_ptr.vmem [resolvable:$true] %s49
      %52 = dma.hbm_to_vmem [thread:$0]  %s48, 16, %s50, [#allocation5]
    $region21: #{transformer_forward.35} parent=1 // pred_fallthru
      _
    // Predicated region
    $region22: #{transformer_forward.35} parent=1 // pred_check
      _
    $region23: #{transformer_forward.35} parent=1 // pred_check_branch
      %54 = sbr.rel (0) target = $region25
    $region24: #{transformer_forward.35} parent=1 // pred_region
      %56 = vsyncadd [#allocation8], 0
      %s58 = sshll.u32 %s5, 4
      %s59 = int_to_ptr.hbm [resolvable:$true] %s58
      %s60 = sshll.u32 [#allocation7], 4
      %s61 = int_to_ptr.vmem [resolvable:$true] %s60
      %63 = dma.hbm_to_vmem [thread:$0]  %s59, 16, %s61, [#allocation8]
    $region25: #{transformer_forward.35} parent=1 // pred_fallthru
      _
    // Predicated region
    $region26: #{transformer_forward.35} parent=1 // pred_check
      _
    $region27: #{transformer_forward.35} parent=1 // pred_check_branch
      %65 = sbr.rel (0) target = $region29
    $region28: #{transformer_forward.35} parent=1 // pred_region
      %67 = dma.done [#allocation3], 1024
    $region29: #{transformer_forward.35} parent=1 // pred_fallthru
      _
    // Predicated region
    $region30: #{transformer_forward.35} parent=1 // pred_check
      _
    $region31: #{transformer_forward.35} parent=1 // pred_check_branch
      %69 = sbr.rel (0) target = $region33
    $region32: #{transformer_forward.35} parent=1 // pred_region
      %71 = dma.done [#allocation5], 16
    $region33: #{transformer_forward.35} parent=1 // pred_fallthru
      _
    // Predicated region
    $region34: #{transformer_forward.35} parent=1 // pred_check
      _
    $region35: #{transformer_forward.35} parent=1 // pred_check_branch
      %73 = sbr.rel (0) target = $region37
    $region36: #{transformer_forward.35} parent=1 // pred_region
      %75 = dma.done [#allocation5], 16
    $region37: #{transformer_forward.35} parent=1 // pred_fallthru
      _
    // Predicated region
    $region38: #{transformer_forward.35} parent=1 // pred_check
      _
    $region39: #{transformer_forward.35} parent=1 // pred_check_branch
      %77 = sbr.rel (0) target = $region41
    $region40: #{transformer_forward.35} parent=1 // pred_region
      %79 = dma.done [#allocation8], 16
    $region41: #{transformer_forward.35} parent=1 // pred_fallthru
      _
    %v80 = vld [vmem:[%s0] sm:$0xf]
    %v81 = vld [vmem:[%s0 + $0x4] sm:$0xf]
    %v82 = vld [vmem:[#allocation2] sm:$0xf]
    %v83 = vld [vmem:[#allocation2 + $0x4] sm:$0xf]
    %v84 = vld [vmem:[#allocation2 + $0x8] sm:$0xf]
    %v85 = vld [vmem:[#allocation2 + $0xc] sm:$0xf]
    %v86 = vld [vmem:[#allocation2 + $0x10] sm:$0xf]
    %v87 = vld [vmem:[#allocation2 + $0x14] sm:$0xf]
    %v88 = vld [vmem:[#allocation2 + $0x18] sm:$0xf]
    %v89 = vld [vmem:[#allocation2 + $0x1c] sm:$0xf]
    %v90 = vld [vmem:[#allocation2 + $0x20] sm:$0xf]
    %v91 = vld [vmem:[#allocation2 + $0x24] sm:$0xf]
    %v92 = vld [vmem:[#allocation2 + $0x28] sm:$0xf]
    %v93 = vld [vmem:[#allocation2 + $0x2c] sm:$0xf]
    %v94 = vld [vmem:[#allocation2 + $0x30] sm:$0xf]
    %v95 = vld [vmem:[#allocation2 + $0x34] sm:$0xf]
    %v96 = vld [vmem:[#allocation2 + $0x38] sm:$0xf]
    %v97 = vld [vmem:[#allocation2 + $0x3c] sm:$0xf]
    %v98 = vld [vmem:[#allocation4] sm:$0x1]
    %v100 = vperm.slane %v98, 0
    %v104 = vunpack.c.l.b16 %v80
    %v105 = vunpack.c.l.b16 %v81
    %v106 = vpack.c.b16 %v105, %v104
    %v124 = vunpack.c.l.b16 %v82
    %v125 = vunpack.c.l.b16 %v83
    %v126 = vunpack.c.l.b16 %v84
    %v127 = vunpack.c.l.b16 %v85
    %v128 = vunpack.c.l.b16 %v86
    %v129 = vunpack.c.l.b16 %v87
    %v130 = vunpack.c.l.b16 %v88
    %v131 = vunpack.c.l.b16 %v89
    %v132 = vunpack.c.l.b16 %v90
    %v133 = vunpack.c.l.b16 %v91
    %v134 = vunpack.c.l.b16 %v92
    %v135 = vunpack.c.l.b16 %v93
    %v136 = vunpack.c.l.b16 %v94
    %v137 = vunpack.c.l.b16 %v95
    %v138 = vunpack.c.l.b16 %v96
    %v139 = vunpack.c.l.b16 %v97
    %v140 = vpack.c.b16 %v125, %v124
    %v141 = vpack.c.b16 %v127, %v126
    %v142 = vpack.c.b16 %v129, %v128
    %v143 = vpack.c.b16 %v131, %v130
    %v144 = vpack.c.b16 %v133, %v132
    %v145 = vpack.c.b16 %v135, %v134
    %v146 = vpack.c.b16 %v137, %v136
    %v147 = vpack.c.b16 %v139, %v138
    %156 = vmatpush.bf16.msra.mxu0 %v147
    %157 = vmatpush.bf16.msra.mxu0 %v146
    %158 = vmatpush.bf16.msra.mxu0 %v145
    %159 = vmatpush.bf16.msra.mxu0 %v144
    %160 = vmatpush.bf16.msra.mxu0 %v143
    %161 = vmatpush.bf16.msra.mxu0 %v142
    %162 = vmatpush.bf16.msra.mxu0 %v141
    %163 = vmatpush.bf16.msra.mxu0 %v140
    %164 = vmatmul.bf16.gmra.mxu0 %v106
    %v165 = vpop.f32.mrf.mxu0
    %v166 = vadd.f32 %v100, %v165
    %v167 = vpop.f32.mrf.mxu0
    %v168 = vadd.f32 %v100, %v167
    %169 = vdwg.mxu0
    %v170 = vld [vmem:[%s3] sm:$0xf]
    %v171 = vld [vmem:[%s3 + $0x4] sm:$0xf]
    %v172 = vunpack.c.l.bf16 %v170
    %v173 = vunpack.c.l.bf16 %v171
    %v174 = vadd.f32 %v166, %v172
    %v175 = vadd.f32 %v168, %v173
    %176 = vadd.xlane.f32.xlu0 %v174
    %v177 = vpop.xlane.xlu0 %176
    %178 = vadd.xlane.f32.xlu0 %v175
    %v179 = vpop.xlane.xlu0 %178
    %v180 = vrcp.pop 128.0
    %v181 = vmul.f32 128.0, %v180
    %v182 = vsub.f32 1.0, %v181
    %v183 = vmul.f32 %v180, %v182
    %v184 = vadd.f32 %v180, %v183
    %vm185 = vweird.f32 %v180
    %v186 = vsel %vm185, %v180, %v184
    %v187 = vmul.f32 %v177, %v186
    %v188 = vmul.f32 %v179, %v186
    %v189 = vsub.f32 %v174, %v187
    %v190 = vsub.f32 %v175, %v188
    %v191 = vmul.f32 %v189, %v189
    %v192 = vmul.f32 %v190, %v190
    %193 = vadd.xlane.f32.xlu0 %v191
    %v194 = vpop.xlane.xlu0 %193
    %195 = vadd.xlane.f32.xlu0 %v192
    %v196 = vpop.xlane.xlu0 %195
    %v197 = vmul.f32 %v194, %v186
    %v198 = vmul.f32 %v196, %v186
    %v199 = vadd.f32 %v197, 1e-06
    %v200 = vadd.f32 %v198, 1e-06
    %v201 = vrsqrt.pop %v199
    %v202 = vmul.f32 %v201, %v199
    %v203 = vmul.f32 %v202, %v201
    %v204 = vmul.f32 0.5, %v203
    %v205 = vsub.f32 1.5, %v204
    %v206 = vmul.f32 %v201, %v205
    %vm207 = vweird.f32 %v199
    %vm208 = vweird.f32 %v201
    %vm209 = vmor %vm207, %vm208
    %v210 = vsel %vm209, %v201, %v206
    %v211 = vrsqrt.pop %v200
    %v212 = vmul.f32 %v211, %v200
    %v213 = vmul.f32 %v212, %v211
    %v214 = vmul.f32 0.5, %v213
    %v215 = vsub.f32 1.5, %v214
    %v216 = vmul.f32 %v211, %v215
    %vm217 = vweird.f32 %v200
    %vm218 = vweird.f32 %v211
    %vm219 = vmor %vm217, %vm218
    %v220 = vsel %vm219, %v211, %v216
    %v221 = vmul.f32 %v189, %v210
    %v222 = vmul.f32 %v190, %v220
    %v223 = vld [vmem:[#allocation6] sm:$0x1]
    %v225 = vperm.slane %v223, 0
    %v227 = vmul.f32 %v221, %v225
    %v228 = vmul.f32 %v222, %v225
    %v229 = vld [vmem:[#allocation7] sm:$0x1]
    %v231 = vperm.slane %v229, 0
    %v233 = vadd.f32 %v227, %v231
    %v234 = vadd.f32 %v228, %v231
    %v235 = vpack.c.bf16 %v233, %v233
    %v236 = vpack.c.bf16 %v234, %v234
    %237 = vst [vmem:[%s6] sm:$0xf] %v235
    %238 = vst [vmem:[%s6 + $0x4] sm:$0xf] %v236
    // Predicated region
    $region42: #{transformer_forward.35} parent=1 // pred_check
      _
    $region43: #{transformer_forward.35} parent=1 // pred_check_branch
      %240 = sbr.rel (0) target = $region45
    $region44: #{transformer_forward.35} parent=1 // pred_region
      _
    $region45: #{transformer_forward.35} parent=1 // pred_fallthru
      _
    // Predicated region
    $region46: #{transformer_forward.35} parent=1 // pred_check
      _
    $region47: #{transformer_forward.35} parent=1 // pred_check_branch
      %242 = sbr.rel (0) target = $region49
    $region48: #{transformer_forward.35} parent=1 // pred_region
      _
    $region49: #{transformer_forward.35} parent=1 // pred_fallthru
      _
    %243 = vsyncpa [#allocation3], 1
    %244 = vsyncpa [#allocation5], 1
    %245 = vsyncpa [#allocation8], 1

// kernel: transformer_forward.36
$region0: #{transformer_forward.36}
  #allocation0 [shape = 'u32[]', space=smem, size = 0x4, offset = 0x4, fixed_abs, tag = 'smem constant byte address 0x4 - core index']
  #allocation1 [shape = 'u32[72,128]{1,0:T(1,128)}', space=vmem, size = 0x9000, scoped, tag = 'internal scratch']
  %s0 = inlined_call_operand.vmem [shape: bf16[16,128], index: 0, kind: input, shape index: {}]
  %s1 = inlined_call_operand.hbm [shape: bf16[128,128], index: 1, kind: input, shape index: {}]
  %s2 = inlined_call_operand.hbm [shape: f32[1,128], index: 2, kind: input, shape index: {}]
  %s3 = inlined_call_operand.vmem [shape: bf16[16,128], index: 3, kind: output, shape index: {}]
  %s4 = sld [smem:[#allocation0]]
  $region30: #{transformer_forward.36} parent=0
    _
  %s6 = ssub.s32 1, %s4
  %s7 = scalar_select 0, %s6, %s4
  $region1: #{transformer_forward.36} parent=0
    #allocation2 [shape = 'u8[32768]{0}', space=vmem, size = 0x8000, scoped, tag = 'input window, operand 1, single buffered']
    #allocation3 [shape = 's32[1]{0}', space=sflag, size = 0x4, scoped, tag = 'scoped memory for transformer_forward.36']
    #allocation4 [shape = 'u8[512]{0}', space=vmem, size = 0x400, scoped, tag = 'input window, operand 2, single buffered']
    #allocation5 [shape = 's32[1]{0}', space=sflag, size = 0x4, scoped, tag = 'scoped memory for transformer_forward.36']
    %8 = vsyncpa [#allocation3], 0
    %9 = vsyncpa [#allocation5], 0
    // Predicated region
    $region2: #{transformer_forward.36} parent=1 // pred_check
      _
    $region3: #{transformer_forward.36} parent=1 // pred_check_branch
      %11 = sbr.rel (0) target = $region5
    $region4: #{transformer_forward.36} parent=1 // pred_region
      _
    $region5: #{transformer_forward.36} parent=1 // pred_fallthru
      _
    // Predicated region
    $region6: #{transformer_forward.36} parent=1 // pred_check
      _
    $region7: #{transformer_forward.36} parent=1 // pred_check_branch
      %13 = sbr.rel (0) target = $region9
    $region8: #{transformer_forward.36} parent=1 // pred_region
      %15 = vsyncadd [#allocation3], 0
      %s16 = sshll.u32 %s1, 4
      %s17 = int_to_ptr.hbm [resolvable:$true] %s16
      %s18 = sshll.u32 [#allocation2], 4
      %s19 = int_to_ptr.vmem [resolvable:$true] %s18
      %24 = dma.hbm_to_vmem [thread:$0]  %s17, 1024, %s19, [#allocation3], 64, 64, 4
    $region9: #{transformer_forward.36} parent=1 // pred_fallthru
      _
    // Predicated region
    $region10: #{transformer_forward.36} parent=1 // pred_check
      _
    $region11: #{transformer_forward.36} parent=1 // pred_check_branch
      %26 = sbr.rel (0) target = $region13
    $region12: #{transformer_forward.36} parent=1 // pred_region
      %28 = vsyncadd [#allocation5], 0
      %s30 = sshll.u32 %s2, 4
      %s31 = int_to_ptr.hbm [resolvable:$true] %s30
      %s32 = sshll.u32 [#allocation4], 4
      %s33 = int_to_ptr.vmem [resolvable:$true] %s32
      %35 = dma.hbm_to_vmem [thread:$0]  %s31, 16, %s33, [#allocation5]
    $region13: #{transformer_forward.36} parent=1 // pred_fallthru
      _
    // Predicated region
    $region14: #{transformer_forward.36} parent=1 // pred_check
      _
    $region15: #{transformer_forward.36} parent=1 // pred_check_branch
      %37 = sbr.rel (0) target = $region17
    $region16: #{transformer_forward.36} parent=1 // pred_region
      %39 = dma.done [#allocation3], 1024
    $region17: #{transformer_forward.36} parent=1 // pred_fallthru
      _
    // Predicated region
    $region18: #{transformer_forward.36} parent=1 // pred_check
      _
    $region19: #{transformer_forward.36} parent=1 // pred_check_branch
      %41 = sbr.rel (0) target = $region21
    $region20: #{transformer_forward.36} parent=1 // pred_region
      %43 = dma.done [#allocation5], 16
    $region21: #{transformer_forward.36} parent=1 // pred_fallthru
      _
    %v44 = vld [vmem:[%s0] sm:$0xf]
    %v45 = vld [vmem:[%s0 + $0x4] sm:$0xf]
    %v46 = vld [vmem:[#allocation2] sm:$0xf]
    %v47 = vld [vmem:[#allocation2 + $0x4] sm:$0xf]
    %v48 = vld [vmem:[#allocation2 + $0x8] sm:$0xf]
    %v49 = vld [vmem:[#allocation2 + $0xc] sm:$0xf]
    %v50 = vld [vmem:[#allocation2 + $0x10] sm:$0xf]
    %v51 = vld [vmem:[#allocation2 + $0x14] sm:$0xf]
    %v52 = vld [vmem:[#allocation2 + $0x18] sm:$0xf]
    %v53 = vld [vmem:[#allocation2 + $0x1c] sm:$0xf]
    %v54 = vld [vmem:[#allocation2 + $0x20] sm:$0xf]
    %v55 = vld [vmem:[#allocation2 + $0x24] sm:$0xf]
    %v56 = vld [vmem:[#allocation2 + $0x28] sm:$0xf]
    %v57 = vld [vmem:[#allocation2 + $0x2c] sm:$0xf]
    %v58 = vld [vmem:[#allocation2 + $0x30] sm:$0xf]
    %v59 = vld [vmem:[#allocation2 + $0x34] sm:$0xf]
    %v60 = vld [vmem:[#allocation2 + $0x38] sm:$0xf]
    %v61 = vld [vmem:[#allocation2 + $0x3c] sm:$0xf]
    %v62 = vld [vmem:[#allocation4] sm:$0x1]
    %v64 = vperm.slane %v62, 0
    %v68 = vunpack.c.l.b16 %v44
    %v69 = vunpack.c.l.b16 %v45
    %v70 = vpack.c.b16 %v69, %v68
    %v88 = vunpack.c.l.b16 %v46
    %v89 = vunpack.c.l.b16 %v47
    %v90 = vunpack.c.l.b16 %v48
    %v91 = vunpack.c.l.b16 %v49
    %v92 = vunpack.c.l.b16 %v50
    %v93 = vunpack.c.l.b16 %v51
    %v94 = vunpack.c.l.b16 %v52
    %v95 = vunpack.c.l.b16 %v53
    %v96 = vunpack.c.l.b16 %v54
    %v97 = vunpack.c.l.b16 %v55
    %v98 = vunpack.c.l.b16 %v56
    %v99 = vunpack.c.l.b16 %v57
    %v100 = vunpack.c.l.b16 %v58
    %v101 = vunpack.c.l.b16 %v59
    %v102 = vunpack.c.l.b16 %v60
    %v103 = vunpack.c.l.b16 %v61
    %v104 = vpack.c.b16 %v89, %v88
    %v105 = vpack.c.b16 %v91, %v90
    %v106 = vpack.c.b16 %v93, %v92
    %v107 = vpack.c.b16 %v95, %v94
    %v108 = vpack.c.b16 %v97, %v96
    %v109 = vpack.c.b16 %v99, %v98
    %v110 = vpack.c.b16 %v101, %v100
    %v111 = vpack.c.b16 %v103, %v102
    %120 = vmatpush.bf16.msra.mxu0 %v111
    %121 = vmatpush.bf16.msra.mxu0 %v110
    %122 = vmatpush.bf16.msra.mxu0 %v109
    %123 = vmatpush.bf16.msra.mxu0 %v108
    %124 = vmatpush.bf16.msra.mxu0 %v107
    %125 = vmatpush.bf16.msra.mxu0 %v106
    %126 = vmatpush.bf16.msra.mxu0 %v105
    %127 = vmatpush.bf16.msra.mxu0 %v104
    %128 = vmatmul.bf16.gmra.mxu0 %v70
    %v129 = vpop.f32.mrf.mxu0
    %v130 = vadd.f32 %v64, %v129
    %v131 = vpop.f32.mrf.mxu0
    %v132 = vadd.f32 %v64, %v131
    %133 = vdwg.mxu0
    %v134 = vpack.c.bf16 %v130, %v130
    %v135 = vpack.c.bf16 %v132, %v132
    %136 = vst [vmem:[%s3] sm:$0xf] %v134
    %137 = vst [vmem:[%s3 + $0x4] sm:$0xf] %v135
    // Predicated region
    $region22: #{transformer_forward.36} parent=1 // pred_check
      _
    $region23: #{transformer_forward.36} parent=1 // pred_check_branch
      %139 = sbr.rel (0) target = $region25
    $region24: #{transformer_forward.36} parent=1 // pred_region
      _
    $region25: #{transformer_forward.36} parent=1 // pred_fallthru
      _
    // Predicated region
    $region26: #{transformer_forward.36} parent=1 // pred_check
      _
    $region27: #{transformer_forward.36} parent=1 // pred_check_branch
      %141 = sbr.rel (0) target = $region29
    $region28: #{transformer_forward.36} parent=1 // pred_region
      _
    $region29: #{transformer_forward.36} parent=1 // pred_fallthru
      _
    %142 = vsyncpa [#allocation3], 1
    %143 = vsyncpa [#allocation5], 1

// kernel: transformer_forward.34
$region0: #{transformer_forward.34}
  #allocation0 [shape = 'u32[]', space=smem, size = 0x4, offset = 0x4, fixed_abs, tag = 'smem constant byte address 0x4 - core index']
  #allocation1 [shape = 'u32[72,128]{1,0:T(1,128)}', space=vmem, size = 0x9000, scoped, tag = 'internal scratch']
  #allocation2 [shape = 'f32[8,4]{1,0:T(8,128)}', space=vmem, size = 0x1000, scoped, tag = 'scratch operand']
  #allocation3 [shape = 'f32[8,4]{1,0:T(8,128)}', space=vmem, size = 0x1000, scoped, tag = 'scratch operand']
  #allocation4 [shape = 'f32[8,128]{1,0:T(8,128)}', space=vmem, size = 0x1000, scoped, tag = 'scratch operand']
  %s0 = inlined_call_operand.vmem [shape: bf16[2,8,128], index: 0, kind: input, shape index: {}]
  %s1 = inlined_call_operand.vmem [shape: bf16[2,8,128], index: 1, kind: input, shape index: {}]
  %s2 = inlined_call_operand.vmem [shape: bf16[2,8,128], index: 2, kind: input, shape index: {}]
  %s3 = inlined_call_operand.vmem [shape: f32[2,1,8], index: 3, kind: input, shape index: {}]
  %s4 = inlined_call_operand.vmem [shape: bf16[2,8,128], index: 4, kind: output, shape index: {}]
  %s5 = sld [smem:[#allocation0]]
  $region65: #{transformer_forward.34} parent=0
    _
  %s7 = ssub.s32 1, %s5
  %s8 = scalar_select 0, %s7, %s5
  loop: start=0, step=1, limit=4
  $region2: #{transformer_forward.34} parent=0 // loop_pre_header
    _
  $region3: #{transformer_forward.34} parent=0 // loop_header
    %s10 = sphi 0, %s14
    %p11 = scmp.ge.s32.totalorder %s10, 4
    %s17 = sphi 0, %s36
    %s18 = sphi 0, %s32
    %s19 = sphi 0, %s28
    %s20 = sphi 0, %s17
    %s21 = sphi 0, %s18
    %s22 = sphi 0, %s19
    %s23 = sphi 0, %s20
    %s24 = sphi 0, %s21
    %s25 = sphi 0, %s22
    %s41 = sphi 0, %s43
    %s44 = sphi 0, %s41
    %s45 = sphi 0, %s44
    %s61 = sphi 0, %s45
    %s69 = sphi 0, %s71
    %s72 = sphi 0, %s69
    %s73 = sphi 0, %s72
    %s89 = sphi 0, %s73
    %s97 = sphi 0, %s99
    %s100 = sphi 0, %s97
    %s101 = sphi 0, %s100
    %s117 = sphi 0, %s101
    %s125 = sphi 0, %s127
    %s128 = sphi 0, %s125
    %s129 = sphi 0, %s128
    %s145 = sphi 0, %s129
    %s153 = sphi 0, %s155
    %s156 = sphi 0, %s153
    %s157 = sphi 0, %s156
    %s173 = sphi 0, %s157
  $region4: #{transformer_forward.34} parent=0 // loop_header_branch
    %13 = sbr.rel (%p11) target = $region8
  $region5: #{transformer_forward.34} parent=0 // loop_body
    %s15 = ssub.s32 %s10, 1
    %s16 = ssub.s32 %s10, 2
    %s26 = sadd.s32 1, %s19
    %p27 = scmp.ge.s32.totalorder %s26, 1
    %s28 = scalar_select %p27, 0, %s26
    %s29 = sadd.s32 1, %s18
    %s30 = scalar_select %p27, %s29, %s18
    %p31 = scmp.ge.s32.totalorder %s30, 1
    %s32 = scalar_select %p31, 0, %s30
    %s33 = sadd.s32 1, %s17
    %s34 = scalar_select %p31, %s33, %s17
    %p35 = scmp.ge.s32.totalorder %s34, 2
    %s36 = scalar_select %p35, 0, %s34
    %s37 = ssub.s32 %s17, %s36
    %s38 = ssub.s32 %s18, %s32
    %s39 = sor.u32 %s37, %s38
    %p40 = scmp.eq.s32.totalorder %s39, 0
    %s42 = sadd.s32 %s41, 1
    %s43 = scalar_select %p40, %s41, %s42
    %p46 = pneg %p40
    %p47 = scmp.eq.s32.totalorder %s10, 1
    %p48 = por %p46, %p47
    %p49 = scmp.ne.s32.totalorder %s41, %s44
    %p50 = scmp.eq.s32.totalorder %s10, 0
    %p51 = por %p49, %p50
    %p52 = scmp.ne.s32.totalorder %s41, %s44
    %p53 = scmp.eq.s32.totalorder %s15, 1
    %p54 = por %p52, %p53
    %p55 = scmp.ne.s32.totalorder %s44, %s45
    %p56 = scmp.eq.s32.totalorder %s15, 0
    %p57 = por %p55, %p56
    %p58 = scmp.ne.s32.totalorder %s44, %s45
    %p59 = scmp.eq.s32.totalorder %s16, 1
    %p60 = por %p58, %p59
    %p62 = scmp.ne.s32.totalorder %s45, %s61
    %p63 = scmp.eq.s32.totalorder %s16, 0
    %p64 = por %p62, %p63
    %s65 = ssub.s32 %s17, %s36
    %s66 = ssub.s32 %s19, %s28
    %s67 = sor.u32 %s65, %s66
    %p68 = scmp.eq.s32.totalorder %s67, 0
    %s70 = sadd.s32 %s69, 1
    %s71 = scalar_select %p68, %s69, %s70
    %p74 = pneg %p68
    %p75 = scmp.eq.s32.totalorder %s10, 1
    %p76 = por %p74, %p75
    %p77 = scmp.ne.s32.totalorder %s69, %s72
    %p78 = scmp.eq.s32.totalorder %s10, 0
    %p79 = por %p77, %p78
    %p80 = scmp.ne.s32.totalorder %s69, %s72
    %p81 = scmp.eq.s32.totalorder %s15, 1
    %p82 = por %p80, %p81
    %p83 = scmp.ne.s32.totalorder %s72, %s73
    %p84 = scmp.eq.s32.totalorder %s15, 0
    %p85 = por %p83, %p84
    %p86 = scmp.ne.s32.totalorder %s72, %s73
    %p87 = scmp.eq.s32.totalorder %s16, 1
    %p88 = por %p86, %p87
    %p90 = scmp.ne.s32.totalorder %s73, %s89
    %p91 = scmp.eq.s32.totalorder %s16, 0
    %p92 = por %p90, %p91
    %s93 = ssub.s32 %s17, %s36
    %s94 = ssub.s32 %s19, %s28
    %s95 = sor.u32 %s93, %s94
    %p96 = scmp.eq.s32.totalorder %s95, 0
    %s98 = sadd.s32 %s97, 1
    %s99 = scalar_select %p96, %s97, %s98
    %p102 = pneg %p96
    %p103 = scmp.eq.s32.totalorder %s10, 1
    %p104 = por %p102, %p103
    %p105 = scmp.ne.s32.totalorder %s97, %s100
    %p106 = scmp.eq.s32.totalorder %s10, 0
    %p107 = por %p105, %p106
    %p108 = scmp.ne.s32.totalorder %s97, %s100
    %p109 = scmp.eq.s32.totalorder %s15, 1
    %p110 = por %p108, %p109
    %p111 = scmp.ne.s32.totalorder %s100, %s101
    %p112 = scmp.eq.s32.totalorder %s15, 0
    %p113 = por %p111, %p112
    %p114 = scmp.ne.s32.totalorder %s100, %s101
    %p115 = scmp.eq.s32.totalorder %s16, 1
    %p116 = por %p114, %p115
    %p118 = scmp.ne.s32.totalorder %s101, %s117
    %p119 = scmp.eq.s32.totalorder %s16, 0
    %p120 = por %p118, %p119
    %s121 = ssub.s32 %s17, %s36
    %s122 = ssub.s32 %s19, %s28
    %s123 = sor.u32 %s121, %s122
    %p124 = scmp.eq.s32.totalorder %s123, 0
    %s126 = sadd.s32 %s125, 1
    %s127 = scalar_select %p124, %s125, %s126
    %p130 = pneg %p124
    %p131 = scmp.eq.s32.totalorder %s10, 1
    %p132 = por %p130, %p131
    %p133 = scmp.ne.s32.totalorder %s125, %s128
    %p134 = scmp.eq.s32.totalorder %s10, 0
    %p135 = por %p133, %p134
    %p136 = scmp.ne.s32.totalorder %s125, %s128
    %p137 = scmp.eq.s32.totalorder %s15, 1
    %p138 = por %p136, %p137
    %p139 = scmp.ne.s32.totalorder %s128, %s129
    %p140 = scmp.eq.s32.totalorder %s15, 0
    %p141 = por %p139, %p140
    %p142 = scmp.ne.s32.totalorder %s128, %s129
    %p143 = scmp.eq.s32.totalorder %s16, 1
    %p144 = por %p142, %p143
    %p146 = scmp.ne.s32.totalorder %s129, %s145
    %p147 = scmp.eq.s32.totalorder %s16, 0
    %p148 = por %p146, %p147
    %s149 = ssub.s32 %s17, %s36
    %s150 = ssub.s32 %s18, %s32
    %s151 = sor.u32 %s149, %s150
    %p152 = scmp.eq.s32.totalorder %s151, 0
    %s154 = sadd.s32 %s153, 1
    %s155 = scalar_select %p152, %s153, %s154
    %p158 = pneg %p152
    %p159 = scmp.eq.s32.totalorder %s10, 1
    %p160 = por %p158, %p159
    %p161 = scmp.ne.s32.totalorder %s153, %s156
    %p162 = scmp.eq.s32.totalorder %s10, 0
    %p163 = por %p161, %p162
    %p164 = scmp.ne.s32.totalorder %s153, %s156
    %p165 = scmp.eq.s32.totalorder %s15, 1
    %p166 = por %p164, %p165
    %p167 = scmp.ne.s32.totalorder %s156, %s157
    %p168 = scmp.eq.s32.totalorder %s15, 0
    %p169 = por %p167, %p168
    %p170 = scmp.ne.s32.totalorder %s156, %s157
    %p171 = scmp.eq.s32.totalorder %s16, 1
    %p172 = por %p170, %p171
    %p174 = scmp.ne.s32.totalorder %s157, %s173
    %p175 = scmp.eq.s32.totalorder %s16, 0
    %p176 = por %p174, %p175
    %p177 = scmp.le.s32.totalorder 1, %s10
    %p178 = scmp.lt.s32.totalorder %s10, 3
    %p179 = pnand %p177, %p178
    %p180 = pneg %p179
    // Predicated region
    $region9: #{transformer_forward.34} parent=5 // pred_check
      _
    $region10: #{transformer_forward.34} parent=5 // pred_check_branch
      %182 = sbr.rel (%p179) target = $region12
    $region11: #{transformer_forward.34} parent=5 // pred_region
      %s183 = ssub.s32 %s10, 1
    $region12: #{transformer_forward.34} parent=5 // pred_fallthru
      _
    %p184 = scmp.lt.s32.totalorder %s10, 2
    // Predicated region
    $region13: #{transformer_forward.34} parent=5 // pred_check
      %p185 = pneg %p184
    $region14: #{transformer_forward.34} parent=5 // pred_check_branch
      %187 = sbr.rel (%p185) target = $region16
    $region15: #{transformer_forward.34} parent=5 // pred_region
      // Predicated region
      $region17: #{transformer_forward.34} parent=15 // pred_check
        %p188 = pneg %p51
      $region18: #{transformer_forward.34} parent=15 // pred_check_branch
        %190 = sbr.rel (%p188) target = $region20
      $region19: #{transformer_forward.34} parent=15 // pred_region
        %p191 = scmp.lt.s32.totalorder %s17, 1
        %s192 = scalar_select %p191, %s17, 1
        %p193 = scmp.lt.s32.totalorder %s18, 0
        %s194 = scalar_select %p193, %s18, 0
        %s195 = sadd.s32 %s194, %s192
        %s196 = smul.addr %s195, 4
        %s197 = scalar_lea.vmem %s0, %s196
      $region20: #{transformer_forward.34} parent=15 // pred_fallthru
        _
      // Predicated region
      $region21: #{transformer_forward.34} parent=15 // pred_check
        %p198 = pneg %p79
      $region22: #{transformer_forward.34} parent=15 // pred_check_branch
        %200 = sbr.rel (%p198) target = $region24
      $region23: #{transformer_forward.34} parent=15 // pred_region
        %p201 = scmp.lt.s32.totalorder %s17, 1
        %s202 = scalar_select %p201, %s17, 1
        %p203 = scmp.lt.s32.totalorder %s19, 0
        %s204 = scalar_select %p203, %s19, 0
        %s205 = sadd.s32 %s204, %s202
        %s206 = smul.addr %s205, 4
        %s207 = scalar_lea.vmem %s1, %s206
      $region24: #{transformer_forward.34} parent=15 // pred_fallthru
        _
      // Predicated region
      $region25: #{transformer_forward.34} parent=15 // pred_check
        %p208 = pneg %p107
      $region26: #{transformer_forward.34} parent=15 // pred_check_branch
        %210 = sbr.rel (%p208) target = $region28
      $region27: #{transformer_forward.34} parent=15 // pred_region
        %p211 = scmp.lt.s32.totalorder %s17, 1
        %s212 = scalar_select %p211, %s17, 1
        %p213 = scmp.lt.s32.totalorder %s19, 0
        %s214 = scalar_select %p213, %s19, 0
        %s215 = sadd.s32 %s214, %s212
        %s216 = smul.addr %s215, 4
        %s217 = scalar_lea.vmem %s2, %s216
      $region28: #{transformer_forward.34} parent=15 // pred_fallthru
        _
      // Predicated region
      $region29: #{transformer_forward.34} parent=15 // pred_check
        %p218 = pneg %p135
      $region30: #{transformer_forward.34} parent=15 // pred_check_branch
        %220 = sbr.rel (%p218) target = $region32
      $region31: #{transformer_forward.34} parent=15 // pred_region
        %p221 = scmp.lt.s32.totalorder %s17, 1
        %s222 = scalar_select %p221, %s17, 1
        %p223 = scmp.lt.s32.totalorder %s19, 0
        %s224 = scalar_select %p223, %s19, 0
        %s225 = sadd.s32 %s224, %s222
        %s226 = scalar_lea.vmem %s3, %s225
      $region32: #{transformer_forward.34} parent=15 // pred_fallthru
        _
    $region16: #{transformer_forward.34} parent=5 // pred_fallthru
      _
    %p227 = scmp.le.s32.totalorder 1, %s10
    %p228 = scmp.lt.s32.totalorder %s10, 3
    %p229 = pnand %p227, %p228
    %p230 = pneg %p229
    // Predicated region
    $region33: #{transformer_forward.34} parent=5 // pred_check
      _
    $region34: #{transformer_forward.34} parent=5 // pred_check_branch
      %232 = sbr.rel (%p229) target = $region36
    $region35: #{transformer_forward.34} parent=5 // pred_region
      %s233 = ssub.s32 %s10, 1
      %p234 = scmp.lt.s32.totalorder %s20, 1
      %s235 = scalar_select %p234, %s20, 1
      %p236 = scmp.lt.s32.totalorder %s21, 0
      %s237 = scalar_select %p236, %s21, 0
      %s238 = sadd.s32 %s237, %s235
      %s239 = smul.addr %s238, 4
      %s240 = scalar_lea.vmem %s0, %s239
      %p241 = pneg %p57
      %p242 = pneg %p54
      %p243 = scmp.lt.s32.totalorder %s20, 1
      %s244 = scalar_select %p243, %s20, 1
      %p245 = scmp.lt.s32.totalorder %s22, 0
      %s246 = scalar_select %p245, %s22, 0
      %s247 = sadd.s32 %s246, %s244
      %s248 = smul.addr %s247, 4
      %s249 = scalar_lea.vmem %s1, %s248
      %p250 = pneg %p85
      %p251 = pneg %p82
      %p252 = scmp.lt.s32.totalorder %s20, 1
      %s253 = scalar_select %p252, %s20, 1
      %p254 = scmp.lt.s32.totalorder %s22, 0
      %s255 = scalar_select %p254, %s22, 0
      %s256 = sadd.s32 %s255, %s253
      %s257 = smul.addr %s256, 4
      %s258 = scalar_lea.vmem %s2, %s257
      %p259 = pneg %p113
      %p260 = pneg %p110
      %p261 = scmp.lt.s32.totalorder %s20, 1
      %s262 = scalar_select %p261, %s20, 1
      %p263 = scmp.lt.s32.totalorder %s22, 0
      %s264 = scalar_select %p263, %s22, 0
      %s265 = sadd.s32 %s264, %s262
      %s266 = scalar_lea.vmem %s3, %s265
      %p267 = pneg %p141
      %p268 = pneg %p138
      %p269 = pneg %p169
      %p270 = pneg %p166
      %p271 = scmp.lt.s32.totalorder %s20, 1
      %s272 = scalar_select %p271, %s20, 1
      %p273 = scmp.lt.s32.totalorder %s21, 0
      %s274 = scalar_select %p273, %s21, 0
      %s275 = sadd.s32 %s274, %s272
      %s276 = smul.addr %s275, 4
      %s277 = scalar_lea.vmem %s4, %s276
      %p278 = scmp.lt.s32.totalorder %s20, 1
      %s279 = scalar_select %p278, %s20, 1
      %p280 = scmp.lt.s32.totalorder %s21, 0
      %s281 = scalar_select %p280, %s21, 0
      %s282 = sadd.s32 %s281, %s279
      %s283 = smul.addr %s282, 4
      %s284 = scalar_lea.vmem %s0, %s283
      %p285 = scmp.lt.s32.totalorder %s20, 1
      %s286 = scalar_select %p285, %s20, 1
      %p287 = scmp.lt.s32.totalorder %s22, 0
      %s288 = scalar_select %p287, %s22, 0
      %s289 = sadd.s32 %s288, %s286
      %s290 = smul.addr %s289, 4
      %s291 = scalar_lea.vmem %s1, %s290
      %p292 = scmp.lt.s32.totalorder %s20, 1
      %s293 = scalar_select %p292, %s20, 1
      %p294 = scmp.lt.s32.totalorder %s22, 0
      %s295 = scalar_select %p294, %s22, 0
      %s296 = sadd.s32 %s295, %s293
      %s297 = smul.addr %s296, 4
      %s298 = scalar_lea.vmem %s2, %s297
      %p299 = scmp.lt.s32.totalorder %s20, 1
      %s300 = scalar_select %p299, %s20, 1
      %p301 = scmp.lt.s32.totalorder %s22, 0
      %s302 = scalar_select %p301, %s22, 0
      %s303 = sadd.s32 %s302, %s300
      %s304 = scalar_lea.vmem %s3, %s303
      %p305 = scmp.lt.s32.totalorder %s20, 1
      %s306 = scalar_select %p305, %s20, 1
      %p307 = scmp.lt.s32.totalorder %s21, 0
      %s308 = scalar_select %p307, %s21, 0
      %s309 = sadd.s32 %s308, %s306
      %s310 = smul.addr %s309, 4
      %s311 = scalar_lea.vmem %s4, %s310
      %s313 = smul.u32 %s22, 8
      %s314 = smul.u32 %s21, 8
      %p315 = scmp.eq.s32.totalorder %s22, 0
      // Predicated region
      $region37: #{transformer_forward.34} parent=35 // pred_check
        %p316 = pneg %p315
      $region38: #{transformer_forward.34} parent=35 // pred_check_branch
        %318 = sbr.rel (%p316) target = $region40
      $region39: #{transformer_forward.34} parent=35 // pred_region
        %vm319 = vcmask 31744
        %320 = vst.msk [vmem:[#allocation2] sm:$0xff] %vm319, -1e+09
        %321 = vst.msk [vmem:[#allocation3] sm:$0xff] %vm319, 0.0
        %322 = vst [vmem:[#allocation4] sm:$0xff] 0.0
      $region40: #{transformer_forward.34} parent=35 // pred_fallthru
        _
      %s323 = sadd.s32 %s314, 7
      %p324 = scmp.le.s32.totalorder %s313, %s323
      %s325 = sadd.s32 %s313, 7
      %p326 = scmp.gt.s32.totalorder %s325, %s314
      %p327 = pnand %p324, %p326
      %p328 = pneg %p327
      // Predicated region
      $region41: #{transformer_forward.34} parent=35 // pred_check
        _
      $region42: #{transformer_forward.34} parent=35 // pred_check_branch
        %330 = sbr.rel (%p327) target = $region44
      $region43: #{transformer_forward.34} parent=35 // pred_region
        %v331 = vld [vmem:[%s284] sm:$0xf]
        %v332 = vld [vmem:[%s291] sm:$0xf]
        %v333 = vld [vmem:[%s298] sm:$0xf]
        %v334 = vld [vmem:[%s304] sm:$0x1]
        %v335 = vlaneseq
        %v336 = vand.u32 %v335, 127
        %v337 = vstv %s313
        %v338 = vadd.s32 %v337, %v336
        %v339 = vlaneseq
        %v340 = vshrl.u32 %v339, 7
        %v341 = vstv %s314
        %v342 = vadd.s32 %v341, %v340
        %vm343 = vcmp.gt.s32.totalorder %v338, %v342
        %v345 = vperm.slane %v334, 0
        %vm347 = vcmask 261120
        %v349 = vsel %vm347, %v331, 0
        %v352 = vsel %vm347, %v332, 0
        %354 = vmatpush.bf16.xpose.msra.mxu0 0
        %355 = vmatpush.bf16.xpose.msra.mxu0 0
        %356 = vmatpush.bf16.xpose.msra.mxu0 0
        %357 = vmatpush.bf16.xpose.msra.mxu0 0
        %358 = vmatpush.bf16.xpose.msra.mxu0 0
        %359 = vmatpush.bf16.xpose.msra.mxu0 0
        %360 = vmatpush.bf16.xpose.msra.mxu0 0
        %361 = vmatpush.bf16.xpose.msra.mxu0 %v352
        %362 = vmatmul.bf16.gmra.mxu0 %v349
        %v363 = vpop.f32.mrf.mxu0
        %v364 = vadd.f32 %v345, %v363
        %v365 = vpop.f32.mrf.mxu0
        %366 = vdwg.mxu0
        %v367 = vsel %vm343, -1e+09, %v364
        %v368 = vld [vmem:[#allocation2] sm:$0xff]
        %vm369 = vcmask 64512
        %v370 = vsel %vm369, %v367, -inf
        %371 = vmax.xlane.f32.xlu0 %v370
        %v372 = vpop.xlane.xlu0 %371
        %v373 = vmax.f32 %v368, %v372
        %v374 = vsub.f32 %v368, %v373
        %v375 = vmul.f32 %v374, 1.442695
        %v376 = vpow.pop %v375
        %378 = vset.pattern.permute.xlu0 0
        %379 = vperm.xlu0 %378, %v373
        %v380 = vpop.permute.xlu0 %379
        %v382 = vsub.f32 %v367, %v380
        %v383 = vmul.f32 %v382, 1.442695
        %v384 = vpow.pop %v383
        %v385 = vld [vmem:[#allocation3] sm:$0xff]
        %v386 = vmul.f32 %v376, %v385
        %v387 = vsel %vm369, %v384, 0.0
        %388 = vadd.xlane.f32.xlu0 %v387
        %v389 = vpop.xlane.xlu0 %388
        %v390 = vadd.f32 %v386, %v389
        %vm391 = vcmask 7168
        %392 = vst.msk [vmem:[#allocation3] sm:$0xff] %vm391, %v390
        %v393 = vld [vmem:[#allocation4] sm:$0xff]
        %395 = vset.pattern.permute.xlu0 0
        %396 = vperm.xlu0 %395, %v376
        %v397 = vpop.permute.xlu0 %396
        %v399 = vmul.f32 %v397, %v393
        %v400 = vpack.c.bf16 %v384, %v384
        %v402 = vsel %vm369, %v400, 0
        %vm404 = vcmask 1043456
        %v406 = vsel %vm404, %v333, 0
        %408 = vmatpush.bf16.msra.mxu0 0
        %409 = vmatpush.bf16.msra.mxu0 0
        %410 = vmatpush.bf16.msra.mxu0 0
        %411 = vmatpush.bf16.msra.mxu0 0
        %412 = vmatpush.bf16.msra.mxu0 0
        %413 = vmatpush.bf16.msra.mxu0 0
        %414 = vmatpush.bf16.msra.mxu0 0
        %415 = vmatpush.bf16.msra.mxu0 %v406
        %416 = vmatmul.bf16.gmra.mxu0 %v402
        %v417 = vpop.f32.mrf.mxu0
        %v418 = vadd.f32 0.0, %v417
        %v419 = vpop.f32.mrf.mxu0
        %420 = vdwg.mxu0
        %v421 = vadd.f32 %v399, %v418
        %422 = vst.msk [vmem:[#allocation4] sm:$0xff] %vm347, %v421
        %423 = vst.msk [vmem:[#allocation2] sm:$0xff] %vm391, %v373
        %v425 = vunpack.c.l.b16 %v331
        %v426 = vpack.c.b16 %v425, %v425
        %427 = vrot.lane.b32.xlu0 %v426, 96
        %v428 = vpop.permute.xlu0 %427
        %v430 = vunpack.c.l.b16 %v332
        %v431 = vpack.c.b16 %v430, %v430
        %432 = vrot.lane.b32.xlu0 %v431, 96
        %v433 = vpop.permute.xlu0 %432
        %v435 = vsel %vm347, %v428, 0
        %v438 = vsel %vm347, %v433, 0
        %440 = vmatpush.bf16.xpose.msra.mxu0 0
        %441 = vmatpush.bf16.xpose.msra.mxu0 0
        %442 = vmatpush.bf16.xpose.msra.mxu0 0
        %443 = vmatpush.bf16.xpose.msra.mxu0 0
        %444 = vmatpush.bf16.xpose.msra.mxu0 0
        %445 = vmatpush.bf16.xpose.msra.mxu0 0
        %446 = vmatpush.bf16.xpose.msra.mxu0 0
        %447 = vmatpush.bf16.xpose.msra.mxu0 %v438
        %448 = vmatmul.bf16.gmra.mxu0 %v435
        %v449 = vpop.f32.mrf.mxu0
        %v450 = vadd.f32 %v345, %v449
        %v451 = vpop.f32.mrf.mxu0
        %452 = vdwg.mxu0
        %v453 = vsel %vm343, -1e+09, %v450
        %v454 = vld [vmem:[#allocation2] sm:$0xff]
        %v455 = vsel %vm369, %v453, -inf
        %456 = vmax.xlane.f32.xlu0 %v455
        %v457 = vpop.xlane.xlu0 %456
        %v458 = vmax.f32 %v454, %v457
        %v459 = vsub.f32 %v454, %v458
        %v460 = vmul.f32 %v459, 1.442695
        %v461 = vpow.pop %v460
        %463 = vset.pattern.permute.xlu0 1
        %464 = vperm.xlu0 %463, %v458
        %v465 = vpop.permute.xlu0 %464
        %v467 = vsub.f32 %v453, %v465
        %v468 = vmul.f32 %v467, 1.442695
        %v469 = vpow.pop %v468
        %v470 = vld [vmem:[#allocation3] sm:$0xff]
        %v471 = vmul.f32 %v461, %v470
        %v472 = vsel %vm369, %v469, 0.0
        %473 = vadd.xlane.f32.xlu0 %v472
        %v474 = vpop.xlane.xlu0 %473
        %v475 = vadd.f32 %v471, %v474
        %vm476 = vcmask 15368
        %477 = vst.msk [vmem:[#allocation3] sm:$0xff] %vm476, %v475
        %v478 = vld [vmem:[#allocation4] sm:$0xff]
        %480 = vset.pattern.permute.xlu0 1
        %481 = vperm.xlu0 %480, %v461
        %v482 = vpop.permute.xlu0 %481
        %v484 = vmul.f32 %v482, %v478
        %v485 = vpack.c.bf16 %v469, %v469
        %v487 = vunpack.c.l.b16 %v333
        %v488 = vpack.c.b16 %v487, %v487
        %489 = vrot.lane.b32.xlu0 %v488, 96
        %v490 = vpop.permute.xlu0 %489
        %v492 = vsel %vm369, %v485, 0
        %v495 = vsel %vm404, %v490, 0
        %497 = vmatpush.bf16.msra.mxu0 0
        %498 = vmatpush.bf16.msra.mxu0 0
        %499 = vmatpush.bf16.msra.mxu0 0
        %500 = vmatpush.bf16.msra.mxu0 0
        %501 = vmatpush.bf16.msra.mxu0 0
        %502 = vmatpush.bf16.msra.mxu0 0
        %503 = vmatpush.bf16.msra.mxu0 0
        %504 = vmatpush.bf16.msra.mxu0 %v495
        %505 = vmatmul.bf16.gmra.mxu0 %v492
        %v506 = vpop.f32.mrf.mxu0
        %v507 = vadd.f32 0.0, %v506
        %v508 = vpop.f32.mrf.mxu0
        %509 = vdwg.mxu0
        %511 = vrot.lane.b32.xlu0 %v507, 32
        %v512 = vpop.permute.xlu0 %511
        %v514 = vadd.f32 %v484, %v512
        %vm515 = vcmask 523520
        %516 = vst.msk [vmem:[#allocation4] sm:$0xff] %vm515, %v514
        %517 = vst.msk [vmem:[#allocation2] sm:$0xff] %vm476, %v458
        %518 = vrot.lane.b32.xlu0 %v426, 64
        %v519 = vpop.permute.xlu0 %518
        %520 = vrot.lane.b32.xlu0 %v431, 64
        %v521 = vpop.permute.xlu0 %520
        %v523 = vsel %vm347, %v519, 0
        %v526 = vsel %vm347, %v521, 0
        %528 = vmatpush.bf16.xpose.msra.mxu0 0
        %529 = vmatpush.bf16.xpose.msra.mxu0 0
        %530 = vmatpush.bf16.xpose.msra.mxu0 0
        %531 = vmatpush.bf16.xpose.msra.mxu0 0
        %532 = vmatpush.bf16.xpose.msra.mxu0 0
        %533 = vmatpush.bf16.xpose.msra.mxu0 0
        %534 = vmatpush.bf16.xpose.msra.mxu0 0
        %535 = vmatpush.bf16.xpose.msra.mxu0 %v526
        %536 = vmatmul.bf16.gmra.mxu0 %v523
        %v537 = vpop.f32.mrf.mxu0
        %v538 = vadd.f32 %v345, %v537
        %v539 = vpop.f32.mrf.mxu0
        %540 = vdwg.mxu0
        %v541 = vsel %vm343, -1e+09, %v538
        %v542 = vld [vmem:[#allocation2] sm:$0xff]
        %v543 = vsel %vm369, %v541, -inf
        %544 = vmax.xlane.f32.xlu0 %v543
        %v545 = vpop.xlane.xlu0 %544
        %v546 = vmax.f32 %v542, %v545
        %v547 = vsub.f32 %v542, %v546
        %v548 = vmul.f32 %v547, 1.442695
        %v549 = vpow.pop %v548
        %551 = vset.pattern.permute.xlu0 2
        %552 = vperm.xlu0 %551, %v546
        %v553 = vpop.permute.xlu0 %552
        %v555 = vsub.f32 %v541, %v553
        %v556 = vmul.f32 %v555, 1.442695
        %v557 = vpow.pop %v556
        %v558 = vld [vmem:[#allocation3] sm:$0xff]
        %v559 = vmul.f32 %v549, %v558
        %v560 = vsel %vm369, %v557, 0.0
        %561 = vadd.xlane.f32.xlu0 %v560
        %v562 = vpop.xlane.xlu0 %561
        %v563 = vadd.f32 %v559, %v562
        %vm564 = vcmask 23568
        %565 = vst.msk [vmem:[#allocation3] sm:$0xff] %vm564, %v563
        %v566 = vld [vmem:[#allocation4] sm:$0xff]
        %568 = vset.pattern.permute.xlu0 2
        %569 = vperm.xlu0 %568, %v549
        %v570 = vpop.permute.xlu0 %569
        %v572 = vmul.f32 %v570, %v566
        %v573 = vpack.c.bf16 %v557, %v557
        %574 = vrot.lane.b32.xlu0 %v488, 64
        %v575 = vpop.permute.xlu0 %574
        %v577 = vsel %vm369, %v573, 0
        %v580 = vsel %vm404, %v575, 0
        %582 = vmatpush.bf16.msra.mxu0 0
        %583 = vmatpush.bf16.msra.mxu0 0
        %584 = vmatpush.bf16.msra.mxu0 0
        %585 = vmatpush.bf16.msra.mxu0 0
        %586 = vmatpush.bf16.msra.mxu0 0
        %587 = vmatpush.bf16.msra.mxu0 0
        %588 = vmatpush.bf16.msra.mxu0 0
        %589 = vmatpush.bf16.msra.mxu0 %v580
        %590 = vmatmul.bf16.gmra.mxu0 %v577
        %v591 = vpop.f32.mrf.mxu0
        %v592 = vadd.f32 0.0, %v591
        %v593 = vpop.f32.mrf.mxu0
        %594 = vdwg.mxu0
        %596 = vrot.lane.b32.xlu0 %v592, 64
        %v597 = vpop.permute.xlu0 %596
        %v599 = vadd.f32 %v572, %v597
        %vm600 = vcmask 785920
        %601 = vst.msk [vmem:[#allocation4] sm:$0xff] %vm600, %v599
        %602 = vst.msk [vmem:[#allocation2] sm:$0xff] %vm564, %v546
        %603 = vrot.lane.b32.xlu0 %v426, 32
        %v604 = vpop.permute.xlu0 %603
        %605 = vrot.lane.b32.xlu0 %v431, 32
        %v606 = vpop.permute.xlu0 %605
        %v608 = vsel %vm347, %v604, 0
        %v611 = vsel %vm347, %v606, 0
        %613 = vmatpush.bf16.xpose.msra.mxu0 0
        %614 = vmatpush.bf16.xpose.msra.mxu0 0
        %615 = vmatpush.bf16.xpose.msra.mxu0 0
        %616 = vmatpush.bf16.xpose.msra.mxu0 0
        %617 = vmatpush.bf16.xpose.msra.mxu0 0
        %618 = vmatpush.bf16.xpose.msra.mxu0 0
        %619 = vmatpush.bf16.xpose.msra.mxu0 0
        %620 = vmatpush.bf16.xpose.msra.mxu0 %v611
        %621 = vmatmul.bf16.gmra.mxu0 %v608
        %v622 = vpop.f32.mrf.mxu0
        %v623 = vadd.f32 %v345, %v622
        %v624 = vpop.f32.mrf.mxu0
        %625 = vdwg.mxu0
        %v626 = vsel %vm343, -1e+09, %v623
        %v627 = vld [vmem:[#allocation2] sm:$0xff]
        %v628 = vsel %vm369, %v626, -inf
        %629 = vmax.xlane.f32.xlu0 %v628
        %v630 = vpop.xlane.xlu0 %629
        %v631 = vmax.f32 %v627, %v630
        %v632 = vsub.f32 %v627, %v631
        %v633 = vmul.f32 %v632, 1.442695
        %v634 = vpow.pop %v633
        %636 = vset.pattern.permute.xlu0 3
        %637 = vperm.xlu0 %636, %v631
        %v638 = vpop.permute.xlu0 %637
        %v640 = vsub.f32 %v626, %v638
        %v641 = vmul.f32 %v640, 1.442695
        %v642 = vpow.pop %v641
        %v643 = vld [vmem:[#allocation3] sm:$0xff]
        %v644 = vmul.f32 %v634, %v643
        %v645 = vsel %vm369, %v642, 0.0
        %646 = vadd.xlane.f32.xlu0 %v645
        %v647 = vpop.xlane.xlu0 %646
        %v648 = vadd.f32 %v644, %v647
        %vm649 = vcmask 31768
        %650 = vst.msk [vmem:[#allocation3] sm:$0xff] %vm649, %v648
        %v651 = vld [vmem:[#allocation4] sm:$0xff]
        %653 = vset.pattern.permute.xlu0 3
        %654 = vperm.xlu0 %653, %v634
        %v655 = vpop.permute.xlu0 %654
        %v657 = vmul.f32 %v655, %v651
        %v658 = vpack.c.bf16 %v642, %v642
        %659 = vrot.lane.b32.xlu0 %v488, 32
        %v660 = vpop.permute.xlu0 %659
        %v662 = vsel %vm369, %v658, 0
        %v665 = vsel %vm404, %v660, 0
        %667 = vmatpush.bf16.msra.mxu0 0
        %668 = vmatpush.bf16.msra.mxu0 0
        %669 = vmatpush.bf16.msra.mxu0 0
        %670 = vmatpush.bf16.msra.mxu0 0
        %671 = vmatpush.bf16.msra.mxu0 0
        %672 = vmatpush.bf16.msra.mxu0 0
        %673 = vmatpush.bf16.msra.mxu0 0
        %674 = vmatpush.bf16.msra.mxu0 %v665
        %675 = vmatmul.bf16.gmra.mxu0 %v662
        %v676 = vpop.f32.mrf.mxu0
        %v677 = vadd.f32 0.0, %v676
        %v678 = vpop.f32.mrf.mxu0
        %679 = vdwg.mxu0
        %681 = vrot.lane.b32.xlu0 %v677, 96
        %v682 = vpop.permute.xlu0 %681
        %v684 = vadd.f32 %v657, %v682
        %vm685 = vcmask 1048320
        %686 = vst.msk [vmem:[#allocation4] sm:$0xff] %vm685, %v684
        %687 = vst.msk [vmem:[#allocation2] sm:$0xff] %vm649, %v631
      $region44: #{transformer_forward.34} parent=35 // pred_fallthru
        _
      %p688 = scmp.le.s32.totalorder %s325, %s314
      %p689 = pnand %p324, %p688
      %p690 = pneg %p689
      // Predicated region
      $region45: #{transformer_forward.34} parent=35 // pred_check
        _
      $region46: #{transformer_forward.34} parent=35 // pred_check_branch
        %692 = sbr.rel (%p689) target = $region48
      $region47: #{transformer_forward.34} parent=35 // pred_region
        %v693 = vld [vmem:[%s284] sm:$0xf]
        %v694 = vld [vmem:[%s291] sm:$0xf]
        %v695 = vld [vmem:[%s298] sm:$0xf]
        %v696 = vld [vmem:[%s304] sm:$0x1]
        %v698 = vperm.slane %v696, 0
        %vm700 = vcmask 261120
        %v702 = vsel %vm700, %v693, 0
        %v705 = vsel %vm700, %v694, 0
        %707 = vmatpush.bf16.xpose.msra.mxu0 0
        %708 = vmatpush.bf16.xpose.msra.mxu0 0
        %709 = vmatpush.bf16.xpose.msra.mxu0 0
        %710 = vmatpush.bf16.xpose.msra.mxu0 0
        %711 = vmatpush.bf16.xpose.msra.mxu0 0
        %712 = vmatpush.bf16.xpose.msra.mxu0 0
        %713 = vmatpush.bf16.xpose.msra.mxu0 0
        %714 = vmatpush.bf16.xpose.msra.mxu0 %v705
        %715 = vmatmul.bf16.gmra.mxu0 %v702
        %v716 = vpop.f32.mrf.mxu0
        %v717 = vadd.f32 %v698, %v716
        %v718 = vpop.f32.mrf.mxu0
        %719 = vdwg.mxu0
        %v720 = vld [vmem:[#allocation2] sm:$0xff]
        %vm721 = vcmask 64512
        %v722 = vsel %vm721, %v717, -inf
        %723 = vmax.xlane.f32.xlu0 %v722
        %v724 = vpop.xlane.xlu0 %723
        %v725 = vmax.f32 %v720, %v724
        %v726 = vsub.f32 %v720, %v725
        %v727 = vmul.f32 %v726, 1.442695
        %v728 = vpow.pop %v727
        %730 = vset.pattern.permute.xlu0 0
        %731 = vperm.xlu0 %730, %v725
        %v732 = vpop.permute.xlu0 %731
        %v734 = vsub.f32 %v717, %v732
        %v735 = vmul.f32 %v734, 1.442695
        %v736 = vpow.pop %v735
        %v737 = vld [vmem:[#allocation3] sm:$0xff]
        %v738 = vmul.f32 %v728, %v737
        %v739 = vsel %vm721, %v736, 0.0
        %740 = vadd.xlane.f32.xlu0 %v739
        %v741 = vpop.xlane.xlu0 %740
        %v742 = vadd.f32 %v738, %v741
        %vm743 = vcmask 7168
        %744 = vst.msk [vmem:[#allocation3] sm:$0xff] %vm743, %v742
        %v745 = vld [vmem:[#allocation4] sm:$0xff]
        %747 = vset.pattern.permute.xlu0 0
        %748 = vperm.xlu0 %747, %v728
        %v749 = vpop.permute.xlu0 %748
        %v751 = vmul.f32 %v749, %v745
        %v752 = vpack.c.bf16 %v736, %v736
        %v754 = vsel %vm721, %v752, 0
        %vm756 = vcmask 1043456
        %v758 = vsel %vm756, %v695, 0
        %760 = vmatpush.bf16.msra.mxu0 0
        %761 = vmatpush.bf16.msra.mxu0 0
        %762 = vmatpush.bf16.msra.mxu0 0
        %763 = vmatpush.bf16.msra.mxu0 0
        %764 = vmatpush.bf16.msra.mxu0 0
        %765 = vmatpush.bf16.msra.mxu0 0
        %766 = vmatpush.bf16.msra.mxu0 0
        %767 = vmatpush.bf16.msra.mxu0 %v758
        %768 = vmatmul.bf16.gmra.mxu0 %v754
        %v769 = vpop.f32.mrf.mxu0
        %v770 = vadd.f32 0.0, %v769
        %v771 = vpop.f32.mrf.mxu0
        %772 = vdwg.mxu0
        %v773 = vadd.f32 %v751, %v770
        %774 = vst.msk [vmem:[#allocation4] sm:$0xff] %vm700, %v773
        %775 = vst.msk [vmem:[#allocation2] sm:$0xff] %vm743, %v725
        %v777 = vunpack.c.l.b16 %v693
        %v778 = vpack.c.b16 %v777, %v777
        %779 = vrot.lane.b32.xlu0 %v778, 96
        %v780 = vpop.permute.xlu0 %779
        %v782 = vunpack.c.l.b16 %v694
        %v783 = vpack.c.b16 %v782, %v782
        %784 = vrot.lane.b32.xlu0 %v783, 96
        %v785 = vpop.permute.xlu0 %784
        %v787 = vsel %vm700, %v780, 0
        %v790 = vsel %vm700, %v785, 0
        %792 = vmatpush.bf16.xpose.msra.mxu0 0
        %793 = vmatpush.bf16.xpose.msra.mxu0 0
        %794 = vmatpush.bf16.xpose.msra.mxu0 0
        %795 = vmatpush.bf16.xpose.msra.mxu0 0
        %796 = vmatpush.bf16.xpose.msra.mxu0 0
        %797 = vmatpush.bf16.xpose.msra.mxu0 0
        %798 = vmatpush.bf16.xpose.msra.mxu0 0
        %799 = vmatpush.bf16.xpose.msra.mxu0 %v790
        %800 = vmatmul.bf16.gmra.mxu0 %v787
        %v801 = vpop.f32.mrf.mxu0
        %v802 = vadd.f32 %v698, %v801
        %v803 = vpop.f32.mrf.mxu0
        %804 = vdwg.mxu0
        %v805 = vld [vmem:[#allocation2] sm:$0xff]
        %v806 = vsel %vm721, %v802, -inf
        %807 = vmax.xlane.f32.xlu0 %v806
        %v808 = vpop.xlane.xlu0 %807
        %v809 = vmax.f32 %v805, %v808
        %v810 = vsub.f32 %v805, %v809
        %v811 = vmul.f32 %v810, 1.442695
        %v812 = vpow.pop %v811
        %814 = vset.pattern.permute.xlu0 1
        %815 = vperm.xlu0 %814, %v809
        %v816 = vpop.permute.xlu0 %815
        %v818 = vsub.f32 %v802, %v816
        %v819 = vmul.f32 %v818, 1.442695
        %v820 = vpow.pop %v819
        %v821 = vld [vmem:[#allocation3] sm:$0xff]
        %v822 = vmul.f32 %v812, %v821
        %v823 = vsel %vm721, %v820, 0.0
        %824 = vadd.xlane.f32.xlu0 %v823
        %v825 = vpop.xlane.xlu0 %824
        %v826 = vadd.f32 %v822, %v825
        %vm827 = vcmask 15368
        %828 = vst.msk [vmem:[#allocation3] sm:$0xff] %vm827, %v826
        %v829 = vld [vmem:[#allocation4] sm:$0xff]
        %831 = vset.pattern.permute.xlu0 1
        %832 = vperm.xlu0 %831, %v812
        %v833 = vpop.permute.xlu0 %832
        %v835 = vmul.f32 %v833, %v829
        %v836 = vpack.c.bf16 %v820, %v820
        %v838 = vunpack.c.l.b16 %v695
        %v839 = vpack.c.b16 %v838, %v838
        %840 = vrot.lane.b32.xlu0 %v839, 96
        %v841 = vpop.permute.xlu0 %840
        %v843 = vsel %vm721, %v836, 0
        %v846 = vsel %vm756, %v841, 0
        %848 = vmatpush.bf16.msra.mxu0 0
        %849 = vmatpush.bf16.msra.mxu0 0
        %850 = vmatpush.bf16.msra.mxu0 0
        %851 = vmatpush.bf16.msra.mxu0 0
        %852 = vmatpush.bf16.msra.mxu0 0
        %853 = vmatpush.bf16.msra.mxu0 0
        %854 = vmatpush.bf16.msra.mxu0 0
        %855 = vmatpush.bf16.msra.mxu0 %v846
        %856 = vmatmul.bf16.gmra.mxu0 %v843
        %v857 = vpop.f32.mrf.mxu0
        %v858 = vadd.f32 0.0, %v857
        %v859 = vpop.f32.mrf.mxu0
        %860 = vdwg.mxu0
        %862 = vrot.lane.b32.xlu0 %v858, 32
        %v863 = vpop.permute.xlu0 %862
        %v865 = vadd.f32 %v835, %v863
        %vm866 = vcmask 523520
        %867 = vst.msk [vmem:[#allocation4] sm:$0xff] %vm866, %v865
        %868 = vst.msk [vmem:[#allocation2] sm:$0xff] %vm827, %v809
        %869 = vrot.lane.b32.xlu0 %v778, 64
        %v870 = vpop.permute.xlu0 %869
        %871 = vrot.lane.b32.xlu0 %v783, 64
        %v872 = vpop.permute.xlu0 %871
        %v874 = vsel %vm700, %v870, 0
        %v877 = vsel %vm700, %v872, 0
        %879 = vmatpush.bf16.xpose.msra.mxu0 0
        %880 = vmatpush.bf16.xpose.msra.mxu0 0
        %881 = vmatpush.bf16.xpose.msra.mxu0 0
        %882 = vmatpush.bf16.xpose.msra.mxu0 0
        %883 = vmatpush.bf16.xpose.msra.mxu0 0
        %884 = vmatpush.bf16.xpose.msra.mxu0 0
        %885 = vmatpush.bf16.xpose.msra.mxu0 0
        %886 = vmatpush.bf16.xpose.msra.mxu0 %v877
        %887 = vmatmul.bf16.gmra.mxu0 %v874
        %v888 = vpop.f32.mrf.mxu0
        %v889 = vadd.f32 %v698, %v888
        %v890 = vpop.f32.mrf.mxu0
        %891 = vdwg.mxu0
        %v892 = vld [vmem:[#allocation2] sm:$0xff]
        %v893 = vsel %vm721, %v889, -inf
        %894 = vmax.xlane.f32.xlu0 %v893
        %v895 = vpop.xlane.xlu0 %894
        %v896 = vmax.f32 %v892, %v895
        %v897 = vsub.f32 %v892, %v896
        %v898 = vmul.f32 %v897, 1.442695
        %v899 = vpow.pop %v898
        %901 = vset.pattern.permute.xlu0 2
        %902 = vperm.xlu0 %901, %v896
        %v903 = vpop.permute.xlu0 %902
        %v905 = vsub.f32 %v889, %v903
        %v906 = vmul.f32 %v905, 1.442695
        %v907 = vpow.pop %v906
        %v908 = vld [vmem:[#allocation3] sm:$0xff]
        %v909 = vmul.f32 %v899, %v908
        %v910 = vsel %vm721, %v907, 0.0
        %911 = vadd.xlane.f32.xlu0 %v910
        %v912 = vpop.xlane.xlu0 %911
        %v913 = vadd.f32 %v909, %v912
        %vm914 = vcmask 23568
        %915 = vst.msk [vmem:[#allocation3] sm:$0xff] %vm914, %v913
        %v916 = vld [vmem:[#allocation4] sm:$0xff]
        %918 = vset.pattern.permute.xlu0 2
        %919 = vperm.xlu0 %918, %v899
        %v920 = vpop.permute.xlu0 %919
        %v922 = vmul.f32 %v920, %v916
        %v923 = vpack.c.bf16 %v907, %v907
        %924 = vrot.lane.b32.xlu0 %v839, 64
        %v925 = vpop.permute.xlu0 %924
        %v927 = vsel %vm721, %v923, 0
        %v930 = vsel %vm756, %v925, 0
        %932 = vmatpush.bf16.msra.mxu0 0
        %933 = vmatpush.bf16.msra.mxu0 0
        %934 = vmatpush.bf16.msra.mxu0 0
        %935 = vmatpush.bf16.msra.mxu0 0
        %936 = vmatpush.bf16.msra.mxu0 0
        %937 = vmatpush.bf16.msra.mxu0 0
        %938 = vmatpush.bf16.msra.mxu0 0
        %939 = vmatpush.bf16.msra.mxu0 %v930
        %940 = vmatmul.bf16.gmra.mxu0 %v927
        %v941 = vpop.f32.mrf.mxu0
        %v942 = vadd.f32 0.0, %v941
        %v943 = vpop.f32.mrf.mxu0
        %944 = vdwg.mxu0
        %946 = vrot.lane.b32.xlu0 %v942, 64
        %v947 = vpop.permute.xlu0 %946
        %v949 = vadd.f32 %v922, %v947
        %vm950 = vcmask 785920
        %951 = vst.msk [vmem:[#allocation4] sm:$0xff] %vm950, %v949
        %952 = vst.msk [vmem:[#allocation2] sm:$0xff] %vm914, %v896
        %953 = vrot.lane.b32.xlu0 %v778, 32
        %v954 = vpop.permute.xlu0 %953
        %955 = vrot.lane.b32.xlu0 %v783, 32
        %v956 = vpop.permute.xlu0 %955
        %v958 = vsel %vm700, %v954, 0
        %v961 = vsel %vm700, %v956, 0
        %963 = vmatpush.bf16.xpose.msra.mxu0 0
        %964 = vmatpush.bf16.xpose.msra.mxu0 0
        %965 = vmatpush.bf16.xpose.msra.mxu0 0
        %966 = vmatpush.bf16.xpose.msra.mxu0 0
        %967 = vmatpush.bf16.xpose.msra.mxu0 0
        %968 = vmatpush.bf16.xpose.msra.mxu0 0
        %969 = vmatpush.bf16.xpose.msra.mxu0 0
        %970 = vmatpush.bf16.xpose.msra.mxu0 %v961
        %971 = vmatmul.bf16.gmra.mxu0 %v958
        %v972 = vpop.f32.mrf.mxu0
        %v973 = vadd.f32 %v698, %v972
        %v974 = vpop.f32.mrf.mxu0
        %975 = vdwg.mxu0
        %v976 = vld [vmem:[#allocation2] sm:$0xff]
        %v977 = vsel %vm721, %v973, -inf
        %978 = vmax.xlane.f32.xlu0 %v977
        %v979 = vpop.xlane.xlu0 %978
        %v980 = vmax.f32 %v976, %v979
        %v981 = vsub.f32 %v976, %v980
        %v982 = vmul.f32 %v981, 1.442695
        %v983 = vpow.pop %v982
        %985 = vset.pattern.permute.xlu0 3
        %986 = vperm.xlu0 %985, %v980
        %v987 = vpop.permute.xlu0 %986
        %v989 = vsub.f32 %v973, %v987
        %v990 = vmul.f32 %v989, 1.442695
        %v991 = vpow.pop %v990
        %v992 = vld [vmem:[#allocation3] sm:$0xff]
        %v993 = vmul.f32 %v983, %v992
        %v994 = vsel %vm721, %v991, 0.0
        %995 = vadd.xlane.f32.xlu0 %v994
        %v996 = vpop.xlane.xlu0 %995
        %v997 = vadd.f32 %v993, %v996
        %vm998 = vcmask 31768
        %999 = vst.msk [vmem:[#allocation3] sm:$0xff] %vm998, %v997
        %v1000 = vld [vmem:[#allocation4] sm:$0xff]
        %1002 = vset.pattern.permute.xlu0 3
        %1003 = vperm.xlu0 %1002, %v983
        %v1004 = vpop.permute.xlu0 %1003
        %v1006 = vmul.f32 %v1004, %v1000
        %v1007 = vpack.c.bf16 %v991, %v991
        %1008 = vrot.lane.b32.xlu0 %v839, 32
        %v1009 = vpop.permute.xlu0 %1008
        %v1011 = vsel %vm721, %v1007, 0
        %v1014 = vsel %vm756, %v1009, 0
        %1016 = vmatpush.bf16.msra.mxu0 0
        %1017 = vmatpush.bf16.msra.mxu0 0
        %1018 = vmatpush.bf16.msra.mxu0 0
        %1019 = vmatpush.bf16.msra.mxu0 0
        %1020 = vmatpush.bf16.msra.mxu0 0
        %1021 = vmatpush.bf16.msra.mxu0 0
        %1022 = vmatpush.bf16.msra.mxu0 0
        %1023 = vmatpush.bf16.msra.mxu0 %v1014
        %1024 = vmatmul.bf16.gmra.mxu0 %v1011
        %v1025 = vpop.f32.mrf.mxu0
        %v1026 = vadd.f32 0.0, %v1025
        %v1027 = vpop.f32.mrf.mxu0
        %1028 = vdwg.mxu0
        %1030 = vrot.lane.b32.xlu0 %v1026, 96
        %v1031 = vpop.permute.xlu0 %1030
        %v1033 = vadd.f32 %v1006, %v1031
        %vm1034 = vcmask 1048320
        %1035 = vst.msk [vmem:[#allocation4] sm:$0xff] %vm1034, %v1033
        %1036 = vst.msk [vmem:[#allocation2] sm:$0xff] %vm998, %v980
      $region48: #{transformer_forward.34} parent=35 // pred_fallthru
        _
      // Predicated region
      $region49: #{transformer_forward.34} parent=35 // pred_check
        %p1037 = pneg %p315
      $region50: #{transformer_forward.34} parent=35 // pred_check_branch
        %1039 = sbr.rel (%p1037) target = $region52
      $region51: #{transformer_forward.34} parent=35 // pred_region
        %v1040 = vld [vmem:[#allocation2] sm:$0xff]
        %vm1041 = vcmp.gt.f32.partialorder %v1040, -5e+08
        %v1042 = vld [vmem:[#allocation3] sm:$0xff]
        %v1043 = vmax.f32 %v1042, 1e-30
        %v1044 = vrcp.pop %v1043
        %v1045 = vmul.f32 %v1043, %v1044
        %v1046 = vsub.f32 1.0, %v1045
        %v1047 = vmul.f32 %v1044, %v1046
        %v1048 = vadd.f32 %v1044, %v1047
        %vm1049 = vweird.f32 %v1043
        %vm1050 = vweird.f32 %v1044
        %vm1051 = vmor %vm1049, %vm1050
        %v1052 = vsel %vm1051, %v1044, %v1048
        %v1053 = vand.u32 2147483647, %v1043
        %vm1054 = vcmp.eq.f32.partialorder %v1053, 8.507059e+37
        %v1055 = vand.u32 %v1043, 2147483648
        %v1056 = vor.u32 1.1754944e-38, %v1055
        %v1057 = vsel %vm1054, %v1056, %v1052
        %v1058 = vmul.f32 1.0, %v1057
        %v1059 = vsel %vm1041, %v1058, 0.0
        %v1060 = vld [vmem:[#allocation4] sm:$0xff]
        %1062 = vset.pattern.permute.xlu0 0
        %1063 = vperm.xlu0 %1062, %v1059
        %v1064 = vpop.permute.xlu0 %1063
        %v1066 = vmul.f32 %v1060, %v1064
        %vm1067 = vcmask 261120
        %1068 = vst.msk [vmem:[#allocation4] sm:$0xff] %vm1067, %v1066
        %v1069 = vld [vmem:[#allocation2] sm:$0xff]
        %vm1070 = vcmp.gt.f32.partialorder %v1069, -5e+08
        %v1071 = vld [vmem:[#allocation3] sm:$0xff]
        %v1072 = vmax.f32 %v1071, 1e-30
        %v1073 = vrcp.pop %v1072
        %v1074 = vmul.f32 %v1072, %v1073
        %v1075 = vsub.f32 1.0, %v1074
        %v1076 = vmul.f32 %v1073, %v1075
        %v1077 = vadd.f32 %v1073, %v1076
        %vm1078 = vweird.f32 %v1072
        %vm1079 = vweird.f32 %v1073
        %vm1080 = vmor %vm1078, %vm1079
        %v1081 = vsel %vm1080, %v1073, %v1077
        %v1082 = vand.u32 2147483647, %v1072
        %vm1083 = vcmp.eq.f32.partialorder %v1082, 8.507059e+37
        %v1084 = vand.u32 %v1072, 2147483648
        %v1085 = vor.u32 1.1754944e-38, %v1084
        %v1086 = vsel %vm1083, %v1085, %v1081
        %v1087 = vmul.f32 1.0, %v1086
        %v1088 = vsel %vm1070, %v1087, 0.0
        %v1089 = vld [vmem:[#allocation4] sm:$0xff]
        %1091 = vset.pattern.permute.xlu0 1
        %1092 = vperm.xlu0 %1091, %v1088
        %v1093 = vpop.permute.xlu0 %1092
        %v1095 = vmul.f32 %v1089, %v1093
        %vm1096 = vcmask 523520
        %1097 = vst.msk [vmem:[#allocation4] sm:$0xff] %vm1096, %v1095
        %v1098 = vld [vmem:[#allocation2] sm:$0xff]
        %vm1099 = vcmp.gt.f32.partialorder %v1098, -5e+08
        %v1100 = vld [vmem:[#allocation3] sm:$0xff]
        %v1101 = vmax.f32 %v1100, 1e-30
        %v1102 = vrcp.pop %v1101
        %v1103 = vmul.f32 %v1101, %v1102
        %v1104 = vsub.f32 1.0, %v1103
        %v1105 = vmul.f32 %v1102, %v1104
        %v1106 = vadd.f32 %v1102, %v1105
        %vm1107 = vweird.f32 %v1101
        %vm1108 = vweird.f32 %v1102
        %vm1109 = vmor %vm1107, %vm1108
        %v1110 = vsel %vm1109, %v1102, %v1106
        %v1111 = vand.u32 2147483647, %v1101
        %vm1112 = vcmp.eq.f32.partialorder %v1111, 8.507059e+37
        %v1113 = vand.u32 %v1101, 2147483648
        %v1114 = vor.u32 1.1754944e-38, %v1113
        %v1115 = vsel %vm1112, %v1114, %v1110
        %v1116 = vmul.f32 1.0, %v1115
        %v1117 = vsel %vm1099, %v1116, 0.0
        %v1118 = vld [vmem:[#allocation4] sm:$0xff]
        %1120 = vset.pattern.permute.xlu0 2
        %1121 = vperm.xlu0 %1120, %v1117
        %v1122 = vpop.permute.xlu0 %1121
        %v1124 = vmul.f32 %v1118, %v1122
        %vm1125 = vcmask 785920
        %1126 = vst.msk [vmem:[#allocation4] sm:$0xff] %vm1125, %v1124
        %v1127 = vld [vmem:[#allocation2] sm:$0xff]
        %vm1128 = vcmp.gt.f32.partialorder %v1127, -5e+08
        %v1129 = vld [vmem:[#allocation3] sm:$0xff]
        %v1130 = vmax.f32 %v1129, 1e-30
        %v1131 = vrcp.pop %v1130
        %v1132 = vmul.f32 %v1130, %v1131
        %v1133 = vsub.f32 1.0, %v1132
        %v1134 = vmul.f32 %v1131, %v1133
        %v1135 = vadd.f32 %v1131, %v1134
        %vm1136 = vweird.f32 %v1130
        %vm1137 = vweird.f32 %v1131
        %vm1138 = vmor %vm1136, %vm1137
        %v1139 = vsel %vm1138, %v1131, %v1135
        %v1140 = vand.u32 2147483647, %v1130
        %vm1141 = vcmp.eq.f32.partialorder %v1140, 8.507059e+37
        %v1142 = vand.u32 %v1130, 2147483648
        %v1143 = vor.u32 1.1754944e-38, %v1142
        %v1144 = vsel %vm1141, %v1143, %v1139
        %v1145 = vmul.f32 1.0, %v1144
        %v1146 = vsel %vm1128, %v1145, 0.0
        %v1147 = vld [vmem:[#allocation4] sm:$0xff]
        %1149 = vset.pattern.permute.xlu0 3
        %1150 = vperm.xlu0 %1149, %v1146
        %v1151 = vpop.permute.xlu0 %1150
        %v1153 = vmul.f32 %v1147, %v1151
        %vm1154 = vcmask 1048320
        %1155 = vst.msk [vmem:[#allocation4] sm:$0xff] %vm1154, %v1153
        %v1156 = vld [vmem:[#allocation4] sm:$0xff]
        %v1157 = vpack.c.bf16 %v1156, %v1156
        %1158 = vst [vmem:[%s311] sm:$0xf] %v1157
      $region52: #{transformer_forward.34} parent=35 // pred_fallthru
        _
      %p1159 = scmp.lt.s32.totalorder %s20, 1
      %s1160 = scalar_select %p1159, %s20, 1
      %p1161 = scmp.lt.s32.totalorder %s21, 0
      %s1162 = scalar_select %p1161, %s21, 0
      %s1163 = sadd.s32 %s1162, %s1160
      %s1164 = smul.addr %s1163, 4
      %s1165 = scalar_lea.vmem %s4, %s1164
      // Predicated region
      $region53: #{transformer_forward.34} parent=35 // pred_check
        %p1166 = pneg %p166
      $region54: #{transformer_forward.34} parent=35 // pred_check_branch
        %1168 = sbr.rel (%p1166) target = $region56
      $region55: #{transformer_forward.34} parent=35 // pred_region
        _
      $region56: #{transformer_forward.34} parent=35 // pred_fallthru
        _
    $region36: #{transformer_forward.34} parent=5 // pred_fallthru
      _
    %p1169 = scmp.le.s32.totalorder 2, %s10
    // Predicated region
    $region57: #{transformer_forward.34} parent=5 // pred_check
      %p1170 = pneg %p1169
    $region58: #{transformer_forward.34} parent=5 // pred_check_branch
      %1172 = sbr.rel (%p1170) target = $region60
    $region59: #{transformer_forward.34} parent=5 // pred_region
      %s1173 = ssub.s32 %s10, 2
      // Predicated region
      $region61: #{transformer_forward.34} parent=59 // pred_check
        %p1174 = pneg %p172
      $region62: #{transformer_forward.34} parent=59 // pred_check_branch
        %1176 = sbr.rel (%p1174) target = $region64
      $region63: #{transformer_forward.34} parent=59 // pred_region
        %p1177 = scmp.lt.s32.totalorder %s23, 1
        %s1178 = scalar_select %p1177, %s23, 1
        %p1179 = scmp.lt.s32.totalorder %s24, 0
        %s1180 = scalar_select %p1179, %s24, 0
        %s1181 = sadd.s32 %s1180, %s1178
        %s1182 = smul.addr %s1181, 4
        %s1183 = scalar_lea.vmem %s4, %s1182
      $region64: #{transformer_forward.34} parent=59 // pred_fallthru
        _
    $region60: #{transformer_forward.34} parent=5 // pred_fallthru
      _
  $region6: #{transformer_forward.34} parent=0 // loop_footer
    %s14 = sadd.s32 1, %s10
  $region7: #{transformer_forward.34} parent=0 // loop_footer_branch
    %9 = sbr.rel target = $region3
  $region8: #{transformer_forward.34} parent=0 // loop_exit
    _

// kernel: transformer_forward.40
$region0: #{transformer_forward.40}
  #allocation0 [shape = 'u32[]', space=smem, size = 0x4, offset = 0x4, fixed_abs, tag = 'smem constant byte address 0x4 - core index']
  #allocation1 [shape = 'u32[72,128]{1,0:T(1,128)}', space=vmem, size = 0x9000, scoped, tag = 'internal scratch']
  #allocation2 [shape = 'f32[16,128]{1,0:T(8,128)}', space=vmem, size = 0x2000, scoped, tag = 'scratch operand']
  %s0 = inlined_call_operand.vmem [shape: bf16[16,128], index: 0, kind: input, shape index: {}]
  %s1 = inlined_call_operand.vmem [shape: bf16[128,256], index: 1, kind: input, shape index: {}]
  %s2 = inlined_call_operand.vmem [shape: f32[1,256], index: 2, kind: input, shape index: {}]
  %s3 = inlined_call_operand.vmem [shape: bf16[256,128], index: 3, kind: input, shape index: {}]
  %s4 = inlined_call_operand.hbm [shape: f32[1,128], index: 4, kind: input, shape index: {}]
  %s5 = inlined_call_operand.hbm [shape: f32[1,128], index: 5, kind: input, shape index: {}]
  %s6 = inlined_call_operand.hbm [shape: f32[1,128], index: 6, kind: input, shape index: {}]
  %s7 = inlined_call_operand.vmem [shape: bf16[16,128], index: 7, kind: output, shape index: {}]
  %s8 = sld [smem:[#allocation0]]
  $region58: #{transformer_forward.40} parent=0
    _
  %s10 = ssub.s32 1, %s8
  %s11 = scalar_select 0, %s10, %s8
  $region1: #{transformer_forward.40} parent=0
    #allocation3 [shape = 'u8[512]{0}', space=vmem, size = 0x400, scoped, tag = 'input window, operand 4, single buffered']
    #allocation4 [shape = 's32[1]{0}', space=sflag, size = 0x4, scoped, tag = 'scoped memory for transformer_forward.40']
    #allocation5 [shape = 'u8[512]{0}', space=vmem, size = 0x400, scoped, tag = 'input window, operand 5, single buffered']
    #allocation6 [shape = 's32[1]{0}', space=sflag, size = 0x4, scoped, tag = 'scoped memory for transformer_forward.40']
    #allocation7 [shape = 'u8[512]{0}', space=vmem, size = 0x400, scoped, tag = 'input window, operand 6, single buffered']
    %12 = vsyncpa [#allocation4], 0
    %13 = vsyncpa [#allocation6], 0
    // Predicated region
    $region2: #{transformer_forward.40} parent=1 // pred_check
      _
    $region3: #{transformer_forward.40} parent=1 // pred_check_branch
      %15 = sbr.rel (0) target = $region5
    $region4: #{transformer_forward.40} parent=1 // pred_region
      _
    $region5: #{transformer_forward.40} parent=1 // pred_fallthru
      _
    // Predicated region
    $region6: #{transformer_forward.40} parent=1 // pred_check
      _
    $region7: #{transformer_forward.40} parent=1 // pred_check_branch
      %17 = sbr.rel (0) target = $region9
    $region8: #{transformer_forward.40} parent=1 // pred_region
      _
    $region9: #{transformer_forward.40} parent=1 // pred_fallthru
      _
    // Predicated region
    $region10: #{transformer_forward.40} parent=1 // pred_check
      _
    $region11: #{transformer_forward.40} parent=1 // pred_check_branch
      %19 = sbr.rel (0) target = $region13
    $region12: #{transformer_forward.40} parent=1 // pred_region
      _
    $region13: #{transformer_forward.40} parent=1 // pred_fallthru
      _
    // Predicated region
    $region14: #{transformer_forward.40} parent=1 // pred_check
      _
    $region15: #{transformer_forward.40} parent=1 // pred_check_branch
      %21 = sbr.rel (0) target = $region17
    $region16: #{transformer_forward.40} parent=1 // pred_region
      _
    $region17: #{transformer_forward.40} parent=1 // pred_fallthru
      _
    // Predicated region
    $region18: #{transformer_forward.40} parent=1 // pred_check
      _
    $region19: #{transformer_forward.40} parent=1 // pred_check_branch
      %23 = sbr.rel (0) target = $region21
    $region20: #{transformer_forward.40} parent=1 // pred_region
      %25 = vsyncadd [#allocation4], 0
      %s27 = sshll.u32 %s4, 4
      %s28 = int_to_ptr.hbm [resolvable:$true] %s27
      %s29 = sshll.u32 [#allocation3], 4
      %s30 = int_to_ptr.vmem [resolvable:$true] %s29
      %32 = dma.hbm_to_vmem [thread:$0]  %s28, 16, %s30, [#allocation4]
    $region21: #{transformer_forward.40} parent=1 // pred_fallthru
      _
    // Predicated region
    $region22: #{transformer_forward.40} parent=1 // pred_check
      _
    $region23: #{transformer_forward.40} parent=1 // pred_check_branch
      %34 = sbr.rel (0) target = $region25
    $region24: #{transformer_forward.40} parent=1 // pred_region
      %36 = vsyncadd [#allocation6], 0
      %s38 = sshll.u32 %s5, 4
      %s39 = int_to_ptr.hbm [resolvable:$true] %s38
      %s40 = sshll.u32 [#allocation5], 4
      %s41 = int_to_ptr.vmem [resolvable:$true] %s40
      %43 = dma.hbm_to_vmem [thread:$0]  %s39, 16, %s41, [#allocation6]
    $region25: #{transformer_forward.40} parent=1 // pred_fallthru
      _
    // Predicated region
    $region26: #{transformer_forward.40} parent=1 // pred_check
      _
    $region27: #{transformer_forward.40} parent=1 // pred_check_branch
      %45 = sbr.rel (0) target = $region29
    $region28: #{transformer_forward.40} parent=1 // pred_region
      %47 = vsyncadd [#allocation6], 0
      %s49 = sshll.u32 %s6, 4
      %s50 = int_to_ptr.hbm [resolvable:$true] %s49
      %s51 = sshll.u32 [#allocation7], 4
      %s52 = int_to_ptr.vmem [resolvable:$true] %s51
      %54 = dma.hbm_to_vmem [thread:$0]  %s50, 16, %s52, [#allocation6]
    $region29: #{transformer_forward.40} parent=1 // pred_fallthru
      _
    // Predicated region
    $region30: #{transformer_forward.40} parent=1 // pred_check
      _
    $region31: #{transformer_forward.40} parent=1 // pred_check_branch
      %56 = sbr.rel (0) target = $region33
    $region32: #{transformer_forward.40} parent=1 // pred_region
      %58 = dma.done [#allocation4], 16
    $region33: #{transformer_forward.40} parent=1 // pred_fallthru
      _
    // Predicated region
    $region34: #{transformer_forward.40} parent=1 // pred_check
      _
    $region35: #{transformer_forward.40} parent=1 // pred_check_branch
      %60 = sbr.rel (0) target = $region37
    $region36: #{transformer_forward.40} parent=1 // pred_region
      %62 = dma.done [#allocation6], 16
    $region37: #{transformer_forward.40} parent=1 // pred_fallthru
      _
    // Predicated region
    $region38: #{transformer_forward.40} parent=1 // pred_check
      _
    $region39: #{transformer_forward.40} parent=1 // pred_check_branch
      %64 = sbr.rel (0) target = $region41
    $region40: #{transformer_forward.40} parent=1 // pred_region
      %66 = dma.done [#allocation6], 16
    $region41: #{transformer_forward.40} parent=1 // pred_fallthru
      _
    %p67 = scmp.eq.s32.totalorder 0, 0
    // Predicated region
    $region42: #{transformer_forward.40} parent=1 // pred_check
      %p68 = pneg %p67
    $region43: #{transformer_forward.40} parent=1 // pred_check_branch
      %70 = sbr.rel (%p68) target = $region45
    $region44: #{transformer_forward.40} parent=1 // pred_region
      %71 = vst [vmem:[#allocation2] sm:$0xff] 0.0
      %72 = vst [vmem:[#allocation2 + $0x8] sm:$0xff] 0.0
    $region45: #{transformer_forward.40} parent=1 // pred_fallthru
      _
    %v73 = vld [vmem:[%s0] sm:$0xf]
    %v74 = vld [vmem:[%s0 + $0x4] sm:$0xf]
    %v75 = vld [vmem:[%s1] sm:$0xff]
    %v76 = vld [vmem:[%s1 + $0x8] sm:$0xff]
    %v77 = vld [vmem:[%s1 + $0x10] sm:$0xff]
    %v78 = vld [vmem:[%s1 + $0x18] sm:$0xff]
    %v79 = vld [vmem:[%s1 + $0x20] sm:$0xff]
    %v80 = vld [vmem:[%s1 + $0x28] sm:$0xff]
    %v81 = vld [vmem:[%s1 + $0x30] sm:$0xff]
    %v82 = vld [vmem:[%s1 + $0x38] sm:$0xff]
    %v83 = vld [vmem:[%s1 + $0x40] sm:$0xff]
    %v84 = vld [vmem:[%s1 + $0x48] sm:$0xff]
    %v85 = vld [vmem:[%s1 + $0x50] sm:$0xff]
    %v86 = vld [vmem:[%s1 + $0x58] sm:$0xff]
    %v87 = vld [vmem:[%s1 + $0x60] sm:$0xff]
    %v88 = vld [vmem:[%s1 + $0x68] sm:$0xff]
    %v89 = vld [vmem:[%s1 + $0x70] sm:$0xff]
    %v90 = vld [vmem:[%s1 + $0x78] sm:$0xff]
    %v91 = vld [vmem:[%s2] sm:$0x3]
    %v93 = vperm.slane %v91, 0
    %v94 = vperm.slane %v91, 1
    %v99 = vunpack.c.l.b16 %v73
    %v100 = vunpack.c.l.b16 %v74
    %v101 = vpack.c.b16 %v100, %v99
    %v119 = vunpack.c.l.b16 %v75
    %v120 = vunpack.c.h.b16 %v75
    %v121 = vunpack.c.l.b16 %v76
    %v122 = vunpack.c.h.b16 %v76
    %v123 = vunpack.c.l.b16 %v77
    %v124 = vunpack.c.h.b16 %v77
    %v125 = vunpack.c.l.b16 %v78
    %v126 = vunpack.c.h.b16 %v78
    %v127 = vunpack.c.l.b16 %v79
    %v128 = vunpack.c.h.b16 %v79
    %v129 = vunpack.c.l.b16 %v80
    %v130 = vunpack.c.h.b16 %v80
    %v131 = vunpack.c.l.b16 %v81
    %v132 = vunpack.c.h.b16 %v81
    %v133 = vunpack.c.l.b16 %v82
    %v134 = vunpack.c.h.b16 %v82
    %v135 = vunpack.c.l.b16 %v83
    %v136 = vunpack.c.h.b16 %v83
    %v137 = vunpack.c.l.b16 %v84
    %v138 = vunpack.c.h.b16 %v84
    %v139 = vunpack.c.l.b16 %v85
    %v140 = vunpack.c.h.b16 %v85
    %v141 = vunpack.c.l.b16 %v86
    %v142 = vunpack.c.h.b16 %v86
    %v143 = vunpack.c.l.b16 %v87
    %v144 = vunpack.c.h.b16 %v87
    %v145 = vunpack.c.l.b16 %v88
    %v146 = vunpack.c.h.b16 %v88
    %v147 = vunpack.c.l.b16 %v89
    %v148 = vunpack.c.h.b16 %v89
    %v149 = vunpack.c.l.b16 %v90
    %v150 = vunpack.c.h.b16 %v90
    %v151 = vpack.c.b16 %v121, %v119
    %v152 = vpack.c.b16 %v122, %v120
    %v153 = vpack.c.b16 %v125, %v123
    %v154 = vpack.c.b16 %v126, %v124
    %v155 = vpack.c.b16 %v129, %v127
    %v156 = vpack.c.b16 %v130, %v128
    %v157 = vpack.c.b16 %v133, %v131
    %v158 = vpack.c.b16 %v134, %v132
    %v159 = vpack.c.b16 %v137, %v135
    %v160 = vpack.c.b16 %v138, %v136
    %v161 = vpack.c.b16 %v141, %v139
    %v162 = vpack.c.b16 %v142, %v140
    %v163 = vpack.c.b16 %v145, %v143
    %v164 = vpack.c.b16 %v146, %v144
    %v165 = vpack.c.b16 %v149, %v147
    %v166 = vpack.c.b16 %v150, %v148
    %183 = vmatpush.bf16.msra.mxu0 %v165
    %184 = vmatpush.bf16.msra.mxu0 %v163
    %185 = vmatpush.bf16.msra.mxu0 %v161
    %186 = vmatpush.bf16.msra.mxu0 %v159
    %187 = vmatpush.bf16.msra.mxu0 %v157
    %188 = vmatpush.bf16.msra.mxu0 %v155
    %189 = vmatpush.bf16.msra.mxu0 %v153
    %190 = vmatpush.bf16.msra.mxu0 %v151
    %191 = vmatmul.bf16.gmra.mxu0 %v101
    %v192 = vpop.f32.mrf.mxu0
    %v193 = vadd.f32 %v93, %v192
    %v194 = vpop.f32.mrf.mxu0
    %v195 = vadd.f32 %v93, %v194
    %196 = vdwg.mxu0
    %197 = vmatpush.bf16.msra.mxu0 %v166
    %198 = vmatpush.bf16.msra.mxu0 %v164
    %199 = vmatpush.bf16.msra.mxu0 %v162
    %200 = vmatpush.bf16.msra.mxu0 %v160
    %201 = vmatpush.bf16.msra.mxu0 %v158
    %202 = vmatpush.bf16.msra.mxu0 %v156
    %203 = vmatpush.bf16.msra.mxu0 %v154
    %204 = vmatpush.bf16.msra.mxu0 %v152
    %205 = vmatmul.bf16.gmra.mxu0 %v101
    %v206 = vpop.f32.mrf.mxu0
    %v207 = vadd.f32 %v94, %v206
    %v208 = vpop.f32.mrf.mxu0
    %v209 = vadd.f32 %v94, %v208
    %210 = vdwg.mxu0
    %v211 = vmax.f32 %v193, 0.0
    %v212 = vmax.f32 %v207, 0.0
    %v213 = vmax.f32 %v195, 0.0
    %v214 = vmax.f32 %v209, 0.0
    %v215 = vld [vmem:[%s3] sm:$0xf]
    %v216 = vld [vmem:[%s3 + $0x4] sm:$0xf]
    %v217 = vld [vmem:[%s3 + $0x8] sm:$0xf]
    %v218 = vld [vmem:[%s3 + $0xc] sm:$0xf]
    %v219 = vld [vmem:[%s3 + $0x10] sm:$0xf]
    %v220 = vld [vmem:[%s3 + $0x14] sm:$0xf]
    %v221 = vld [vmem:[%s3 + $0x18] sm:$0xf]
    %v222 = vld [vmem:[%s3 + $0x1c] sm:$0xf]
    %v223 = vld [vmem:[%s3 + $0x20] sm:$0xf]
    %v224 = vld [vmem:[%s3 + $0x24] sm:$0xf]
    %v225 = vld [vmem:[%s3 + $0x28] sm:$0xf]
    %v226 = vld [vmem:[%s3 + $0x2c] sm:$0xf]
    %v227 = vld [vmem:[%s3 + $0x30] sm:$0xf]
    %v228 = vld [vmem:[%s3 + $0x34] sm:$0xf]
    %v229 = vld [vmem:[%s3 + $0x38] sm:$0xf]
    %v230 = vld [vmem:[%s3 + $0x3c] sm:$0xf]
    %v231 = vld [vmem:[%s3 + $0x40] sm:$0xf]
    %v232 = vld [vmem:[%s3 + $0x44] sm:$0xf]
    %v233 = vld [vmem:[%s3 + $0x48] sm:$0xf]
    %v234 = vld [vmem:[%s3 + $0x4c] sm:$0xf]
    %v235 = vld [vmem:[%s3 + $0x50] sm:$0xf]
    %v236 = vld [vmem:[%s3 + $0x54] sm:$0xf]
    %v237 = vld [vmem:[%s3 + $0x58] sm:$0xf]
    %v238 = vld [vmem:[%s3 + $0x5c] sm:$0xf]
    %v239 = vld [vmem:[%s3 + $0x60] sm:$0xf]
    %v240 = vld [vmem:[%s3 + $0x64] sm:$0xf]
    %v241 = vld [vmem:[%s3 + $0x68] sm:$0xf]
    %v242 = vld [vmem:[%s3 + $0x6c] sm:$0xf]
    %v243 = vld [vmem:[%s3 + $0x70] sm:$0xf]
    %v244 = vld [vmem:[%s3 + $0x74] sm:$0xf]
    %v245 = vld [vmem:[%s3 + $0x78] sm:$0xf]
    %v246 = vld [vmem:[%s3 + $0x7c] sm:$0xf]
    %v247 = vld [vmem:[#allocation2] sm:$0xff]
    %v248 = vld [vmem:[#allocation2 + $0x8] sm:$0xff]
    %v249 = vpack.c.bf16 %v213, %v211
    %v250 = vpack.c.bf16 %v214, %v212
    %v283 = vunpack.c.l.b16 %v215
    %v284 = vunpack.c.l.b16 %v216
    %v285 = vunpack.c.l.b16 %v217
    %v286 = vunpack.c.l.b16 %v218
    %v287 = vunpack.c.l.b16 %v219
    %v288 = vunpack.c.l.b16 %v220
    %v289 = vunpack.c.l.b16 %v221
    %v290 = vunpack.c.l.b16 %v222
    %v291 = vunpack.c.l.b16 %v223
    %v292 = vunpack.c.l.b16 %v224
    %v293 = vunpack.c.l.b16 %v225
    %v294 = vunpack.c.l.b16 %v226
    %v295 = vunpack.c.l.b16 %v227
    %v296 = vunpack.c.l.b16 %v228
    %v297 = vunpack.c.l.b16 %v229
    %v298 = vunpack.c.l.b16 %v230
    %v299 = vunpack.c.l.b16 %v231
    %v300 = vunpack.c.l.b16 %v232
    %v301 = vunpack.c.l.b16 %v233
    %v302 = vunpack.c.l.b16 %v234
    %v303 = vunpack.c.l.b16 %v235
    %v304 = vunpack.c.l.b16 %v236
    %v305 = vunpack.c.l.b16 %v237
    %v306 = vunpack.c.l.b16 %v238
    %v307 = vunpack.c.l.b16 %v239
    %v308 = vunpack.c.l.b16 %v240
    %v309 = vunpack.c.l.b16 %v241
    %v310 = vunpack.c.l.b16 %v242
    %v311 = vunpack.c.l.b16 %v243
    %v312 = vunpack.c.l.b16 %v244
    %v313 = vunpack.c.l.b16 %v245
    %v314 = vunpack.c.l.b16 %v246
    %v315 = vpack.c.b16 %v284, %v283
    %v316 = vpack.c.b16 %v286, %v285
    %v317 = vpack.c.b16 %v288, %v287
    %v318 = vpack.c.b16 %v290, %v289
    %v319 = vpack.c.b16 %v292, %v291
    %v320 = vpack.c.b16 %v294, %v293
    %v321 = vpack.c.b16 %v296, %v295
    %v322 = vpack.c.b16 %v298, %v297
    %v323 = vpack.c.b16 %v300, %v299
    %v324 = vpack.c.b16 %v302, %v301
    %v325 = vpack.c.b16 %v304, %v303
    %v326 = vpack.c.b16 %v306, %v305
    %v327 = vpack.c.b16 %v308, %v307
    %v328 = vpack.c.b16 %v310, %v309
    %v329 = vpack.c.b16 %v312, %v311
    %v330 = vpack.c.b16 %v314, %v313
    %347 = vmatpush.bf16.msra.mxu0 %v322
    %348 = vmatpush.bf16.msra.mxu0 %v321
    %349 = vmatpush.bf16.msra.mxu0 %v320
    %350 = vmatpush.bf16.msra.mxu0 %v319
    %351 = vmatpush.bf16.msra.mxu0 %v318
    %352 = vmatpush.bf16.msra.mxu0 %v317
    %353 = vmatpush.bf16.msra.mxu0 %v316
    %354 = vmatpush.bf16.msra.mxu0 %v315
    %355 = vmatmul.bf16.gmra.mxu0 %v249
    %v356 = vpop.f32.mrf.mxu0
    %v357 = vadd.f32 0.0, %v356
    %v358 = vpop.f32.mrf.mxu0
    %v359 = vadd.f32 0.0, %v358
    %360 = vdwg.mxu0
    %361 = vmatpush.bf16.msra.mxu0 %v330
    %362 = vmatpush.bf16.msra.mxu0 %v329
    %363 = vmatpush.bf16.msra.mxu0 %v328
    %364 = vmatpush.bf16.msra.mxu0 %v327
    %365 = vmatpush.bf16.msra.mxu0 %v326
    %366 = vmatpush.bf16.msra.mxu0 %v325
    %367 = vmatpush.bf16.msra.mxu0 %v324
    %368 = vmatpush.bf16.msra.mxu0 %v323
    %369 = vmatmul.bf16.gmra.mxu0 %v250
    %v370 = vpop.f32.mrf.mxu0
    %v371 = vadd.f32 %v357, %v370
    %v372 = vpop.f32.mrf.mxu0
    %v373 = vadd.f32 %v359, %v372
    %374 = vdwg.mxu0
    %v375 = vadd.f32 %v247, %v371
    %v376 = vadd.f32 %v248, %v373
    %377 = vst [vmem:[#allocation2] sm:$0xff] %v375
    %378 = vst [vmem:[#allocation2 + $0x8] sm:$0xff] %v376
    // Predicated region
    $region46: #{transformer_forward.40} parent=1 // pred_check
      %p379 = pneg %p67
    $region47: #{transformer_forward.40} parent=1 // pred_check_branch
      %381 = sbr.rel (%p379) target = $region49
    $region48: #{transformer_forward.40} parent=1 // pred_region
      %v382 = vld [vmem:[#allocation2] sm:$0xff]
      %v383 = vld [vmem:[#allocation2 + $0x8] sm:$0xff]
      %v384 = vld [vmem:[#allocation3] sm:$0x1]
      %v386 = vperm.slane %v384, 0
      %v388 = vadd.f32 %v382, %v386
      %v389 = vadd.f32 %v383, %v386
      %v390 = vld [vmem:[%s0] sm:$0xf]
      %v391 = vld [vmem:[%s0 + $0x4] sm:$0xf]
      %v392 = vunpack.c.l.bf16 %v390
      %v393 = vunpack.c.l.bf16 %v391
      %v394 = vadd.f32 %v388, %v392
      %v395 = vadd.f32 %v389, %v393
      %396 = vadd.xlane.f32.xlu0 %v394
      %v397 = vpop.xlane.xlu0 %396
      %398 = vadd.xlane.f32.xlu0 %v395
      %v399 = vpop.xlane.xlu0 %398
      %v400 = vrcp.pop 128.0
      %v401 = vmul.f32 128.0, %v400
      %v402 = vsub.f32 1.0, %v401
      %v403 = vmul.f32 %v400, %v402
      %v404 = vadd.f32 %v400, %v403
      %vm405 = vweird.f32 %v400
      %v406 = vsel %vm405, %v400, %v404
      %v407 = vmul.f32 %v397, %v406
      %v408 = vmul.f32 %v399, %v406
      %v409 = vsub.f32 %v394, %v407
      %v410 = vsub.f32 %v395, %v408
      %v411 = vmul.f32 %v409, %v409
      %v412 = vmul.f32 %v410, %v410
      %413 = vadd.xlane.f32.xlu0 %v411
      %v414 = vpop.xlane.xlu0 %413
      %415 = vadd.xlane.f32.xlu0 %v412
      %v416 = vpop.xlane.xlu0 %415
      %v417 = vmul.f32 %v414, %v406
      %v418 = vmul.f32 %v416, %v406
      %v419 = vadd.f32 %v417, 1e-06
      %v420 = vadd.f32 %v418, 1e-06
      %v421 = vrsqrt.pop %v419
      %v422 = vmul.f32 %v421, %v419
      %v423 = vmul.f32 %v422, %v421
      %v424 = vmul.f32 0.5, %v423
      %v425 = vsub.f32 1.5, %v424
      %v426 = vmul.f32 %v421, %v425
      %vm427 = vweird.f32 %v419
      %vm428 = vweird.f32 %v421
      %vm429 = vmor %vm427, %vm428
      %v430 = vsel %vm429, %v421, %v426
      %v431 = vrsqrt.pop %v420
      %v432 = vmul.f32 %v431, %v420
      %v433 = vmul.f32 %v432, %v431
      %v434 = vmul.f32 0.5, %v433
      %v435 = vsub.f32 1.5, %v434
      %v436 = vmul.f32 %v431, %v435
      %vm437 = vweird.f32 %v420
      %vm438 = vweird.f32 %v431
      %vm439 = vmor %vm437, %vm438
      %v440 = vsel %vm439, %v431, %v436
      %v441 = vmul.f32 %v409, %v430
      %v442 = vmul.f32 %v410, %v440
      %v443 = vld [vmem:[#allocation5] sm:$0x1]
      %v445 = vperm.slane %v443, 0
      %v447 = vmul.f32 %v441, %v445
      %v448 = vmul.f32 %v442, %v445
      %v449 = vld [vmem:[#allocation7] sm:$0x1]
      %v451 = vperm.slane %v449, 0
      %v453 = vadd.f32 %v447, %v451
      %v454 = vadd.f32 %v448, %v451
      %v455 = vpack.c.bf16 %v453, %v453
      %v456 = vpack.c.bf16 %v454, %v454
      %457 = vst [vmem:[%s7] sm:$0xf] %v455
      %458 = vst [vmem:[%s7 + $0x4] sm:$0xf] %v456
    $region49: #{transformer_forward.40} parent=1 // pred_fallthru
      _
    // Predicated region
    $region50: #{transformer_forward.40} parent=1 // pred_check
      _
    $region51: #{transformer_forward.40} parent=1 // pred_check_branch
      %460 = sbr.rel (0) target = $region53
    $region52: #{transformer_forward.40} parent=1 // pred_region
      _
    $region53: #{transformer_forward.40} parent=1 // pred_fallthru
      _
    // Predicated region
    $region54: #{transformer_forward.40} parent=1 // pred_check
      _
    $region55: #{transformer_forward.40} parent=1 // pred_check_branch
      %462 = sbr.rel (0) target = $region57
    $region56: #{transformer_forward.40} parent=1 // pred_region
      _
    $region57: #{transformer_forward.40} parent=1 // pred_fallthru
      _
    %463 = vsyncpa [#allocation4], 1
    %464 = vsyncpa [#allocation6], 1

// kernel: transformer_forward.38
$region0: #{transformer_forward.38}
  #allocation0 [shape = 'u32[]', space=smem, size = 0x4, offset = 0x4, fixed_abs, tag = 'smem constant byte address 0x4 - core index']
  #allocation1 [shape = 'u32[72,128]{1,0:T(1,128)}', space=vmem, size = 0x9000, scoped, tag = 'internal scratch']
  #allocation2 [shape = 'f32[8,4]{1,0:T(8,128)}', space=vmem, size = 0x1000, scoped, tag = 'scratch operand']
  #allocation3 [shape = 'f32[8,4]{1,0:T(8,128)}', space=vmem, size = 0x1000, scoped, tag = 'scratch operand']
  #allocation4 [shape = 'f32[8,128]{1,0:T(8,128)}', space=vmem, size = 0x1000, scoped, tag = 'scratch operand']
  %s0 = inlined_call_operand.vmem [shape: bf16[2,8,128], index: 0, kind: input, shape index: {}]
  %s1 = inlined_call_operand.vmem [shape: bf16[2,10,128], index: 1, kind: input, shape index: {}]
  %s2 = inlined_call_operand.vmem [shape: bf16[2,10,128], index: 2, kind: input, shape index: {}]
  %s3 = inlined_call_operand.vmem [shape: f32[2,1,10], index: 3, kind: input, shape index: {}]
  %s4 = inlined_call_operand.vmem [shape: bf16[2,8,128], index: 4, kind: output, shape index: {}]
  %s5 = sld [smem:[#allocation0]]
  $region57: #{transformer_forward.38} parent=0
    _
  %s7 = ssub.s32 1, %s5
  %s8 = scalar_select 0, %s7, %s5
  loop: start=0, step=1, limit=4
  $region2: #{transformer_forward.38} parent=0 // loop_pre_header
    _
  $region3: #{transformer_forward.38} parent=0 // loop_header
    %s10 = sphi 0, %s14
    %p11 = scmp.ge.s32.totalorder %s10, 4
    %s17 = sphi 0, %s36
    %s18 = sphi 0, %s32
    %s19 = sphi 0, %s28
    %s20 = sphi 0, %s17
    %s21 = sphi 0, %s18
    %s22 = sphi 0, %s19
    %s23 = sphi 0, %s20
    %s24 = sphi 0, %s21
    %s25 = sphi 0, %s22
    %s41 = sphi 0, %s43
    %s44 = sphi 0, %s41
    %s45 = sphi 0, %s44
    %s61 = sphi 0, %s45
    %s69 = sphi 0, %s71
    %s72 = sphi 0, %s69
    %s73 = sphi 0, %s72
    %s89 = sphi 0, %s73
    %s97 = sphi 0, %s99
    %s100 = sphi 0, %s97
    %s101 = sphi 0, %s100
    %s117 = sphi 0, %s101
    %s125 = sphi 0, %s127
    %s128 = sphi 0, %s125
    %s129 = sphi 0, %s128
    %s145 = sphi 0, %s129
    %s153 = sphi 0, %s155
    %s156 = sphi 0, %s153
    %s157 = sphi 0, %s156
    %s173 = sphi 0, %s157
  $region4: #{transformer_forward.38} parent=0 // loop_header_branch
    %13 = sbr.rel (%p11) target = $region8
  $region5: #{transformer_forward.38} parent=0 // loop_body
    %s15 = ssub.s32 %s10, 1
    %s16 = ssub.s32 %s10, 2
    %s26 = sadd.s32 1, %s19
    %p27 = scmp.ge.s32.totalorder %s26, 1
    %s28 = scalar_select %p27, 0, %s26
    %s29 = sadd.s32 1, %s18
    %s30 = scalar_select %p27, %s29, %s18
    %p31 = scmp.ge.s32.totalorder %s30, 1
    %s32 = scalar_select %p31, 0, %s30
    %s33 = sadd.s32 1, %s17
    %s34 = scalar_select %p31, %s33, %s17
    %p35 = scmp.ge.s32.totalorder %s34, 2
    %s36 = scalar_select %p35, 0, %s34
    %s37 = ssub.s32 %s17, %s36
    %s38 = ssub.s32 %s18, %s32
    %s39 = sor.u32 %s37, %s38
    %p40 = scmp.eq.s32.totalorder %s39, 0
    %s42 = sadd.s32 %s41, 1
    %s43 = scalar_select %p40, %s41, %s42
    %p46 = pneg %p40
    %p47 = scmp.eq.s32.totalorder %s10, 1
    %p48 = por %p46, %p47
    %p49 = scmp.ne.s32.totalorder %s41, %s44
    %p50 = scmp.eq.s32.totalorder %s10, 0
    %p51 = por %p49, %p50
    %p52 = scmp.ne.s32.totalorder %s41, %s44
    %p53 = scmp.eq.s32.totalorder %s15, 1
    %p54 = por %p52, %p53
    %p55 = scmp.ne.s32.totalorder %s44, %s45
    %p56 = scmp.eq.s32.totalorder %s15, 0
    %p57 = por %p55, %p56
    %p58 = scmp.ne.s32.totalorder %s44, %s45
    %p59 = scmp.eq.s32.totalorder %s16, 1
    %p60 = por %p58, %p59
    %p62 = scmp.ne.s32.totalorder %s45, %s61
    %p63 = scmp.eq.s32.totalorder %s16, 0
    %p64 = por %p62, %p63
    %s65 = ssub.s32 %s17, %s36
    %s66 = ssub.s32 %s19, %s28
    %s67 = sor.u32 %s65, %s66
    %p68 = scmp.eq.s32.totalorder %s67, 0
    %s70 = sadd.s32 %s69, 1
    %s71 = scalar_select %p68, %s69, %s70
    %p74 = pneg %p68
    %p75 = scmp.eq.s32.totalorder %s10, 1
    %p76 = por %p74, %p75
    %p77 = scmp.ne.s32.totalorder %s69, %s72
    %p78 = scmp.eq.s32.totalorder %s10, 0
    %p79 = por %p77, %p78
    %p80 = scmp.ne.s32.totalorder %s69, %s72
    %p81 = scmp.eq.s32.totalorder %s15, 1
    %p82 = por %p80, %p81
    %p83 = scmp.ne.s32.totalorder %s72, %s73
    %p84 = scmp.eq.s32.totalorder %s15, 0
    %p85 = por %p83, %p84
    %p86 = scmp.ne.s32.totalorder %s72, %s73
    %p87 = scmp.eq.s32.totalorder %s16, 1
    %p88 = por %p86, %p87
    %p90 = scmp.ne.s32.totalorder %s73, %s89
    %p91 = scmp.eq.s32.totalorder %s16, 0
    %p92 = por %p90, %p91
    %s93 = ssub.s32 %s17, %s36
    %s94 = ssub.s32 %s19, %s28
    %s95 = sor.u32 %s93, %s94
    %p96 = scmp.eq.s32.totalorder %s95, 0
    %s98 = sadd.s32 %s97, 1
    %s99 = scalar_select %p96, %s97, %s98
    %p102 = pneg %p96
    %p103 = scmp.eq.s32.totalorder %s10, 1
    %p104 = por %p102, %p103
    %p105 = scmp.ne.s32.totalorder %s97, %s100
    %p106 = scmp.eq.s32.totalorder %s10, 0
    %p107 = por %p105, %p106
    %p108 = scmp.ne.s32.totalorder %s97, %s100
    %p109 = scmp.eq.s32.totalorder %s15, 1
    %p110 = por %p108, %p109
    %p111 = scmp.ne.s32.totalorder %s100, %s101
    %p112 = scmp.eq.s32.totalorder %s15, 0
    %p113 = por %p111, %p112
    %p114 = scmp.ne.s32.totalorder %s100, %s101
    %p115 = scmp.eq.s32.totalorder %s16, 1
    %p116 = por %p114, %p115
    %p118 = scmp.ne.s32.totalorder %s101, %s117
    %p119 = scmp.eq.s32.totalorder %s16, 0
    %p120 = por %p118, %p119
    %s121 = ssub.s32 %s17, %s36
    %s122 = ssub.s32 %s19, %s28
    %s123 = sor.u32 %s121, %s122
    %p124 = scmp.eq.s32.totalorder %s123, 0
    %s126 = sadd.s32 %s125, 1
    %s127 = scalar_select %p124, %s125, %s126
    %p130 = pneg %p124
    %p131 = scmp.eq.s32.totalorder %s10, 1
    %p132 = por %p130, %p131
    %p133 = scmp.ne.s32.totalorder %s125, %s128
    %p134 = scmp.eq.s32.totalorder %s10, 0
    %p135 = por %p133, %p134
    %p136 = scmp.ne.s32.totalorder %s125, %s128
    %p137 = scmp.eq.s32.totalorder %s15, 1
    %p138 = por %p136, %p137
    %p139 = scmp.ne.s32.totalorder %s128, %s129
    %p140 = scmp.eq.s32.totalorder %s15, 0
    %p141 = por %p139, %p140
    %p142 = scmp.ne.s32.totalorder %s128, %s129
    %p143 = scmp.eq.s32.totalorder %s16, 1
    %p144 = por %p142, %p143
    %p146 = scmp.ne.s32.totalorder %s129, %s145
    %p147 = scmp.eq.s32.totalorder %s16, 0
    %p148 = por %p146, %p147
    %s149 = ssub.s32 %s17, %s36
    %s150 = ssub.s32 %s18, %s32
    %s151 = sor.u32 %s149, %s150
    %p152 = scmp.eq.s32.totalorder %s151, 0
    %s154 = sadd.s32 %s153, 1
    %s155 = scalar_select %p152, %s153, %s154
    %p158 = pneg %p152
    %p159 = scmp.eq.s32.totalorder %s10, 1
    %p160 = por %p158, %p159
    %p161 = scmp.ne.s32.totalorder %s153, %s156
    %p162 = scmp.eq.s32.totalorder %s10, 0
    %p163 = por %p161, %p162
    %p164 = scmp.ne.s32.totalorder %s153, %s156
    %p165 = scmp.eq.s32.totalorder %s15, 1
    %p166 = por %p164, %p165
    %p167 = scmp.ne.s32.totalorder %s156, %s157
    %p168 = scmp.eq.s32.totalorder %s15, 0
    %p169 = por %p167, %p168
    %p170 = scmp.ne.s32.totalorder %s156, %s157
    %p171 = scmp.eq.s32.totalorder %s16, 1
    %p172 = por %p170, %p171
    %p174 = scmp.ne.s32.totalorder %s157, %s173
    %p175 = scmp.eq.s32.totalorder %s16, 0
    %p176 = por %p174, %p175
    %p177 = scmp.le.s32.totalorder 1, %s10
    %p178 = scmp.lt.s32.totalorder %s10, 3
    %p179 = pnand %p177, %p178
    %p180 = pneg %p179
    // Predicated region
    $region9: #{transformer_forward.38} parent=5 // pred_check
      _
    $region10: #{transformer_forward.38} parent=5 // pred_check_branch
      %182 = sbr.rel (%p179) target = $region12
    $region11: #{transformer_forward.38} parent=5 // pred_region
      %s183 = ssub.s32 %s10, 1
    $region12: #{transformer_forward.38} parent=5 // pred_fallthru
      _
    %p184 = scmp.lt.s32.totalorder %s10, 2
    // Predicated region
    $region13: #{transformer_forward.38} parent=5 // pred_check
      %p185 = pneg %p184
    $region14: #{transformer_forward.38} parent=5 // pred_check_branch
      %187 = sbr.rel (%p185) target = $region16
    $region15: #{transformer_forward.38} parent=5 // pred_region
      // Predicated region
      $region17: #{transformer_forward.38} parent=15 // pred_check
        %p188 = pneg %p51
      $region18: #{transformer_forward.38} parent=15 // pred_check_branch
        %190 = sbr.rel (%p188) target = $region20
      $region19: #{transformer_forward.38} parent=15 // pred_region
        %p191 = scmp.lt.s32.totalorder %s17, 1
        %s192 = scalar_select %p191, %s17, 1
        %p193 = scmp.lt.s32.totalorder %s18, 0
        %s194 = scalar_select %p193, %s18, 0
        %s195 = sadd.s32 %s194, %s192
        %s196 = smul.addr %s195, 4
        %s197 = scalar_lea.vmem %s0, %s196
      $region20: #{transformer_forward.38} parent=15 // pred_fallthru
        _
      // Predicated region
      $region21: #{transformer_forward.38} parent=15 // pred_check
        %p198 = pneg %p79
      $region22: #{transformer_forward.38} parent=15 // pred_check_branch
        %200 = sbr.rel (%p198) target = $region24
      $region23: #{transformer_forward.38} parent=15 // pred_region
        %s201 = smul.u32 2, %s19
        %p202 = scmp.lt.s32.totalorder %s17, 1
        %s203 = scalar_select %p202, %s17, 1
        %p204 = scmp.lt.s32.totalorder %s201, 1
        %s205 = scalar_select %p204, %s201, 1
        %s206 = smul.addr %s203, 2
        %s207 = sadd.s32 %s205, %s206
        %s208 = smul.addr %s207, 4
        %s209 = scalar_lea.vmem %s1, %s208
        %s210 = smul.u32 2, %s19
      $region24: #{transformer_forward.38} parent=15 // pred_fallthru
        _
      // Predicated region
      $region25: #{transformer_forward.38} parent=15 // pred_check
        %p211 = pneg %p107
      $region26: #{transformer_forward.38} parent=15 // pred_check_branch
        %213 = sbr.rel (%p211) target = $region28
      $region27: #{transformer_forward.38} parent=15 // pred_region
        %s214 = smul.u32 2, %s19
        %p215 = scmp.lt.s32.totalorder %s17, 1
        %s216 = scalar_select %p215, %s17, 1
        %p217 = scmp.lt.s32.totalorder %s214, 1
        %s218 = scalar_select %p217, %s214, 1
        %s219 = smul.addr %s216, 2
        %s220 = sadd.s32 %s218, %s219
        %s221 = smul.addr %s220, 4
        %s222 = scalar_lea.vmem %s2, %s221
        %s223 = smul.u32 2, %s19
      $region28: #{transformer_forward.38} parent=15 // pred_fallthru
        _
      // Predicated region
      $region29: #{transformer_forward.38} parent=15 // pred_check
        %p224 = pneg %p135
      $region30: #{transformer_forward.38} parent=15 // pred_check_branch
        %226 = sbr.rel (%p224) target = $region32
      $region31: #{transformer_forward.38} parent=15 // pred_region
        %p227 = scmp.lt.s32.totalorder %s17, 1
        %s228 = scalar_select %p227, %s17, 1
        %p229 = scmp.lt.s32.totalorder %s19, 0
        %s230 = scalar_select %p229, %s19, 0
        %s231 = sadd.s32 %s230, %s228
        %s232 = scalar_lea.vmem %s3, %s231
      $region32: #{transformer_forward.38} parent=15 // pred_fallthru
        _
    $region16: #{transformer_forward.38} parent=5 // pred_fallthru
      _
    %p233 = scmp.le.s32.totalorder 1, %s10
    %p234 = scmp.lt.s32.totalorder %s10, 3
    %p235 = pnand %p233, %p234
    %p236 = pneg %p235
    // Predicated region
    $region33: #{transformer_forward.38} parent=5 // pred_check
      _
    $region34: #{transformer_forward.38} parent=5 // pred_check_branch
      %238 = sbr.rel (%p235) target = $region36
    $region35: #{transformer_forward.38} parent=5 // pred_region
      %s239 = ssub.s32 %s10, 1
      %p240 = scmp.lt.s32.totalorder %s20, 1
      %s241 = scalar_select %p240, %s20, 1
      %p242 = scmp.lt.s32.totalorder %s21, 0
      %s243 = scalar_select %p242, %s21, 0
      %s244 = sadd.s32 %s243, %s241
      %s245 = smul.addr %s244, 4
      %s246 = scalar_lea.vmem %s0, %s245
      %p247 = pneg %p57
      %p248 = pneg %p54
      %s249 = smul.u32 2, %s22
      %p250 = scmp.lt.s32.totalorder %s20, 1
      %s251 = scalar_select %p250, %s20, 1
      %p252 = scmp.lt.s32.totalorder %s249, 1
      %s253 = scalar_select %p252, %s249, 1
      %s254 = smul.addr %s251, 2
      %s255 = sadd.s32 %s253, %s254
      %s256 = smul.addr %s255, 4
      %s257 = scalar_lea.vmem %s1, %s256
      %p258 = pneg %p85
      %p259 = pneg %p82
      %s260 = smul.u32 2, %s22
      %p261 = scmp.lt.s32.totalorder %s20, 1
      %s262 = scalar_select %p261, %s20, 1
      %p263 = scmp.lt.s32.totalorder %s260, 1
      %s264 = scalar_select %p263, %s260, 1
      %s265 = smul.addr %s262, 2
      %s266 = sadd.s32 %s264, %s265
      %s267 = smul.addr %s266, 4
      %s268 = scalar_lea.vmem %s2, %s267
      %p269 = pneg %p113
      %p270 = pneg %p110
      %p271 = scmp.lt.s32.totalorder %s20, 1
      %s272 = scalar_select %p271, %s20, 1
      %p273 = scmp.lt.s32.totalorder %s22, 0
      %s274 = scalar_select %p273, %s22, 0
      %s275 = sadd.s32 %s274, %s272
      %s276 = scalar_lea.vmem %s3, %s275
      %p277 = pneg %p141
      %p278 = pneg %p138
      %p279 = pneg %p169
      %p280 = pneg %p166
      %p281 = scmp.lt.s32.totalorder %s20, 1
      %s282 = scalar_select %p281, %s20, 1
      %p283 = scmp.lt.s32.totalorder %s21, 0
      %s284 = scalar_select %p283, %s21, 0
      %s285 = sadd.s32 %s284, %s282
      %s286 = smul.addr %s285, 4
      %s287 = scalar_lea.vmem %s4, %s286
      %p288 = scmp.lt.s32.totalorder %s20, 1
      %s289 = scalar_select %p288, %s20, 1
      %p290 = scmp.lt.s32.totalorder %s21, 0
      %s291 = scalar_select %p290, %s21, 0
      %s292 = sadd.s32 %s291, %s289
      %s293 = smul.addr %s292, 4
      %s294 = scalar_lea.vmem %s0, %s293
      %s295 = smul.u32 2, %s22
      %p296 = scmp.lt.s32.totalorder %s20, 1
      %s297 = scalar_select %p296, %s20, 1
      %p298 = scmp.lt.s32.totalorder %s295, 1
      %s299 = scalar_select %p298, %s295, 1
      %s300 = smul.addr %s297, 2
      %s301 = sadd.s32 %s299, %s300
      %s302 = smul.addr %s301, 4
      %s303 = scalar_lea.vmem %s1, %s302
      %s304 = smul.u32 2, %s22
      %s305 = smul.u32 2, %s22
      %p306 = scmp.lt.s32.totalorder %s20, 1
      %s307 = scalar_select %p306, %s20, 1
      %p308 = scmp.lt.s32.totalorder %s305, 1
      %s309 = scalar_select %p308, %s305, 1
      %s310 = smul.addr %s307, 2
      %s311 = sadd.s32 %s309, %s310
      %s312 = smul.addr %s311, 4
      %s313 = scalar_lea.vmem %s2, %s312
      %s314 = smul.u32 2, %s22
      %p315 = scmp.lt.s32.totalorder %s20, 1
      %s316 = scalar_select %p315, %s20, 1
      %p317 = scmp.lt.s32.totalorder %s22, 0
      %s318 = scalar_select %p317, %s22, 0
      %s319 = sadd.s32 %s318, %s316
      %s320 = scalar_lea.vmem %s3, %s319
      %p321 = scmp.lt.s32.totalorder %s20, 1
      %s322 = scalar_select %p321, %s20, 1
      %p323 = scmp.lt.s32.totalorder %s21, 0
      %s324 = scalar_select %p323, %s21, 0
      %s325 = sadd.s32 %s324, %s322
      %s326 = smul.addr %s325, 4
      %s327 = scalar_lea.vmem %s4, %s326
      %p329 = scmp.eq.s32.totalorder %s22, 0
      // Predicated region
      $region37: #{transformer_forward.38} parent=35 // pred_check
        %p330 = pneg %p329
      $region38: #{transformer_forward.38} parent=35 // pred_check_branch
        %332 = sbr.rel (%p330) target = $region40
      $region39: #{transformer_forward.38} parent=35 // pred_region
        %vm333 = vcmask 31744
        %334 = vst.msk [vmem:[#allocation2] sm:$0xff] %vm333, -1e+09
        %335 = vst.msk [vmem:[#allocation3] sm:$0xff] %vm333, 0.0
        %336 = vst [vmem:[#allocation4] sm:$0xff] 0.0
      $region40: #{transformer_forward.38} parent=35 // pred_fallthru
        _
      %v337 = vld [vmem:[%s294] sm:$0xf]
      %v338 = vld [vmem:[%s303] sm:$0xf]
      %v339 = vld [vmem:[%s303 + $0x4] sm:$0x1]
      %v340 = vld [vmem:[%s313] sm:$0xf]
      %v341 = vld [vmem:[%s313 + $0x4] sm:$0x1]
      %v342 = vld [vmem:[%s320] sm:$0x1]
      %v344 = vperm.slane %v342, 0
      %v348 = vunpack.c.l.b16 %v338
      %v349 = vunpack.c.l.b16 %v339
      %v350 = vpack.c.b16 %v349, %v348
      %vm351 = vcmask 261120
      %v353 = vsel %vm351, %v337, 0
      %v356 = vsel %vm351, %v350, 0
      %358 = vmatpush.bf16.xpose.msra.mxu0 0
      %359 = vmatpush.bf16.xpose.msra.mxu0 0
      %360 = vmatpush.bf16.xpose.msra.mxu0 0
      %361 = vmatpush.bf16.xpose.msra.mxu0 0
      %362 = vmatpush.bf16.xpose.msra.mxu0 0
      %363 = vmatpush.bf16.xpose.msra.mxu0 0
      %364 = vmatpush.bf16.xpose.msra.mxu0 0
      %365 = vmatpush.bf16.xpose.msra.mxu0 %v356
      %366 = vmatmul.bf16.gmra.mxu0 %v353
      %v367 = vpop.f32.mrf.mxu0
      %v368 = vadd.f32 %v344, %v367
      %v369 = vpop.f32.mrf.mxu0
      %370 = vdwg.mxu0
      %v371 = vld [vmem:[#allocation2] sm:$0xff]
      %vm372 = vcmask 80896
      %v373 = vsel %vm372, %v368, -inf
      %374 = vmax.xlane.f32.xlu0 %v373
      %v375 = vpop.xlane.xlu0 %374
      %v376 = vmax.f32 %v371, %v375
      %v377 = vsub.f32 %v371, %v376
      %v378 = vmul.f32 %v377, 1.442695
      %v379 = vpow.pop %v378
      %381 = vset.pattern.permute.xlu0 0
      %382 = vperm.xlu0 %381, %v376
      %v383 = vpop.permute.xlu0 %382
      %v385 = vsub.f32 %v368, %v383
      %v386 = vmul.f32 %v385, 1.442695
      %v387 = vpow.pop %v386
      %v388 = vld [vmem:[#allocation3] sm:$0xff]
      %v389 = vmul.f32 %v379, %v388
      %v390 = vsel %vm372, %v387, 0.0
      %391 = vadd.xlane.f32.xlu0 %v390
      %v392 = vpop.xlane.xlu0 %391
      %v393 = vadd.f32 %v389, %v392
      %vm394 = vcmask 7168
      %395 = vst.msk [vmem:[#allocation3] sm:$0xff] %vm394, %v393
      %v396 = vld [vmem:[#allocation4] sm:$0xff]
      %398 = vset.pattern.permute.xlu0 0
      %399 = vperm.xlu0 %398, %v379
      %v400 = vpop.permute.xlu0 %399
      %v402 = vmul.f32 %v400, %v396
      %v403 = vpack.c.bf16 %v387, %v387
      %v406 = vunpack.c.l.b16 %v340
      %v407 = vunpack.c.l.b16 %v341
      %v408 = vpack.c.b16 %v407, %v406
      %v410 = vsel %vm372, %v403, 0
      %vm412 = vcmask 1044480
      %v414 = vsel %vm412, %v408, 0
      %416 = vmatpush.bf16.msra.mxu0 0
      %417 = vmatpush.bf16.msra.mxu0 0
      %418 = vmatpush.bf16.msra.mxu0 0
      %419 = vmatpush.bf16.msra.mxu0 0
      %420 = vmatpush.bf16.msra.mxu0 0
      %421 = vmatpush.bf16.msra.mxu0 0
      %422 = vmatpush.bf16.msra.mxu0 0
      %423 = vmatpush.bf16.msra.mxu0 %v414
      %424 = vmatmul.bf16.gmra.mxu0 %v410
      %v425 = vpop.f32.mrf.mxu0
      %v426 = vadd.f32 0.0, %v425
      %v427 = vpop.f32.mrf.mxu0
      %428 = vdwg.mxu0
      %v429 = vadd.f32 %v402, %v426
      %430 = vst.msk [vmem:[#allocation4] sm:$0xff] %vm351, %v429
      %431 = vst.msk [vmem:[#allocation2] sm:$0xff] %vm394, %v376
      %v433 = vunpack.c.l.b16 %v337
      %v434 = vpack.c.b16 %v433, %v433
      %435 = vrot.lane.b32.xlu0 %v434, 96
      %v436 = vpop.permute.xlu0 %435
      %437 = vrot.lane.b32.xlu0 %v350, 96
      %v438 = vpop.permute.xlu0 %437
      %v440 = vsel %vm351, %v436, 0
      %v443 = vsel %vm351, %v438, 0
      %445 = vmatpush.bf16.xpose.msra.mxu0 0
      %446 = vmatpush.bf16.xpose.msra.mxu0 0
      %447 = vmatpush.bf16.xpose.msra.mxu0 0
      %448 = vmatpush.bf16.xpose.msra.mxu0 0
      %449 = vmatpush.bf16.xpose.msra.mxu0 0
      %450 = vmatpush.bf16.xpose.msra.mxu0 0
      %451 = vmatpush.bf16.xpose.msra.mxu0 0
      %452 = vmatpush.bf16.xpose.msra.mxu0 %v443
      %453 = vmatmul.bf16.gmra.mxu0 %v440
      %v454 = vpop.f32.mrf.mxu0
      %v455 = vadd.f32 %v344, %v454
      %v456 = vpop.f32.mrf.mxu0
      %457 = vdwg.mxu0
      %v458 = vld [vmem:[#allocation2] sm:$0xff]
      %v459 = vsel %vm372, %v455, -inf
      %460 = vmax.xlane.f32.xlu0 %v459
      %v461 = vpop.xlane.xlu0 %460
      %v462 = vmax.f32 %v458, %v461
      %v463 = vsub.f32 %v458, %v462
      %v464 = vmul.f32 %v463, 1.442695
      %v465 = vpow.pop %v464
      %467 = vset.pattern.permute.xlu0 1
      %468 = vperm.xlu0 %467, %v462
      %v469 = vpop.permute.xlu0 %468
      %v471 = vsub.f32 %v455, %v469
      %v472 = vmul.f32 %v471, 1.442695
      %v473 = vpow.pop %v472
      %v474 = vld [vmem:[#allocation3] sm:$0xff]
      %v475 = vmul.f32 %v465, %v474
      %v476 = vsel %vm372, %v473, 0.0
      %477 = vadd.xlane.f32.xlu0 %v476
      %v478 = vpop.xlane.xlu0 %477
      %v479 = vadd.f32 %v475, %v478
      %vm480 = vcmask 15368
      %481 = vst.msk [vmem:[#allocation3] sm:$0xff] %vm480, %v479
      %v482 = vld [vmem:[#allocation4] sm:$0xff]
      %484 = vset.pattern.permute.xlu0 1
      %485 = vperm.xlu0 %484, %v465
      %v486 = vpop.permute.xlu0 %485
      %v488 = vmul.f32 %v486, %v482
      %v489 = vpack.c.bf16 %v473, %v473
      %490 = vrot.lane.b32.xlu0 %v408, 96
      %v491 = vpop.permute.xlu0 %490
      %v493 = vsel %vm372, %v489, 0
      %v496 = vsel %vm412, %v491, 0
      %498 = vmatpush.bf16.msra.mxu0 0
      %499 = vmatpush.bf16.msra.mxu0 0
      %500 = vmatpush.bf16.msra.mxu0 0
      %501 = vmatpush.bf16.msra.mxu0 0
      %502 = vmatpush.bf16.msra.mxu0 0
      %503 = vmatpush.bf16.msra.mxu0 0
      %504 = vmatpush.bf16.msra.mxu0 0
      %505 = vmatpush.bf16.msra.mxu0 %v496
      %506 = vmatmul.bf16.gmra.mxu0 %v493
      %v507 = vpop.f32.mrf.mxu0
      %v508 = vadd.f32 0.0, %v507
      %v509 = vpop.f32.mrf.mxu0
      %510 = vdwg.mxu0
      %512 = vrot.lane.b32.xlu0 %v508, 32
      %v513 = vpop.permute.xlu0 %512
      %v515 = vadd.f32 %v488, %v513
      %vm516 = vcmask 523520
      %517 = vst.msk [vmem:[#allocation4] sm:$0xff] %vm516, %v515
      %518 = vst.msk [vmem:[#allocation2] sm:$0xff] %vm480, %v462
      %519 = vrot.lane.b32.xlu0 %v434, 64
      %v520 = vpop.permute.xlu0 %519
      %521 = vrot.lane.b32.xlu0 %v350, 64
      %v522 = vpop.permute.xlu0 %521
      %v524 = vsel %vm351, %v520, 0
      %v527 = vsel %vm351, %v522, 0
      %529 = vmatpush.bf16.xpose.msra.mxu0 0
      %530 = vmatpush.bf16.xpose.msra.mxu0 0
      %531 = vmatpush.bf16.xpose.msra.mxu0 0
      %532 = vmatpush.bf16.xpose.msra.mxu0 0
      %533 = vmatpush.bf16.xpose.msra.mxu0 0
      %534 = vmatpush.bf16.xpose.msra.mxu0 0
      %535 = vmatpush.bf16.xpose.msra.mxu0 0
      %536 = vmatpush.bf16.xpose.msra.mxu0 %v527
      %537 = vmatmul.bf16.gmra.mxu0 %v524
      %v538 = vpop.f32.mrf.mxu0
      %v539 = vadd.f32 %v344, %v538
      %v540 = vpop.f32.mrf.mxu0
      %541 = vdwg.mxu0
      %v542 = vld [vmem:[#allocation2] sm:$0xff]
      %v543 = vsel %vm372, %v539, -inf
      %544 = vmax.xlane.f32.xlu0 %v543
      %v545 = vpop.xlane.xlu0 %544
      %v546 = vmax.f32 %v542, %v545
      %v547 = vsub.f32 %v542, %v546
      %v548 = vmul.f32 %v547, 1.442695
      %v549 = vpow.pop %v548
      %551 = vset.pattern.permute.xlu0 2
      %552 = vperm.xlu0 %551, %v546
      %v553 = vpop.permute.xlu0 %552
      %v555 = vsub.f32 %v539, %v553
      %v556 = vmul.f32 %v555, 1.442695
      %v557 = vpow.pop %v556
      %v558 = vld [vmem:[#allocation3] sm:$0xff]
      %v559 = vmul.f32 %v549, %v558
      %v560 = vsel %vm372, %v557, 0.0
      %561 = vadd.xlane.f32.xlu0 %v560
      %v562 = vpop.xlane.xlu0 %561
      %v563 = vadd.f32 %v559, %v562
      %vm564 = vcmask 23568
      %565 = vst.msk [vmem:[#allocation3] sm:$0xff] %vm564, %v563
      %v566 = vld [vmem:[#allocation4] sm:$0xff]
      %568 = vset.pattern.permute.xlu0 2
      %569 = vperm.xlu0 %568, %v549
      %v570 = vpop.permute.xlu0 %569
      %v572 = vmul.f32 %v570, %v566
      %v573 = vpack.c.bf16 %v557, %v557
      %574 = vrot.lane.b32.xlu0 %v408, 64
      %v575 = vpop.permute.xlu0 %574
      %v577 = vsel %vm372, %v573, 0
      %v580 = vsel %vm412, %v575, 0
      %582 = vmatpush.bf16.msra.mxu0 0
      %583 = vmatpush.bf16.msra.mxu0 0
      %584 = vmatpush.bf16.msra.mxu0 0
      %585 = vmatpush.bf16.msra.mxu0 0
      %586 = vmatpush.bf16.msra.mxu0 0
      %587 = vmatpush.bf16.msra.mxu0 0
      %588 = vmatpush.bf16.msra.mxu0 0
      %589 = vmatpush.bf16.msra.mxu0 %v580
      %590 = vmatmul.bf16.gmra.mxu0 %v577
      %v591 = vpop.f32.mrf.mxu0
      %v592 = vadd.f32 0.0, %v591
      %v593 = vpop.f32.mrf.mxu0
      %594 = vdwg.mxu0
      %596 = vrot.lane.b32.xlu0 %v592, 64
      %v597 = vpop.permute.xlu0 %596
      %v599 = vadd.f32 %v572, %v597
      %vm600 = vcmask 785920
      %601 = vst.msk [vmem:[#allocation4] sm:$0xff] %vm600, %v599
      %602 = vst.msk [vmem:[#allocation2] sm:$0xff] %vm564, %v546
      %603 = vrot.lane.b32.xlu0 %v434, 32
      %v604 = vpop.permute.xlu0 %603
      %605 = vrot.lane.b32.xlu0 %v350, 32
      %v606 = vpop.permute.xlu0 %605
      %v608 = vsel %vm351, %v604, 0
      %v611 = vsel %vm351, %v606, 0
      %613 = vmatpush.bf16.xpose.msra.mxu0 0
      %614 = vmatpush.bf16.xpose.msra.mxu0 0
      %615 = vmatpush.bf16.xpose.msra.mxu0 0
      %616 = vmatpush.bf16.xpose.msra.mxu0 0
      %617 = vmatpush.bf16.xpose.msra.mxu0 0
      %618 = vmatpush.bf16.xpose.msra.mxu0 0
      %619 = vmatpush.bf16.xpose.msra.mxu0 0
      %620 = vmatpush.bf16.xpose.msra.mxu0 %v611
      %621 = vmatmul.bf16.gmra.mxu0 %v608
      %v622 = vpop.f32.mrf.mxu0
      %v623 = vadd.f32 %v344, %v622
      %v624 = vpop.f32.mrf.mxu0
      %625 = vdwg.mxu0
      %v626 = vld [vmem:[#allocation2] sm:$0xff]
      %v627 = vsel %vm372, %v623, -inf
      %628 = vmax.xlane.f32.xlu0 %v627
      %v629 = vpop.xlane.xlu0 %628
      %v630 = vmax.f32 %v626, %v629
      %v631 = vsub.f32 %v626, %v630
      %v632 = vmul.f32 %v631, 1.442695
      %v633 = vpow.pop %v632
      %635 = vset.pattern.permute.xlu0 3
      %636 = vperm.xlu0 %635, %v630
      %v637 = vpop.permute.xlu0 %636
      %v639 = vsub.f32 %v623, %v637
      %v640 = vmul.f32 %v639, 1.442695
      %v641 = vpow.pop %v640
      %v642 = vld [vmem:[#allocation3] sm:$0xff]
      %v643 = vmul.f32 %v633, %v642
      %v644 = vsel %vm372, %v641, 0.0
      %645 = vadd.xlane.f32.xlu0 %v644
      %v646 = vpop.xlane.xlu0 %645
      %v647 = vadd.f32 %v643, %v646
      %vm648 = vcmask 31768
      %649 = vst.msk [vmem:[#allocation3] sm:$0xff] %vm648, %v647
      %v650 = vld [vmem:[#allocation4] sm:$0xff]
      %652 = vset.pattern.permute.xlu0 3
      %653 = vperm.xlu0 %652, %v633
      %v654 = vpop.permute.xlu0 %653
      %v656 = vmul.f32 %v654, %v650
      %v657 = vpack.c.bf16 %v641, %v641
      %658 = vrot.lane.b32.xlu0 %v408, 32
      %v659 = vpop.permute.xlu0 %658
      %v661 = vsel %vm372, %v657, 0
      %v664 = vsel %vm412, %v659, 0
      %666 = vmatpush.bf16.msra.mxu0 0
      %667 = vmatpush.bf16.msra.mxu0 0
      %668 = vmatpush.bf16.msra.mxu0 0
      %669 = vmatpush.bf16.msra.mxu0 0
      %670 = vmatpush.bf16.msra.mxu0 0
      %671 = vmatpush.bf16.msra.mxu0 0
      %672 = vmatpush.bf16.msra.mxu0 0
      %673 = vmatpush.bf16.msra.mxu0 %v664
      %674 = vmatmul.bf16.gmra.mxu0 %v661
      %v675 = vpop.f32.mrf.mxu0
      %v676 = vadd.f32 0.0, %v675
      %v677 = vpop.f32.mrf.mxu0
      %678 = vdwg.mxu0
      %680 = vrot.lane.b32.xlu0 %v676, 96
      %v681 = vpop.permute.xlu0 %680
      %v683 = vadd.f32 %v656, %v681
      %vm684 = vcmask 1048320
      %685 = vst.msk [vmem:[#allocation4] sm:$0xff] %vm684, %v683
      %686 = vst.msk [vmem:[#allocation2] sm:$0xff] %vm648, %v630
      // Predicated region
      $region41: #{transformer_forward.38} parent=35 // pred_check
        %p687 = pneg %p329
      $region42: #{transformer_forward.38} parent=35 // pred_check_branch
        %689 = sbr.rel (%p687) target = $region44
      $region43: #{transformer_forward.38} parent=35 // pred_region
        %v690 = vld [vmem:[#allocation2] sm:$0xff]
        %vm691 = vcmp.gt.f32.partialorder %v690, -5e+08
        %v692 = vld [vmem:[#allocation3] sm:$0xff]
        %v693 = vmax.f32 %v692, 1e-30
        %v694 = vrcp.pop %v693
        %v695 = vmul.f32 %v693, %v694
        %v696 = vsub.f32 1.0, %v695
        %v697 = vmul.f32 %v694, %v696
        %v698 = vadd.f32 %v694, %v697
        %vm699 = vweird.f32 %v693
        %vm700 = vweird.f32 %v694
        %vm701 = vmor %vm699, %vm700
        %v702 = vsel %vm701, %v694, %v698
        %v703 = vand.u32 2147483647, %v693
        %vm704 = vcmp.eq.f32.partialorder %v703, 8.507059e+37
        %v705 = vand.u32 %v693, 2147483648
        %v706 = vor.u32 1.1754944e-38, %v705
        %v707 = vsel %vm704, %v706, %v702
        %v708 = vmul.f32 1.0, %v707
        %v709 = vsel %vm691, %v708, 0.0
        %v710 = vld [vmem:[#allocation4] sm:$0xff]
        %712 = vset.pattern.permute.xlu0 0
        %713 = vperm.xlu0 %712, %v709
        %v714 = vpop.permute.xlu0 %713
        %v716 = vmul.f32 %v710, %v714
        %717 = vst.msk [vmem:[#allocation4] sm:$0xff] %vm351, %v716
        %v718 = vld [vmem:[#allocation2] sm:$0xff]
        %vm719 = vcmp.gt.f32.partialorder %v718, -5e+08
        %v720 = vld [vmem:[#allocation3] sm:$0xff]
        %v721 = vmax.f32 %v720, 1e-30
        %v722 = vrcp.pop %v721
        %v723 = vmul.f32 %v721, %v722
        %v724 = vsub.f32 1.0, %v723
        %v725 = vmul.f32 %v722, %v724
        %v726 = vadd.f32 %v722, %v725
        %vm727 = vweird.f32 %v721
        %vm728 = vweird.f32 %v722
        %vm729 = vmor %vm727, %vm728
        %v730 = vsel %vm729, %v722, %v726
        %v731 = vand.u32 2147483647, %v721
        %vm732 = vcmp.eq.f32.partialorder %v731, 8.507059e+37
        %v733 = vand.u32 %v721, 2147483648
        %v734 = vor.u32 1.1754944e-38, %v733
        %v735 = vsel %vm732, %v734, %v730
        %v736 = vmul.f32 1.0, %v735
        %v737 = vsel %vm719, %v736, 0.0
        %v738 = vld [vmem:[#allocation4] sm:$0xff]
        %740 = vset.pattern.permute.xlu0 1
        %741 = vperm.xlu0 %740, %v737
        %v742 = vpop.permute.xlu0 %741
        %v744 = vmul.f32 %v738, %v742
        %745 = vst.msk [vmem:[#allocation4] sm:$0xff] %vm516, %v744
        %v746 = vld [vmem:[#allocation2] sm:$0xff]
        %vm747 = vcmp.gt.f32.partialorder %v746, -5e+08
        %v748 = vld [vmem:[#allocation3] sm:$0xff]
        %v749 = vmax.f32 %v748, 1e-30
        %v750 = vrcp.pop %v749
        %v751 = vmul.f32 %v749, %v750
        %v752 = vsub.f32 1.0, %v751
        %v753 = vmul.f32 %v750, %v752
        %v754 = vadd.f32 %v750, %v753
        %vm755 = vweird.f32 %v749
        %vm756 = vweird.f32 %v750
        %vm757 = vmor %vm755, %vm756
        %v758 = vsel %vm757, %v750, %v754
        %v759 = vand.u32 2147483647, %v749
        %vm760 = vcmp.eq.f32.partialorder %v759, 8.507059e+37
        %v761 = vand.u32 %v749, 2147483648
        %v762 = vor.u32 1.1754944e-38, %v761
        %v763 = vsel %vm760, %v762, %v758
        %v764 = vmul.f32 1.0, %v763
        %v765 = vsel %vm747, %v764, 0.0
        %v766 = vld [vmem:[#allocation4] sm:$0xff]
        %768 = vset.pattern.permute.xlu0 2
        %769 = vperm.xlu0 %768, %v765
        %v770 = vpop.permute.xlu0 %769
        %v772 = vmul.f32 %v766, %v770
        %773 = vst.msk [vmem:[#allocation4] sm:$0xff] %vm600, %v772
        %v774 = vld [vmem:[#allocation2] sm:$0xff]
        %vm775 = vcmp.gt.f32.partialorder %v774, -5e+08
        %v776 = vld [vmem:[#allocation3] sm:$0xff]
        %v777 = vmax.f32 %v776, 1e-30
        %v778 = vrcp.pop %v777
        %v779 = vmul.f32 %v777, %v778
        %v780 = vsub.f32 1.0, %v779
        %v781 = vmul.f32 %v778, %v780
        %v782 = vadd.f32 %v778, %v781
        %vm783 = vweird.f32 %v777
        %vm784 = vweird.f32 %v778
        %vm785 = vmor %vm783, %vm784
        %v786 = vsel %vm785, %v778, %v782
        %v787 = vand.u32 2147483647, %v777
        %vm788 = vcmp.eq.f32.partialorder %v787, 8.507059e+37
        %v789 = vand.u32 %v777, 2147483648
        %v790 = vor.u32 1.1754944e-38, %v789
        %v791 = vsel %vm788, %v790, %v786
        %v792 = vmul.f32 1.0, %v791
        %v793 = vsel %vm775, %v792, 0.0
        %v794 = vld [vmem:[#allocation4] sm:$0xff]
        %796 = vset.pattern.permute.xlu0 3
        %797 = vperm.xlu0 %796, %v793
        %v798 = vpop.permute.xlu0 %797
        %v800 = vmul.f32 %v794, %v798
        %801 = vst.msk [vmem:[#allocation4] sm:$0xff] %vm684, %v800
        %v802 = vld [vmem:[#allocation4] sm:$0xff]
        %v803 = vpack.c.bf16 %v802, %v802
        %804 = vst [vmem:[%s327] sm:$0xf] %v803
      $region44: #{transformer_forward.38} parent=35 // pred_fallthru
        _
      %p805 = scmp.lt.s32.totalorder %s20, 1
      %s806 = scalar_select %p805, %s20, 1
      %p807 = scmp.lt.s32.totalorder %s21, 0
      %s808 = scalar_select %p807, %s21, 0
      %s809 = sadd.s32 %s808, %s806
      %s810 = smul.addr %s809, 4
      %s811 = scalar_lea.vmem %s4, %s810
      // Predicated region
      $region45: #{transformer_forward.38} parent=35 // pred_check
        %p812 = pneg %p166
      $region46: #{transformer_forward.38} parent=35 // pred_check_branch
        %814 = sbr.rel (%p812) target = $region48
      $region47: #{transformer_forward.38} parent=35 // pred_region
        _
      $region48: #{transformer_forward.38} parent=35 // pred_fallthru
        _
    $region36: #{transformer_forward.38} parent=5 // pred_fallthru
      _
    %p815 = scmp.le.s32.totalorder 2, %s10
    // Predicated region
    $region49: #{transformer_forward.38} parent=5 // pred_check
      %p816 = pneg %p815
    $region50: #{transformer_forward.38} parent=5 // pred_check_branch
      %818 = sbr.rel (%p816) target = $region52
    $region51: #{transformer_forward.38} parent=5 // pred_region
      %s819 = ssub.s32 %s10, 2
      // Predicated region
      $region53: #{transformer_forward.38} parent=51 // pred_check
        %p820 = pneg %p172
      $region54: #{transformer_forward.38} parent=51 // pred_check_branch
        %822 = sbr.rel (%p820) target = $region56
      $region55: #{transformer_forward.38} parent=51 // pred_region
        %p823 = scmp.lt.s32.totalorder %s23, 1
        %s824 = scalar_select %p823, %s23, 1
        %p825 = scmp.lt.s32.totalorder %s24, 0
        %s826 = scalar_select %p825, %s24, 0
        %s827 = sadd.s32 %s826, %s824
        %s828 = smul.addr %s827, 4
        %s829 = scalar_lea.vmem %s4, %s828
      $region56: #{transformer_forward.38} parent=51 // pred_fallthru
        _
    $region52: #{transformer_forward.38} parent=5 // pred_fallthru
      _
  $region6: #{transformer_forward.38} parent=0 // loop_footer
    %s14 = sadd.s32 1, %s10
  $region7: #{transformer_forward.38} parent=0 // loop_footer_branch
    %9 = sbr.rel target = $region3
  $region8: #{transformer_forward.38} parent=0 // loop_exit
    _

// kernel: transformer_forward.41
$region0: #{transformer_forward.41}
  #allocation0 [shape = 'u32[]', space=smem, size = 0x4, offset = 0x4, fixed_abs, tag = 'smem constant byte address 0x4 - core index']
  #allocation1 [shape = 'u32[72,128]{1,0:T(1,128)}', space=vmem, size = 0x9000, scoped, tag = 'internal scratch']
  %s0 = inlined_call_operand.vmem [shape: bf16[16,128], index: 0, kind: input, shape index: {}]
  %s1 = inlined_call_operand.hbm [shape: bf16[128,128], index: 1, kind: input, shape index: {}]
  %s2 = inlined_call_operand.hbm [shape: bf16[128,128], index: 2, kind: input, shape index: {}]
  %s3 = inlined_call_operand.hbm [shape: bf16[128,128], index: 3, kind: input, shape index: {}]
  %s4 = inlined_call_operand.hbm [shape: f32[1,128], index: 4, kind: input, shape index: {}]
  %s5 = inlined_call_operand.hbm [shape: f32[1,128], index: 5, kind: input, shape index: {}]
  %s6 = inlined_call_operand.hbm [shape: f32[1,128], index: 6, kind: input, shape index: {}]
  %s7 = inlined_call_operand.vmem [shape: bf16[16,128], index: 7, kind: output, shape index: {0}]
  %s8 = inlined_call_operand.vmem [shape: bf16[16,128], index: 8, kind: output, shape index: {1}]
  %s9 = inlined_call_operand.vmem [shape: bf16[16,128], index: 9, kind: output, shape index: {2}]
  %10 = xla_tuple %s7, %s8, %s9
  %s11 = sld [smem:[#allocation0]]
  $region78: #{transformer_forward.41} parent=0
    _
  %s13 = ssub.s32 1, %s11
  %s14 = scalar_select 0, %s13, %s11
  $region1: #{transformer_forward.41} parent=0
    #allocation2 [shape = 'u8[32768]{0}', space=vmem, size = 0x8000, scoped, tag = 'input window, operand 1, single buffered']
    #allocation3 [shape = 's32[1]{0}', space=sflag, size = 0x4, scoped, tag = 'scoped memory for transformer_forward.41']
    #allocation4 [shape = 'u8[32768]{0}', space=vmem, size = 0x8000, scoped, tag = 'input window, operand 2, single buffered']
    #allocation5 [shape = 's32[1]{0}', space=sflag, size = 0x4, scoped, tag = 'scoped memory for transformer_forward.41']
    #allocation6 [shape = 'u8[32768]{0}', space=vmem, size = 0x8000, scoped, tag = 'input window, operand 3, single buffered']
    #allocation7 [shape = 'u8[512]{0}', space=vmem, size = 0x400, scoped, tag = 'input window, operand 4, single buffered']
    #allocation8 [shape = 's32[1]{0}', space=sflag, size = 0x4, scoped, tag = 'scoped memory for transformer_forward.41']
    #allocation9 [shape = 'u8[512]{0}', space=vmem, size = 0x400, scoped, tag = 'input window, operand 5, single buffered']
    #allocation10 [shape = 'u8[512]{0}', space=vmem, size = 0x400, scoped, tag = 'input window, operand 6, single buffered']
    #allocation11 [shape = 's32[1]{0}', space=sflag, size = 0x4, scoped, tag = 'scoped memory for transformer_forward.41']
    %15 = vsyncpa [#allocation3], 0
    %16 = vsyncpa [#allocation5], 0
    %17 = vsyncpa [#allocation8], 0
    %18 = vsyncpa [#allocation11], 0
    // Predicated region
    $region2: #{transformer_forward.41} parent=1 // pred_check
      _
    $region3: #{transformer_forward.41} parent=1 // pred_check_branch
      %20 = sbr.rel (0) target = $region5
    $region4: #{transformer_forward.41} parent=1 // pred_region
      _
    $region5: #{transformer_forward.41} parent=1 // pred_fallthru
      _
    // Predicated region
    $region6: #{transformer_forward.41} parent=1 // pred_check
      _
    $region7: #{transformer_forward.41} parent=1 // pred_check_branch
      %22 = sbr.rel (0) target = $region9
    $region8: #{transformer_forward.41} parent=1 // pred_region
      %24 = vsyncadd [#allocation3], 0
      %s25 = sshll.u32 %s1, 4
      %s26 = int_to_ptr.hbm [resolvable:$true] %s25
      %s27 = sshll.u32 [#allocation2], 4
      %s28 = int_to_ptr.vmem [resolvable:$true] %s27
      %33 = dma.hbm_to_vmem [thread:$0]  %s26, 1024, %s28, [#allocation3], 64, 64, 4
    $region9: #{transformer_forward.41} parent=1 // pred_fallthru
      _
    // Predicated region
    $region10: #{transformer_forward.41} parent=1 // pred_check
      _
    $region11: #{transformer_forward.41} parent=1 // pred_check_branch
      %35 = sbr.rel (0) target = $region13
    $region12: #{transformer_forward.41} parent=1 // pred_region
      %37 = vsyncadd [#allocation5], 0
      %s38 = sshll.u32 %s2, 4
      %s39 = int_to_ptr.hbm [resolvable:$true] %s38
      %s40 = sshll.u32 [#allocation4], 4
      %s41 = int_to_ptr.vmem [resolvable:$true] %s40
      %46 = dma.hbm_to_vmem [thread:$0]  %s39, 1024, %s41, [#allocation5], 64, 64, 4
    $region13: #{transformer_forward.41} parent=1 // pred_fallthru
      _
    // Predicated region
    $region14: #{transformer_forward.41} parent=1 // pred_check
      _
    $region15: #{transformer_forward.41} parent=1 // pred_check_branch
      %48 = sbr.rel (0) target = $region17
    $region16: #{transformer_forward.41} parent=1 // pred_region
      %50 = vsyncadd [#allocation5], 0
      %s51 = sshll.u32 %s3, 4
      %s52 = int_to_ptr.hbm [resolvable:$true] %s51
      %s53 = sshll.u32 [#allocation6], 4
      %s54 = int_to_ptr.vmem [resolvable:$true] %s53
      %59 = dma.hbm_to_vmem [thread:$0]  %s52, 1024, %s54, [#allocation5], 64, 64, 4
    $region17: #{transformer_forward.41} parent=1 // pred_fallthru
      _
    // Predicated region
    $region18: #{transformer_forward.41} parent=1 // pred_check
      _
    $region19: #{transformer_forward.41} parent=1 // pred_check_branch
      %61 = sbr.rel (0) target = $region21
    $region20: #{transformer_forward.41} parent=1 // pred_region
      %63 = vsyncadd [#allocation8], 0
      %s65 = sshll.u32 %s4, 4
      %s66 = int_to_ptr.hbm [resolvable:$true] %s65
      %s67 = sshll.u32 [#allocation7], 4
      %s68 = int_to_ptr.vmem [resolvable:$true] %s67
      %70 = dma.hbm_to_vmem [thread:$0]  %s66, 16, %s68, [#allocation8]
    $region21: #{transformer_forward.41} parent=1 // pred_fallthru
      _
    // Predicated region
    $region22: #{transformer_forward.41} parent=1 // pred_check
      _
    $region23: #{transformer_forward.41} parent=1 // pred_check_branch
      %72 = sbr.rel (0) target = $region25
    $region24: #{transformer_forward.41} parent=1 // pred_region
      %74 = vsyncadd [#allocation8], 0
      %s76 = sshll.u32 %s5, 4
      %s77 = int_to_ptr.hbm [resolvable:$true] %s76
      %s78 = sshll.u32 [#allocation9], 4
      %s79 = int_to_ptr.vmem [resolvable:$true] %s78
      %81 = dma.hbm_to_vmem [thread:$0]  %s77, 16, %s79, [#allocation8]
    $region25: #{transformer_forward.41} parent=1 // pred_fallthru
      _
    // Predicated region
    $region26: #{transformer_forward.41} parent=1 // pred_check
      _
    $region27: #{transformer_forward.41} parent=1 // pred_check_branch
      %83 = sbr.rel (0) target = $region29
    $region28: #{transformer_forward.41} parent=1 // pred_region
      %85 = vsyncadd [#allocation11], 0
      %s87 = sshll.u32 %s6, 4
      %s88 = int_to_ptr.hbm [resolvable:$true] %s87
      %s89 = sshll.u32 [#allocation10], 4
      %s90 = int_to_ptr.vmem [resolvable:$true] %s89
      %92 = dma.hbm_to_vmem [thread:$0]  %s88, 16, %s90, [#allocation11]
    $region29: #{transformer_forward.41} parent=1 // pred_fallthru
      _
    // Predicated region
    $region30: #{transformer_forward.41} parent=1 // pred_check
      _
    $region31: #{transformer_forward.41} parent=1 // pred_check_branch
      %94 = sbr.rel (0) target = $region33
    $region32: #{transformer_forward.41} parent=1 // pred_region
      %96 = dma.done [#allocation3], 1024
    $region33: #{transformer_forward.41} parent=1 // pred_fallthru
      _
    // Predicated region
    $region34: #{transformer_forward.41} parent=1 // pred_check
      _
    $region35: #{transformer_forward.41} parent=1 // pred_check_branch
      %98 = sbr.rel (0) target = $region37
    $region36: #{transformer_forward.41} parent=1 // pred_region
      %100 = dma.done [#allocation5], 1024
    $region37: #{transformer_forward.41} parent=1 // pred_fallthru
      _
    // Predicated region
    $region38: #{transformer_forward.41} parent=1 // pred_check
      _
    $region39: #{transformer_forward.41} parent=1 // pred_check_branch
      %102 = sbr.rel (0) target = $region41
    $region40: #{transformer_forward.41} parent=1 // pred_region
      %104 = dma.done [#allocation5], 1024
    $region41: #{transformer_forward.41} parent=1 // pred_fallthru
      _
    // Predicated region
    $region42: #{transformer_forward.41} parent=1 // pred_check
      _
    $region43: #{transformer_forward.41} parent=1 // pred_check_branch
      %106 = sbr.rel (0) target = $region45
    $region44: #{transformer_forward.41} parent=1 // pred_region
      %108 = dma.done [#allocation8], 16
    $region45: #{transformer_forward.41} parent=1 // pred_fallthru
      _
    // Predicated region
    $region46: #{transformer_forward.41} parent=1 // pred_check
      _
    $region47: #{transformer_forward.41} parent=1 // pred_check_branch
      %110 = sbr.rel (0) target = $region49
    $region48: #{transformer_forward.41} parent=1 // pred_region
      %112 = dma.done [#allocation8], 16
    $region49: #{transformer_forward.41} parent=1 // pred_fallthru
      _
    // Predicated region
    $region50: #{transformer_forward.41} parent=1 // pred_check
      _
    $region51: #{transformer_forward.41} parent=1 // pred_check_branch
      %114 = sbr.rel (0) target = $region53
    $region52: #{transformer_forward.41} parent=1 // pred_region
      %116 = dma.done [#allocation11], 16
    $region53: #{transformer_forward.41} parent=1 // pred_fallthru
      _
    %v117 = vld [vmem:[%s0] sm:$0xf]
    %v118 = vld [vmem:[%s0 + $0x4] sm:$0xf]
    %v119 = vld [vmem:[#allocation2] sm:$0xf]
    %v120 = vld [vmem:[#allocation2 + $0x4] sm:$0xf]
    %v121 = vld [vmem:[#allocation2 + $0x8] sm:$0xf]
    %v122 = vld [vmem:[#allocation2 + $0xc] sm:$0xf]
    %v123 = vld [vmem:[#allocation2 + $0x10] sm:$0xf]
    %v124 = vld [vmem:[#allocation2 + $0x14] sm:$0xf]
    %v125 = vld [vmem:[#allocation2 + $0x18] sm:$0xf]
    %v126 = vld [vmem:[#allocation2 + $0x1c] sm:$0xf]
    %v127 = vld [vmem:[#allocation2 + $0x20] sm:$0xf]
    %v128 = vld [vmem:[#allocation2 + $0x24] sm:$0xf]
    %v129 = vld [vmem:[#allocation2 + $0x28] sm:$0xf]
    %v130 = vld [vmem:[#allocation2 + $0x2c] sm:$0xf]
    %v131 = vld [vmem:[#allocation2 + $0x30] sm:$0xf]
    %v132 = vld [vmem:[#allocation2 + $0x34] sm:$0xf]
    %v133 = vld [vmem:[#allocation2 + $0x38] sm:$0xf]
    %v134 = vld [vmem:[#allocation2 + $0x3c] sm:$0xf]
    %v135 = vld [vmem:[#allocation7] sm:$0x1]
    %v137 = vperm.slane %v135, 0
    %v141 = vunpack.c.l.b16 %v117
    %v142 = vunpack.c.l.b16 %v118
    %v143 = vpack.c.b16 %v142, %v141
    %v161 = vunpack.c.l.b16 %v119
    %v162 = vunpack.c.l.b16 %v120
    %v163 = vunpack.c.l.b16 %v121
    %v164 = vunpack.c.l.b16 %v122
    %v165 = vunpack.c.l.b16 %v123
    %v166 = vunpack.c.l.b16 %v124
    %v167 = vunpack.c.l.b16 %v125
    %v168 = vunpack.c.l.b16 %v126
    %v169 = vunpack.c.l.b16 %v127
    %v170 = vunpack.c.l.b16 %v128
    %v171 = vunpack.c.l.b16 %v129
    %v172 = vunpack.c.l.b16 %v130
    %v173 = vunpack.c.l.b16 %v131
    %v174 = vunpack.c.l.b16 %v132
    %v175 = vunpack.c.l.b16 %v133
    %v176 = vunpack.c.l.b16 %v134
    %v177 = vpack.c.b16 %v162, %v161
    %v178 = vpack.c.b16 %v164, %v163
    %v179 = vpack.c.b16 %v166, %v165
    %v180 = vpack.c.b16 %v168, %v167
    %v181 = vpack.c.b16 %v170, %v169
    %v182 = vpack.c.b16 %v172, %v171
    %v183 = vpack.c.b16 %v174, %v173
    %v184 = vpack.c.b16 %v176, %v175
    %193 = vmatpush.bf16.msra.mxu0 %v184
    %194 = vmatpush.bf16.msra.mxu0 %v183
    %195 = vmatpush.bf16.msra.mxu0 %v182
    %196 = vmatpush.bf16.msra.mxu0 %v181
    %197 = vmatpush.bf16.msra.mxu0 %v180
    %198 = vmatpush.bf16.msra.mxu0 %v179
    %199 = vmatpush.bf16.msra.mxu0 %v178
    %200 = vmatpush.bf16.msra.mxu0 %v177
    %201 = vmatmul.bf16.gmra.mxu0 %v143
    %v202 = vpop.f32.mrf.mxu0
    %v203 = vadd.f32 %v137, %v202
    %v204 = vpop.f32.mrf.mxu0
    %v205 = vadd.f32 %v137, %v204
    %206 = vdwg.mxu0
    %v207 = vpack.c.bf16 %v203, %v203
    %v208 = vpack.c.bf16 %v205, %v205
    %209 = vst [vmem:[%s7] sm:$0xf] %v207
    %210 = vst [vmem:[%s7 + $0x4] sm:$0xf] %v208
    %v211 = vld [vmem:[#allocation4] sm:$0xf]
    %v212 = vld [vmem:[#allocation4 + $0x4] sm:$0xf]
    %v213 = vld [vmem:[#allocation4 + $0x8] sm:$0xf]
    %v214 = vld [vmem:[#allocation4 + $0xc] sm:$0xf]
    %v215 = vld [vmem:[#allocation4 + $0x10] sm:$0xf]
    %v216 = vld [vmem:[#allocation4 + $0x14] sm:$0xf]
    %v217 = vld [vmem:[#allocation4 + $0x18] sm:$0xf]
    %v218 = vld [vmem:[#allocation4 + $0x1c] sm:$0xf]
    %v219 = vld [vmem:[#allocation4 + $0x20] sm:$0xf]
    %v220 = vld [vmem:[#allocation4 + $0x24] sm:$0xf]
    %v221 = vld [vmem:[#allocation4 + $0x28] sm:$0xf]
    %v222 = vld [vmem:[#allocation4 + $0x2c] sm:$0xf]
    %v223 = vld [vmem:[#allocation4 + $0x30] sm:$0xf]
    %v224 = vld [vmem:[#allocation4 + $0x34] sm:$0xf]
    %v225 = vld [vmem:[#allocation4 + $0x38] sm:$0xf]
    %v226 = vld [vmem:[#allocation4 + $0x3c] sm:$0xf]
    %v227 = vld [vmem:[#allocation9] sm:$0x1]
    %v229 = vperm.slane %v227, 0
    %v247 = vunpack.c.l.b16 %v211
    %v248 = vunpack.c.l.b16 %v212
    %v249 = vunpack.c.l.b16 %v213
    %v250 = vunpack.c.l.b16 %v214
    %v251 = vunpack.c.l.b16 %v215
    %v252 = vunpack.c.l.b16 %v216
    %v253 = vunpack.c.l.b16 %v217
    %v254 = vunpack.c.l.b16 %v218
    %v255 = vunpack.c.l.b16 %v219
    %v256 = vunpack.c.l.b16 %v220
    %v257 = vunpack.c.l.b16 %v221
    %v258 = vunpack.c.l.b16 %v222
    %v259 = vunpack.c.l.b16 %v223
    %v260 = vunpack.c.l.b16 %v224
    %v261 = vunpack.c.l.b16 %v225
    %v262 = vunpack.c.l.b16 %v226
    %v263 = vpack.c.b16 %v248, %v247
    %v264 = vpack.c.b16 %v250, %v249
    %v265 = vpack.c.b16 %v252, %v251
    %v266 = vpack.c.b16 %v254, %v253
    %v267 = vpack.c.b16 %v256, %v255
    %v268 = vpack.c.b16 %v258, %v257
    %v269 = vpack.c.b16 %v260, %v259
    %v270 = vpack.c.b16 %v262, %v261
    %279 = vmatpush.bf16.msra.mxu0 %v270
    %280 = vmatpush.bf16.msra.mxu0 %v269
    %281 = vmatpush.bf16.msra.mxu0 %v268
    %282 = vmatpush.bf16.msra.mxu0 %v267
    %283 = vmatpush.bf16.msra.mxu0 %v266
    %284 = vmatpush.bf16.msra.mxu0 %v265
    %285 = vmatpush.bf16.msra.mxu0 %v264
    %286 = vmatpush.bf16.msra.mxu0 %v263
    %287 = vmatmul.bf16.gmra.mxu0 %v143
    %v288 = vpop.f32.mrf.mxu0
    %v289 = vadd.f32 %v229, %v288
    %v290 = vpop.f32.mrf.mxu0
    %v291 = vadd.f32 %v229, %v290
    %292 = vdwg.mxu0
    %v293 = vpack.c.bf16 %v289, %v289
    %v294 = vpack.c.bf16 %v291, %v291
    %295 = vst [vmem:[%s8] sm:$0xf] %v293
    %296 = vst [vmem:[%s8 + $0x4] sm:$0xf] %v294
    %v297 = vld [vmem:[#allocation6] sm:$0xf]
    %v298 = vld [vmem:[#allocation6 + $0x4] sm:$0xf]
    %v299 = vld [vmem:[#allocation6 + $0x8] sm:$0xf]
    %v300 = vld [vmem:[#allocation6 + $0xc] sm:$0xf]
    %v301 = vld [vmem:[#allocation6 + $0x10] sm:$0xf]
    %v302 = vld [vmem:[#allocation6 + $0x14] sm:$0xf]
    %v303 = vld [vmem:[#allocation6 + $0x18] sm:$0xf]
    %v304 = vld [vmem:[#allocation6 + $0x1c] sm:$0xf]
    %v305 = vld [vmem:[#allocation6 + $0x20] sm:$0xf]
    %v306 = vld [vmem:[#allocation6 + $0x24] sm:$0xf]
    %v307 = vld [vmem:[#allocation6 + $0x28] sm:$0xf]
    %v308 = vld [vmem:[#allocation6 + $0x2c] sm:$0xf]
    %v309 = vld [vmem:[#allocation6 + $0x30] sm:$0xf]
    %v310 = vld [vmem:[#allocation6 + $0x34] sm:$0xf]
    %v311 = vld [vmem:[#allocation6 + $0x38] sm:$0xf]
    %v312 = vld [vmem:[#allocation6 + $0x3c] sm:$0xf]
    %v313 = vld [vmem:[#allocation10] sm:$0x1]
    %v315 = vperm.slane %v313, 0
    %v333 = vunpack.c.l.b16 %v297
    %v334 = vunpack.c.l.b16 %v298
    %v335 = vunpack.c.l.b16 %v299
    %v336 = vunpack.c.l.b16 %v300
    %v337 = vunpack.c.l.b16 %v301
    %v338 = vunpack.c.l.b16 %v302
    %v339 = vunpack.c.l.b16 %v303
    %v340 = vunpack.c.l.b16 %v304
    %v341 = vunpack.c.l.b16 %v305
    %v342 = vunpack.c.l.b16 %v306
    %v343 = vunpack.c.l.b16 %v307
    %v344 = vunpack.c.l.b16 %v308
    %v345 = vunpack.c.l.b16 %v309
    %v346 = vunpack.c.l.b16 %v310
    %v347 = vunpack.c.l.b16 %v311
    %v348 = vunpack.c.l.b16 %v312
    %v349 = vpack.c.b16 %v334, %v333
    %v350 = vpack.c.b16 %v336, %v335
    %v351 = vpack.c.b16 %v338, %v337
    %v352 = vpack.c.b16 %v340, %v339
    %v353 = vpack.c.b16 %v342, %v341
    %v354 = vpack.c.b16 %v344, %v343
    %v355 = vpack.c.b16 %v346, %v345
    %v356 = vpack.c.b16 %v348, %v347
    %365 = vmatpush.bf16.msra.mxu0 %v356
    %366 = vmatpush.bf16.msra.mxu0 %v355
    %367 = vmatpush.bf16.msra.mxu0 %v354
    %368 = vmatpush.bf16.msra.mxu0 %v353
    %369 = vmatpush.bf16.msra.mxu0 %v352
    %370 = vmatpush.bf16.msra.mxu0 %v351
    %371 = vmatpush.bf16.msra.mxu0 %v350
    %372 = vmatpush.bf16.msra.mxu0 %v349
    %373 = vmatmul.bf16.gmra.mxu0 %v143
    %v374 = vpop.f32.mrf.mxu0
    %v375 = vadd.f32 %v315, %v374
    %v376 = vpop.f32.mrf.mxu0
    %v377 = vadd.f32 %v315, %v376
    %378 = vdwg.mxu0
    %v379 = vpack.c.bf16 %v375, %v375
    %v380 = vpack.c.bf16 %v377, %v377
    %381 = vst [vmem:[%s9] sm:$0xf] %v379
    %382 = vst [vmem:[%s9 + $0x4] sm:$0xf] %v380
    // Predicated region
    $region54: #{transformer_forward.41} parent=1 // pred_check
      _
    $region55: #{transformer_forward.41} parent=1 // pred_check_branch
      %384 = sbr.rel (0) target = $region57
    $region56: #{transformer_forward.41} parent=1 // pred_region
      _
    $region57: #{transformer_forward.41} parent=1 // pred_fallthru
      _
    // Predicated region
    $region58: #{transformer_forward.41} parent=1 // pred_check
      _
    $region59: #{transformer_forward.41} parent=1 // pred_check_branch
      %386 = sbr.rel (0) target = $region61
    $region60: #{transformer_forward.41} parent=1 // pred_region
      _
    $region61: #{transformer_forward.41} parent=1 // pred_fallthru
      _
    // Predicated region
    $region62: #{transformer_forward.41} parent=1 // pred_check
      _
    $region63: #{transformer_forward.41} parent=1 // pred_check_branch
      %388 = sbr.rel (0) target = $region65
    $region64: #{transformer_forward.41} parent=1 // pred_region
      _
    $region65: #{transformer_forward.41} parent=1 // pred_fallthru
      _
    // Predicated region
    $region66: #{transformer_forward.41} parent=1 // pred_check
      _
    $region67: #{transformer_forward.41} parent=1 // pred_check_branch
      %390 = sbr.rel (0) target = $region69
    $region68: #{transformer_forward.41} parent=1 // pred_region
      _
    $region69: #{transformer_forward.41} parent=1 // pred_fallthru
      _
    // Predicated region
    $region70: #{transformer_forward.41} parent=1 // pred_check
      _
    $region71: #{transformer_forward.41} parent=1 // pred_check_branch
      %392 = sbr.rel (0) target = $region73
    $region72: #{transformer_forward.41} parent=1 // pred_region
      _
    $region73: #{transformer_forward.41} parent=1 // pred_fallthru
      _
    // Predicated region
    $region74: #{transformer_forward.41} parent=1 // pred_check
      _
    $region75: #{transformer_forward.41} parent=1 // pred_check_branch
      %394 = sbr.rel (0) target = $region77
    $region76: #{transformer_forward.41} parent=1 // pred_region
      _
    $region77: #{transformer_forward.41} parent=1 // pred_fallthru
      _
    %395 = vsyncpa [#allocation3], 1
    %396 = vsyncpa [#allocation5], 1
    %397 = vsyncpa [#allocation8], 1
    %398 = vsyncpa [#allocation11], 1

// kernel: transformer_forward.45
$region0: #{transformer_forward.45}
  #allocation0 [shape = 'u32[]', space=smem, size = 0x4, offset = 0x4, fixed_abs, tag = 'smem constant byte address 0x4 - core index']
  #allocation1 [shape = 'u32[72,128]{1,0:T(1,128)}', space=vmem, size = 0x9000, scoped, tag = 'internal scratch']
  %s0 = inlined_call_operand.vmem [shape: bf16[20,128], index: 0, kind: input, shape index: {}]
  %s1 = inlined_call_operand.hbm [shape: bf16[128,128], index: 1, kind: input, shape index: {}]
  %s2 = inlined_call_operand.hbm [shape: bf16[128,128], index: 2, kind: input, shape index: {}]
  %s3 = inlined_call_operand.hbm [shape: f32[1,128], index: 3, kind: input, shape index: {}]
  %s4 = inlined_call_operand.hbm [shape: f32[1,128], index: 4, kind: input, shape index: {}]
  %s5 = inlined_call_operand.vmem [shape: bf16[20,128], index: 5, kind: output, shape index: {0}]
  %s6 = inlined_call_operand.vmem [shape: bf16[20,128], index: 6, kind: output, shape index: {1}]
  %7 = xla_tuple %s5, %s6
  %s8 = sld [smem:[#allocation0]]
  $region54: #{transformer_forward.45} parent=0
    _
  %s10 = ssub.s32 1, %s8
  %s11 = scalar_select 0, %s10, %s8
  $region1: #{transformer_forward.45} parent=0
    #allocation2 [shape = 'u8[32768]{0}', space=vmem, size = 0x8000, scoped, tag = 'input window, operand 1, single buffered']
    #allocation3 [shape = 's32[1]{0}', space=sflag, size = 0x4, scoped, tag = 'scoped memory for transformer_forward.45']
    #allocation4 [shape = 'u8[32768]{0}', space=vmem, size = 0x8000, scoped, tag = 'input window, operand 2, single buffered']
    #allocation5 [shape = 's32[1]{0}', space=sflag, size = 0x4, scoped, tag = 'scoped memory for transformer_forward.45']
    #allocation6 [shape = 'u8[512]{0}', space=vmem, size = 0x400, scoped, tag = 'input window, operand 3, single buffered']
    #allocation7 [shape = 'u8[512]{0}', space=vmem, size = 0x400, scoped, tag = 'input window, operand 4, single buffered']
    #allocation8 [shape = 's32[1]{0}', space=sflag, size = 0x4, scoped, tag = 'scoped memory for transformer_forward.45']
    %12 = vsyncpa [#allocation3], 0
    %13 = vsyncpa [#allocation5], 0
    %14 = vsyncpa [#allocation8], 0
    // Predicated region
    $region2: #{transformer_forward.45} parent=1 // pred_check
      _
    $region3: #{transformer_forward.45} parent=1 // pred_check_branch
      %16 = sbr.rel (0) target = $region5
    $region4: #{transformer_forward.45} parent=1 // pred_region
      _
    $region5: #{transformer_forward.45} parent=1 // pred_fallthru
      _
    // Predicated region
    $region6: #{transformer_forward.45} parent=1 // pred_check
      _
    $region7: #{transformer_forward.45} parent=1 // pred_check_branch
      %18 = sbr.rel (0) target = $region9
    $region8: #{transformer_forward.45} parent=1 // pred_region
      %20 = vsyncadd [#allocation3], 0
      %s21 = sshll.u32 %s1, 4
      %s22 = int_to_ptr.hbm [resolvable:$true] %s21
      %s23 = sshll.u32 [#allocation2], 4
      %s24 = int_to_ptr.vmem [resolvable:$true] %s23
      %29 = dma.hbm_to_vmem [thread:$0]  %s22, 1024, %s24, [#allocation3], 64, 64, 4
    $region9: #{transformer_forward.45} parent=1 // pred_fallthru
      _
    // Predicated region
    $region10: #{transformer_forward.45} parent=1 // pred_check
      _
    $region11: #{transformer_forward.45} parent=1 // pred_check_branch
      %31 = sbr.rel (0) target = $region13
    $region12: #{transformer_forward.45} parent=1 // pred_region
      %33 = vsyncadd [#allocation5], 0
      %s34 = sshll.u32 %s2, 4
      %s35 = int_to_ptr.hbm [resolvable:$true] %s34
      %s36 = sshll.u32 [#allocation4], 4
      %s37 = int_to_ptr.vmem [resolvable:$true] %s36
      %42 = dma.hbm_to_vmem [thread:$0]  %s35, 1024, %s37, [#allocation5], 64, 64, 4
    $region13: #{transformer_forward.45} parent=1 // pred_fallthru
      _
    // Predicated region
    $region14: #{transformer_forward.45} parent=1 // pred_check
      _
    $region15: #{transformer_forward.45} parent=1 // pred_check_branch
      %44 = sbr.rel (0) target = $region17
    $region16: #{transformer_forward.45} parent=1 // pred_region
      %46 = vsyncadd [#allocation5], 0
      %s48 = sshll.u32 %s3, 4
      %s49 = int_to_ptr.hbm [resolvable:$true] %s48
      %s50 = sshll.u32 [#allocation6], 4
      %s51 = int_to_ptr.vmem [resolvable:$true] %s50
      %53 = dma.hbm_to_vmem [thread:$0]  %s49, 16, %s51, [#allocation5]
    $region17: #{transformer_forward.45} parent=1 // pred_fallthru
      _
    // Predicated region
    $region18: #{transformer_forward.45} parent=1 // pred_check
      _
    $region19: #{transformer_forward.45} parent=1 // pred_check_branch
      %55 = sbr.rel (0) target = $region21
    $region20: #{transformer_forward.45} parent=1 // pred_region
      %57 = vsyncadd [#allocation8], 0
      %s59 = sshll.u32 %s4, 4
      %s60 = int_to_ptr.hbm [resolvable:$true] %s59
      %s61 = sshll.u32 [#allocation7], 4
      %s62 = int_to_ptr.vmem [resolvable:$true] %s61
      %64 = dma.hbm_to_vmem [thread:$0]  %s60, 16, %s62, [#allocation8]
    $region21: #{transformer_forward.45} parent=1 // pred_fallthru
      _
    // Predicated region
    $region22: #{transformer_forward.45} parent=1 // pred_check
      _
    $region23: #{transformer_forward.45} parent=1 // pred_check_branch
      %66 = sbr.rel (0) target = $region25
    $region24: #{transformer_forward.45} parent=1 // pred_region
      %68 = dma.done [#allocation3], 1024
    $region25: #{transformer_forward.45} parent=1 // pred_fallthru
      _
    // Predicated region
    $region26: #{transformer_forward.45} parent=1 // pred_check
      _
    $region27: #{transformer_forward.45} parent=1 // pred_check_branch
      %70 = sbr.rel (0) target = $region29
    $region28: #{transformer_forward.45} parent=1 // pred_region
      %72 = dma.done [#allocation5], 1024
    $region29: #{transformer_forward.45} parent=1 // pred_fallthru
      _
    // Predicated region
    $region30: #{transformer_forward.45} parent=1 // pred_check
      _
    $region31: #{transformer_forward.45} parent=1 // pred_check_branch
      %74 = sbr.rel (0) target = $region33
    $region32: #{transformer_forward.45} parent=1 // pred_region
      %76 = dma.done [#allocation5], 16
    $region33: #{transformer_forward.45} parent=1 // pred_fallthru
      _
    // Predicated region
    $region34: #{transformer_forward.45} parent=1 // pred_check
      _
    $region35: #{transformer_forward.45} parent=1 // pred_check_branch
      %78 = sbr.rel (0) target = $region37
    $region36: #{transformer_forward.45} parent=1 // pred_region
      %80 = dma.done [#allocation8], 16
    $region37: #{transformer_forward.45} parent=1 // pred_fallthru
      _
    %v81 = vld [vmem:[%s0] sm:$0xf]
    %v82 = vld [vmem:[%s0 + $0x4] sm:$0xf]
    %v83 = vld [vmem:[%s0 + $0x8] sm:$0x3]
    %v84 = vld [vmem:[#allocation2] sm:$0xf]
    %v85 = vld [vmem:[#allocation2 + $0x4] sm:$0xf]
    %v86 = vld [vmem:[#allocation2 + $0x8] sm:$0xf]
    %v87 = vld [vmem:[#allocation2 + $0xc] sm:$0xf]
    %v88 = vld [vmem:[#allocation2 + $0x10] sm:$0xf]
    %v89 = vld [vmem:[#allocation2 + $0x14] sm:$0xf]
    %v90 = vld [vmem:[#allocation2 + $0x18] sm:$0xf]
    %v91 = vld [vmem:[#allocation2 + $0x1c] sm:$0xf]
    %v92 = vld [vmem:[#allocation2 + $0x20] sm:$0xf]
    %v93 = vld [vmem:[#allocation2 + $0x24] sm:$0xf]
    %v94 = vld [vmem:[#allocation2 + $0x28] sm:$0xf]
    %v95 = vld [vmem:[#allocation2 + $0x2c] sm:$0xf]
    %v96 = vld [vmem:[#allocation2 + $0x30] sm:$0xf]
    %v97 = vld [vmem:[#allocation2 + $0x34] sm:$0xf]
    %v98 = vld [vmem:[#allocation2 + $0x38] sm:$0xf]
    %v99 = vld [vmem:[#allocation2 + $0x3c] sm:$0xf]
    %v100 = vld [vmem:[#allocation6] sm:$0x1]
    %v102 = vperm.slane %v100, 0
    %v107 = vunpack.c.l.b16 %v81
    %v108 = vunpack.c.l.b16 %v82
    %v109 = vunpack.c.l.b16 %v83
    %v110 = vpack.c.b16 %v108, %v107
    %v111 = vpack.c.b16 %v109, %v109
    %v130 = vunpack.c.l.b16 %v84
    %v131 = vunpack.c.l.b16 %v85
    %v132 = vunpack.c.l.b16 %v86
    %v133 = vunpack.c.l.b16 %v87
    %v134 = vunpack.c.l.b16 %v88
    %v135 = vunpack.c.l.b16 %v89
    %v136 = vunpack.c.l.b16 %v90
    %v137 = vunpack.c.l.b16 %v91
    %v138 = vunpack.c.l.b16 %v92
    %v139 = vunpack.c.l.b16 %v93
    %v140 = vunpack.c.l.b16 %v94
    %v141 = vunpack.c.l.b16 %v95
    %v142 = vunpack.c.l.b16 %v96
    %v143 = vunpack.c.l.b16 %v97
    %v144 = vunpack.c.l.b16 %v98
    %v145 = vunpack.c.l.b16 %v99
    %v146 = vpack.c.b16 %v131, %v130
    %v147 = vpack.c.b16 %v133, %v132
    %v148 = vpack.c.b16 %v135, %v134
    %v149 = vpack.c.b16 %v137, %v136
    %v150 = vpack.c.b16 %v139, %v138
    %v151 = vpack.c.b16 %v141, %v140
    %v152 = vpack.c.b16 %v143, %v142
    %v153 = vpack.c.b16 %v145, %v144
    %162 = vmatpush.bf16.msra.mxu0 %v153
    %163 = vmatpush.bf16.msra.mxu0 %v152
    %164 = vmatpush.bf16.msra.mxu0 %v151
    %165 = vmatpush.bf16.msra.mxu0 %v150
    %166 = vmatpush.bf16.msra.mxu0 %v149
    %167 = vmatpush.bf16.msra.mxu0 %v148
    %168 = vmatpush.bf16.msra.mxu0 %v147
    %169 = vmatpush.bf16.msra.mxu0 %v146
    %170 = vmatmul.bf16.gmra.mxu0 %v110
    %v171 = vpop.f32.mrf.mxu0
    %v172 = vadd.f32 %v102, %v171
    %v173 = vpop.f32.mrf.mxu0
    %v174 = vadd.f32 %v102, %v173
    %175 = vmatmul.bf16.gmra.mxu0 %v111
    %v176 = vpop.f32.mrf.mxu0
    %v177 = vadd.f32 %v102, %v176
    %v178 = vpop.f32.mrf.mxu0
    %179 = vdwg.mxu0
    %v180 = vpack.c.bf16 %v172, %v172
    %v181 = vpack.c.bf16 %v174, %v174
    %v182 = vpack.c.bf16 %v177, %v177
    %183 = vst [vmem:[%s5] sm:$0xf] %v180
    %184 = vst [vmem:[%s5 + $0x4] sm:$0xf] %v181
    %185 = vst [vmem:[%s5 + $0x8] sm:$0x3] %v182
    %v186 = vld [vmem:[#allocation4] sm:$0xf]
    %v187 = vld [vmem:[#allocation4 + $0x4] sm:$0xf]
    %v188 = vld [vmem:[#allocation4 + $0x8] sm:$0xf]
    %v189 = vld [vmem:[#allocation4 + $0xc] sm:$0xf]
    %v190 = vld [vmem:[#allocation4 + $0x10] sm:$0xf]
    %v191 = vld [vmem:[#allocation4 + $0x14] sm:$0xf]
    %v192 = vld [vmem:[#allocation4 + $0x18] sm:$0xf]
    %v193 = vld [vmem:[#allocation4 + $0x1c] sm:$0xf]
    %v194 = vld [vmem:[#allocation4 + $0x20] sm:$0xf]
    %v195 = vld [vmem:[#allocation4 + $0x24] sm:$0xf]
    %v196 = vld [vmem:[#allocation4 + $0x28] sm:$0xf]
    %v197 = vld [vmem:[#allocation4 + $0x2c] sm:$0xf]
    %v198 = vld [vmem:[#allocation4 + $0x30] sm:$0xf]
    %v199 = vld [vmem:[#allocation4 + $0x34] sm:$0xf]
    %v200 = vld [vmem:[#allocation4 + $0x38] sm:$0xf]
    %v201 = vld [vmem:[#allocation4 + $0x3c] sm:$0xf]
    %v202 = vld [vmem:[#allocation7] sm:$0x1]
    %v204 = vperm.slane %v202, 0
    %v222 = vunpack.c.l.b16 %v186
    %v223 = vunpack.c.l.b16 %v187
    %v224 = vunpack.c.l.b16 %v188
    %v225 = vunpack.c.l.b16 %v189
    %v226 = vunpack.c.l.b16 %v190
    %v227 = vunpack.c.l.b16 %v191
    %v228 = vunpack.c.l.b16 %v192
    %v229 = vunpack.c.l.b16 %v193
    %v230 = vunpack.c.l.b16 %v194
    %v231 = vunpack.c.l.b16 %v195
    %v232 = vunpack.c.l.b16 %v196
    %v233 = vunpack.c.l.b16 %v197
    %v234 = vunpack.c.l.b16 %v198
    %v235 = vunpack.c.l.b16 %v199
    %v236 = vunpack.c.l.b16 %v200
    %v237 = vunpack.c.l.b16 %v201
    %v238 = vpack.c.b16 %v223, %v222
    %v239 = vpack.c.b16 %v225, %v224
    %v240 = vpack.c.b16 %v227, %v226
    %v241 = vpack.c.b16 %v229, %v228
    %v242 = vpack.c.b16 %v231, %v230
    %v243 = vpack.c.b16 %v233, %v232
    %v244 = vpack.c.b16 %v235, %v234
    %v245 = vpack.c.b16 %v237, %v236
    %254 = vmatpush.bf16.msra.mxu0 %v245
    %255 = vmatpush.bf16.msra.mxu0 %v244
    %256 = vmatpush.bf16.msra.mxu0 %v243
    %257 = vmatpush.bf16.msra.mxu0 %v242
    %258 = vmatpush.bf16.msra.mxu0 %v241
    %259 = vmatpush.bf16.msra.mxu0 %v240
    %260 = vmatpush.bf16.msra.mxu0 %v239
    %261 = vmatpush.bf16.msra.mxu0 %v238
    %262 = vmatmul.bf16.gmra.mxu0 %v110
    %v263 = vpop.f32.mrf.mxu0
    %v264 = vadd.f32 %v204, %v263
    %v265 = vpop.f32.mrf.mxu0
    %v266 = vadd.f32 %v204, %v265
    %267 = vmatmul.bf16.gmra.mxu0 %v111
    %v268 = vpop.f32.mrf.mxu0
    %v269 = vadd.f32 %v204, %v268
    %v270 = vpop.f32.mrf.mxu0
    %271 = vdwg.mxu0
    %v272 = vpack.c.bf16 %v264, %v264
    %v273 = vpack.c.bf16 %v266, %v266
    %v274 = vpack.c.bf16 %v269, %v269
    %275 = vst [vmem:[%s6] sm:$0xf] %v272
    %276 = vst [vmem:[%s6 + $0x4] sm:$0xf] %v273
    %277 = vst [vmem:[%s6 + $0x8] sm:$0x3] %v274
    // Predicated region
    $region38: #{transformer_forward.45} parent=1 // pred_check
      _
    $region39: #{transformer_forward.45} parent=1 // pred_check_branch
      %279 = sbr.rel (0) target = $region41
    $region40: #{transformer_forward.45} parent=1 // pred_region
      _
    $region41: #{transformer_forward.45} parent=1 // pred_fallthru
      _
    // Predicated region
    $region42: #{transformer_forward.45} parent=1 // pred_check
      _
    $region43: #{transformer_forward.45} parent=1 // pred_check_branch
      %281 = sbr.rel (0) target = $region45
    $region44: #{transformer_forward.45} parent=1 // pred_region
      _
    $region45: #{transformer_forward.45} parent=1 // pred_fallthru
      _
    // Predicated region
    $region46: #{transformer_forward.45} parent=1 // pred_check
      _
    $region47: #{transformer_forward.45} parent=1 // pred_check_branch
      %283 = sbr.rel (0) target = $region49
    $region48: #{transformer_forward.45} parent=1 // pred_region
      _
    $region49: #{transformer_forward.45} parent=1 // pred_fallthru
      _
    // Predicated region
    $region50: #{transformer_forward.45} parent=1 // pred_check
      _
    $region51: #{transformer_forward.45} parent=1 // pred_check_branch
      %285 = sbr.rel (0) target = $region53
    $region52: #{transformer_forward.45} parent=1 // pred_region
      _
    $region53: #{transformer_forward.45} parent=1 // pred_fallthru
      _
    %286 = vsyncpa [#allocation3], 1
    %287 = vsyncpa [#allocation5], 1
    %288 = vsyncpa [#allocation8], 1

// kernel: transformer_forward.49
$region0: #{transformer_forward.49}
  #allocation0 [shape = 'u32[]', space=smem, size = 0x4, offset = 0x4, fixed_abs, tag = 'smem constant byte address 0x4 - core index']
  #allocation1 [shape = 'u32[72,128]{1,0:T(1,128)}', space=vmem, size = 0x9000, scoped, tag = 'internal scratch']
  #allocation2 [shape = 'f32[16,1]{1,0:T(8,128)}', space=vmem, size = 0x2000, scoped, tag = 'scratch operand']
  #allocation3 [shape = 'f32[16,1]{1,0:T(8,128)}', space=vmem, size = 0x2000, scoped, tag = 'scratch operand']
  #allocation4 [shape = 'f32[16,1]{1,0:T(8,128)}', space=vmem, size = 0x2000, scoped, tag = 'scratch operand']
  #allocation5 [shape = 'f32[16,1]{1,0:T(8,128)}', space=vmem, size = 0x2000, scoped, tag = 'scratch operand']
  %s0 = inlined_call_operand.vmem [shape: bf16[16,128], index: 0, kind: input, shape index: {}]
  %s1 = inlined_call_operand.vmem [shape: bf16[128,256], index: 1, kind: input, shape index: {}]
  %s2 = inlined_call_operand.vmem [shape: f32[1,256], index: 2, kind: input, shape index: {}]
  %s3 = inlined_call_operand.vmem [shape: s32[16,1], index: 3, kind: input, shape index: {}]
  %s4 = inlined_call_operand.vmem [shape: f32[16,256], index: 4, kind: output, shape index: {0}]
  %s5 = inlined_call_operand.vmem [shape: f32[16,1], index: 5, kind: output, shape index: {1}]
  %s6 = inlined_call_operand.vmem [shape: f32[16,1], index: 6, kind: output, shape index: {2}]
  %s7 = inlined_call_operand.vmem [shape: f32[16,1], index: 7, kind: output, shape index: {3}]
  %8 = xla_tuple %s4, %s5, %s6, %s7
  %s9 = sld [smem:[#allocation0]]
  $region58: #{transformer_forward.49} parent=0
    _
  %s11 = ssub.s32 1, %s9
  %s12 = scalar_select 0, %s11, %s9
  // Predicated region
  $region2: #{transformer_forward.49} parent=0 // pred_check
    _
  $region3: #{transformer_forward.49} parent=0 // pred_check_branch
    %14 = sbr.rel (0) target = $region5
  $region4: #{transformer_forward.49} parent=0 // pred_region
    _
  $region5: #{transformer_forward.49} parent=0 // pred_fallthru
    _
  // Predicated region
  $region6: #{transformer_forward.49} parent=0 // pred_check
    _
  $region7: #{transformer_forward.49} parent=0 // pred_check_branch
    %16 = sbr.rel (0) target = $region9
  $region8: #{transformer_forward.49} parent=0 // pred_region
    _
  $region9: #{transformer_forward.49} parent=0 // pred_fallthru
    _
  // Predicated region
  $region10: #{transformer_forward.49} parent=0 // pred_check
    _
  $region11: #{transformer_forward.49} parent=0 // pred_check_branch
    %18 = sbr.rel (0) target = $region13
  $region12: #{transformer_forward.49} parent=0 // pred_region
    _
  $region13: #{transformer_forward.49} parent=0 // pred_fallthru
    _
  // Predicated region
  $region14: #{transformer_forward.49} parent=0 // pred_check
    _
  $region15: #{transformer_forward.49} parent=0 // pred_check_branch
    %20 = sbr.rel (0) target = $region17
  $region16: #{transformer_forward.49} parent=0 // pred_region
    _
  $region17: #{transformer_forward.49} parent=0 // pred_fallthru
    _
  %p21 = scmp.eq.s32.totalorder 0, 0
  // Predicated region
  $region18: #{transformer_forward.49} parent=0 // pred_check
    %p22 = pneg %p21
  $region19: #{transformer_forward.49} parent=0 // pred_check_branch
    %24 = sbr.rel (%p22) target = $region21
  $region20: #{transformer_forward.49} parent=0 // pred_region
    %vm25 = vcmask 7168
    %26 = vst.msk [vmem:[#allocation2] sm:$0xff] %vm25, -1e+09
    %27 = vst.msk [vmem:[#allocation2 + $0x8] sm:$0xff] %vm25, -1e+09
    %28 = vst.msk [vmem:[#allocation3] sm:$0xff] %vm25, 0.0
    %29 = vst.msk [vmem:[#allocation3 + $0x8] sm:$0xff] %vm25, 0.0
    %30 = vst.msk [vmem:[#allocation4] sm:$0xff] %vm25, 0.0
    %31 = vst.msk [vmem:[#allocation4 + $0x8] sm:$0xff] %vm25, 0.0
    %32 = vst.msk [vmem:[#allocation5] sm:$0xff] %vm25, 0.0
    %33 = vst.msk [vmem:[#allocation5 + $0x8] sm:$0xff] %vm25, 0.0
  $region21: #{transformer_forward.49} parent=0 // pred_fallthru
    _
  %v34 = vld [vmem:[%s0] sm:$0xf]
  %v35 = vld [vmem:[%s0 + $0x4] sm:$0xf]
  %v36 = vld [vmem:[%s1] sm:$0xff]
  %v37 = vld [vmem:[%s1 + $0x8] sm:$0xff]
  %v38 = vld [vmem:[%s1 + $0x10] sm:$0xff]
  %v39 = vld [vmem:[%s1 + $0x18] sm:$0xff]
  %v40 = vld [vmem:[%s1 + $0x20] sm:$0xff]
  %v41 = vld [vmem:[%s1 + $0x28] sm:$0xff]
  %v42 = vld [vmem:[%s1 + $0x30] sm:$0xff]
  %v43 = vld [vmem:[%s1 + $0x38] sm:$0xff]
  %v44 = vld [vmem:[%s1 + $0x40] sm:$0xff]
  %v45 = vld [vmem:[%s1 + $0x48] sm:$0xff]
  %v46 = vld [vmem:[%s1 + $0x50] sm:$0xff]
  %v47 = vld [vmem:[%s1 + $0x58] sm:$0xff]
  %v48 = vld [vmem:[%s1 + $0x60] sm:$0xff]
  %v49 = vld [vmem:[%s1 + $0x68] sm:$0xff]
  %v50 = vld [vmem:[%s1 + $0x70] sm:$0xff]
  %v51 = vld [vmem:[%s1 + $0x78] sm:$0xff]
  %v52 = vld [vmem:[%s2] sm:$0x3]
  %v54 = vperm.slane %v52, 0
  %v55 = vperm.slane %v52, 1
  %v60 = vunpack.c.l.b16 %v34
  %v61 = vunpack.c.l.b16 %v35
  %v62 = vpack.c.b16 %v61, %v60
  %v80 = vunpack.c.l.b16 %v36
  %v81 = vunpack.c.h.b16 %v36
  %v82 = vunpack.c.l.b16 %v37
  %v83 = vunpack.c.h.b16 %v37
  %v84 = vunpack.c.l.b16 %v38
  %v85 = vunpack.c.h.b16 %v38
  %v86 = vunpack.c.l.b16 %v39
  %v87 = vunpack.c.h.b16 %v39
  %v88 = vunpack.c.l.b16 %v40
  %v89 = vunpack.c.h.b16 %v40
  %v90 = vunpack.c.l.b16 %v41
  %v91 = vunpack.c.h.b16 %v41
  %v92 = vunpack.c.l.b16 %v42
  %v93 = vunpack.c.h.b16 %v42
  %v94 = vunpack.c.l.b16 %v43
  %v95 = vunpack.c.h.b16 %v43
  %v96 = vunpack.c.l.b16 %v44
  %v97 = vunpack.c.h.b16 %v44
  %v98 = vunpack.c.l.b16 %v45
  %v99 = vunpack.c.h.b16 %v45
  %v100 = vunpack.c.l.b16 %v46
  %v101 = vunpack.c.h.b16 %v46
  %v102 = vunpack.c.l.b16 %v47
  %v103 = vunpack.c.h.b16 %v47
  %v104 = vunpack.c.l.b16 %v48
  %v105 = vunpack.c.h.b16 %v48
  %v106 = vunpack.c.l.b16 %v49
  %v107 = vunpack.c.h.b16 %v49
  %v108 = vunpack.c.l.b16 %v50
  %v109 = vunpack.c.h.b16 %v50
  %v110 = vunpack.c.l.b16 %v51
  %v111 = vunpack.c.h.b16 %v51
  %v112 = vpack.c.b16 %v82, %v80
  %v113 = vpack.c.b16 %v83, %v81
  %v114 = vpack.c.b16 %v86, %v84
  %v115 = vpack.c.b16 %v87, %v85
  %v116 = vpack.c.b16 %v90, %v88
  %v117 = vpack.c.b16 %v91, %v89
  %v118 = vpack.c.b16 %v94, %v92
  %v119 = vpack.c.b16 %v95, %v93
  %v120 = vpack.c.b16 %v98, %v96
  %v121 = vpack.c.b16 %v99, %v97
  %v122 = vpack.c.b16 %v102, %v100
  %v123 = vpack.c.b16 %v103, %v101
  %v124 = vpack.c.b16 %v106, %v104
  %v125 = vpack.c.b16 %v107, %v105
  %v126 = vpack.c.b16 %v110, %v108
  %v127 = vpack.c.b16 %v111, %v109
  %144 = vmatpush.bf16.msra.mxu0 %v126
  %145 = vmatpush.bf16.msra.mxu0 %v124
  %146 = vmatpush.bf16.msra.mxu0 %v122
  %147 = vmatpush.bf16.msra.mxu0 %v120
  %148 = vmatpush.bf16.msra.mxu0 %v118
  %149 = vmatpush.bf16.msra.mxu0 %v116
  %150 = vmatpush.bf16.msra.mxu0 %v114
  %151 = vmatpush.bf16.msra.mxu0 %v112
  %152 = vmatmul.bf16.gmra.mxu0 %v62
  %v153 = vpop.f32.mrf.mxu0
  %v154 = vadd.f32 %v54, %v153
  %v155 = vpop.f32.mrf.mxu0
  %v156 = vadd.f32 %v54, %v155
  %157 = vdwg.mxu0
  %158 = vmatpush.bf16.msra.mxu0 %v127
  %159 = vmatpush.bf16.msra.mxu0 %v125
  %160 = vmatpush.bf16.msra.mxu0 %v123
  %161 = vmatpush.bf16.msra.mxu0 %v121
  %162 = vmatpush.bf16.msra.mxu0 %v119
  %163 = vmatpush.bf16.msra.mxu0 %v117
  %164 = vmatpush.bf16.msra.mxu0 %v115
  %165 = vmatpush.bf16.msra.mxu0 %v113
  %166 = vmatmul.bf16.gmra.mxu0 %v62
  %v167 = vpop.f32.mrf.mxu0
  %v168 = vadd.f32 %v55, %v167
  %v169 = vpop.f32.mrf.mxu0
  %v170 = vadd.f32 %v55, %v169
  %171 = vdwg.mxu0
  %172 = vst [vmem:[%s4] sm:$0xff] %v154
  %173 = vst [vmem:[%s4 + $0x8] sm:$0xff] %v168
  %174 = vst [vmem:[%s4 + $0x10] sm:$0xff] %v156
  %175 = vst [vmem:[%s4 + $0x18] sm:$0xff] %v170
  %s176 = smul.u32 0, 256
  %v177 = vlaneseq
  %v178 = vand.u32 %v177, 127
  %v179 = vadd.s32 %v178, 128
  %v180 = vstv %s176
  %v181 = vadd.s32 %v180, %v178
  %v182 = vadd.s32 %v180, %v179
  %v183 = vld [vmem:[#allocation2] sm:$0xff]
  %v184 = vld [vmem:[#allocation2 + $0x8] sm:$0xff]
  %v185 = vmax.f32 %v154, %v168
  %186 = vmax.xlane.f32.xlu0 %v185
  %v187 = vpop.xlane.xlu0 %186
  %v188 = vmax.f32 %v156, %v170
  %189 = vmax.xlane.f32.xlu0 %v188
  %v190 = vpop.xlane.xlu0 %189
  %v191 = vmax.f32 %v183, %v187
  %v192 = vmax.f32 %v184, %v190
  %v193 = vld [vmem:[#allocation3] sm:$0xff]
  %v194 = vld [vmem:[#allocation3 + $0x8] sm:$0xff]
  %v195 = vsub.f32 %v183, %v191
  %v196 = vsub.f32 %v184, %v192
  %v197 = vmul.f32 %v195, 1.442695
  %v198 = vpow.pop %v197
  %v199 = vmul.f32 %v196, 1.442695
  %v200 = vpow.pop %v199
  %v201 = vmul.f32 %v193, %v198
  %v202 = vmul.f32 %v194, %v200
  %204 = vset.pattern.permute.xlu0 0
  %205 = vperm.xlu0 %204, %v191
  %v206 = vpop.permute.xlu0 %205
  %209 = vset.pattern.permute.xlu0 0
  %210 = vperm.xlu0 %209, %v192
  %v211 = vpop.permute.xlu0 %210
  %v213 = vsub.f32 %v154, %v206
  %v214 = vsub.f32 %v168, %v206
  %v215 = vsub.f32 %v156, %v211
  %v216 = vsub.f32 %v170, %v211
  %v217 = vmul.f32 %v213, 1.442695
  %v218 = vpow.pop %v217
  %v219 = vmul.f32 %v214, 1.442695
  %v220 = vpow.pop %v219
  %v221 = vmul.f32 %v215, 1.442695
  %v222 = vpow.pop %v221
  %v223 = vmul.f32 %v216, 1.442695
  %v224 = vpow.pop %v223
  %v225 = vadd.f32 %v218, %v220
  %226 = vadd.xlane.f32.xlu0 %v225
  %v227 = vpop.xlane.xlu0 %226
  %v228 = vadd.f32 %v222, %v224
  %229 = vadd.xlane.f32.xlu0 %v228
  %v230 = vpop.xlane.xlu0 %229
  %v231 = vadd.f32 %v201, %v227
  %v232 = vadd.f32 %v202, %v230
  %vm233 = vcmask 7168
  %234 = vst.msk [vmem:[#allocation3] sm:$0xff] %vm233, %v231
  %235 = vst.msk [vmem:[#allocation3 + $0x8] sm:$0xff] %vm233, %v232
  %236 = vst.msk [vmem:[#allocation2] sm:$0xff] %vm233, %v191
  %237 = vst.msk [vmem:[#allocation2 + $0x8] sm:$0xff] %vm233, %v192
  %v238 = vld [vmem:[#allocation4] sm:$0xff]
  %v239 = vld [vmem:[#allocation4 + $0x8] sm:$0xff]
  %v240 = vadd.f32 %v154, %v168
  %241 = vadd.xlane.f32.xlu0 %v240
  %v242 = vpop.xlane.xlu0 %241
  %v243 = vadd.f32 %v156, %v170
  %244 = vadd.xlane.f32.xlu0 %v243
  %v245 = vpop.xlane.xlu0 %244
  %v246 = vadd.f32 %v238, %v242
  %v247 = vadd.f32 %v239, %v245
  %248 = vst.msk [vmem:[#allocation4] sm:$0xff] %vm233, %v246
  %249 = vst.msk [vmem:[#allocation4 + $0x8] sm:$0xff] %vm233, %v247
  %v250 = vld [vmem:[#allocation5] sm:$0xff]
  %v251 = vld [vmem:[#allocation5 + $0x8] sm:$0xff]
  %v252 = vld [vmem:[%s3] sm:$0xff]
  %v253 = vld [vmem:[%s3 + $0x8] sm:$0xff]
  %254 = vset.pattern.permute.xlu0 0
  %255 = vperm.xlu0 %254, %v252
  %v256 = vpop.permute.xlu0 %255
  %257 = vset.pattern.permute.xlu0 0
  %258 = vperm.xlu0 %257, %v253
  %v259 = vpop.permute.xlu0 %258
  %vm260 = vcmp.eq.s32.totalorder %v181, %v256
  %vm261 = vcmp.eq.s32.totalorder %v182, %v256
  %vm262 = vcmp.eq.s32.totalorder %v181, %v259
  %vm263 = vcmp.eq.s32.totalorder %v182, %v259
  %v264 = vsel %vm260, %v154, 0.0
  %v265 = vsel %vm261, %v168, 0.0
  %v266 = vsel %vm262, %v156, 0.0
  %v267 = vsel %vm263, %v170, 0.0
  %v268 = vadd.f32 %v264, %v265
  %269 = vadd.xlane.f32.xlu0 %v268
  %v270 = vpop.xlane.xlu0 %269
  %v271 = vadd.f32 %v266, %v267
  %272 = vadd.xlane.f32.xlu0 %v271
  %v273 = vpop.xlane.xlu0 %272
  %v274 = vadd.f32 %v250, %v270
  %v275 = vadd.f32 %v251, %v273
  %276 = vst.msk [vmem:[#allocation5] sm:$0xff] %vm233, %v274
  %277 = vst.msk [vmem:[#allocation5 + $0x8] sm:$0xff] %vm233, %v275
  // Predicated region
  $region22: #{transformer_forward.49} parent=0 // pred_check
    %p278 = pneg %p21
  $region23: #{transformer_forward.49} parent=0 // pred_check_branch
    %280 = sbr.rel (%p278) target = $region25
  $region24: #{transformer_forward.49} parent=0 // pred_region
    %v281 = vld [vmem:[#allocation2] sm:$0xff]
    %v282 = vld [vmem:[#allocation2 + $0x8] sm:$0xff]
    %v283 = vld [vmem:[#allocation3] sm:$0xff]
    %v284 = vld [vmem:[#allocation3 + $0x8] sm:$0xff]
    %v285 = vlog2.pop %v283
    %v286 = vmul.f32 %v285, 0.6931472
    %v287 = vlog2.pop %v284
    %v288 = vmul.f32 %v287, 0.6931472
    %v289 = vadd.f32 %v281, %v286
    %v290 = vadd.f32 %v282, %v288
    %291 = vst.msk [vmem:[%s5] sm:$0xff] %vm233, %v289
    %292 = vst.msk [vmem:[%s5 + $0x8] sm:$0xff] %vm233, %v290
    %v293 = vld [vmem:[#allocation4] sm:$0xff]
    %v294 = vld [vmem:[#allocation4 + $0x8] sm:$0xff]
    %295 = vst.msk [vmem:[%s6] sm:$0xff] %vm233, %v293
    %296 = vst.msk [vmem:[%s6 + $0x8] sm:$0xff] %vm233, %v294
    %v297 = vld [vmem:[#allocation5] sm:$0xff]
    %v298 = vld [vmem:[#allocation5 + $0x8] sm:$0xff]
    %299 = vst.msk [vmem:[%s7] sm:$0xff] %vm233, %v297
    %300 = vst.msk [vmem:[%s7 + $0x8] sm:$0xff] %vm233, %v298
  $region25: #{transformer_forward.49} parent=0 // pred_fallthru
    _
  // Predicated region
  $region26: #{transformer_forward.49} parent=0 // pred_check
    _
  $region27: #{transformer_forward.49} parent=0 // pred_check_branch
    %302 = sbr.rel (0) target = $region29
  $region28: #{transformer_forward.49} parent=0 // pred_region
    _
  $region29: #{transformer_forward.49} parent=0 // pred_fallthru
    _
  // Predicated region
  $region30: #{transformer_forward.49} parent=0 // pred_check
    _
  $region31: #{transformer_forward.49} parent=0 // pred_check_branch
    %304 = sbr.rel (0) target = $region33
  $region32: #{transformer_forward.49} parent=0 // pred_region
    _
  $region33: #{transformer_forward.49} parent=0 // pred_fallthru
    _
  // Predicated region
  $region34: #{transformer_forward.49} parent=0 // pred_check
    _
  $region35: #{transformer_forward.49} parent=0 // pred_check_branch
    %306 = sbr.rel (0) target = $region37
  $region36: #{transformer_forward.49} parent=0 // pred_region
    _
  $region37: #{transformer_forward.49} parent=0 // pred_fallthru
    _
  // Predicated region
  $region38: #{transformer_forward.49} parent=0 // pred_check
    _
  $region39: #{transformer_forward.49} parent=0 // pred_check_branch
    %308 = sbr.rel (0) target = $region41
  $region40: #{transformer_forward.49} parent=0 // pred_region
    _
  $region41: #{transformer_forward.49} parent=0 // pred_fallthru
    _
  // Predicated region
  $region42: #{transformer_forward.49} parent=0 // pred_check
    _
  $region43: #{transformer_forward.49} parent=0 // pred_check_branch
    %310 = sbr.rel (0) target = $region45
  $region44: #{transformer_forward.49} parent=0 // pred_region
    _
  $region45: #{transformer_forward.49} parent=0 // pred_fallthru
    _
  // Predicated region
  $region46: #{transformer_forward.49} parent=0 // pred_check
    _
  $region47: #{transformer_forward.49} parent=0 // pred_check_branch
    %312 = sbr.rel (0) target = $region49
  $region48: #{transformer_forward.49} parent=0 // pred_region
    _
  $region49: #{transformer_forward.49} parent=0 // pred_fallthru
    _
  // Predicated region
  $region50: #{transformer_forward.49} parent=0 // pred_check
    _
  $region51: #{transformer_forward.49} parent=0 // pred_check_branch
    %314 = sbr.rel (0) target = $region53
  $region52: #{transformer_forward.49} parent=0 // pred_region
    _
  $region53: #{transformer_forward.49} parent=0 // pred_fallthru
    _
  // Predicated region
  $region54: #{transformer_forward.49} parent=0 // pred_check
    _
  $region55: #{transformer_forward.49} parent=0 // pred_check_branch
    %316 = sbr.rel (0) target = $region57
  $region56: #{transformer_forward.49} parent=0 // pred_region
    _
  $region57: #{transformer_forward.49} parent=0 // pred_fallthru
    _

</llo_original>
